<compile_context>
chip_gen: v5e
topology: v5e:2x2
jax: 0.10.0
libtpu: 0.0.40
codegen_flags: <defaults>
</compile_context>

<pallas_src>
import math
import numpy as np
import jax
import jax.numpy as jnp
from jax.experimental import pallas as pl
from jax.experimental.pallas import tpu as pltpu

# ----------------------------- config -----------------------------
IMG_SIZE = (1, 44, 44)      # (C, H, W) -- module is built for 44x44 ZDC images
LATENT_Z = 10
LATENT_W = 10
NUM_PROP = 2
HID_CH = 32
HIDDEN = 512
KSIZE = 4
BATCH = 2
NEG_SLOPE = 0.1

# conv-chain geometry:  4 -(stride 3)-> 11 -(stride 2)-> 22 -(stride 2)-> 44
H0 = KSIZE
OH1, OH2, OH3 = 11, 22, 44
OW3 = 44
LANE0 = HID_CH * KSIZE          # 128 lanes per input row of convT1 (lane = ci*4 + iw)


def _pad128(n):
    return ((n + 127) // 128) * 128


NPAD1 = _pad128(HID_CH * OH1)        # 352 -> 384
NPAD2 = _pad128(HID_CH * OH2)        # 704 -> 768
NPAD3 = _pad128(IMG_SIZE[0] * OH3)   # 44  -> 128


def _leaky(x):
    return jnp.where(x > 0, x, NEG_SLOPE * x)


# ----------------------------- fused Pallas kernel -----------------------------
def make_decoder_kernel(B):
    f32 = jnp.float32

    def kernel(wz_ref, wm_ref,
               wp1w, wp1b, wp2w, wp2b,
               pr1e, pr1b, pr2w, pr2b,
               l1w, l1b, l2w, l2b, l3w, l3b,
               r2c1, shc1, cb1,
               r2c2, shc2, cb2,
               r2c3, shc3, cb3,
               img_ref, prop_ref, wp_ref,
               x0_s, ys1, ys2, ys3):
        wz = wz_ref[...]                            # (B, Dw+Dz), pre-concatenated
        wm = wm_ref[...]                            # (B, P*Dw),  pre-masked

        # ---- wp heads + property heads (batched over NUM_PROP via block-diag weights) ----
        t = _leaky(jnp.dot(wm, wp1w[...], preferred_element_type=f32) + wp1b[...])   # (B,P*16)
        wp = jnp.dot(t, wp2w[...], preferred_element_type=f32) + wp2b[...]           # (B,P)
        u = _leaky(jnp.dot(wp, pr1e[...], preferred_element_type=f32) + pr1b[...])   # (B,P*16)
        v = jnp.dot(u, pr2w[...], preferred_element_type=f32) + pr2b[...]            # (B,P)
        prop = 1.0 / (1.0 + jnp.exp(-v)) + wp
        wp_ref[...] = wp
        prop_ref[...] = prop

        # ---- MLP trunk (whole batch at once; lin3 columns pre-permuted to (ih,ci,iw)) ----
        h = _leaky(jnp.dot(wz, l1w[...], preferred_element_type=f32) + l1b[...])     # (B,512)
        h = _leaky(jnp.dot(h, l2w[...], preferred_element_type=f32) + l2b[...])      # (B,512)
        feat = _leaky(jnp.dot(h, l3w[...], preferred_element_type=f32) + l3b[...])   # (B,512)

        # (B,512) -> (B*4, 128): row = b*4 + ih, lane = ci*4 + iw (128-aligned slices)
        for b in range(B):
            for ih in range(KSIZE):
                r = b * KSIZE + ih
                x0_s[r:r + 1, :] = feat[b:b + 1, ih * LANE0:(ih + 1) * LANE0]
        x = x0_s[...]

        # ---- ConvTranspose2d = 2 matmuls: Y = X @ R2cat ; out = leaky(ShCat @ Ystack + b) ----
        def convt(xv, r2c, ys, shc, cb, hb, npad):
            y = jnp.dot(xv, r2c[...], preferred_element_type=f32)        # (H*B, 4*npad)
            for kh in range(KSIZE):                                      # vertical stack of kh blocks
                ys[kh * hb:(kh + 1) * hb, :] = y[:, kh * npad:(kh + 1) * npad]
            out = jnp.dot(shc[...], ys[...], preferred_element_type=f32)  # (OH*B, npad)
            return _leaky(out + cb[...])

        x = convt(x, r2c1, ys1, shc1, cb1, H0 * B, NPAD1)     # (B*11, 384)
        x = convt(x, r2c2, ys2, shc2, cb2, OH1 * B, NPAD2)    # (B*22, 768)
        x = convt(x, r2c3, ys3, shc3, cb3, OH2 * B, NPAD3)    # (B*44, 128)

        img_ref[...] = x                                      # one dense, lane-aligned store

    return kernel


# ----------------------------- wrapper -----------------------------
WEIGHT_NAMES = ('wp1w', 'wp1b', 'wp2w', 'wp2b',
                'pr1e', 'pr1b', 'pr2w', 'pr2b',
                'l1w', 'l1b', 'l2w', 'l2b', 'l3w', 'l3b',
                'r2c1', 'shc1', 'cb1',
                'r2c2', 'shc2', 'cb2',
                'r2c3', 'shc3', 'cb3')


def decoder_forward(kp, z, w, w_mask):
    B = z.shape[0]
    # trivial layout plumbing done in XLA (removes in-kernel scratch assembly):
    wz = jnp.concatenate([w, z], axis=-1).astype(jnp.float32)                       # (B, Dw+Dz)
    wm = (w[:, None, :] * w_mask).reshape(B, NUM_PROP * LATENT_W).astype(jnp.float32)

    weights = [kp[k] for k in WEIGHT_NAMES]

    out_shape = (
        jax.ShapeDtypeStruct((B * OH3, NPAD3), jnp.float32),   # image slab, 128-lane dense
        jax.ShapeDtypeStruct((B, NUM_PROP), jnp.float32),      # prop
        jax.ShapeDtypeStruct((B, NUM_PROP), jnp.float32),      # wp
    )

    img_flat, prop, wp = pl.pallas_call(
        make_decoder_kernel(B),
        out_shape=out_shape,
        scratch_shapes=[
            pltpu.VMEM((B * KSIZE, LANE0), jnp.float32),          # lin3 output as (b*4+ih, ci*4+iw)
            pltpu.VMEM((KSIZE * H0 * B, NPAD1), jnp.float32),     # Ystack for convT1
            pltpu.VMEM((KSIZE * OH1 * B, NPAD2), jnp.float32),    # Ystack for convT2
            pltpu.VMEM((KSIZE * OH2 * B, NPAD3), jnp.float32),    # Ystack for convT3
        ],
        compiler_params=pltpu.CompilerParams(vmem_limit_bytes=32 * 1024 * 1024),
    )(wz, wm, *weights)

    img = img_flat[:, :OW3].reshape(B, IMG_SIZE[0], OH3, OW3)
    return img, prop, wp


# ----------------------------- parameters (torch layout) -----------------------------
def _uniform(key, shape, bound):
    return jax.random.uniform(key, shape, jnp.float32, -bound, bound)


def _init_linear(key, fan_in, fan_out):
    k1, k2 = jax.random.split(key)
    bound = 1.0 / math.sqrt(fan_in)
    return _uniform(k1, (fan_in, fan_out), bound), _uniform(k2, (fan_out,), bound)


def _spectral_normalize(w):
    # TODO(synk): exact `spectral_norm_fc` coefficient / power-iteration unknown; apply plain
    # spectral normalization W / sigma_max(W) once at init (kernel and reference share weights).
    sigma = float(np.linalg.norm(np.asarray(w), 2))
    return w / sigma


def init_params(key):
    keys = iter(jax.random.split(key, 32))
    p = {}

    pr_w1, pr_b1, pr_w2, pr_b2 = [], [], [], []
    wp_w1, wp_b1, wp_w2, wp_b2 = [], [], [], []
    for _ in range(NUM_PROP):
        w1, b1 = _init_linear(next(keys), 1, 16)
        w2, b2 = _init_linear(next(keys), 16, 1)
        pr_w1.append(_spectral_normalize(w1)); pr_b1.append(b1)
        pr_w2.append(_spectral_normalize(w2)); pr_b2.append(b2)
    for _ in range(NUM_PROP):
        w1, b1 = _init_linear(next(keys), LATENT_W, 16)
        w2, b2 = _init_linear(next(keys), 16, 1)
        wp_w1.append(w1); wp_b1.append(b1)
        wp_w2.append(w2); wp_b2.append(b2)
    p['pr_w1'], p['pr_b1'] = jnp.stack(pr_w1), jnp.stack(pr_b1)   # (P,1,16), (P,16)
    p['pr_w2'], p['pr_b2'] = jnp.stack(pr_w2), jnp.stack(pr_b2)   # (P,16,1), (P,1)
    p['wp_w1'], p['wp_b1'] = jnp.stack(wp_w1), jnp.stack(wp_b1)   # (P,Dw,16), (P,16)
    p['wp_w2'], p['wp_b2'] = jnp.stack(wp_w2), jnp.stack(wp_b2)   # (P,16,1), (P,1)

    out3 = HID_CH * KSIZE * KSIZE
    p['l1w'], p['l1b'] = _init_linear(next(keys), LATENT_Z + LATENT_W, HIDDEN)
    p['l2w'], p['l2b'] = _init_linear(next(keys), HIDDEN, HIDDEN)
    p['l3w'], p['l3b'] = _init_linear(next(keys), HIDDEN, out3)

    def init_convT(k, cin, cout):
        k1, k2 = jax.random.split(k)
        bound = 1.0 / math.sqrt(cin * KSIZE * KSIZE)
        return (_uniform(k1, (cin, cout, KSIZE, KSIZE), bound),
                _uniform(k2, (cout,), bound))

    p['ct1_w'], p['ct1_b'] = init_convT(next(keys), HID_CH, HID_CH)
    p['ct2_w'], p['ct2_b'] = init_convT(next(keys), HID_CH, HID_CH)
    p['ct3_w'], p['ct3_b'] = init_convT(next(keys), HID_CH, IMG_SIZE[0])
    # NOTE: convT_64 exists in the torch __init__ only for 64x64 images and is never used
    # in forward() for 44x44, so it is not instantiated here.
    return p


# ----------------------------- host-side packing for the kernel -----------------------------
def build_convt_packed(w_t, bias, H, W, stride, pad, B, nin_pad, npad):
    """ConvTranspose2d -> (R2cat, ShCat, bias_row).  With X[b*H+ih, ci*W+iw] = x[b,ci,ih,iw]:

         Y                       = X @ R2cat                  # (H*B, K*npad)
         Ystack[kh*H*B + r, :]   = Y[r, kh*npad:(kh+1)*npad]
         out                     = ShCat @ Ystack + bias_row  # (OH*B, npad)

       R2cat[ci*W+iw, kh*npad + co*OW+ow] = weight[ci,co,kh, ow - iw*stride + pad] (valid tap)
       ShCat[:, kh*H*B:(kh+1)*H*B]        = kron(I_B, Sh[kh]),  Sh[kh][oh,ih] = 1 iff
                                            oh == ih*stride - pad + kh.
       Lanes >= Cout*OW (and rows >= Cin*W) are zero padding to the next 128 multiple."""
    w_np = np.asarray(w_t, np.float32)
    Cin, Cout, K, _ = w_np.shape
    OH = (H - 1) * stride - 2 * pad + K
    OW = (W - 1) * stride - 2 * pad + K
    r2cat = np.zeros((nin_pad, K * npad), np.float32)
    for kh in range(K):
        for kw in range(K):
            for iw in range(W):
                ow = iw * stride - pad + kw
                if 0 <= ow < OW:
                    rows = np.arange(Cin) * W + iw
                    cols = kh * npad + np.arange(Cout) * OW + ow
                    r2cat[np.ix_(rows, cols)] = w_np[:, :, kh, kw]
    sh = np.zeros((K, OH, H), np.float32)
    for kh in range(K):
        for ih in range(H):
            oh = ih * stride - pad + kh
            if 0 <= oh < OH:
                sh[kh, oh, ih] = 1.0
    eye_b = np.eye(B, dtype=np.float32)
    shcat = np.concatenate([np.kron(eye_b, sh[kh]) for kh in range(K)], axis=1)
    cb = np.zeros((1, npad), np.float32)
    cb[0, :Cout * OW] = np.repeat(np.asarray(bias, np.float32), OW)
    return r2cat, shcat, cb, OH, OW


def pack_kernel_params(p, batch):
    kp = {}
    P, Dw = NUM_PROP, LATENT_W

    # block-diagonal head weights (batch the NUM_PROP loop into single matmuls)
    wp1w = np.zeros((P * Dw, P * 16), np.float32)
    wp1b = np.zeros((1, P * 16), np.float32)
    wp2w = np.zeros((P * 16, P), np.float32)
    wp2b = np.zeros((1, P), np.float32)
    pr1e = np.zeros((P, P * 16), np.float32)
    pr1b = np.zeros((1, P * 16), np.float32)
    pr2w = np.zeros((P * 16, P), np.float32)
    pr2b = np.zeros((1, P), np.float32)
    for i in range(P):
        wp1w[i * Dw:(i + 1) * Dw, i * 16:(i + 1) * 16] = np.asarray(p['wp_w1'][i])
        wp1b[0, i * 16:(i + 1) * 16] = np.asarray(p['wp_b1'][i])
        wp2w[i * 16:(i + 1) * 16, i] = np.asarray(p['wp_w2'][i])[:, 0]
        wp2b[0, i] = np.asarray(p['wp_b2'][i])[0]
        pr1e[i, i * 16:(i + 1) * 16] = np.asarray(p['pr_w1'][i])[0]
        pr1b[0, i * 16:(i + 1) * 16] = np.asarray(p['pr_b1'][i])
        pr2w[i * 16:(i + 1) * 16, i] = np.asarray(p['pr_w2'][i])[:, 0]
        pr2b[0, i] = np.asarray(p['pr_b2'][i])[0]
    for name, arr in (('wp1w', wp1w), ('wp1b', wp1b), ('wp2w', wp2w), ('wp2b', wp2b),
                      ('pr1e', pr1e), ('pr1b', pr1b), ('pr2w', pr2w), ('pr2b', pr2b)):
        kp[name] = jnp.asarray(arr)

    kp['l1w'], kp['l1b'] = p['l1w'], p['l1b'].reshape(1, -1)
    kp['l2w'], kp['l2b'] = p['l2w'], p['l2b'].reshape(1, -1)

    # permute lin3 output columns: torch lane order (ci, ih, iw) -> kernel order (ih, ci, iw)
    perm = np.zeros(HID_CH * KSIZE * KSIZE, np.int32)
    for ih in range(KSIZE):
        for ci in range(HID_CH):
            for iw in range(KSIZE):
                perm[ih * HID_CH * KSIZE + ci * KSIZE + iw] = ci * KSIZE * KSIZE + ih * KSIZE + iw
    kp['l3w'] = p['l3w'][:, perm]
    kp['l3b'] = p['l3b'][perm].reshape(1, -1)

    r2, sh, cb, oh, _ = build_convt_packed(p['ct1_w'], p['ct1_b'], H0, H0, 3, 1, batch, LANE0, NPAD1)
    assert oh == OH1
    kp['r2c1'], kp['shc1'], kp['cb1'] = jnp.asarray(r2), jnp.asarray(sh), jnp.asarray(cb)
    r2, sh, cb, oh, _ = build_convt_packed(p['ct2_w'], p['ct2_b'], OH1, OH1, 2, 1, batch, NPAD1, NPAD2)
    assert oh == OH2
    kp['r2c2'], kp['shc2'], kp['cb2'] = jnp.asarray(r2), jnp.asarray(sh), jnp.asarray(cb)
    r2, sh, cb, oh, _ = build_convt_packed(p['ct3_w'], p['ct3_b'], OH2, OH2, 2, 1, batch, NPAD2, NPAD3)
    assert oh == OH3
    kp['r2c3'], kp['shc3'], kp['cb3'] = jnp.asarray(r2), jnp.asarray(sh), jnp.asarray(cb)
    return kp


# ----------------------------- pure-JAX reference -----------------------------
def reference_forward(params, z, w, w_mask):
    B = z.shape[0]
    wz = jnp.concatenate([w, z], axis=-1)
    wp_cols, prop_cols = [], []
    for pidx in range(NUM_PROP):
        wm = w * w_mask[:, pidx, :]
        t = _leaky(wm @ params['wp_w1'][pidx] + params['wp_b1'][pidx])
        wp_p = t @ params['wp_w2'][pidx] + params['wp_b2'][pidx]
        s = _leaky(wp_p @ params['pr_w1'][pidx] + params['pr_b1'][pidx])
        s = jax.nn.sigmoid(s @ params['pr_w2'][pidx] + params['pr_b2'][pidx])
        wp_cols.append(wp_p)
        prop_cols.append(s + wp_p)
    wp_ref = jnp.concatenate(wp_cols, axis=-1)
    prop_ref = jnp.concatenate(prop_cols, axis=-1)

    h = _leaky(wz @ params['l1w'] + params['l1b'])
    h = _leaky(h @ params['l2w'] + params['l2b'])
    h = _leaky(h @ params['l3w'] + params['l3b'])
    x = h.reshape(B, HID_CH, KSIZE, KSIZE)

    def convT(x_nchw, wgt, b, s, pad):
        Bc, Cin, H, W = x_nchw.shape
        Cout, K = wgt.shape[1], wgt.shape[2]
        full = jnp.zeros((Bc, Cout, (H - 1) * s + K, (W - 1) * s + K), jnp.float32)
        for kh in range(K):
            for kw in range(K):
                contrib = jnp.einsum('bchw,cd->bdhw', x_nchw, wgt[:, :, kh, kw])
                full = full.at[:, :, kh:kh + (H - 1) * s + 1:s,
                                     kw:kw + (W - 1) * s + 1:s].add(contrib)
        OH = (H - 1) * s - 2 * pad + K
        OW = (W - 1) * s - 2 * pad + K
        return full[:, :, pad:pad + OH, pad:pad + OW] + b[None, :, None, None]

    x = _leaky(convT(x, params['ct1_w'], params['ct1_b'], 3, 1))
    x = _leaky(convT(x, params['ct2_w'], params['ct2_b'], 2, 1))
    x = _leaky(convT(x, params['ct3_w'], params['ct3_b'], 2, 1))
    return x, prop_ref, wp_ref


# ----------------------------- main -----------------------------
if __name__ == "__main__":
    key = jax.random.PRNGKey(0)
    kpar, kz, kw, km = jax.random.split(key, 4)
    params = init_params(kpar)
    kparams = pack_kernel_params(params, BATCH)

    z = jax.random.normal(kz, (BATCH, LATENT_Z), jnp.float32)
    w = jax.random.normal(kw, (BATCH, LATENT_W), jnp.float32)
    w_mask = jax.random.bernoulli(km, 0.5, (BATCH, NUM_PROP, LATENT_W)).astype(jnp.float32)

    x_img, prop, wp = decoder_forward(kparams, z, w, w_mask)
    x_img, prop, wp = jax.block_until_ready((x_img, prop, wp))

    assert x_img.shape == (BATCH, IMG_SIZE[0], IMG_SIZE[1], IMG_SIZE[2])
    assert prop.shape == (BATCH, NUM_PROP) and wp.shape == (BATCH, NUM_PROP)

    x_ref, prop_ref, wp_ref = reference_forward(params, z, w, w_mask)
    np.testing.assert_allclose(np.asarray(wp), np.asarray(wp_ref), rtol=1e-3, atol=1e-3)
    np.testing.assert_allclose(np.asarray(prop), np.asarray(prop_ref), rtol=1e-3, atol=1e-3)
    np.testing.assert_allclose(np.asarray(x_img), np.asarray(x_ref), rtol=1e-3, atol=1e-3)

    print("KERNEL_OK")
</pallas_src>

<mosaic_0001>
module attributes {stable_mosaic.version = 11 : i64} {
  func.func @kernel(%arg0: memref<2x20xf32, #tpu.memory_space<vmem>>, %arg1: memref<2x20xf32, #tpu.memory_space<vmem>>, %arg2: memref<20x32xf32, #tpu.memory_space<vmem>>, %arg3: memref<1x32xf32, #tpu.memory_space<vmem>>, %arg4: memref<32x2xf32, #tpu.memory_space<vmem>>, %arg5: memref<1x2xf32, #tpu.memory_space<vmem>>, %arg6: memref<2x32xf32, #tpu.memory_space<vmem>>, %arg7: memref<1x32xf32, #tpu.memory_space<vmem>>, %arg8: memref<32x2xf32, #tpu.memory_space<vmem>>, %arg9: memref<1x2xf32, #tpu.memory_space<vmem>>, %arg10: memref<20x512xf32, #tpu.memory_space<vmem>>, %arg11: memref<1x512xf32, #tpu.memory_space<vmem>>, %arg12: memref<512x512xf32, #tpu.memory_space<vmem>>, %arg13: memref<1x512xf32, #tpu.memory_space<vmem>>, %arg14: memref<512x512xf32, #tpu.memory_space<vmem>>, %arg15: memref<1x512xf32, #tpu.memory_space<vmem>>, %arg16: memref<128x1536xf32, #tpu.memory_space<vmem>>, %arg17: memref<22x32xf32, #tpu.memory_space<vmem>>, %arg18: memref<1x384xf32, #tpu.memory_space<vmem>>, %arg19: memref<384x3072xf32, #tpu.memory_space<vmem>>, %arg20: memref<44x88xf32, #tpu.memory_space<vmem>>, %arg21: memref<1x768xf32, #tpu.memory_space<vmem>>, %arg22: memref<768x512xf32, #tpu.memory_space<vmem>>, %arg23: memref<88x176xf32, #tpu.memory_space<vmem>>, %arg24: memref<1x128xf32, #tpu.memory_space<vmem>>, %arg25: memref<88x128xf32, #tpu.memory_space<vmem>>, %arg26: memref<2x2xf32, #tpu.memory_space<vmem>>, %arg27: memref<2x2xf32, #tpu.memory_space<vmem>>, %arg28: memref<8x128xf32, #tpu.memory_space<vmem>>, %arg29: memref<32x384xf32, #tpu.memory_space<vmem>>, %arg30: memref<88x768xf32, #tpu.memory_space<vmem>>, %arg31: memref<176x128xf32, #tpu.memory_space<vmem>>) attributes {dimension_semantics = [], scalar_prefetch = 0 : i64, scratch_operands = 4 : i64, tpu.core_type = #tpu.core_type<tc>} {
    %c0 = arith.constant 0 : index
    %c0_0 = arith.constant 0 : index
    %0 = vector.load %arg0[%c0, %c0_0] : memref<2x20xf32, #tpu.memory_space<vmem>>, vector<2x20xf32>
    %c0_1 = arith.constant 0 : index
    %c0_2 = arith.constant 0 : index
    %1 = vector.load %arg1[%c0_1, %c0_2] : memref<2x20xf32, #tpu.memory_space<vmem>>, vector<2x20xf32>
    %c0_3 = arith.constant 0 : index
    %c0_4 = arith.constant 0 : index
    %2 = vector.load %arg2[%c0_3, %c0_4] : memref<20x32xf32, #tpu.memory_space<vmem>>, vector<20x32xf32>
    %cst = arith.constant dense<0.000000e+00> : vector<2x32xf32>
    %3 = tpu.matmul %1, %2, %cst {dimension_numbers = #tpu.dot_dimension_numbers<[1], [0], [0], [1], [0, 0, 1, 1], [], []>} : vector<2x20xf32>, vector<20x32xf32>, vector<2x32xf32> -> vector<2x32xf32>
    %c0_5 = arith.constant 0 : index
    %c0_6 = arith.constant 0 : index
    %4 = vector.load %arg3[%c0_5, %c0_6] : memref<1x32xf32, #tpu.memory_space<vmem>>, vector<1x32xf32>
    %5 = vector.broadcast %4 : vector<1x32xf32> to vector<2x32xf32>
    %6 = arith.addf %3, %5 : vector<2x32xf32>
    %cst_7 = arith.constant 0.000000e+00 : f32
    %7 = vector.broadcast %cst_7 : f32 to vector<2x32xf32>
    %8 = arith.cmpf ogt, %6, %7 : vector<2x32xf32>
    %cst_8 = arith.constant 1.000000e-01 : f32
    %9 = vector.broadcast %cst_8 : f32 to vector<2x32xf32>
    %10 = arith.mulf %9, %6 : vector<2x32xf32>
    %11 = arith.select %8, %6, %10 : vector<2x32xi1>, vector<2x32xf32>
    %c0_9 = arith.constant 0 : index
    %c0_10 = arith.constant 0 : index
    %12 = vector.load %arg4[%c0_9, %c0_10] : memref<32x2xf32, #tpu.memory_space<vmem>>, vector<32x2xf32>
    %cst_11 = arith.constant dense<0.000000e+00> : vector<2x2xf32>
    %13 = tpu.matmul %11, %12, %cst_11 {dimension_numbers = #tpu.dot_dimension_numbers<[1], [0], [0], [1], [0, 0, 1, 1], [], []>} : vector<2x32xf32>, vector<32x2xf32>, vector<2x2xf32> -> vector<2x2xf32>
    %c0_12 = arith.constant 0 : index
    %c0_13 = arith.constant 0 : index
    %14 = vector.load %arg5[%c0_12, %c0_13] : memref<1x2xf32, #tpu.memory_space<vmem>>, vector<1x2xf32>
    %15 = vector.broadcast %14 : vector<1x2xf32> to vector<2x2xf32>
    %16 = arith.addf %13, %15 : vector<2x2xf32>
    %c0_14 = arith.constant 0 : index
    %c0_15 = arith.constant 0 : index
    %17 = vector.load %arg6[%c0_14, %c0_15] : memref<2x32xf32, #tpu.memory_space<vmem>>, vector<2x32xf32>
    %cst_16 = arith.constant dense<0.000000e+00> : vector<2x32xf32>
    %18 = tpu.matmul %16, %17, %cst_16 {dimension_numbers = #tpu.dot_dimension_numbers<[1], [0], [0], [1], [0, 0, 1, 1], [], []>} : vector<2x2xf32>, vector<2x32xf32>, vector<2x32xf32> -> vector<2x32xf32>
    %c0_17 = arith.constant 0 : index
    %c0_18 = arith.constant 0 : index
    %19 = vector.load %arg7[%c0_17, %c0_18] : memref<1x32xf32, #tpu.memory_space<vmem>>, vector<1x32xf32>
    %20 = vector.broadcast %19 : vector<1x32xf32> to vector<2x32xf32>
    %21 = arith.addf %18, %20 : vector<2x32xf32>
    %cst_19 = arith.constant 0.000000e+00 : f32
    %22 = vector.broadcast %cst_19 : f32 to vector<2x32xf32>
    %23 = arith.cmpf ogt, %21, %22 : vector<2x32xf32>
    %cst_20 = arith.constant 1.000000e-01 : f32
    %24 = vector.broadcast %cst_20 : f32 to vector<2x32xf32>
    %25 = arith.mulf %24, %21 : vector<2x32xf32>
    %26 = arith.select %23, %21, %25 : vector<2x32xi1>, vector<2x32xf32>
    %c0_21 = arith.constant 0 : index
    %c0_22 = arith.constant 0 : index
    %27 = vector.load %arg8[%c0_21, %c0_22] : memref<32x2xf32, #tpu.memory_space<vmem>>, vector<32x2xf32>
    %cst_23 = arith.constant dense<0.000000e+00> : vector<2x2xf32>
    %28 = tpu.matmul %26, %27, %cst_23 {dimension_numbers = #tpu.dot_dimension_numbers<[1], [0], [0], [1], [0, 0, 1, 1], [], []>} : vector<2x32xf32>, vector<32x2xf32>, vector<2x2xf32> -> vector<2x2xf32>
    %c0_24 = arith.constant 0 : index
    %c0_25 = arith.constant 0 : index
    %29 = vector.load %arg9[%c0_24, %c0_25] : memref<1x2xf32, #tpu.memory_space<vmem>>, vector<1x2xf32>
    %30 = vector.broadcast %29 : vector<1x2xf32> to vector<2x2xf32>
    %31 = arith.addf %28, %30 : vector<2x2xf32>
    %cst_26 = arith.constant 0.000000e+00 : f32
    %32 = vector.broadcast %cst_26 : f32 to vector<2x2xf32>
    %33 = arith.subf %32, %31 : vector<2x2xf32>
    %34 = math.exp %33 : vector<2x2xf32>
    %cst_27 = arith.constant 1.000000e+00 : f32
    %35 = vector.broadcast %cst_27 : f32 to vector<2x2xf32>
    %36 = arith.addf %35, %34 : vector<2x2xf32>
    %cst_28 = arith.constant 1.000000e+00 : f32
    %37 = vector.broadcast %cst_28 : f32 to vector<2x2xf32>
    %38 = arith.divf %37, %36 : vector<2x2xf32>
    %39 = arith.addf %38, %16 : vector<2x2xf32>
    %c0_29 = arith.constant 0 : index
    %c0_30 = arith.constant 0 : index
    %40 = vector.load %arg27[%c0_29, %c0_30] : memref<2x2xf32, #tpu.memory_space<vmem>>, vector<2x2xf32>
    tpu.vector_store %arg27[%c0_29, %c0_30], %16 {strides = array<i32>} : memref<2x2xf32, #tpu.memory_space<vmem>>, vector<2x2xf32>,
    %c0_31 = arith.constant 0 : index
    %c0_32 = arith.constant 0 : index
    %41 = vector.load %arg26[%c0_31, %c0_32] : memref<2x2xf32, #tpu.memory_space<vmem>>, vector<2x2xf32>
    tpu.vector_store %arg26[%c0_31, %c0_32], %39 {strides = array<i32>} : memref<2x2xf32, #tpu.memory_space<vmem>>, vector<2x2xf32>,
    %c0_33 = arith.constant 0 : index
    %c0_34 = arith.constant 0 : index
    %42 = vector.load %arg10[%c0_33, %c0_34] : memref<20x512xf32, #tpu.memory_space<vmem>>, vector<20x512xf32>
    %cst_35 = arith.constant dense<0.000000e+00> : vector<2x512xf32>
    %43 = tpu.matmul %0, %42, %cst_35 {dimension_numbers = #tpu.dot_dimension_numbers<[1], [0], [0], [1], [0, 0, 1, 1], [], []>} : vector<2x20xf32>, vector<20x512xf32>, vector<2x512xf32> -> vector<2x512xf32>
    %c0_36 = arith.constant 0 : index
    %c0_37 = arith.constant 0 : index
    %44 = vector.load %arg11[%c0_36, %c0_37] : memref<1x512xf32, #tpu.memory_space<vmem>>, vector<1x512xf32>
    %45 = vector.broadcast %44 : vector<1x512xf32> to vector<2x512xf32>
    %46 = arith.addf %43, %45 : vector<2x512xf32>
    %cst_38 = arith.constant 0.000000e+00 : f32
    %47 = vector.broadcast %cst_38 : f32 to vector<2x512xf32>
    %48 = arith.cmpf ogt, %46, %47 : vector<2x512xf32>
    %cst_39 = arith.constant 1.000000e-01 : f32
    %49 = vector.broadcast %cst_39 : f32 to vector<2x512xf32>
    %50 = arith.mulf %49, %46 : vector<2x512xf32>
    %51 = arith.select %48, %46, %50 : vector<2x512xi1>, vector<2x512xf32>
    %c0_40 = arith.constant 0 : index
    %c0_41 = arith.constant 0 : index
    %52 = vector.load %arg12[%c0_40, %c0_41] : memref<512x512xf32, #tpu.memory_space<vmem>>, vector<512x512xf32>
    %cst_42 = arith.constant dense<0.000000e+00> : vector<2x512xf32>
    %53 = tpu.matmul %51, %52, %cst_42 {dimension_numbers = #tpu.dot_dimension_numbers<[1], [0], [0], [1], [0, 0, 1, 1], [], []>} : vector<2x512xf32>, vector<512x512xf32>, vector<2x512xf32> -> vector<2x512xf32>
    %c0_43 = arith.constant 0 : index
    %c0_44 = arith.constant 0 : index
    %54 = vector.load %arg13[%c0_43, %c0_44] : memref<1x512xf32, #tpu.memory_space<vmem>>, vector<1x512xf32>
    %55 = vector.broadcast %54 : vector<1x512xf32> to vector<2x512xf32>
    %56 = arith.addf %53, %55 : vector<2x512xf32>
    %cst_45 = arith.constant 0.000000e+00 : f32
    %57 = vector.broadcast %cst_45 : f32 to vector<2x512xf32>
    %58 = arith.cmpf ogt, %56, %57 : vector<2x512xf32>
    %cst_46 = arith.constant 1.000000e-01 : f32
    %59 = vector.broadcast %cst_46 : f32 to vector<2x512xf32>
    %60 = arith.mulf %59, %56 : vector<2x512xf32>
    %61 = arith.select %58, %56, %60 : vector<2x512xi1>, vector<2x512xf32>
    %c0_47 = arith.constant 0 : index
    %c0_48 = arith.constant 0 : index
    %62 = vector.load %arg14[%c0_47, %c0_48] : memref<512x512xf32, #tpu.memory_space<vmem>>, vector<512x512xf32>
    %cst_49 = arith.constant dense<0.000000e+00> : vector<2x512xf32>
    %63 = tpu.matmul %61, %62, %cst_49 {dimension_numbers = #tpu.dot_dimension_numbers<[1], [0], [0], [1], [0, 0, 1, 1], [], []>} : vector<2x512xf32>, vector<512x512xf32>, vector<2x512xf32> -> vector<2x512xf32>
    %c0_50 = arith.constant 0 : index
    %c0_51 = arith.constant 0 : index
    %64 = vector.load %arg15[%c0_50, %c0_51] : memref<1x512xf32, #tpu.memory_space<vmem>>, vector<1x512xf32>
    %65 = vector.broadcast %64 : vector<1x512xf32> to vector<2x512xf32>
    %66 = arith.addf %63, %65 : vector<2x512xf32>
    %cst_52 = arith.constant 0.000000e+00 : f32
    %67 = vector.broadcast %cst_52 : f32 to vector<2x512xf32>
    %68 = arith.cmpf ogt, %66, %67 : vector<2x512xf32>
    %cst_53 = arith.constant 1.000000e-01 : f32
    %69 = vector.broadcast %cst_53 : f32 to vector<2x512xf32>
    %70 = arith.mulf %69, %66 : vector<2x512xf32>
    %71 = arith.select %68, %66, %70 : vector<2x512xi1>, vector<2x512xf32>
    %72 = vector.extract_strided_slice %71 {offsets = [0, 0], sizes = [1, 128], strides = [1, 1]} : vector<2x512xf32> to vector<1x128xf32>
    %c0_54 = arith.constant 0 : index
    %c0_55 = arith.constant 0 : index
    %73 = vector.load %arg28[%c0_54, %c0_55] : memref<8x128xf32, #tpu.memory_space<vmem>>, vector<1x128xf32>
    tpu.vector_store %arg28[%c0_54, %c0_55], %72 {strides = array<i32>} : memref<8x128xf32, #tpu.memory_space<vmem>>, vector<1x128xf32>,
    %74 = vector.extract_strided_slice %71 {offsets = [0, 128], sizes = [1, 128], strides = [1, 1]} : vector<2x512xf32> to vector<1x128xf32>
    %c1 = arith.constant 1 : index
    %c0_56 = arith.constant 0 : index
    %75 = vector.load %arg28[%c1, %c0_56] : memref<8x128xf32, #tpu.memory_space<vmem>>, vector<1x128xf32>
    tpu.vector_store %arg28[%c1, %c0_56], %74 {strides = array<i32>} : memref<8x128xf32, #tpu.memory_space<vmem>>, vector<1x128xf32>,
    %76 = vector.extract_strided_slice %71 {offsets = [0, 256], sizes = [1, 128], strides = [1, 1]} : vector<2x512xf32> to vector<1x128xf32>
    %c2 = arith.constant 2 : index
    %c0_57 = arith.constant 0 : index
    %77 = vector.load %arg28[%c2, %c0_57] : memref<8x128xf32, #tpu.memory_space<vmem>>, vector<1x128xf32>
    tpu.vector_store %arg28[%c2, %c0_57], %76 {strides = array<i32>} : memref<8x128xf32, #tpu.memory_space<vmem>>, vector<1x128xf32>,
    %78 = vector.extract_strided_slice %71 {offsets = [0, 384], sizes = [1, 128], strides = [1, 1]} : vector<2x512xf32> to vector<1x128xf32>
    %c3 = arith.constant 3 : index
    %c0_58 = arith.constant 0 : index
    %79 = vector.load %arg28[%c3, %c0_58] : memref<8x128xf32, #tpu.memory_space<vmem>>, vector<1x128xf32>
    tpu.vector_store %arg28[%c3, %c0_58], %78 {strides = array<i32>} : memref<8x128xf32, #tpu.memory_space<vmem>>, vector<1x128xf32>,
    %80 = vector.extract_strided_slice %71 {offsets = [1, 0], sizes = [1, 128], strides = [1, 1]} : vector<2x512xf32> to vector<1x128xf32>
    %c4 = arith.constant 4 : index
    %c0_59 = arith.constant 0 : index
    %81 = vector.load %arg28[%c4, %c0_59] : memref<8x128xf32, #tpu.memory_space<vmem>>, vector<1x128xf32>
    tpu.vector_store %arg28[%c4, %c0_59], %80 {strides = array<i32>} : memref<8x128xf32, #tpu.memory_space<vmem>>, vector<1x128xf32>,
    %82 = vector.extract_strided_slice %71 {offsets = [1, 128], sizes = [1, 128], strides = [1, 1]} : vector<2x512xf32> to vector<1x128xf32>
    %c5 = arith.constant 5 : index
    %c0_60 = arith.constant 0 : index
    %83 = vector.load %arg28[%c5, %c0_60] : memref<8x128xf32, #tpu.memory_space<vmem>>, vector<1x128xf32>
    tpu.vector_store %arg28[%c5, %c0_60], %82 {strides = array<i32>} : memref<8x128xf32, #tpu.memory_space<vmem>>, vector<1x128xf32>,
    %84 = vector.extract_strided_slice %71 {offsets = [1, 256], sizes = [1, 128], strides = [1, 1]} : vector<2x512xf32> to vector<1x128xf32>
    %c6 = arith.constant 6 : index
    %c0_61 = arith.constant 0 : index
    %85 = vector.load %arg28[%c6, %c0_61] : memref<8x128xf32, #tpu.memory_space<vmem>>, vector<1x128xf32>
    tpu.vector_store %arg28[%c6, %c0_61], %84 {strides = array<i32>} : memref<8x128xf32, #tpu.memory_space<vmem>>, vector<1x128xf32>,
    %86 = vector.extract_strided_slice %71 {offsets = [1, 384], sizes = [1, 128], strides = [1, 1]} : vector<2x512xf32> to vector<1x128xf32>
    %c7 = arith.constant 7 : index
    %c0_62 = arith.constant 0 : index
    %87 = vector.load %arg28[%c7, %c0_62] : memref<8x128xf32, #tpu.memory_space<vmem>>, vector<1x128xf32>
    tpu.vector_store %arg28[%c7, %c0_62], %86 {strides = array<i32>} : memref<8x128xf32, #tpu.memory_space<vmem>>, vector<1x128xf32>,
    %c0_63 = arith.constant 0 : index
    %c0_64 = arith.constant 0 : index
    %88 = vector.load %arg28[%c0_63, %c0_64] : memref<8x128xf32, #tpu.memory_space<vmem>>, vector<8x128xf32>
    %c0_65 = arith.constant 0 : index
    %c0_66 = arith.constant 0 : index
    %89 = vector.load %arg16[%c0_65, %c0_66] : memref<128x1536xf32, #tpu.memory_space<vmem>>, vector<128x1536xf32>
    %cst_67 = arith.constant dense<0.000000e+00> : vector<8x1536xf32>
    %90 = tpu.matmul %88, %89, %cst_67 {dimension_numbers = #tpu.dot_dimension_numbers<[1], [0], [0], [1], [0, 0, 1, 1], [], []>} : vector<8x128xf32>, vector<128x1536xf32>, vector<8x1536xf32> -> vector<8x1536xf32>
    %91 = vector.extract_strided_slice %90 {offsets = [0, 0], sizes = [8, 384], strides = [1, 1]} : vector<8x1536xf32> to vector<8x384xf32>
    %c0_68 = arith.constant 0 : index
    %c0_69 = arith.constant 0 : index
    %92 = vector.load %arg29[%c0_68, %c0_69] : memref<32x384xf32, #tpu.memory_space<vmem>>, vector<8x384xf32>
    tpu.vector_store %arg29[%c0_68, %c0_69], %91 {strides = array<i32>} : memref<32x384xf32, #tpu.memory_space<vmem>>, vector<8x384xf32>,
    %93 = vector.extract_strided_slice %90 {offsets = [0, 384], sizes = [8, 384], strides = [1, 1]} : vector<8x1536xf32> to vector<8x384xf32>
    %c8 = arith.constant 8 : index
    %c0_70 = arith.constant 0 : index
    %94 = vector.load %arg29[%c8, %c0_70] : memref<32x384xf32, #tpu.memory_space<vmem>>, vector<8x384xf32>
    tpu.vector_store %arg29[%c8, %c0_70], %93 {strides = array<i32>} : memref<32x384xf32, #tpu.memory_space<vmem>>, vector<8x384xf32>,
    %95 = vector.extract_strided_slice %90 {offsets = [0, 768], sizes = [8, 384], strides = [1, 1]} : vector<8x1536xf32> to vector<8x384xf32>
    %c16 = arith.constant 16 : index
    %c0_71 = arith.constant 0 : index
    %96 = vector.load %arg29[%c16, %c0_71] : memref<32x384xf32, #tpu.memory_space<vmem>>, vector<8x384xf32>
    tpu.vector_store %arg29[%c16, %c0_71], %95 {strides = array<i32>} : memref<32x384xf32, #tpu.memory_space<vmem>>, vector<8x384xf32>,
    %97 = vector.extract_strided_slice %90 {offsets = [0, 1152], sizes = [8, 384], strides = [1, 1]} : vector<8x1536xf32> to vector<8x384xf32>
    %c24 = arith.constant 24 : index
    %c0_72 = arith.constant 0 : index
    %98 = vector.load %arg29[%c24, %c0_72] : memref<32x384xf32, #tpu.memory_space<vmem>>, vector<8x384xf32>
    tpu.vector_store %arg29[%c24, %c0_72], %97 {strides = array<i32>} : memref<32x384xf32, #tpu.memory_space<vmem>>, vector<8x384xf32>,
    %c0_73 = arith.constant 0 : index
    %c0_74 = arith.constant 0 : index
    %99 = vector.load %arg17[%c0_73, %c0_74] : memref<22x32xf32, #tpu.memory_space<vmem>>, vector<22x32xf32>
    %c0_75 = arith.constant 0 : index
    %c0_76 = arith.constant 0 : index
    %100 = vector.load %arg29[%c0_75, %c0_76] : memref<32x384xf32, #tpu.memory_space<vmem>>, vector<32x384xf32>
    %cst_77 = arith.constant dense<0.000000e+00> : vector<22x384xf32>
    %101 = tpu.matmul %99, %100, %cst_77 {dimension_numbers = #tpu.dot_dimension_numbers<[1], [0], [0], [1], [0, 0, 1, 1], [], []>} : vector<22x32xf32>, vector<32x384xf32>, vector<22x384xf32> -> vector<22x384xf32>
    %c0_78 = arith.constant 0 : index
    %c0_79 = arith.constant 0 : index
    %102 = vector.load %arg18[%c0_78, %c0_79] : memref<1x384xf32, #tpu.memory_space<vmem>>, vector<1x384xf32>
    %103 = vector.broadcast %102 : vector<1x384xf32> to vector<22x384xf32>
    %104 = arith.addf %101, %103 : vector<22x384xf32>
    %cst_80 = arith.constant 0.000000e+00 : f32
    %105 = vector.broadcast %cst_80 : f32 to vector<22x384xf32>
    %106 = arith.cmpf ogt, %104, %105 : vector<22x384xf32>
    %cst_81 = arith.constant 1.000000e-01 : f32
    %107 = vector.broadcast %cst_81 : f32 to vector<22x384xf32>
    %108 = arith.mulf %107, %104 : vector<22x384xf32>
    %109 = arith.select %106, %104, %108 : vector<22x384xi1>, vector<22x384xf32>
    %c0_82 = arith.constant 0 : index
    %c0_83 = arith.constant 0 : index
    %110 = vector.load %arg19[%c0_82, %c0_83] : memref<384x3072xf32, #tpu.memory_space<vmem>>, vector<384x3072xf32>
    %cst_84 = arith.constant dense<0.000000e+00> : vector<22x3072xf32>
    %111 = tpu.matmul %109, %110, %cst_84 {dimension_numbers = #tpu.dot_dimension_numbers<[1], [0], [0], [1], [0, 0, 1, 1], [], []>} : vector<22x384xf32>, vector<384x3072xf32>, vector<22x3072xf32> -> vector<22x3072xf32>
    %112 = vector.extract_strided_slice %111 {offsets = [0, 0], sizes = [22, 768], strides = [1, 1]} : vector<22x3072xf32> to vector<22x768xf32>
    %c0_85 = arith.constant 0 : index
    %c0_86 = arith.constant 0 : index
    %113 = vector.load %arg30[%c0_85, %c0_86] : memref<88x768xf32, #tpu.memory_space<vmem>>, vector<22x768xf32>
    tpu.vector_store %arg30[%c0_85, %c0_86], %112 {strides = array<i32>} : memref<88x768xf32, #tpu.memory_space<vmem>>, vector<22x768xf32>,
    %114 = vector.extract_strided_slice %111 {offsets = [0, 768], sizes = [22, 768], strides = [1, 1]} : vector<22x3072xf32> to vector<22x768xf32>
    %c22 = arith.constant 22 : index
    %c0_87 = arith.constant 0 : index
    %115 = vector.load %arg30[%c22, %c0_87] : memref<88x768xf32, #tpu.memory_space<vmem>>, vector<22x768xf32>
    tpu.vector_store %arg30[%c22, %c0_87], %114 {strides = array<i32>} : memref<88x768xf32, #tpu.memory_space<vmem>>, vector<22x768xf32>,
    %116 = vector.extract_strided_slice %111 {offsets = [0, 1536], sizes = [22, 768], strides = [1, 1]} : vector<22x3072xf32> to vector<22x768xf32>
    %c44 = arith.constant 44 : index
    %c0_88 = arith.constant 0 : index
    %117 = vector.load %arg30[%c44, %c0_88] : memref<88x768xf32, #tpu.memory_space<vmem>>, vector<22x768xf32>
    tpu.vector_store %arg30[%c44, %c0_88], %116 {strides = array<i32>} : memref<88x768xf32, #tpu.memory_space<vmem>>, vector<22x768xf32>,
    %118 = vector.extract_strided_slice %111 {offsets = [0, 2304], sizes = [22, 768], strides = [1, 1]} : vector<22x3072xf32> to vector<22x768xf32>
    %c66 = arith.constant 66 : index
    %c0_89 = arith.constant 0 : index
    %119 = vector.load %arg30[%c66, %c0_89] : memref<88x768xf32, #tpu.memory_space<vmem>>, vector<22x768xf32>
    tpu.vector_store %arg30[%c66, %c0_89], %118 {strides = array<i32>} : memref<88x768xf32, #tpu.memory_space<vmem>>, vector<22x768xf32>,
    %c0_90 = arith.constant 0 : index
    %c0_91 = arith.constant 0 : index
    %120 = vector.load %arg20[%c0_90, %c0_91] : memref<44x88xf32, #tpu.memory_space<vmem>>, vector<44x88xf32>
    %c0_92 = arith.constant 0 : index
    %c0_93 = arith.constant 0 : index
    %121 = vector.load %arg30[%c0_92, %c0_93] : memref<88x768xf32, #tpu.memory_space<vmem>>, vector<88x768xf32>
    %cst_94 = arith.constant dense<0.000000e+00> : vector<44x768xf32>
    %122 = tpu.matmul %120, %121, %cst_94 {dimension_numbers = #tpu.dot_dimension_numbers<[1], [0], [0], [1], [0, 0, 1, 1], [], []>} : vector<44x88xf32>, vector<88x768xf32>, vector<44x768xf32> -> vector<44x768xf32>
    %c0_95 = arith.constant 0 : index
    %c0_96 = arith.constant 0 : index
    %123 = vector.load %arg21[%c0_95, %c0_96] : memref<1x768xf32, #tpu.memory_space<vmem>>, vector<1x768xf32>
    %124 = vector.broadcast %123 : vector<1x768xf32> to vector<44x768xf32>
    %125 = arith.addf %122, %124 : vector<44x768xf32>
    %cst_97 = arith.constant 0.000000e+00 : f32
    %126 = vector.broadcast %cst_97 : f32 to vector<44x768xf32>
    %127 = arith.cmpf ogt, %125, %126 : vector<44x768xf32>
    %cst_98 = arith.constant 1.000000e-01 : f32
    %128 = vector.broadcast %cst_98 : f32 to vector<44x768xf32>
    %129 = arith.mulf %128, %125 : vector<44x768xf32>
    %130 = arith.select %127, %125, %129 : vector<44x768xi1>, vector<44x768xf32>
    %c0_99 = arith.constant 0 : index
    %c0_100 = arith.constant 0 : index
    %131 = vector.load %arg22[%c0_99, %c0_100] : memref<768x512xf32, #tpu.memory_space<vmem>>, vector<768x512xf32>
    %cst_101 = arith.constant dense<0.000000e+00> : vector<44x512xf32>
    %132 = tpu.matmul %130, %131, %cst_101 {dimension_numbers = #tpu.dot_dimension_numbers<[1], [0], [0], [1], [0, 0, 1, 1], [], []>} : vector<44x768xf32>, vector<768x512xf32>, vector<44x512xf32> -> vector<44x512xf32>
    %133 = vector.extract_strided_slice %132 {offsets = [0, 0], sizes = [44, 128], strides = [1, 1]} : vector<44x512xf32> to vector<44x128xf32>
    %c0_102 = arith.constant 0 : index
    %c0_103 = arith.constant 0 : index
    %134 = vector.load %arg31[%c0_102, %c0_103] : memref<176x128xf32, #tpu.memory_space<vmem>>, vector<44x128xf32>
    tpu.vector_store %arg31[%c0_102, %c0_103], %133 {strides = array<i32>} : memref<176x128xf32, #tpu.memory_space<vmem>>, vector<44x128xf32>,
    %135 = vector.extract_strided_slice %132 {offsets = [0, 128], sizes = [44, 128], strides = [1, 1]} : vector<44x512xf32> to vector<44x128xf32>
    %c44_104 = arith.constant 44 : index
    %c0_105 = arith.constant 0 : index
    %136 = vector.load %arg31[%c44_104, %c0_105] : memref<176x128xf32, #tpu.memory_space<vmem>>, vector<44x128xf32>
    tpu.vector_store %arg31[%c44_104, %c0_105], %135 {strides = array<i32>} : memref<176x128xf32, #tpu.memory_space<vmem>>, vector<44x128xf32>,
    %137 = vector.extract_strided_slice %132 {offsets = [0, 256], sizes = [44, 128], strides = [1, 1]} : vector<44x512xf32> to vector<44x128xf32>
    %c88 = arith.constant 88 : index
    %c0_106 = arith.constant 0 : index
    %138 = vector.load %arg31[%c88, %c0_106] : memref<176x128xf32, #tpu.memory_space<vmem>>, vector<44x128xf32>
    tpu.vector_store %arg31[%c88, %c0_106], %137 {strides = array<i32>} : memref<176x128xf32, #tpu.memory_space<vmem>>, vector<44x128xf32>,
    %139 = vector.extract_strided_slice %132 {offsets = [0, 384], sizes = [44, 128], strides = [1, 1]} : vector<44x512xf32> to vector<44x128xf32>
    %c132 = arith.constant 132 : index
    %c0_107 = arith.constant 0 : index
    %140 = vector.load %arg31[%c132, %c0_107] : memref<176x128xf32, #tpu.memory_space<vmem>>, vector<44x128xf32>
    tpu.vector_store %arg31[%c132, %c0_107], %139 {strides = array<i32>} : memref<176x128xf32, #tpu.memory_space<vmem>>, vector<44x128xf32>,
    %c0_108 = arith.constant 0 : index
    %c0_109 = arith.constant 0 : index
    %141 = vector.load %arg23[%c0_108, %c0_109] : memref<88x176xf32, #tpu.memory_space<vmem>>, vector<88x176xf32>
    %c0_110 = arith.constant 0 : index
    %c0_111 = arith.constant 0 : index
    %142 = vector.load %arg31[%c0_110, %c0_111] : memref<176x128xf32, #tpu.memory_space<vmem>>, vector<176x128xf32>
    %cst_112 = arith.constant dense<0.000000e+00> : vector<88x128xf32>
    %143 = tpu.matmul %141, %142, %cst_112 {dimension_numbers = #tpu.dot_dimension_numbers<[1], [0], [0], [1], [0, 0, 1, 1], [], []>} : vector<88x176xf32>, vector<176x128xf32>, vector<88x128xf32> -> vector<88x128xf32>
    %c0_113 = arith.constant 0 : index
    %c0_114 = arith.constant 0 : index
    %144 = vector.load %arg24[%c0_113, %c0_114] : memref<1x128xf32, #tpu.memory_space<vmem>>, vector<1x128xf32>
    %145 = vector.broadcast %144 : vector<1x128xf32> to vector<88x128xf32>
    %146 = arith.addf %143, %145 : vector<88x128xf32>
    %cst_115 = arith.constant 0.000000e+00 : f32
    %147 = vector.broadcast %cst_115 : f32 to vector<88x128xf32>
    %148 = arith.cmpf ogt, %146, %147 : vector<88x128xf32>
    %cst_116 = arith.constant 1.000000e-01 : f32
    %149 = vector.broadcast %cst_116 : f32 to vector<88x128xf32>
    %150 = arith.mulf %149, %146 : vector<88x128xf32>
    %151 = arith.select %148, %146, %150 : vector<88x128xi1>, vector<88x128xf32>
    %c0_117 = arith.constant 0 : index
    %c0_118 = arith.constant 0 : index
    %152 = vector.load %arg25[%c0_117, %c0_118] : memref<88x128xf32, #tpu.memory_space<vmem>>, vector<88x128xf32>
    tpu.vector_store %arg25[%c0_117, %c0_118], %151 {strides = array<i32>} : memref<88x128xf32, #tpu.memory_space<vmem>>, vector<88x128xf32>,
    return
  }
}

</mosaic_0001>

<llo_original>
// kernel: tpu_custom_call.1
$region0: #{tpu_custom_call.1}
  #allocation0 [shape = 'u32[]', space=smem, size = 0x4, offset = 0x4, fixed_abs, tag = 'smem constant byte address 0x4 - core index']
  #allocation1 [shape = 'u32[72,128]{1,0:T(1,128)}', space=vmem, size = 0x9000, scoped, tag = 'internal scratch']
  #allocation2 [shape = 'f32[8,128]{1,0:T(8,128)}', space=vmem, size = 0x1000, scoped, tag = 'scratch operand']
  #allocation3 [shape = 'f32[32,384]{1,0:T(8,128)}', space=vmem, size = 0xc000, scoped, tag = 'scratch operand']
  #allocation4 [shape = 'f32[88,768]{1,0:T(8,128)}', space=vmem, size = 0x42000, scoped, tag = 'scratch operand']
  #allocation5 [shape = 'f32[176,128]{1,0:T(8,128)}', space=vmem, size = 0x16000, scoped, tag = 'scratch operand']
  %s0 = inlined_call_operand.hbm [shape: f32[2,20], index: 0, kind: input, shape index: {}]
  %s1 = inlined_call_operand.hbm [shape: f32[2,20], index: 1, kind: input, shape index: {}]
  %s2 = inlined_call_operand.hbm [shape: f32[20,32], index: 2, kind: input, shape index: {}]
  %s3 = inlined_call_operand.hbm [shape: f32[1,32], index: 3, kind: input, shape index: {}]
  %s4 = inlined_call_operand.vmem [shape: f32[32,2], index: 4, kind: input, shape index: {}]
  %s5 = inlined_call_operand.hbm [shape: f32[1,2], index: 5, kind: input, shape index: {}]
  %s6 = inlined_call_operand.hbm [shape: f32[2,32], index: 6, kind: input, shape index: {}]
  %s7 = inlined_call_operand.hbm [shape: f32[1,32], index: 7, kind: input, shape index: {}]
  %s8 = inlined_call_operand.vmem [shape: f32[32,2], index: 8, kind: input, shape index: {}]
  %s9 = inlined_call_operand.hbm [shape: f32[1,2], index: 9, kind: input, shape index: {}]
  %s10 = inlined_call_operand.hbm [shape: f32[20,512], index: 10, kind: input, shape index: {}]
  %s11 = inlined_call_operand.hbm [shape: f32[1,512], index: 11, kind: input, shape index: {}]
  %s12 = inlined_call_operand.hbm [shape: f32[512,512], index: 12, kind: input, shape index: {}]
  %s13 = inlined_call_operand.hbm [shape: f32[1,512], index: 13, kind: input, shape index: {}]
  %s14 = inlined_call_operand.hbm [shape: f32[512,512], index: 14, kind: input, shape index: {}]
  %s15 = inlined_call_operand.hbm [shape: f32[1,512], index: 15, kind: input, shape index: {}]
  %s16 = inlined_call_operand.hbm [shape: f32[128,1536], index: 16, kind: input, shape index: {}]
  %s17 = inlined_call_operand.hbm [shape: f32[22,32], index: 17, kind: input, shape index: {}]
  %s18 = inlined_call_operand.hbm [shape: f32[1,384], index: 18, kind: input, shape index: {}]
  %s19 = inlined_call_operand.hbm [shape: f32[384,3072], index: 19, kind: input, shape index: {}]
  %s20 = inlined_call_operand.hbm [shape: f32[44,88], index: 20, kind: input, shape index: {}]
  %s21 = inlined_call_operand.hbm [shape: f32[1,768], index: 21, kind: input, shape index: {}]
  %s22 = inlined_call_operand.hbm [shape: f32[768,512], index: 22, kind: input, shape index: {}]
  %s23 = inlined_call_operand.hbm [shape: f32[88,176], index: 23, kind: input, shape index: {}]
  %s24 = inlined_call_operand.hbm [shape: f32[1,128], index: 24, kind: input, shape index: {}]
  %s25 = inlined_call_operand.hbm [shape: f32[88,128], index: 25, kind: output, shape index: {0}]
  %s26 = inlined_call_operand.hbm [shape: f32[2,2], index: 26, kind: output, shape index: {1}]
  %s27 = inlined_call_operand.hbm [shape: f32[2,2], index: 27, kind: output, shape index: {2}]
  %28 = xla_tuple %s25, %s26, %s27
  %s29 = sld [smem:[#allocation0]]
  $region218: #{tpu_custom_call.1} parent=0
    _
  %s31 = ssub.s32 1, %s29
  %s32 = scalar_select 0, %s31, %s29
  $region1: #{tpu_custom_call.1} parent=0
    #allocation6 [shape = 'u8[1024]{0}', space=vmem, size = 0x400, scoped, tag = 'input window, operand 0, single buffered']
    #allocation7 [shape = 's32[1]{0}', space=sflag, size = 0x4, scoped, tag = 'scoped memory for tpu_custom_call.1']
    #allocation8 [shape = 's32[1]{0}', space=sflag, size = 0x4, scoped, tag = 'scoped memory for tpu_custom_call.1']
    #allocation9 [shape = 'u8[1024]{0}', space=vmem, size = 0x400, scoped, tag = 'input window, operand 1, single buffered']
    #allocation10 [shape = 's32[1]{0}', space=sflag, size = 0x4, scoped, tag = 'scoped memory for tpu_custom_call.1']
    #allocation11 [shape = 'u8[12288]{0}', space=vmem, size = 0x3000, scoped, tag = 'input window, operand 2, single buffered']
    #allocation12 [shape = 'u8[512]{0}', space=vmem, size = 0x400, scoped, tag = 'input window, operand 3, single buffered']
    #allocation13 [shape = 's32[1]{0}', space=sflag, size = 0x4, scoped, tag = 'scoped memory for tpu_custom_call.1']
    #allocation14 [shape = 'u8[512]{0}', space=vmem, size = 0x400, scoped, tag = 'input window, operand 5, single buffered']
    #allocation15 [shape = 'u8[1024]{0}', space=vmem, size = 0x400, scoped, tag = 'input window, operand 6, single buffered']
    #allocation16 [shape = 's32[1]{0}', space=sflag, size = 0x4, scoped, tag = 'scoped memory for tpu_custom_call.1']
    #allocation17 [shape = 'u8[512]{0}', space=vmem, size = 0x400, scoped, tag = 'input window, operand 7, single buffered']
    #allocation18 [shape = 'u8[512]{0}', space=vmem, size = 0x400, scoped, tag = 'input window, operand 9, single buffered']
    #allocation19 [shape = 's32[1]{0}', space=sflag, size = 0x4, scoped, tag = 'scoped memory for tpu_custom_call.1']
    #allocation20 [shape = 'u8[49152]{0}', space=vmem, size = 0xc000, scoped, tag = 'input window, operand 10, single buffered']
    #allocation21 [shape = 'u8[2048]{0}', space=vmem, size = 0x800, scoped, tag = 'input window, operand 11, single buffered']
    #allocation22 [shape = 's32[1]{0}', space=sflag, size = 0x4, scoped, tag = 'scoped memory for tpu_custom_call.1']
    #allocation23 [shape = 'u8[1048576]{0}', space=vmem, size = 0x100000, scoped, tag = 'input window, operand 12, single buffered']
    #allocation24 [shape = 'u8[2048]{0}', space=vmem, size = 0x800, scoped, tag = 'input window, operand 13, single buffered']
    #allocation25 [shape = 's32[1]{0}', space=sflag, size = 0x4, scoped, tag = 'scoped memory for tpu_custom_call.1']
    #allocation26 [shape = 'u8[1048576]{0}', space=vmem, size = 0x100000, scoped, tag = 'input window, operand 14, single buffered']
    #allocation27 [shape = 'u8[2048]{0}', space=vmem, size = 0x800, scoped, tag = 'input window, operand 15, single buffered']
    #allocation28 [shape = 's32[1]{0}', space=sflag, size = 0x4, scoped, tag = 'scoped memory for tpu_custom_call.1']
    #allocation29 [shape = 'u8[786432]{0}', space=vmem, size = 0xc0000, scoped, tag = 'input window, operand 16, single buffered']
    #allocation30 [shape = 'u8[12288]{0}', space=vmem, size = 0x3000, scoped, tag = 'input window, operand 17, single buffered']
    #allocation31 [shape = 's32[1]{0}', space=sflag, size = 0x4, scoped, tag = 'scoped memory for tpu_custom_call.1']
    #allocation32 [shape = 'u8[1536]{0}', space=vmem, size = 0x800, scoped, tag = 'input window, operand 18, single buffered']
    #allocation33 [shape = 'u8[4718592]{0}', space=vmem, size = 0x480000, scoped, tag = 'input window, operand 19, single buffered']
    #allocation34 [shape = 's32[1]{0}', space=sflag, size = 0x4, scoped, tag = 'scoped memory for tpu_custom_call.1']
    #allocation35 [shape = 'u8[24576]{0}', space=vmem, size = 0x6000, scoped, tag = 'input window, operand 20, single buffered']
    #allocation36 [shape = 'u8[3072]{0}', space=vmem, size = 0xc00, scoped, tag = 'input window, operand 21, single buffered']
    #allocation37 [shape = 's32[1]{0}', space=sflag, size = 0x4, scoped, tag = 'scoped memory for tpu_custom_call.1']
    #allocation38 [shape = 'u8[1572864]{0}', space=vmem, size = 0x180000, scoped, tag = 'input window, operand 22, single buffered']
    #allocation39 [shape = 'u8[90112]{0}', space=vmem, size = 0x16000, scoped, tag = 'input window, operand 23, single buffered']
    #allocation40 [shape = 's32[1]{0}', space=sflag, size = 0x4, scoped, tag = 'scoped memory for tpu_custom_call.1']
    #allocation41 [shape = 'u8[512]{0}', space=vmem, size = 0x400, scoped, tag = 'input window, operand 24, single buffered']
    #allocation42 [shape = 'u8[45056]{0}', space=vmem, size = 0xb000, scoped, tag = 'output window, operand 0, single buffered']
    #allocation43 [shape = 'u8[1024]{0}', space=vmem, size = 0x400, scoped, tag = 'output window, operand 1, single buffered']
    #allocation44 [shape = 's32[1]{0}', space=sflag, size = 0x4, scoped, tag = 'scoped memory for tpu_custom_call.1']
    #allocation45 [shape = 'u8[1024]{0}', space=vmem, size = 0x400, scoped, tag = 'output window, operand 2, single buffered']
    %33 = vsyncpa [#allocation7], 0
    %34 = vsyncpa [#allocation10], 0
    %35 = vsyncpa [#allocation13], 0
    %36 = vsyncpa [#allocation16], 0
    %37 = vsyncpa [#allocation19], 0
    %38 = vsyncpa [#allocation22], 0
    %39 = vsyncpa [#allocation25], 0
    %40 = vsyncpa [#allocation28], 0
    %41 = vsyncpa [#allocation31], 0
    %42 = vsyncpa [#allocation34], 0
    %43 = vsyncpa [#allocation37], 0
    %44 = vsyncpa [#allocation40], 0
    %45 = vsyncpa [#allocation8], 0
    %46 = vsyncpa [#allocation44], 0
    // Predicated region
    $region2: #{tpu_custom_call.1} parent=1 // pred_check
      _
    $region3: #{tpu_custom_call.1} parent=1 // pred_check_branch
      %48 = sbr.rel (0) target = $region5
    $region4: #{tpu_custom_call.1} parent=1 // pred_region
      %50 = vsyncadd [#allocation7], 0
      %s52 = sshll.u32 %s0, 4
      %s53 = int_to_ptr.hbm [resolvable:$true] %s52
      %s54 = sshll.u32 [#allocation6], 4
      %s55 = int_to_ptr.vmem [resolvable:$true] %s54
      %57 = dma.hbm_to_vmem [thread:$0]  %s53, 32, %s55, [#allocation7]
    $region5: #{tpu_custom_call.1} parent=1 // pred_fallthru
      _
    // Predicated region
    $region6: #{tpu_custom_call.1} parent=1 // pred_check
      _
    $region7: #{tpu_custom_call.1} parent=1 // pred_check_branch
      %59 = sbr.rel (0) target = $region9
    $region8: #{tpu_custom_call.1} parent=1 // pred_region
      %61 = vsyncadd [#allocation10], 0
      %s63 = sshll.u32 %s1, 4
      %s64 = int_to_ptr.hbm [resolvable:$true] %s63
      %s65 = sshll.u32 [#allocation9], 4
      %s66 = int_to_ptr.vmem [resolvable:$true] %s65
      %68 = dma.hbm_to_vmem [thread:$0]  %s64, 32, %s66, [#allocation10]
    $region9: #{tpu_custom_call.1} parent=1 // pred_fallthru
      _
    // Predicated region
    $region10: #{tpu_custom_call.1} parent=1 // pred_check
      _
    $region11: #{tpu_custom_call.1} parent=1 // pred_check_branch
      %70 = sbr.rel (0) target = $region13
    $region12: #{tpu_custom_call.1} parent=1 // pred_region
      %72 = vsyncadd [#allocation10], 0
      %s73 = sshll.u32 %s2, 4
      %s74 = int_to_ptr.hbm [resolvable:$true] %s73
      %s75 = sshll.u32 [#allocation11], 4
      %s76 = int_to_ptr.vmem [resolvable:$true] %s75
      %81 = dma.hbm_to_vmem [thread:$0]  %s74, 384, %s76, [#allocation10], 128, 128, 8
    $region13: #{tpu_custom_call.1} parent=1 // pred_fallthru
      _
    // Predicated region
    $region14: #{tpu_custom_call.1} parent=1 // pred_check
      _
    $region15: #{tpu_custom_call.1} parent=1 // pred_check_branch
      %83 = sbr.rel (0) target = $region17
    $region16: #{tpu_custom_call.1} parent=1 // pred_region
      %85 = vsyncadd [#allocation13], 0
      %s87 = sshll.u32 %s3, 4
      %s88 = int_to_ptr.hbm [resolvable:$true] %s87
      %s89 = sshll.u32 [#allocation12], 4
      %s90 = int_to_ptr.vmem [resolvable:$true] %s89
      %92 = dma.hbm_to_vmem [thread:$0]  %s88, 16, %s90, [#allocation13]
    $region17: #{tpu_custom_call.1} parent=1 // pred_fallthru
      _
    // Predicated region
    $region18: #{tpu_custom_call.1} parent=1 // pred_check
      _
    $region19: #{tpu_custom_call.1} parent=1 // pred_check_branch
      %94 = sbr.rel (0) target = $region21
    $region20: #{tpu_custom_call.1} parent=1 // pred_region
      _
    $region21: #{tpu_custom_call.1} parent=1 // pred_fallthru
      _
    // Predicated region
    $region22: #{tpu_custom_call.1} parent=1 // pred_check
      _
    $region23: #{tpu_custom_call.1} parent=1 // pred_check_branch
      %96 = sbr.rel (0) target = $region25
    $region24: #{tpu_custom_call.1} parent=1 // pred_region
      %98 = vsyncadd [#allocation13], 0
      %s100 = sshll.u32 %s5, 4
      %s101 = int_to_ptr.hbm [resolvable:$true] %s100
      %s102 = sshll.u32 [#allocation14], 4
      %s103 = int_to_ptr.vmem [resolvable:$true] %s102
      %105 = dma.hbm_to_vmem [thread:$0]  %s101, 16, %s103, [#allocation13]
    $region25: #{tpu_custom_call.1} parent=1 // pred_fallthru
      _
    // Predicated region
    $region26: #{tpu_custom_call.1} parent=1 // pred_check
      _
    $region27: #{tpu_custom_call.1} parent=1 // pred_check_branch
      %107 = sbr.rel (0) target = $region29
    $region28: #{tpu_custom_call.1} parent=1 // pred_region
      %109 = vsyncadd [#allocation16], 0
      %s111 = sshll.u32 %s6, 4
      %s112 = int_to_ptr.hbm [resolvable:$true] %s111
      %s113 = sshll.u32 [#allocation15], 4
      %s114 = int_to_ptr.vmem [resolvable:$true] %s113
      %116 = dma.hbm_to_vmem [thread:$0]  %s112, 32, %s114, [#allocation16]
    $region29: #{tpu_custom_call.1} parent=1 // pred_fallthru
      _
    // Predicated region
    $region30: #{tpu_custom_call.1} parent=1 // pred_check
      _
    $region31: #{tpu_custom_call.1} parent=1 // pred_check_branch
      %118 = sbr.rel (0) target = $region33
    $region32: #{tpu_custom_call.1} parent=1 // pred_region
      %120 = vsyncadd [#allocation16], 0
      %s122 = sshll.u32 %s7, 4
      %s123 = int_to_ptr.hbm [resolvable:$true] %s122
      %s124 = sshll.u32 [#allocation17], 4
      %s125 = int_to_ptr.vmem [resolvable:$true] %s124
      %127 = dma.hbm_to_vmem [thread:$0]  %s123, 16, %s125, [#allocation16]
    $region33: #{tpu_custom_call.1} parent=1 // pred_fallthru
      _
    // Predicated region
    $region34: #{tpu_custom_call.1} parent=1 // pred_check
      _
    $region35: #{tpu_custom_call.1} parent=1 // pred_check_branch
      %129 = sbr.rel (0) target = $region37
    $region36: #{tpu_custom_call.1} parent=1 // pred_region
      _
    $region37: #{tpu_custom_call.1} parent=1 // pred_fallthru
      _
    // Predicated region
    $region38: #{tpu_custom_call.1} parent=1 // pred_check
      _
    $region39: #{tpu_custom_call.1} parent=1 // pred_check_branch
      %131 = sbr.rel (0) target = $region41
    $region40: #{tpu_custom_call.1} parent=1 // pred_region
      %133 = vsyncadd [#allocation19], 0
      %s135 = sshll.u32 %s9, 4
      %s136 = int_to_ptr.hbm [resolvable:$true] %s135
      %s137 = sshll.u32 [#allocation18], 4
      %s138 = int_to_ptr.vmem [resolvable:$true] %s137
      %140 = dma.hbm_to_vmem [thread:$0]  %s136, 16, %s138, [#allocation19]
    $region41: #{tpu_custom_call.1} parent=1 // pred_fallthru
      _
    // Predicated region
    $region42: #{tpu_custom_call.1} parent=1 // pred_check
      _
    $region43: #{tpu_custom_call.1} parent=1 // pred_check_branch
      %142 = sbr.rel (0) target = $region45
    $region44: #{tpu_custom_call.1} parent=1 // pred_region
      %144 = vsyncadd [#allocation19], 0
      %s145 = sshll.u32 %s10, 4
      %s146 = int_to_ptr.hbm [resolvable:$true] %s145
      %s147 = sshll.u32 [#allocation20], 4
      %s148 = int_to_ptr.vmem [resolvable:$true] %s147
      %153 = dma.hbm_to_vmem [thread:$0]  %s146, 1536, %s148, [#allocation19], 512, 512, 32
    $region45: #{tpu_custom_call.1} parent=1 // pred_fallthru
      _
    // Predicated region
    $region46: #{tpu_custom_call.1} parent=1 // pred_check
      _
    $region47: #{tpu_custom_call.1} parent=1 // pred_check_branch
      %155 = sbr.rel (0) target = $region49
    $region48: #{tpu_custom_call.1} parent=1 // pred_region
      %157 = vsyncadd [#allocation22], 0
      %s159 = sshll.u32 %s11, 4
      %s160 = int_to_ptr.hbm [resolvable:$true] %s159
      %s161 = sshll.u32 [#allocation21], 4
      %s162 = int_to_ptr.vmem [resolvable:$true] %s161
      %164 = dma.hbm_to_vmem [thread:$0]  %s160, 64, %s162, [#allocation22]
    $region49: #{tpu_custom_call.1} parent=1 // pred_fallthru
      _
    // Predicated region
    $region50: #{tpu_custom_call.1} parent=1 // pred_check
      _
    $region51: #{tpu_custom_call.1} parent=1 // pred_check_branch
      %166 = sbr.rel (0) target = $region53
    $region52: #{tpu_custom_call.1} parent=1 // pred_region
      %168 = vsyncadd [#allocation22], 0
      %s169 = sshll.u32 %s12, 4
      %s170 = int_to_ptr.hbm [resolvable:$true] %s169
      %s171 = sshll.u32 [#allocation23], 4
      %s172 = int_to_ptr.vmem [resolvable:$true] %s171
      %177 = dma.hbm_to_vmem [thread:$0]  %s170, 32768, %s172, [#allocation22], 512, 512, 32
    $region53: #{tpu_custom_call.1} parent=1 // pred_fallthru
      _
    // Predicated region
    $region54: #{tpu_custom_call.1} parent=1 // pred_check
      _
    $region55: #{tpu_custom_call.1} parent=1 // pred_check_branch
      %179 = sbr.rel (0) target = $region57
    $region56: #{tpu_custom_call.1} parent=1 // pred_region
      %181 = vsyncadd [#allocation25], 0
      %s183 = sshll.u32 %s13, 4
      %s184 = int_to_ptr.hbm [resolvable:$true] %s183
      %s185 = sshll.u32 [#allocation24], 4
      %s186 = int_to_ptr.vmem [resolvable:$true] %s185
      %188 = dma.hbm_to_vmem [thread:$0]  %s184, 64, %s186, [#allocation25]
    $region57: #{tpu_custom_call.1} parent=1 // pred_fallthru
      _
    // Predicated region
    $region58: #{tpu_custom_call.1} parent=1 // pred_check
      _
    $region59: #{tpu_custom_call.1} parent=1 // pred_check_branch
      %190 = sbr.rel (0) target = $region61
    $region60: #{tpu_custom_call.1} parent=1 // pred_region
      %192 = vsyncadd [#allocation25], 0
      %s193 = sshll.u32 %s14, 4
      %s194 = int_to_ptr.hbm [resolvable:$true] %s193
      %s195 = sshll.u32 [#allocation26], 4
      %s196 = int_to_ptr.vmem [resolvable:$true] %s195
      %201 = dma.hbm_to_vmem [thread:$0]  %s194, 32768, %s196, [#allocation25], 512, 512, 32
    $region61: #{tpu_custom_call.1} parent=1 // pred_fallthru
      _
    // Predicated region
    $region62: #{tpu_custom_call.1} parent=1 // pred_check
      _
    $region63: #{tpu_custom_call.1} parent=1 // pred_check_branch
      %203 = sbr.rel (0) target = $region65
    $region64: #{tpu_custom_call.1} parent=1 // pred_region
      %205 = vsyncadd [#allocation28], 0
      %s207 = sshll.u32 %s15, 4
      %s208 = int_to_ptr.hbm [resolvable:$true] %s207
      %s209 = sshll.u32 [#allocation27], 4
      %s210 = int_to_ptr.vmem [resolvable:$true] %s209
      %212 = dma.hbm_to_vmem [thread:$0]  %s208, 64, %s210, [#allocation28]
    $region65: #{tpu_custom_call.1} parent=1 // pred_fallthru
      _
    // Predicated region
    $region66: #{tpu_custom_call.1} parent=1 // pred_check
      _
    $region67: #{tpu_custom_call.1} parent=1 // pred_check_branch
      %214 = sbr.rel (0) target = $region69
    $region68: #{tpu_custom_call.1} parent=1 // pred_region
      %216 = vsyncadd [#allocation28], 0
      %s217 = sshll.u32 %s16, 4
      %s218 = int_to_ptr.hbm [resolvable:$true] %s217
      %s219 = sshll.u32 [#allocation29], 4
      %s220 = int_to_ptr.vmem [resolvable:$true] %s219
      %225 = dma.hbm_to_vmem [thread:$0]  %s218, 24576, %s220, [#allocation28], 1536, 1536, 96
    $region69: #{tpu_custom_call.1} parent=1 // pred_fallthru
      _
    // Predicated region
    $region70: #{tpu_custom_call.1} parent=1 // pred_check
      _
    $region71: #{tpu_custom_call.1} parent=1 // pred_check_branch
      %227 = sbr.rel (0) target = $region73
    $region72: #{tpu_custom_call.1} parent=1 // pred_region
      %229 = vsyncadd [#allocation31], 0
      %s230 = sshll.u32 %s17, 4
      %s231 = int_to_ptr.hbm [resolvable:$true] %s230
      %s232 = sshll.u32 [#allocation30], 4
      %s233 = int_to_ptr.vmem [resolvable:$true] %s232
      %238 = dma.hbm_to_vmem [thread:$0]  %s231, 384, %s233, [#allocation31], 128, 128, 8
    $region73: #{tpu_custom_call.1} parent=1 // pred_fallthru
      _
    // Predicated region
    $region74: #{tpu_custom_call.1} parent=1 // pred_check
      _
    $region75: #{tpu_custom_call.1} parent=1 // pred_check_branch
      %240 = sbr.rel (0) target = $region77
    $region76: #{tpu_custom_call.1} parent=1 // pred_region
      %242 = vsyncadd [#allocation31], 0
      %s244 = sshll.u32 %s18, 4
      %s245 = int_to_ptr.hbm [resolvable:$true] %s244
      %s246 = sshll.u32 [#allocation32], 4
      %s247 = int_to_ptr.vmem [resolvable:$true] %s246
      %249 = dma.hbm_to_vmem [thread:$0]  %s245, 48, %s247, [#allocation31]
    $region77: #{tpu_custom_call.1} parent=1 // pred_fallthru
      _
    // Predicated region
    $region78: #{tpu_custom_call.1} parent=1 // pred_check
      _
    $region79: #{tpu_custom_call.1} parent=1 // pred_check_branch
      %251 = sbr.rel (0) target = $region81
    $region80: #{tpu_custom_call.1} parent=1 // pred_region
      %253 = vsyncadd [#allocation34], 0
      %s254 = sshll.u32 %s19, 4
      %s255 = int_to_ptr.hbm [resolvable:$true] %s254
      %s256 = sshll.u32 [#allocation33], 4
      %s257 = int_to_ptr.vmem [resolvable:$true] %s256
      %262 = dma.hbm_to_vmem [thread:$0]  %s255, 147456, %s257, [#allocation34], 3072, 3072, 192
    $region81: #{tpu_custom_call.1} parent=1 // pred_fallthru
      _
    // Predicated region
    $region82: #{tpu_custom_call.1} parent=1 // pred_check
      _
    $region83: #{tpu_custom_call.1} parent=1 // pred_check_branch
      %264 = sbr.rel (0) target = $region85
    $region84: #{tpu_custom_call.1} parent=1 // pred_region
      %266 = vsyncadd [#allocation34], 0
      %s267 = sshll.u32 %s20, 4
      %s268 = int_to_ptr.hbm [resolvable:$true] %s267
      %s269 = sshll.u32 [#allocation35], 4
      %s270 = int_to_ptr.vmem [resolvable:$true] %s269
      %275 = dma.hbm_to_vmem [thread:$0]  %s268, 768, %s270, [#allocation34], 128, 128, 8
    $region85: #{tpu_custom_call.1} parent=1 // pred_fallthru
      _
    // Predicated region
    $region86: #{tpu_custom_call.1} parent=1 // pred_check
      _
    $region87: #{tpu_custom_call.1} parent=1 // pred_check_branch
      %277 = sbr.rel (0) target = $region89
    $region88: #{tpu_custom_call.1} parent=1 // pred_region
      %279 = vsyncadd [#allocation37], 0
      %s281 = sshll.u32 %s21, 4
      %s282 = int_to_ptr.hbm [resolvable:$true] %s281
      %s283 = sshll.u32 [#allocation36], 4
      %s284 = int_to_ptr.vmem [resolvable:$true] %s283
      %286 = dma.hbm_to_vmem [thread:$0]  %s282, 96, %s284, [#allocation37]
    $region89: #{tpu_custom_call.1} parent=1 // pred_fallthru
      _
    // Predicated region
    $region90: #{tpu_custom_call.1} parent=1 // pred_check
      _
    $region91: #{tpu_custom_call.1} parent=1 // pred_check_branch
      %288 = sbr.rel (0) target = $region93
    $region92: #{tpu_custom_call.1} parent=1 // pred_region
      %290 = vsyncadd [#allocation37], 0
      %s291 = sshll.u32 %s22, 4
      %s292 = int_to_ptr.hbm [resolvable:$true] %s291
      %s293 = sshll.u32 [#allocation38], 4
      %s294 = int_to_ptr.vmem [resolvable:$true] %s293
      %299 = dma.hbm_to_vmem [thread:$0]  %s292, 49152, %s294, [#allocation37], 512, 512, 32
    $region93: #{tpu_custom_call.1} parent=1 // pred_fallthru
      _
    // Predicated region
    $region94: #{tpu_custom_call.1} parent=1 // pred_check
      _
    $region95: #{tpu_custom_call.1} parent=1 // pred_check_branch
      %301 = sbr.rel (0) target = $region97
    $region96: #{tpu_custom_call.1} parent=1 // pred_region
      %303 = vsyncadd [#allocation40], 0
      %s304 = sshll.u32 %s23, 4
      %s305 = int_to_ptr.hbm [resolvable:$true] %s304
      %s306 = sshll.u32 [#allocation39], 4
      %s307 = int_to_ptr.vmem [resolvable:$true] %s306
      %312 = dma.hbm_to_vmem [thread:$0]  %s305, 2816, %s307, [#allocation40], 256, 256, 16
    $region97: #{tpu_custom_call.1} parent=1 // pred_fallthru
      _
    // Predicated region
    $region98: #{tpu_custom_call.1} parent=1 // pred_check
      _
    $region99: #{tpu_custom_call.1} parent=1 // pred_check_branch
      %314 = sbr.rel (0) target = $region101
    $region100: #{tpu_custom_call.1} parent=1 // pred_region
      %316 = vsyncadd [#allocation40], 0
      %s318 = sshll.u32 %s24, 4
      %s319 = int_to_ptr.hbm [resolvable:$true] %s318
      %s320 = sshll.u32 [#allocation41], 4
      %s321 = int_to_ptr.vmem [resolvable:$true] %s320
      %323 = dma.hbm_to_vmem [thread:$0]  %s319, 16, %s321, [#allocation40]
    $region101: #{tpu_custom_call.1} parent=1 // pred_fallthru
      _
    // Predicated region
    $region102: #{tpu_custom_call.1} parent=1 // pred_check
      _
    $region103: #{tpu_custom_call.1} parent=1 // pred_check_branch
      %325 = sbr.rel (0) target = $region105
    $region104: #{tpu_custom_call.1} parent=1 // pred_region
      %327 = dma.done [#allocation7], 32
    $region105: #{tpu_custom_call.1} parent=1 // pred_fallthru
      _
    // Predicated region
    $region106: #{tpu_custom_call.1} parent=1 // pred_check
      _
    $region107: #{tpu_custom_call.1} parent=1 // pred_check_branch
      %329 = sbr.rel (0) target = $region109
    $region108: #{tpu_custom_call.1} parent=1 // pred_region
      %331 = dma.done [#allocation10], 32
    $region109: #{tpu_custom_call.1} parent=1 // pred_fallthru
      _
    // Predicated region
    $region110: #{tpu_custom_call.1} parent=1 // pred_check
      _
    $region111: #{tpu_custom_call.1} parent=1 // pred_check_branch
      %333 = sbr.rel (0) target = $region113
    $region112: #{tpu_custom_call.1} parent=1 // pred_region
      %335 = dma.done [#allocation10], 384
    $region113: #{tpu_custom_call.1} parent=1 // pred_fallthru
      _
    // Predicated region
    $region114: #{tpu_custom_call.1} parent=1 // pred_check
      _
    $region115: #{tpu_custom_call.1} parent=1 // pred_check_branch
      %337 = sbr.rel (0) target = $region117
    $region116: #{tpu_custom_call.1} parent=1 // pred_region
      %339 = dma.done [#allocation13], 16
    $region117: #{tpu_custom_call.1} parent=1 // pred_fallthru
      _
    // Predicated region
    $region118: #{tpu_custom_call.1} parent=1 // pred_check
      _
    $region119: #{tpu_custom_call.1} parent=1 // pred_check_branch
      %341 = sbr.rel (0) target = $region121
    $region120: #{tpu_custom_call.1} parent=1 // pred_region
      %343 = dma.done [#allocation13], 16
    $region121: #{tpu_custom_call.1} parent=1 // pred_fallthru
      _
    // Predicated region
    $region122: #{tpu_custom_call.1} parent=1 // pred_check
      _
    $region123: #{tpu_custom_call.1} parent=1 // pred_check_branch
      %345 = sbr.rel (0) target = $region125
    $region124: #{tpu_custom_call.1} parent=1 // pred_region
      %347 = dma.done [#allocation16], 32
    $region125: #{tpu_custom_call.1} parent=1 // pred_fallthru
      _
    // Predicated region
    $region126: #{tpu_custom_call.1} parent=1 // pred_check
      _
    $region127: #{tpu_custom_call.1} parent=1 // pred_check_branch
      %349 = sbr.rel (0) target = $region129
    $region128: #{tpu_custom_call.1} parent=1 // pred_region
      %351 = dma.done [#allocation16], 16
    $region129: #{tpu_custom_call.1} parent=1 // pred_fallthru
      _
    // Predicated region
    $region130: #{tpu_custom_call.1} parent=1 // pred_check
      _
    $region131: #{tpu_custom_call.1} parent=1 // pred_check_branch
      %353 = sbr.rel (0) target = $region133
    $region132: #{tpu_custom_call.1} parent=1 // pred_region
      %355 = dma.done [#allocation19], 16
    $region133: #{tpu_custom_call.1} parent=1 // pred_fallthru
      _
    // Predicated region
    $region134: #{tpu_custom_call.1} parent=1 // pred_check
      _
    $region135: #{tpu_custom_call.1} parent=1 // pred_check_branch
      %357 = sbr.rel (0) target = $region137
    $region136: #{tpu_custom_call.1} parent=1 // pred_region
      %359 = dma.done [#allocation19], 1536
    $region137: #{tpu_custom_call.1} parent=1 // pred_fallthru
      _
    // Predicated region
    $region138: #{tpu_custom_call.1} parent=1 // pred_check
      _
    $region139: #{tpu_custom_call.1} parent=1 // pred_check_branch
      %361 = sbr.rel (0) target = $region141
    $region140: #{tpu_custom_call.1} parent=1 // pred_region
      %363 = dma.done [#allocation22], 64
    $region141: #{tpu_custom_call.1} parent=1 // pred_fallthru
      _
    // Predicated region
    $region142: #{tpu_custom_call.1} parent=1 // pred_check
      _
    $region143: #{tpu_custom_call.1} parent=1 // pred_check_branch
      %365 = sbr.rel (0) target = $region145
    $region144: #{tpu_custom_call.1} parent=1 // pred_region
      %367 = dma.done [#allocation22], 32768
    $region145: #{tpu_custom_call.1} parent=1 // pred_fallthru
      _
    // Predicated region
    $region146: #{tpu_custom_call.1} parent=1 // pred_check
      _
    $region147: #{tpu_custom_call.1} parent=1 // pred_check_branch
      %369 = sbr.rel (0) target = $region149
    $region148: #{tpu_custom_call.1} parent=1 // pred_region
      %371 = dma.done [#allocation25], 64
    $region149: #{tpu_custom_call.1} parent=1 // pred_fallthru
      _
    // Predicated region
    $region150: #{tpu_custom_call.1} parent=1 // pred_check
      _
    $region151: #{tpu_custom_call.1} parent=1 // pred_check_branch
      %373 = sbr.rel (0) target = $region153
    $region152: #{tpu_custom_call.1} parent=1 // pred_region
      %375 = dma.done [#allocation25], 32768
    $region153: #{tpu_custom_call.1} parent=1 // pred_fallthru
      _
    // Predicated region
    $region154: #{tpu_custom_call.1} parent=1 // pred_check
      _
    $region155: #{tpu_custom_call.1} parent=1 // pred_check_branch
      %377 = sbr.rel (0) target = $region157
    $region156: #{tpu_custom_call.1} parent=1 // pred_region
      %379 = dma.done [#allocation28], 64
    $region157: #{tpu_custom_call.1} parent=1 // pred_fallthru
      _
    // Predicated region
    $region158: #{tpu_custom_call.1} parent=1 // pred_check
      _
    $region159: #{tpu_custom_call.1} parent=1 // pred_check_branch
      %381 = sbr.rel (0) target = $region161
    $region160: #{tpu_custom_call.1} parent=1 // pred_region
      %383 = dma.done [#allocation28], 24576
    $region161: #{tpu_custom_call.1} parent=1 // pred_fallthru
      _
    // Predicated region
    $region162: #{tpu_custom_call.1} parent=1 // pred_check
      _
    $region163: #{tpu_custom_call.1} parent=1 // pred_check_branch
      %385 = sbr.rel (0) target = $region165
    $region164: #{tpu_custom_call.1} parent=1 // pred_region
      %387 = dma.done [#allocation31], 384
    $region165: #{tpu_custom_call.1} parent=1 // pred_fallthru
      _
    // Predicated region
    $region166: #{tpu_custom_call.1} parent=1 // pred_check
      _
    $region167: #{tpu_custom_call.1} parent=1 // pred_check_branch
      %389 = sbr.rel (0) target = $region169
    $region168: #{tpu_custom_call.1} parent=1 // pred_region
      %391 = dma.done [#allocation31], 48
    $region169: #{tpu_custom_call.1} parent=1 // pred_fallthru
      _
    // Predicated region
    $region170: #{tpu_custom_call.1} parent=1 // pred_check
      _
    $region171: #{tpu_custom_call.1} parent=1 // pred_check_branch
      %393 = sbr.rel (0) target = $region173
    $region172: #{tpu_custom_call.1} parent=1 // pred_region
      %395 = dma.done [#allocation34], 147456
    $region173: #{tpu_custom_call.1} parent=1 // pred_fallthru
      _
    // Predicated region
    $region174: #{tpu_custom_call.1} parent=1 // pred_check
      _
    $region175: #{tpu_custom_call.1} parent=1 // pred_check_branch
      %397 = sbr.rel (0) target = $region177
    $region176: #{tpu_custom_call.1} parent=1 // pred_region
      %399 = dma.done [#allocation34], 768
    $region177: #{tpu_custom_call.1} parent=1 // pred_fallthru
      _
    // Predicated region
    $region178: #{tpu_custom_call.1} parent=1 // pred_check
      _
    $region179: #{tpu_custom_call.1} parent=1 // pred_check_branch
      %401 = sbr.rel (0) target = $region181
    $region180: #{tpu_custom_call.1} parent=1 // pred_region
      %403 = dma.done [#allocation37], 96
    $region181: #{tpu_custom_call.1} parent=1 // pred_fallthru
      _
    // Predicated region
    $region182: #{tpu_custom_call.1} parent=1 // pred_check
      _
    $region183: #{tpu_custom_call.1} parent=1 // pred_check_branch
      %405 = sbr.rel (0) target = $region185
    $region184: #{tpu_custom_call.1} parent=1 // pred_region
      %407 = dma.done [#allocation37], 49152
    $region185: #{tpu_custom_call.1} parent=1 // pred_fallthru
      _
    // Predicated region
    $region186: #{tpu_custom_call.1} parent=1 // pred_check
      _
    $region187: #{tpu_custom_call.1} parent=1 // pred_check_branch
      %409 = sbr.rel (0) target = $region189
    $region188: #{tpu_custom_call.1} parent=1 // pred_region
      %411 = dma.done [#allocation40], 2816
    $region189: #{tpu_custom_call.1} parent=1 // pred_fallthru
      _
    // Predicated region
    $region190: #{tpu_custom_call.1} parent=1 // pred_check
      _
    $region191: #{tpu_custom_call.1} parent=1 // pred_check_branch
      %413 = sbr.rel (0) target = $region193
    $region192: #{tpu_custom_call.1} parent=1 // pred_region
      %415 = dma.done [#allocation40], 16
    $region193: #{tpu_custom_call.1} parent=1 // pred_fallthru
      _
    %v416 = vld [vmem:[#allocation6] sm:$0x3]
    %v417 = vld [vmem:[#allocation9] sm:$0x3]
    %v418 = vld [vmem:[#allocation11] sm:$0xff]
    %v419 = vld [vmem:[#allocation11 + $0x8] sm:$0xff]
    %v420 = vld [vmem:[#allocation11 + $0x10] sm:$0xf]
    %v421 = vld [vmem:[#allocation12] sm:$0x1]
    %v423 = vperm.slane %v421, 0
    %vm425 = vcmask 162816
    %v427 = vsel %vm425, %v417, 0
    %vm429 = vcmask 1043456
    %v431 = vsel %vm429, %v420, 0
    %433 = vmatpush.msra.mxu0 0.0
    %434 = vmatpush.msra.mxu0 0.0
    %435 = vmatpush.msra.mxu0 0.0
    %436 = vmatpush.msra.mxu0 0.0
    %437 = vmatpush.msra.mxu0 0.0
    %438 = vmatpush.msra.mxu0 0.0
    %439 = vmatpush.msra.mxu0 0.0
    %440 = vmatpush.msra.mxu0 0.0
    %441 = vmatpush.msra.mxu0 0.0
    %442 = vmatpush.msra.mxu0 0.0
    %443 = vmatpush.msra.mxu0 0.0
    %444 = vmatpush.msra.mxu0 0.0
    %445 = vmatpush.msra.mxu0 0.0
    %446 = vmatpush.msra.mxu0 %v431
    %447 = vmatpush.msra.mxu0 %v419
    %448 = vmatpush.msra.mxu0 %v418
    %449 = vmatmul.f32.gmra.mxu0 %v427
    %v450 = vpop.f32.mrf.mxu0
    %v451 = vadd.f32 %v423, %v450
    %452 = vdwg.mxu0
    %vm453 = vcmp.gt.f32.partialorder %v451, 0.0
    %v454 = vmul.f32 %v451, 0.1
    %v455 = vsel %vm453, %v451, %v454
    %v456 = vld [vmem:[%s4] sm:$0xff]
    %v457 = vld [vmem:[%s4 + $0x8] sm:$0xff]
    %v458 = vld [vmem:[%s4 + $0x10] sm:$0xff]
    %v459 = vld [vmem:[%s4 + $0x18] sm:$0xff]
    %v460 = vld [vmem:[#allocation14] sm:$0x1]
    %v462 = vperm.slane %v460, 0
    %vm464 = vcmask 261120
    %v466 = vsel %vm464, %v455, 0
    %468 = vmatpush.msra.mxu0 0.0
    %469 = vmatpush.msra.mxu0 0.0
    %470 = vmatpush.msra.mxu0 0.0
    %471 = vmatpush.msra.mxu0 0.0
    %472 = vmatpush.msra.mxu0 0.0
    %473 = vmatpush.msra.mxu0 0.0
    %474 = vmatpush.msra.mxu0 0.0
    %475 = vmatpush.msra.mxu0 0.0
    %476 = vmatpush.msra.mxu0 0.0
    %477 = vmatpush.msra.mxu0 0.0
    %478 = vmatpush.msra.mxu0 0.0
    %479 = vmatpush.msra.mxu0 0.0
    %480 = vmatpush.msra.mxu0 %v459
    %481 = vmatpush.msra.mxu0 %v458
    %482 = vmatpush.msra.mxu0 %v457
    %483 = vmatpush.msra.mxu0 %v456
    %484 = vmatmul.f32.gmra.mxu0 %v466
    %v485 = vpop.f32.mrf.mxu0
    %v486 = vadd.f32 %v462, %v485
    %487 = vdwg.mxu0
    %v488 = vld [vmem:[#allocation15] sm:$0x3]
    %v489 = vld [vmem:[#allocation17] sm:$0x1]
    %v491 = vperm.slane %v489, 0
    %vm493 = vcmask 15360
    %v495 = vsel %vm493, %v486, 0
    %vm497 = vcmask 1041408
    %v499 = vsel %vm497, %v488, 0
    %501 = vmatpush.msra.mxu0 0.0
    %502 = vmatpush.msra.mxu0 0.0
    %503 = vmatpush.msra.mxu0 0.0
    %504 = vmatpush.msra.mxu0 0.0
    %505 = vmatpush.msra.mxu0 0.0
    %506 = vmatpush.msra.mxu0 0.0
    %507 = vmatpush.msra.mxu0 0.0
    %508 = vmatpush.msra.mxu0 0.0
    %509 = vmatpush.msra.mxu0 0.0
    %510 = vmatpush.msra.mxu0 0.0
    %511 = vmatpush.msra.mxu0 0.0
    %512 = vmatpush.msra.mxu0 0.0
    %513 = vmatpush.msra.mxu0 0.0
    %514 = vmatpush.msra.mxu0 0.0
    %515 = vmatpush.msra.mxu0 0.0
    %516 = vmatpush.msra.mxu0 %v499
    %517 = vmatmul.f32.gmra.mxu0 %v495
    %v518 = vpop.f32.mrf.mxu0
    %v519 = vadd.f32 %v491, %v518
    %520 = vdwg.mxu0
    %vm521 = vcmp.gt.f32.partialorder %v519, 0.0
    %v522 = vmul.f32 %v519, 0.1
    %v523 = vsel %vm521, %v519, %v522
    %v524 = vld [vmem:[%s8] sm:$0xff]
    %v525 = vld [vmem:[%s8 + $0x8] sm:$0xff]
    %v526 = vld [vmem:[%s8 + $0x10] sm:$0xff]
    %v527 = vld [vmem:[%s8 + $0x18] sm:$0xff]
    %v528 = vld [vmem:[#allocation18] sm:$0x1]
    %v530 = vperm.slane %v528, 0
    %v533 = vsel %vm464, %v523, 0
    %535 = vmatpush.msra.mxu0 0.0
    %536 = vmatpush.msra.mxu0 0.0
    %537 = vmatpush.msra.mxu0 0.0
    %538 = vmatpush.msra.mxu0 0.0
    %539 = vmatpush.msra.mxu0 0.0
    %540 = vmatpush.msra.mxu0 0.0
    %541 = vmatpush.msra.mxu0 0.0
    %542 = vmatpush.msra.mxu0 0.0
    %543 = vmatpush.msra.mxu0 0.0
    %544 = vmatpush.msra.mxu0 0.0
    %545 = vmatpush.msra.mxu0 0.0
    %546 = vmatpush.msra.mxu0 0.0
    %547 = vmatpush.msra.mxu0 %v527
    %548 = vmatpush.msra.mxu0 %v526
    %549 = vmatpush.msra.mxu0 %v525
    %550 = vmatpush.msra.mxu0 %v524
    %551 = vmatmul.f32.gmra.mxu0 %v533
    %v552 = vpop.f32.mrf.mxu0
    %v553 = vadd.f32 %v530, %v552
    %554 = vdwg.mxu0
    %v555 = vsub.f32 0.0, %v553
    %v556 = vmul.f32 %v555, 1.442695
    %v557 = vpow.pop %v556
    %v558 = vadd.f32 %v557, 1.0
    %v559 = vrcp.pop %v558
    %v560 = vmul.f32 %v558, %v559
    %v561 = vsub.f32 1.0, %v560
    %v562 = vmul.f32 %v559, %v561
    %v563 = vadd.f32 %v559, %v562
    %vm564 = vweird.f32 %v558
    %vm565 = vweird.f32 %v559
    %vm566 = vmor %vm564, %vm565
    %v567 = vsel %vm566, %v559, %v563
    %v568 = vand.u32 2147483647, %v558
    %vm569 = vcmp.eq.f32.partialorder %v568, 8.507059e+37
    %v570 = vand.u32 %v558, 2147483648
    %v571 = vor.u32 1.1754944e-38, %v570
    %v572 = vsel %vm569, %v571, %v567
    %v573 = vmul.f32 1.0, %v572
    %v574 = vadd.f32 %v573, %v486
    %vm575 = vcmask 9216
    %576 = vst.msk [vmem:[#allocation45] sm:$0x3] %vm575, %v486
    %577 = vst.msk [vmem:[#allocation43] sm:$0x3] %vm575, %v574
    %v578 = vld [vmem:[#allocation20] sm:$0xff]
    %v579 = vld [vmem:[#allocation20 + $0x8] sm:$0xff]
    %v580 = vld [vmem:[#allocation20 + $0x10] sm:$0xff]
    %v581 = vld [vmem:[#allocation20 + $0x18] sm:$0xff]
    %v582 = vld [vmem:[#allocation20 + $0x20] sm:$0xff]
    %v583 = vld [vmem:[#allocation20 + $0x28] sm:$0xff]
    %v584 = vld [vmem:[#allocation20 + $0x30] sm:$0xff]
    %v585 = vld [vmem:[#allocation20 + $0x38] sm:$0xff]
    %v586 = vld [vmem:[#allocation20 + $0x40] sm:$0xf]
    %v587 = vld [vmem:[#allocation20 + $0x48] sm:$0xf]
    %v588 = vld [vmem:[#allocation20 + $0x50] sm:$0xf]
    %v589 = vld [vmem:[#allocation20 + $0x58] sm:$0xf]
    %v590 = vld [vmem:[#allocation21] sm:$0xf]
    %v592 = vperm.slane %v590, 0
    %v593 = vperm.slane %v590, 1
    %v594 = vperm.slane %v590, 2
    %v595 = vperm.slane %v590, 3
    %v601 = vsel %vm425, %v416, 0
    %v604 = vsel %vm429, %v586, 0
    %v607 = vsel %vm429, %v587, 0
    %v610 = vsel %vm429, %v588, 0
    %v613 = vsel %vm429, %v589, 0
    %615 = vmatpush.msra.mxu0 0.0
    %616 = vmatpush.msra.mxu0 0.0
    %617 = vmatpush.msra.mxu0 0.0
    %618 = vmatpush.msra.mxu0 0.0
    %619 = vmatpush.msra.mxu0 0.0
    %620 = vmatpush.msra.mxu0 0.0
    %621 = vmatpush.msra.mxu0 0.0
    %622 = vmatpush.msra.mxu0 0.0
    %623 = vmatpush.msra.mxu0 0.0
    %624 = vmatpush.msra.mxu0 0.0
    %625 = vmatpush.msra.mxu0 0.0
    %626 = vmatpush.msra.mxu0 0.0
    %627 = vmatpush.msra.mxu0 0.0
    %628 = vmatpush.msra.mxu0 %v604
    %629 = vmatpush.msra.mxu0 %v582
    %630 = vmatpush.msra.mxu0 %v578
    %631 = vmatmul.f32.gmra.mxu0 %v601
    %v632 = vpop.f32.mrf.mxu0
    %v633 = vadd.f32 %v592, %v632
    %634 = vdwg.mxu0
    %635 = vmatpush.msra.mxu0 0.0
    %636 = vmatpush.msra.mxu0 0.0
    %637 = vmatpush.msra.mxu0 0.0
    %638 = vmatpush.msra.mxu0 0.0
    %639 = vmatpush.msra.mxu0 0.0
    %640 = vmatpush.msra.mxu0 0.0
    %641 = vmatpush.msra.mxu0 0.0
    %642 = vmatpush.msra.mxu0 0.0
    %643 = vmatpush.msra.mxu0 0.0
    %644 = vmatpush.msra.mxu0 0.0
    %645 = vmatpush.msra.mxu0 0.0
    %646 = vmatpush.msra.mxu0 0.0
    %647 = vmatpush.msra.mxu0 0.0
    %648 = vmatpush.msra.mxu0 %v607
    %649 = vmatpush.msra.mxu0 %v583
    %650 = vmatpush.msra.mxu0 %v579
    %651 = vmatmul.f32.gmra.mxu0 %v601
    %v652 = vpop.f32.mrf.mxu0
    %v653 = vadd.f32 %v593, %v652
    %654 = vdwg.mxu0
    %655 = vmatpush.msra.mxu0 0.0
    %656 = vmatpush.msra.mxu0 0.0
    %657 = vmatpush.msra.mxu0 0.0
    %658 = vmatpush.msra.mxu0 0.0
    %659 = vmatpush.msra.mxu0 0.0
    %660 = vmatpush.msra.mxu0 0.0
    %661 = vmatpush.msra.mxu0 0.0
    %662 = vmatpush.msra.mxu0 0.0
    %663 = vmatpush.msra.mxu0 0.0
    %664 = vmatpush.msra.mxu0 0.0
    %665 = vmatpush.msra.mxu0 0.0
    %666 = vmatpush.msra.mxu0 0.0
    %667 = vmatpush.msra.mxu0 0.0
    %668 = vmatpush.msra.mxu0 %v610
    %669 = vmatpush.msra.mxu0 %v584
    %670 = vmatpush.msra.mxu0 %v580
    %671 = vmatmul.f32.gmra.mxu0 %v601
    %v672 = vpop.f32.mrf.mxu0
    %v673 = vadd.f32 %v594, %v672
    %674 = vdwg.mxu0
    %675 = vmatpush.msra.mxu0 0.0
    %676 = vmatpush.msra.mxu0 0.0
    %677 = vmatpush.msra.mxu0 0.0
    %678 = vmatpush.msra.mxu0 0.0
    %679 = vmatpush.msra.mxu0 0.0
    %680 = vmatpush.msra.mxu0 0.0
    %681 = vmatpush.msra.mxu0 0.0
    %682 = vmatpush.msra.mxu0 0.0
    %683 = vmatpush.msra.mxu0 0.0
    %684 = vmatpush.msra.mxu0 0.0
    %685 = vmatpush.msra.mxu0 0.0
    %686 = vmatpush.msra.mxu0 0.0
    %687 = vmatpush.msra.mxu0 0.0
    %688 = vmatpush.msra.mxu0 %v613
    %689 = vmatpush.msra.mxu0 %v585
    %690 = vmatpush.msra.mxu0 %v581
    %691 = vmatmul.f32.gmra.mxu0 %v601
    %v692 = vpop.f32.mrf.mxu0
    %v693 = vadd.f32 %v595, %v692
    %694 = vdwg.mxu0
    %vm695 = vcmp.gt.f32.partialorder %v633, 0.0
    %vm696 = vcmp.gt.f32.partialorder %v653, 0.0
    %vm697 = vcmp.gt.f32.partialorder %v673, 0.0
    %vm698 = vcmp.gt.f32.partialorder %v693, 0.0
    %v699 = vmul.f32 %v633, 0.1
    %v700 = vmul.f32 %v653, 0.1
    %v701 = vmul.f32 %v673, 0.1
    %v702 = vmul.f32 %v693, 0.1
    %v703 = vsel %vm695, %v633, %v699
    %v704 = vsel %vm696, %v653, %v700
    %v705 = vsel %vm697, %v673, %v701
    %v706 = vsel %vm698, %v693, %v702
    %v707 = vld [vmem:[#allocation23] sm:$0xff]
    %v708 = vld [vmem:[#allocation23 + $0x8] sm:$0xff]
    %v709 = vld [vmem:[#allocation23 + $0x10] sm:$0xff]
    %v710 = vld [vmem:[#allocation23 + $0x18] sm:$0xff]
    %v711 = vld [vmem:[#allocation23 + $0x20] sm:$0xff]
    %v712 = vld [vmem:[#allocation23 + $0x28] sm:$0xff]
    %v713 = vld [vmem:[#allocation23 + $0x30] sm:$0xff]
    %v714 = vld [vmem:[#allocation23 + $0x38] sm:$0xff]
    %v715 = vld [vmem:[#allocation23 + $0x40] sm:$0xff]
    %v716 = vld [vmem:[#allocation23 + $0x48] sm:$0xff]
    %v717 = vld [vmem:[#allocation23 + $0x50] sm:$0xff]
    %v718 = vld [vmem:[#allocation23 + $0x58] sm:$0xff]
    %v719 = vld [vmem:[#allocation23 + $0x60] sm:$0xff]
    %v720 = vld [vmem:[#allocation23 + $0x68] sm:$0xff]
    %v721 = vld [vmem:[#allocation23 + $0x70] sm:$0xff]
    %v722 = vld [vmem:[#allocation23 + $0x78] sm:$0xff]
    %v723 = vld [vmem:[#allocation23 + $0x80] sm:$0xff]
    %v724 = vld [vmem:[#allocation23 + $0x88] sm:$0xff]
    %v725 = vld [vmem:[#allocation23 + $0x90] sm:$0xff]
    %v726 = vld [vmem:[#allocation23 + $0x98] sm:$0xff]
    %v727 = vld [vmem:[#allocation23 + $0xa0] sm:$0xff]
    %v728 = vld [vmem:[#allocation23 + $0xa8] sm:$0xff]
    %v729 = vld [vmem:[#allocation23 + $0xb0] sm:$0xff]
    %v730 = vld [vmem:[#allocation23 + $0xb8] sm:$0xff]
    %v731 = vld [vmem:[#allocation23 + $0xc0] sm:$0xff]
    %v732 = vld [vmem:[#allocation23 + $0xc8] sm:$0xff]
    %v733 = vld [vmem:[#allocation23 + $0xd0] sm:$0xff]
    %v734 = vld [vmem:[#allocation23 + $0xd8] sm:$0xff]
    %v735 = vld [vmem:[#allocation23 + $0xe0] sm:$0xff]
    %v736 = vld [vmem:[#allocation23 + $0xe8] sm:$0xff]
    %v737 = vld [vmem:[#allocation23 + $0xf0] sm:$0xff]
    %v738 = vld [vmem:[#allocation23 + $0xf8] sm:$0xff]
    %v739 = vld [vmem:[#allocation23 + $0x100] sm:$0xff]
    %v740 = vld [vmem:[#allocation23 + $0x108] sm:$0xff]
    %v741 = vld [vmem:[#allocation23 + $0x110] sm:$0xff]
    %v742 = vld [vmem:[#allocation23 + $0x118] sm:$0xff]
    %v743 = vld [vmem:[#allocation23 + $0x120] sm:$0xff]
    %v744 = vld [vmem:[#allocation23 + $0x128] sm:$0xff]
    %v745 = vld [vmem:[#allocation23 + $0x130] sm:$0xff]
    %v746 = vld [vmem:[#allocation23 + $0x138] sm:$0xff]
    %v747 = vld [vmem:[#allocation23 + $0x140] sm:$0xff]
    %v748 = vld [vmem:[#allocation23 + $0x148] sm:$0xff]
    %v749 = vld [vmem:[#allocation23 + $0x150] sm:$0xff]
    %v750 = vld [vmem:[#allocation23 + $0x158] sm:$0xff]
    %v751 = vld [vmem:[#allocation23 + $0x160] sm:$0xff]
    %v752 = vld [vmem:[#allocation23 + $0x168] sm:$0xff]
    %v753 = vld [vmem:[#allocation23 + $0x170] sm:$0xff]
    %v754 = vld [vmem:[#allocation23 + $0x178] sm:$0xff]
    %v755 = vld [vmem:[#allocation23 + $0x180] sm:$0xff]
    %v756 = vld [vmem:[#allocation23 + $0x188] sm:$0xff]
    %v757 = vld [vmem:[#allocation23 + $0x190] sm:$0xff]
    %v758 = vld [vmem:[#allocation23 + $0x198] sm:$0xff]
    %v759 = vld [vmem:[#allocation23 + $0x1a0] sm:$0xff]
    %v760 = vld [vmem:[#allocation23 + $0x1a8] sm:$0xff]
    %v761 = vld [vmem:[#allocation23 + $0x1b0] sm:$0xff]
    %v762 = vld [vmem:[#allocation23 + $0x1b8] sm:$0xff]
    %v763 = vld [vmem:[#allocation23 + $0x1c0] sm:$0xff]
    %v764 = vld [vmem:[#allocation23 + $0x1c8] sm:$0xff]
    %v765 = vld [vmem:[#allocation23 + $0x1d0] sm:$0xff]
    %v766 = vld [vmem:[#allocation23 + $0x1d8] sm:$0xff]
    %v767 = vld [vmem:[#allocation23 + $0x1e0] sm:$0xff]
    %v768 = vld [vmem:[#allocation23 + $0x1e8] sm:$0xff]
    %v769 = vld [vmem:[#allocation23 + $0x1f0] sm:$0xff]
    %v770 = vld [vmem:[#allocation23 + $0x1f8] sm:$0xff]
    %v771 = vld [vmem:[#allocation23 + $0x200] sm:$0xff]
    %v772 = vld [vmem:[#allocation23 + $0x208] sm:$0xff]
    %v773 = vld [vmem:[#allocation23 + $0x210] sm:$0xff]
    %v774 = vld [vmem:[#allocation23 + $0x218] sm:$0xff]
    %v775 = vld [vmem:[#allocation23 + $0x220] sm:$0xff]
    %v776 = vld [vmem:[#allocation23 + $0x228] sm:$0xff]
    %v777 = vld [vmem:[#allocation23 + $0x230] sm:$0xff]
    %v778 = vld [vmem:[#allocation23 + $0x238] sm:$0xff]
    %v779 = vld [vmem:[#allocation23 + $0x240] sm:$0xff]
    %v780 = vld [vmem:[#allocation23 + $0x248] sm:$0xff]
    %v781 = vld [vmem:[#allocation23 + $0x250] sm:$0xff]
    %v782 = vld [vmem:[#allocation23 + $0x258] sm:$0xff]
    %v783 = vld [vmem:[#allocation23 + $0x260] sm:$0xff]
    %v784 = vld [vmem:[#allocation23 + $0x268] sm:$0xff]
    %v785 = vld [vmem:[#allocation23 + $0x270] sm:$0xff]
    %v786 = vld [vmem:[#allocation23 + $0x278] sm:$0xff]
    %v787 = vld [vmem:[#allocation23 + $0x280] sm:$0xff]
    %v788 = vld [vmem:[#allocation23 + $0x288] sm:$0xff]
    %v789 = vld [vmem:[#allocation23 + $0x290] sm:$0xff]
    %v790 = vld [vmem:[#allocation23 + $0x298] sm:$0xff]
    %v791 = vld [vmem:[#allocation23 + $0x2a0] sm:$0xff]
    %v792 = vld [vmem:[#allocation23 + $0x2a8] sm:$0xff]
    %v793 = vld [vmem:[#allocation23 + $0x2b0] sm:$0xff]
    %v794 = vld [vmem:[#allocation23 + $0x2b8] sm:$0xff]
    %v795 = vld [vmem:[#allocation23 + $0x2c0] sm:$0xff]
    %v796 = vld [vmem:[#allocation23 + $0x2c8] sm:$0xff]
    %v797 = vld [vmem:[#allocation23 + $0x2d0] sm:$0xff]
    %v798 = vld [vmem:[#allocation23 + $0x2d8] sm:$0xff]
    %v799 = vld [vmem:[#allocation23 + $0x2e0] sm:$0xff]
    %v800 = vld [vmem:[#allocation23 + $0x2e8] sm:$0xff]
    %v801 = vld [vmem:[#allocation23 + $0x2f0] sm:$0xff]
    %v802 = vld [vmem:[#allocation23 + $0x2f8] sm:$0xff]
    %v803 = vld [vmem:[#allocation23 + $0x300] sm:$0xff]
    %v804 = vld [vmem:[#allocation23 + $0x308] sm:$0xff]
    %v805 = vld [vmem:[#allocation23 + $0x310] sm:$0xff]
    %v806 = vld [vmem:[#allocation23 + $0x318] sm:$0xff]
    %v807 = vld [vmem:[#allocation23 + $0x320] sm:$0xff]
    %v808 = vld [vmem:[#allocation23 + $0x328] sm:$0xff]
    %v809 = vld [vmem:[#allocation23 + $0x330] sm:$0xff]
    %v810 = vld [vmem:[#allocation23 + $0x338] sm:$0xff]
    %v811 = vld [vmem:[#allocation23 + $0x340] sm:$0xff]
    %v812 = vld [vmem:[#allocation23 + $0x348] sm:$0xff]
    %v813 = vld [vmem:[#allocation23 + $0x350] sm:$0xff]
    %v814 = vld [vmem:[#allocation23 + $0x358] sm:$0xff]
    %v815 = vld [vmem:[#allocation23 + $0x360] sm:$0xff]
    %v816 = vld [vmem:[#allocation23 + $0x368] sm:$0xff]
    %v817 = vld [vmem:[#allocation23 + $0x370] sm:$0xff]
    %v818 = vld [vmem:[#allocation23 + $0x378] sm:$0xff]
    %v819 = vld [vmem:[#allocation23 + $0x380] sm:$0xff]
    %v820 = vld [vmem:[#allocation23 + $0x388] sm:$0xff]
    %v821 = vld [vmem:[#allocation23 + $0x390] sm:$0xff]
    %v822 = vld [vmem:[#allocation23 + $0x398] sm:$0xff]
    %v823 = vld [vmem:[#allocation23 + $0x3a0] sm:$0xff]
    %v824 = vld [vmem:[#allocation23 + $0x3a8] sm:$0xff]
    %v825 = vld [vmem:[#allocation23 + $0x3b0] sm:$0xff]
    %v826 = vld [vmem:[#allocation23 + $0x3b8] sm:$0xff]
    %v827 = vld [vmem:[#allocation23 + $0x3c0] sm:$0xff]
    %v828 = vld [vmem:[#allocation23 + $0x3c8] sm:$0xff]
    %v829 = vld [vmem:[#allocation23 + $0x3d0] sm:$0xff]
    %v830 = vld [vmem:[#allocation23 + $0x3d8] sm:$0xff]
    %v831 = vld [vmem:[#allocation23 + $0x3e0] sm:$0xff]
    %v832 = vld [vmem:[#allocation23 + $0x3e8] sm:$0xff]
    %v833 = vld [vmem:[#allocation23 + $0x3f0] sm:$0xff]
    %v834 = vld [vmem:[#allocation23 + $0x3f8] sm:$0xff]
    %v835 = vld [vmem:[#allocation23 + $0x400] sm:$0xff]
    %v836 = vld [vmem:[#allocation23 + $0x408] sm:$0xff]
    %v837 = vld [vmem:[#allocation23 + $0x410] sm:$0xff]
    %v838 = vld [vmem:[#allocation23 + $0x418] sm:$0xff]
    %v839 = vld [vmem:[#allocation23 + $0x420] sm:$0xff]
    %v840 = vld [vmem:[#allocation23 + $0x428] sm:$0xff]
    %v841 = vld [vmem:[#allocation23 + $0x430] sm:$0xff]
    %v842 = vld [vmem:[#allocation23 + $0x438] sm:$0xff]
    %v843 = vld [vmem:[#allocation23 + $0x440] sm:$0xff]
    %v844 = vld [vmem:[#allocation23 + $0x448] sm:$0xff]
    %v845 = vld [vmem:[#allocation23 + $0x450] sm:$0xff]
    %v846 = vld [vmem:[#allocation23 + $0x458] sm:$0xff]
    %v847 = vld [vmem:[#allocation23 + $0x460] sm:$0xff]
    %v848 = vld [vmem:[#allocation23 + $0x468] sm:$0xff]
    %v849 = vld [vmem:[#allocation23 + $0x470] sm:$0xff]
    %v850 = vld [vmem:[#allocation23 + $0x478] sm:$0xff]
    %v851 = vld [vmem:[#allocation23 + $0x480] sm:$0xff]
    %v852 = vld [vmem:[#allocation23 + $0x488] sm:$0xff]
    %v853 = vld [vmem:[#allocation23 + $0x490] sm:$0xff]
    %v854 = vld [vmem:[#allocation23 + $0x498] sm:$0xff]
    %v855 = vld [vmem:[#allocation23 + $0x4a0] sm:$0xff]
    %v856 = vld [vmem:[#allocation23 + $0x4a8] sm:$0xff]
    %v857 = vld [vmem:[#allocation23 + $0x4b0] sm:$0xff]
    %v858 = vld [vmem:[#allocation23 + $0x4b8] sm:$0xff]
    %v859 = vld [vmem:[#allocation23 + $0x4c0] sm:$0xff]
    %v860 = vld [vmem:[#allocation23 + $0x4c8] sm:$0xff]
    %v861 = vld [vmem:[#allocation23 + $0x4d0] sm:$0xff]
    %v862 = vld [vmem:[#allocation23 + $0x4d8] sm:$0xff]
    %v863 = vld [vmem:[#allocation23 + $0x4e0] sm:$0xff]
    %v864 = vld [vmem:[#allocation23 + $0x4e8] sm:$0xff]
    %v865 = vld [vmem:[#allocation23 + $0x4f0] sm:$0xff]
    %v866 = vld [vmem:[#allocation23 + $0x4f8] sm:$0xff]
    %v867 = vld [vmem:[#allocation23 + $0x500] sm:$0xff]
    %v868 = vld [vmem:[#allocation23 + $0x508] sm:$0xff]
    %v869 = vld [vmem:[#allocation23 + $0x510] sm:$0xff]
    %v870 = vld [vmem:[#allocation23 + $0x518] sm:$0xff]
    %v871 = vld [vmem:[#allocation23 + $0x520] sm:$0xff]
    %v872 = vld [vmem:[#allocation23 + $0x528] sm:$0xff]
    %v873 = vld [vmem:[#allocation23 + $0x530] sm:$0xff]
    %v874 = vld [vmem:[#allocation23 + $0x538] sm:$0xff]
    %v875 = vld [vmem:[#allocation23 + $0x540] sm:$0xff]
    %v876 = vld [vmem:[#allocation23 + $0x548] sm:$0xff]
    %v877 = vld [vmem:[#allocation23 + $0x550] sm:$0xff]
    %v878 = vld [vmem:[#allocation23 + $0x558] sm:$0xff]
    %v879 = vld [vmem:[#allocation23 + $0x560] sm:$0xff]
    %v880 = vld [vmem:[#allocation23 + $0x568] sm:$0xff]
    %v881 = vld [vmem:[#allocation23 + $0x570] sm:$0xff]
    %v882 = vld [vmem:[#allocation23 + $0x578] sm:$0xff]
    %v883 = vld [vmem:[#allocation23 + $0x580] sm:$0xff]
    %v884 = vld [vmem:[#allocation23 + $0x588] sm:$0xff]
    %v885 = vld [vmem:[#allocation23 + $0x590] sm:$0xff]
    %v886 = vld [vmem:[#allocation23 + $0x598] sm:$0xff]
    %v887 = vld [vmem:[#allocation23 + $0x5a0] sm:$0xff]
    %v888 = vld [vmem:[#allocation23 + $0x5a8] sm:$0xff]
    %v889 = vld [vmem:[#allocation23 + $0x5b0] sm:$0xff]
    %v890 = vld [vmem:[#allocation23 + $0x5b8] sm:$0xff]
    %v891 = vld [vmem:[#allocation23 + $0x5c0] sm:$0xff]
    %v892 = vld [vmem:[#allocation23 + $0x5c8] sm:$0xff]
    %v893 = vld [vmem:[#allocation23 + $0x5d0] sm:$0xff]
    %v894 = vld [vmem:[#allocation23 + $0x5d8] sm:$0xff]
    %v895 = vld [vmem:[#allocation23 + $0x5e0] sm:$0xff]
    %v896 = vld [vmem:[#allocation23 + $0x5e8] sm:$0xff]
    %v897 = vld [vmem:[#allocation23 + $0x5f0] sm:$0xff]
    %v898 = vld [vmem:[#allocation23 + $0x5f8] sm:$0xff]
    %v899 = vld [vmem:[#allocation23 + $0x600] sm:$0xff]
    %v900 = vld [vmem:[#allocation23 + $0x608] sm:$0xff]
    %v901 = vld [vmem:[#allocation23 + $0x610] sm:$0xff]
    %v902 = vld [vmem:[#allocation23 + $0x618] sm:$0xff]
    %v903 = vld [vmem:[#allocation23 + $0x620] sm:$0xff]
    %v904 = vld [vmem:[#allocation23 + $0x628] sm:$0xff]
    %v905 = vld [vmem:[#allocation23 + $0x630] sm:$0xff]
    %v906 = vld [vmem:[#allocation23 + $0x638] sm:$0xff]
    %v907 = vld [vmem:[#allocation23 + $0x640] sm:$0xff]
    %v908 = vld [vmem:[#allocation23 + $0x648] sm:$0xff]
    %v909 = vld [vmem:[#allocation23 + $0x650] sm:$0xff]
    %v910 = vld [vmem:[#allocation23 + $0x658] sm:$0xff]
    %v911 = vld [vmem:[#allocation23 + $0x660] sm:$0xff]
    %v912 = vld [vmem:[#allocation23 + $0x668] sm:$0xff]
    %v913 = vld [vmem:[#allocation23 + $0x670] sm:$0xff]
    %v914 = vld [vmem:[#allocation23 + $0x678] sm:$0xff]
    %v915 = vld [vmem:[#allocation23 + $0x680] sm:$0xff]
    %v916 = vld [vmem:[#allocation23 + $0x688] sm:$0xff]
    %v917 = vld [vmem:[#allocation23 + $0x690] sm:$0xff]
    %v918 = vld [vmem:[#allocation23 + $0x698] sm:$0xff]
    %v919 = vld [vmem:[#allocation23 + $0x6a0] sm:$0xff]
    %v920 = vld [vmem:[#allocation23 + $0x6a8] sm:$0xff]
    %v921 = vld [vmem:[#allocation23 + $0x6b0] sm:$0xff]
    %v922 = vld [vmem:[#allocation23 + $0x6b8] sm:$0xff]
    %v923 = vld [vmem:[#allocation23 + $0x6c0] sm:$0xff]
    %v924 = vld [vmem:[#allocation23 + $0x6c8] sm:$0xff]
    %v925 = vld [vmem:[#allocation23 + $0x6d0] sm:$0xff]
    %v926 = vld [vmem:[#allocation23 + $0x6d8] sm:$0xff]
    %v927 = vld [vmem:[#allocation23 + $0x6e0] sm:$0xff]
    %v928 = vld [vmem:[#allocation23 + $0x6e8] sm:$0xff]
    %v929 = vld [vmem:[#allocation23 + $0x6f0] sm:$0xff]
    %v930 = vld [vmem:[#allocation23 + $0x6f8] sm:$0xff]
    %v931 = vld [vmem:[#allocation23 + $0x700] sm:$0xff]
    %v932 = vld [vmem:[#allocation23 + $0x708] sm:$0xff]
    %v933 = vld [vmem:[#allocation23 + $0x710] sm:$0xff]
    %v934 = vld [vmem:[#allocation23 + $0x718] sm:$0xff]
    %v935 = vld [vmem:[#allocation23 + $0x720] sm:$0xff]
    %v936 = vld [vmem:[#allocation23 + $0x728] sm:$0xff]
    %v937 = vld [vmem:[#allocation23 + $0x730] sm:$0xff]
    %v938 = vld [vmem:[#allocation23 + $0x738] sm:$0xff]
    %v939 = vld [vmem:[#allocation23 + $0x740] sm:$0xff]
    %v940 = vld [vmem:[#allocation23 + $0x748] sm:$0xff]
    %v941 = vld [vmem:[#allocation23 + $0x750] sm:$0xff]
    %v942 = vld [vmem:[#allocation23 + $0x758] sm:$0xff]
    %v943 = vld [vmem:[#allocation23 + $0x760] sm:$0xff]
    %v944 = vld [vmem:[#allocation23 + $0x768] sm:$0xff]
    %v945 = vld [vmem:[#allocation23 + $0x770] sm:$0xff]
    %v946 = vld [vmem:[#allocation23 + $0x778] sm:$0xff]
    %v947 = vld [vmem:[#allocation23 + $0x780] sm:$0xff]
    %v948 = vld [vmem:[#allocation23 + $0x788] sm:$0xff]
    %v949 = vld [vmem:[#allocation23 + $0x790] sm:$0xff]
    %v950 = vld [vmem:[#allocation23 + $0x798] sm:$0xff]
    %v951 = vld [vmem:[#allocation23 + $0x7a0] sm:$0xff]
    %v952 = vld [vmem:[#allocation23 + $0x7a8] sm:$0xff]
    %v953 = vld [vmem:[#allocation23 + $0x7b0] sm:$0xff]
    %v954 = vld [vmem:[#allocation23 + $0x7b8] sm:$0xff]
    %v955 = vld [vmem:[#allocation23 + $0x7c0] sm:$0xff]
    %v956 = vld [vmem:[#allocation23 + $0x7c8] sm:$0xff]
    %v957 = vld [vmem:[#allocation23 + $0x7d0] sm:$0xff]
    %v958 = vld [vmem:[#allocation23 + $0x7d8] sm:$0xff]
    %v959 = vld [vmem:[#allocation23 + $0x7e0] sm:$0xff]
    %v960 = vld [vmem:[#allocation23 + $0x7e8] sm:$0xff]
    %v961 = vld [vmem:[#allocation23 + $0x7f0] sm:$0xff]
    %v962 = vld [vmem:[#allocation23 + $0x7f8] sm:$0xff]
    %v963 = vld [vmem:[#allocation24] sm:$0xf]
    %v965 = vperm.slane %v963, 0
    %v966 = vperm.slane %v963, 1
    %v967 = vperm.slane %v963, 2
    %v968 = vperm.slane %v963, 3
    %973 = vmatpush.msra.mxu0 %v767
    %974 = vmatpush.msra.mxu0 %v763
    %975 = vmatpush.msra.mxu0 %v759
    %976 = vmatpush.msra.mxu0 %v755
    %977 = vmatpush.msra.mxu0 %v751
    %978 = vmatpush.msra.mxu0 %v747
    %979 = vmatpush.msra.mxu0 %v743
    %980 = vmatpush.msra.mxu0 %v739
    %981 = vmatpush.msra.mxu0 %v735
    %982 = vmatpush.msra.mxu0 %v731
    %983 = vmatpush.msra.mxu0 %v727
    %984 = vmatpush.msra.mxu0 %v723
    %985 = vmatpush.msra.mxu0 %v719
    %986 = vmatpush.msra.mxu0 %v715
    %987 = vmatpush.msra.mxu0 %v711
    %988 = vmatpush.msra.mxu0 %v707
    %989 = vmatmul.f32.gmra.mxu0 %v703
    %v990 = vpop.f32.mrf.mxu0
    %v991 = vadd.f32 %v965, %v990
    %992 = vdwg.mxu0
    %993 = vmatpush.msra.mxu0 %v831
    %994 = vmatpush.msra.mxu0 %v827
    %995 = vmatpush.msra.mxu0 %v823
    %996 = vmatpush.msra.mxu0 %v819
    %997 = vmatpush.msra.mxu0 %v815
    %998 = vmatpush.msra.mxu0 %v811
    %999 = vmatpush.msra.mxu0 %v807
    %1000 = vmatpush.msra.mxu0 %v803
    %1001 = vmatpush.msra.mxu0 %v799
    %1002 = vmatpush.msra.mxu0 %v795
    %1003 = vmatpush.msra.mxu0 %v791
    %1004 = vmatpush.msra.mxu0 %v787
    %1005 = vmatpush.msra.mxu0 %v783
    %1006 = vmatpush.msra.mxu0 %v779
    %1007 = vmatpush.msra.mxu0 %v775
    %1008 = vmatpush.msra.mxu0 %v771
    %1009 = vmatmul.f32.gmra.mxu0 %v704
    %v1010 = vpop.f32.mrf.mxu0
    %v1011 = vadd.f32 %v991, %v1010
    %1012 = vdwg.mxu0
    %1013 = vmatpush.msra.mxu0 %v895
    %1014 = vmatpush.msra.mxu0 %v891
    %1015 = vmatpush.msra.mxu0 %v887
    %1016 = vmatpush.msra.mxu0 %v883
    %1017 = vmatpush.msra.mxu0 %v879
    %1018 = vmatpush.msra.mxu0 %v875
    %1019 = vmatpush.msra.mxu0 %v871
    %1020 = vmatpush.msra.mxu0 %v867
    %1021 = vmatpush.msra.mxu0 %v863
    %1022 = vmatpush.msra.mxu0 %v859
    %1023 = vmatpush.msra.mxu0 %v855
    %1024 = vmatpush.msra.mxu0 %v851
    %1025 = vmatpush.msra.mxu0 %v847
    %1026 = vmatpush.msra.mxu0 %v843
    %1027 = vmatpush.msra.mxu0 %v839
    %1028 = vmatpush.msra.mxu0 %v835
    %1029 = vmatmul.f32.gmra.mxu0 %v705
    %v1030 = vpop.f32.mrf.mxu0
    %v1031 = vadd.f32 %v1011, %v1030
    %1032 = vdwg.mxu0
    %1033 = vmatpush.msra.mxu0 %v959
    %1034 = vmatpush.msra.mxu0 %v955
    %1035 = vmatpush.msra.mxu0 %v951
    %1036 = vmatpush.msra.mxu0 %v947
    %1037 = vmatpush.msra.mxu0 %v943
    %1038 = vmatpush.msra.mxu0 %v939
    %1039 = vmatpush.msra.mxu0 %v935
    %1040 = vmatpush.msra.mxu0 %v931
    %1041 = vmatpush.msra.mxu0 %v927
    %1042 = vmatpush.msra.mxu0 %v923
    %1043 = vmatpush.msra.mxu0 %v919
    %1044 = vmatpush.msra.mxu0 %v915
    %1045 = vmatpush.msra.mxu0 %v911
    %1046 = vmatpush.msra.mxu0 %v907
    %1047 = vmatpush.msra.mxu0 %v903
    %1048 = vmatpush.msra.mxu0 %v899
    %1049 = vmatmul.f32.gmra.mxu0 %v706
    %v1050 = vpop.f32.mrf.mxu0
    %v1051 = vadd.f32 %v1031, %v1050
    %1052 = vdwg.mxu0
    %1053 = vmatpush.msra.mxu0 %v768
    %1054 = vmatpush.msra.mxu0 %v764
    %1055 = vmatpush.msra.mxu0 %v760
    %1056 = vmatpush.msra.mxu0 %v756
    %1057 = vmatpush.msra.mxu0 %v752
    %1058 = vmatpush.msra.mxu0 %v748
    %1059 = vmatpush.msra.mxu0 %v744
    %1060 = vmatpush.msra.mxu0 %v740
    %1061 = vmatpush.msra.mxu0 %v736
    %1062 = vmatpush.msra.mxu0 %v732
    %1063 = vmatpush.msra.mxu0 %v728
    %1064 = vmatpush.msra.mxu0 %v724
    %1065 = vmatpush.msra.mxu0 %v720
    %1066 = vmatpush.msra.mxu0 %v716
    %1067 = vmatpush.msra.mxu0 %v712
    %1068 = vmatpush.msra.mxu0 %v708
    %1069 = vmatmul.f32.gmra.mxu0 %v703
    %v1070 = vpop.f32.mrf.mxu0
    %v1071 = vadd.f32 %v966, %v1070
    %1072 = vdwg.mxu0
    %1073 = vmatpush.msra.mxu0 %v832
    %1074 = vmatpush.msra.mxu0 %v828
    %1075 = vmatpush.msra.mxu0 %v824
    %1076 = vmatpush.msra.mxu0 %v820
    %1077 = vmatpush.msra.mxu0 %v816
    %1078 = vmatpush.msra.mxu0 %v812
    %1079 = vmatpush.msra.mxu0 %v808
    %1080 = vmatpush.msra.mxu0 %v804
    %1081 = vmatpush.msra.mxu0 %v800
    %1082 = vmatpush.msra.mxu0 %v796
    %1083 = vmatpush.msra.mxu0 %v792
    %1084 = vmatpush.msra.mxu0 %v788
    %1085 = vmatpush.msra.mxu0 %v784
    %1086 = vmatpush.msra.mxu0 %v780
    %1087 = vmatpush.msra.mxu0 %v776
    %1088 = vmatpush.msra.mxu0 %v772
    %1089 = vmatmul.f32.gmra.mxu0 %v704
    %v1090 = vpop.f32.mrf.mxu0
    %v1091 = vadd.f32 %v1071, %v1090
    %1092 = vdwg.mxu0
    %1093 = vmatpush.msra.mxu0 %v896
    %1094 = vmatpush.msra.mxu0 %v892
    %1095 = vmatpush.msra.mxu0 %v888
    %1096 = vmatpush.msra.mxu0 %v884
    %1097 = vmatpush.msra.mxu0 %v880
    %1098 = vmatpush.msra.mxu0 %v876
    %1099 = vmatpush.msra.mxu0 %v872
    %1100 = vmatpush.msra.mxu0 %v868
    %1101 = vmatpush.msra.mxu0 %v864
    %1102 = vmatpush.msra.mxu0 %v860
    %1103 = vmatpush.msra.mxu0 %v856
    %1104 = vmatpush.msra.mxu0 %v852
    %1105 = vmatpush.msra.mxu0 %v848
    %1106 = vmatpush.msra.mxu0 %v844
    %1107 = vmatpush.msra.mxu0 %v840
    %1108 = vmatpush.msra.mxu0 %v836
    %1109 = vmatmul.f32.gmra.mxu0 %v705
    %v1110 = vpop.f32.mrf.mxu0
    %v1111 = vadd.f32 %v1091, %v1110
    %1112 = vdwg.mxu0
    %1113 = vmatpush.msra.mxu0 %v960
    %1114 = vmatpush.msra.mxu0 %v956
    %1115 = vmatpush.msra.mxu0 %v952
    %1116 = vmatpush.msra.mxu0 %v948
    %1117 = vmatpush.msra.mxu0 %v944
    %1118 = vmatpush.msra.mxu0 %v940
    %1119 = vmatpush.msra.mxu0 %v936
    %1120 = vmatpush.msra.mxu0 %v932
    %1121 = vmatpush.msra.mxu0 %v928
    %1122 = vmatpush.msra.mxu0 %v924
    %1123 = vmatpush.msra.mxu0 %v920
    %1124 = vmatpush.msra.mxu0 %v916
    %1125 = vmatpush.msra.mxu0 %v912
    %1126 = vmatpush.msra.mxu0 %v908
    %1127 = vmatpush.msra.mxu0 %v904
    %1128 = vmatpush.msra.mxu0 %v900
    %1129 = vmatmul.f32.gmra.mxu0 %v706
    %v1130 = vpop.f32.mrf.mxu0
    %v1131 = vadd.f32 %v1111, %v1130
    %1132 = vdwg.mxu0
    %1133 = vmatpush.msra.mxu0 %v769
    %1134 = vmatpush.msra.mxu0 %v765
    %1135 = vmatpush.msra.mxu0 %v761
    %1136 = vmatpush.msra.mxu0 %v757
    %1137 = vmatpush.msra.mxu0 %v753
    %1138 = vmatpush.msra.mxu0 %v749
    %1139 = vmatpush.msra.mxu0 %v745
    %1140 = vmatpush.msra.mxu0 %v741
    %1141 = vmatpush.msra.mxu0 %v737
    %1142 = vmatpush.msra.mxu0 %v733
    %1143 = vmatpush.msra.mxu0 %v729
    %1144 = vmatpush.msra.mxu0 %v725
    %1145 = vmatpush.msra.mxu0 %v721
    %1146 = vmatpush.msra.mxu0 %v717
    %1147 = vmatpush.msra.mxu0 %v713
    %1148 = vmatpush.msra.mxu0 %v709
    %1149 = vmatmul.f32.gmra.mxu0 %v703
    %v1150 = vpop.f32.mrf.mxu0
    %v1151 = vadd.f32 %v967, %v1150
    %1152 = vdwg.mxu0
    %1153 = vmatpush.msra.mxu0 %v833
    %1154 = vmatpush.msra.mxu0 %v829
    %1155 = vmatpush.msra.mxu0 %v825
    %1156 = vmatpush.msra.mxu0 %v821
    %1157 = vmatpush.msra.mxu0 %v817
    %1158 = vmatpush.msra.mxu0 %v813
    %1159 = vmatpush.msra.mxu0 %v809
    %1160 = vmatpush.msra.mxu0 %v805
    %1161 = vmatpush.msra.mxu0 %v801
    %1162 = vmatpush.msra.mxu0 %v797
    %1163 = vmatpush.msra.mxu0 %v793
    %1164 = vmatpush.msra.mxu0 %v789
    %1165 = vmatpush.msra.mxu0 %v785
    %1166 = vmatpush.msra.mxu0 %v781
    %1167 = vmatpush.msra.mxu0 %v777
    %1168 = vmatpush.msra.mxu0 %v773
    %1169 = vmatmul.f32.gmra.mxu0 %v704
    %v1170 = vpop.f32.mrf.mxu0
    %v1171 = vadd.f32 %v1151, %v1170
    %1172 = vdwg.mxu0
    %1173 = vmatpush.msra.mxu0 %v897
    %1174 = vmatpush.msra.mxu0 %v893
    %1175 = vmatpush.msra.mxu0 %v889
    %1176 = vmatpush.msra.mxu0 %v885
    %1177 = vmatpush.msra.mxu0 %v881
    %1178 = vmatpush.msra.mxu0 %v877
    %1179 = vmatpush.msra.mxu0 %v873
    %1180 = vmatpush.msra.mxu0 %v869
    %1181 = vmatpush.msra.mxu0 %v865
    %1182 = vmatpush.msra.mxu0 %v861
    %1183 = vmatpush.msra.mxu0 %v857
    %1184 = vmatpush.msra.mxu0 %v853
    %1185 = vmatpush.msra.mxu0 %v849
    %1186 = vmatpush.msra.mxu0 %v845
    %1187 = vmatpush.msra.mxu0 %v841
    %1188 = vmatpush.msra.mxu0 %v837
    %1189 = vmatmul.f32.gmra.mxu0 %v705
    %v1190 = vpop.f32.mrf.mxu0
    %v1191 = vadd.f32 %v1171, %v1190
    %1192 = vdwg.mxu0
    %1193 = vmatpush.msra.mxu0 %v961
    %1194 = vmatpush.msra.mxu0 %v957
    %1195 = vmatpush.msra.mxu0 %v953
    %1196 = vmatpush.msra.mxu0 %v949
    %1197 = vmatpush.msra.mxu0 %v945
    %1198 = vmatpush.msra.mxu0 %v941
    %1199 = vmatpush.msra.mxu0 %v937
    %1200 = vmatpush.msra.mxu0 %v933
    %1201 = vmatpush.msra.mxu0 %v929
    %1202 = vmatpush.msra.mxu0 %v925
    %1203 = vmatpush.msra.mxu0 %v921
    %1204 = vmatpush.msra.mxu0 %v917
    %1205 = vmatpush.msra.mxu0 %v913
    %1206 = vmatpush.msra.mxu0 %v909
    %1207 = vmatpush.msra.mxu0 %v905
    %1208 = vmatpush.msra.mxu0 %v901
    %1209 = vmatmul.f32.gmra.mxu0 %v706
    %v1210 = vpop.f32.mrf.mxu0
    %v1211 = vadd.f32 %v1191, %v1210
    %1212 = vdwg.mxu0
    %1213 = vmatpush.msra.mxu0 %v770
    %1214 = vmatpush.msra.mxu0 %v766
    %1215 = vmatpush.msra.mxu0 %v762
    %1216 = vmatpush.msra.mxu0 %v758
    %1217 = vmatpush.msra.mxu0 %v754
    %1218 = vmatpush.msra.mxu0 %v750
    %1219 = vmatpush.msra.mxu0 %v746
    %1220 = vmatpush.msra.mxu0 %v742
    %1221 = vmatpush.msra.mxu0 %v738
    %1222 = vmatpush.msra.mxu0 %v734
    %1223 = vmatpush.msra.mxu0 %v730
    %1224 = vmatpush.msra.mxu0 %v726
    %1225 = vmatpush.msra.mxu0 %v722
    %1226 = vmatpush.msra.mxu0 %v718
    %1227 = vmatpush.msra.mxu0 %v714
    %1228 = vmatpush.msra.mxu0 %v710
    %1229 = vmatmul.f32.gmra.mxu0 %v703
    %v1230 = vpop.f32.mrf.mxu0
    %v1231 = vadd.f32 %v968, %v1230
    %1232 = vdwg.mxu0
    %1233 = vmatpush.msra.mxu0 %v834
    %1234 = vmatpush.msra.mxu0 %v830
    %1235 = vmatpush.msra.mxu0 %v826
    %1236 = vmatpush.msra.mxu0 %v822
    %1237 = vmatpush.msra.mxu0 %v818
    %1238 = vmatpush.msra.mxu0 %v814
    %1239 = vmatpush.msra.mxu0 %v810
    %1240 = vmatpush.msra.mxu0 %v806
    %1241 = vmatpush.msra.mxu0 %v802
    %1242 = vmatpush.msra.mxu0 %v798
    %1243 = vmatpush.msra.mxu0 %v794
    %1244 = vmatpush.msra.mxu0 %v790
    %1245 = vmatpush.msra.mxu0 %v786
    %1246 = vmatpush.msra.mxu0 %v782
    %1247 = vmatpush.msra.mxu0 %v778
    %1248 = vmatpush.msra.mxu0 %v774
    %1249 = vmatmul.f32.gmra.mxu0 %v704
    %v1250 = vpop.f32.mrf.mxu0
    %v1251 = vadd.f32 %v1231, %v1250
    %1252 = vdwg.mxu0
    %1253 = vmatpush.msra.mxu0 %v898
    %1254 = vmatpush.msra.mxu0 %v894
    %1255 = vmatpush.msra.mxu0 %v890
    %1256 = vmatpush.msra.mxu0 %v886
    %1257 = vmatpush.msra.mxu0 %v882
    %1258 = vmatpush.msra.mxu0 %v878
    %1259 = vmatpush.msra.mxu0 %v874
    %1260 = vmatpush.msra.mxu0 %v870
    %1261 = vmatpush.msra.mxu0 %v866
    %1262 = vmatpush.msra.mxu0 %v862
    %1263 = vmatpush.msra.mxu0 %v858
    %1264 = vmatpush.msra.mxu0 %v854
    %1265 = vmatpush.msra.mxu0 %v850
    %1266 = vmatpush.msra.mxu0 %v846
    %1267 = vmatpush.msra.mxu0 %v842
    %1268 = vmatpush.msra.mxu0 %v838
    %1269 = vmatmul.f32.gmra.mxu0 %v705
    %v1270 = vpop.f32.mrf.mxu0
    %v1271 = vadd.f32 %v1251, %v1270
    %1272 = vdwg.mxu0
    %1273 = vmatpush.msra.mxu0 %v962
    %1274 = vmatpush.msra.mxu0 %v958
    %1275 = vmatpush.msra.mxu0 %v954
    %1276 = vmatpush.msra.mxu0 %v950
    %1277 = vmatpush.msra.mxu0 %v946
    %1278 = vmatpush.msra.mxu0 %v942
    %1279 = vmatpush.msra.mxu0 %v938
    %1280 = vmatpush.msra.mxu0 %v934
    %1281 = vmatpush.msra.mxu0 %v930
    %1282 = vmatpush.msra.mxu0 %v926
    %1283 = vmatpush.msra.mxu0 %v922
    %1284 = vmatpush.msra.mxu0 %v918
    %1285 = vmatpush.msra.mxu0 %v914
    %1286 = vmatpush.msra.mxu0 %v910
    %1287 = vmatpush.msra.mxu0 %v906
    %1288 = vmatpush.msra.mxu0 %v902
    %1289 = vmatmul.f32.gmra.mxu0 %v706
    %v1290 = vpop.f32.mrf.mxu0
    %v1291 = vadd.f32 %v1271, %v1290
    %1292 = vdwg.mxu0
    %vm1293 = vcmp.gt.f32.partialorder %v1051, 0.0
    %vm1294 = vcmp.gt.f32.partialorder %v1131, 0.0
    %vm1295 = vcmp.gt.f32.partialorder %v1211, 0.0
    %vm1296 = vcmp.gt.f32.partialorder %v1291, 0.0
    %v1297 = vmul.f32 %v1051, 0.1
    %v1298 = vmul.f32 %v1131, 0.1
    %v1299 = vmul.f32 %v1211, 0.1
    %v1300 = vmul.f32 %v1291, 0.1
    %v1301 = vsel %vm1293, %v1051, %v1297
    %v1302 = vsel %vm1294, %v1131, %v1298
    %v1303 = vsel %vm1295, %v1211, %v1299
    %v1304 = vsel %vm1296, %v1291, %v1300
    %v1305 = vld [vmem:[#allocation26] sm:$0xff]
    %v1306 = vld [vmem:[#allocation26 + $0x8] sm:$0xff]
    %v1307 = vld [vmem:[#allocation26 + $0x10] sm:$0xff]
    %v1308 = vld [vmem:[#allocation26 + $0x18] sm:$0xff]
    %v1309 = vld [vmem:[#allocation26 + $0x20] sm:$0xff]
    %v1310 = vld [vmem:[#allocation26 + $0x28] sm:$0xff]
    %v1311 = vld [vmem:[#allocation26 + $0x30] sm:$0xff]
    %v1312 = vld [vmem:[#allocation26 + $0x38] sm:$0xff]
    %v1313 = vld [vmem:[#allocation26 + $0x40] sm:$0xff]
    %v1314 = vld [vmem:[#allocation26 + $0x48] sm:$0xff]
    %v1315 = vld [vmem:[#allocation26 + $0x50] sm:$0xff]
    %v1316 = vld [vmem:[#allocation26 + $0x58] sm:$0xff]
    %v1317 = vld [vmem:[#allocation26 + $0x60] sm:$0xff]
    %v1318 = vld [vmem:[#allocation26 + $0x68] sm:$0xff]
    %v1319 = vld [vmem:[#allocation26 + $0x70] sm:$0xff]
    %v1320 = vld [vmem:[#allocation26 + $0x78] sm:$0xff]
    %v1321 = vld [vmem:[#allocation26 + $0x80] sm:$0xff]
    %v1322 = vld [vmem:[#allocation26 + $0x88] sm:$0xff]
    %v1323 = vld [vmem:[#allocation26 + $0x90] sm:$0xff]
    %v1324 = vld [vmem:[#allocation26 + $0x98] sm:$0xff]
    %v1325 = vld [vmem:[#allocation26 + $0xa0] sm:$0xff]
    %v1326 = vld [vmem:[#allocation26 + $0xa8] sm:$0xff]
    %v1327 = vld [vmem:[#allocation26 + $0xb0] sm:$0xff]
    %v1328 = vld [vmem:[#allocation26 + $0xb8] sm:$0xff]
    %v1329 = vld [vmem:[#allocation26 + $0xc0] sm:$0xff]
    %v1330 = vld [vmem:[#allocation26 + $0xc8] sm:$0xff]
    %v1331 = vld [vmem:[#allocation26 + $0xd0] sm:$0xff]
    %v1332 = vld [vmem:[#allocation26 + $0xd8] sm:$0xff]
    %v1333 = vld [vmem:[#allocation26 + $0xe0] sm:$0xff]
    %v1334 = vld [vmem:[#allocation26 + $0xe8] sm:$0xff]
    %v1335 = vld [vmem:[#allocation26 + $0xf0] sm:$0xff]
    %v1336 = vld [vmem:[#allocation26 + $0xf8] sm:$0xff]
    %v1337 = vld [vmem:[#allocation26 + $0x100] sm:$0xff]
    %v1338 = vld [vmem:[#allocation26 + $0x108] sm:$0xff]
    %v1339 = vld [vmem:[#allocation26 + $0x110] sm:$0xff]
    %v1340 = vld [vmem:[#allocation26 + $0x118] sm:$0xff]
    %v1341 = vld [vmem:[#allocation26 + $0x120] sm:$0xff]
    %v1342 = vld [vmem:[#allocation26 + $0x128] sm:$0xff]
    %v1343 = vld [vmem:[#allocation26 + $0x130] sm:$0xff]
    %v1344 = vld [vmem:[#allocation26 + $0x138] sm:$0xff]
    %v1345 = vld [vmem:[#allocation26 + $0x140] sm:$0xff]
    %v1346 = vld [vmem:[#allocation26 + $0x148] sm:$0xff]
    %v1347 = vld [vmem:[#allocation26 + $0x150] sm:$0xff]
    %v1348 = vld [vmem:[#allocation26 + $0x158] sm:$0xff]
    %v1349 = vld [vmem:[#allocation26 + $0x160] sm:$0xff]
    %v1350 = vld [vmem:[#allocation26 + $0x168] sm:$0xff]
    %v1351 = vld [vmem:[#allocation26 + $0x170] sm:$0xff]
    %v1352 = vld [vmem:[#allocation26 + $0x178] sm:$0xff]
    %v1353 = vld [vmem:[#allocation26 + $0x180] sm:$0xff]
    %v1354 = vld [vmem:[#allocation26 + $0x188] sm:$0xff]
    %v1355 = vld [vmem:[#allocation26 + $0x190] sm:$0xff]
    %v1356 = vld [vmem:[#allocation26 + $0x198] sm:$0xff]
    %v1357 = vld [vmem:[#allocation26 + $0x1a0] sm:$0xff]
    %v1358 = vld [vmem:[#allocation26 + $0x1a8] sm:$0xff]
    %v1359 = vld [vmem:[#allocation26 + $0x1b0] sm:$0xff]
    %v1360 = vld [vmem:[#allocation26 + $0x1b8] sm:$0xff]
    %v1361 = vld [vmem:[#allocation26 + $0x1c0] sm:$0xff]
    %v1362 = vld [vmem:[#allocation26 + $0x1c8] sm:$0xff]
    %v1363 = vld [vmem:[#allocation26 + $0x1d0] sm:$0xff]
    %v1364 = vld [vmem:[#allocation26 + $0x1d8] sm:$0xff]
    %v1365 = vld [vmem:[#allocation26 + $0x1e0] sm:$0xff]
    %v1366 = vld [vmem:[#allocation26 + $0x1e8] sm:$0xff]
    %v1367 = vld [vmem:[#allocation26 + $0x1f0] sm:$0xff]
    %v1368 = vld [vmem:[#allocation26 + $0x1f8] sm:$0xff]
    %v1369 = vld [vmem:[#allocation26 + $0x200] sm:$0xff]
    %v1370 = vld [vmem:[#allocation26 + $0x208] sm:$0xff]
    %v1371 = vld [vmem:[#allocation26 + $0x210] sm:$0xff]
    %v1372 = vld [vmem:[#allocation26 + $0x218] sm:$0xff]
    %v1373 = vld [vmem:[#allocation26 + $0x220] sm:$0xff]
    %v1374 = vld [vmem:[#allocation26 + $0x228] sm:$0xff]
    %v1375 = vld [vmem:[#allocation26 + $0x230] sm:$0xff]
    %v1376 = vld [vmem:[#allocation26 + $0x238] sm:$0xff]
    %v1377 = vld [vmem:[#allocation26 + $0x240] sm:$0xff]
    %v1378 = vld [vmem:[#allocation26 + $0x248] sm:$0xff]
    %v1379 = vld [vmem:[#allocation26 + $0x250] sm:$0xff]
    %v1380 = vld [vmem:[#allocation26 + $0x258] sm:$0xff]
    %v1381 = vld [vmem:[#allocation26 + $0x260] sm:$0xff]
    %v1382 = vld [vmem:[#allocation26 + $0x268] sm:$0xff]
    %v1383 = vld [vmem:[#allocation26 + $0x270] sm:$0xff]
    %v1384 = vld [vmem:[#allocation26 + $0x278] sm:$0xff]
    %v1385 = vld [vmem:[#allocation26 + $0x280] sm:$0xff]
    %v1386 = vld [vmem:[#allocation26 + $0x288] sm:$0xff]
    %v1387 = vld [vmem:[#allocation26 + $0x290] sm:$0xff]
    %v1388 = vld [vmem:[#allocation26 + $0x298] sm:$0xff]
    %v1389 = vld [vmem:[#allocation26 + $0x2a0] sm:$0xff]
    %v1390 = vld [vmem:[#allocation26 + $0x2a8] sm:$0xff]
    %v1391 = vld [vmem:[#allocation26 + $0x2b0] sm:$0xff]
    %v1392 = vld [vmem:[#allocation26 + $0x2b8] sm:$0xff]
    %v1393 = vld [vmem:[#allocation26 + $0x2c0] sm:$0xff]
    %v1394 = vld [vmem:[#allocation26 + $0x2c8] sm:$0xff]
    %v1395 = vld [vmem:[#allocation26 + $0x2d0] sm:$0xff]
    %v1396 = vld [vmem:[#allocation26 + $0x2d8] sm:$0xff]
    %v1397 = vld [vmem:[#allocation26 + $0x2e0] sm:$0xff]
    %v1398 = vld [vmem:[#allocation26 + $0x2e8] sm:$0xff]
    %v1399 = vld [vmem:[#allocation26 + $0x2f0] sm:$0xff]
    %v1400 = vld [vmem:[#allocation26 + $0x2f8] sm:$0xff]
    %v1401 = vld [vmem:[#allocation26 + $0x300] sm:$0xff]
    %v1402 = vld [vmem:[#allocation26 + $0x308] sm:$0xff]
    %v1403 = vld [vmem:[#allocation26 + $0x310] sm:$0xff]
    %v1404 = vld [vmem:[#allocation26 + $0x318] sm:$0xff]
    %v1405 = vld [vmem:[#allocation26 + $0x320] sm:$0xff]
    %v1406 = vld [vmem:[#allocation26 + $0x328] sm:$0xff]
    %v1407 = vld [vmem:[#allocation26 + $0x330] sm:$0xff]
    %v1408 = vld [vmem:[#allocation26 + $0x338] sm:$0xff]
    %v1409 = vld [vmem:[#allocation26 + $0x340] sm:$0xff]
    %v1410 = vld [vmem:[#allocation26 + $0x348] sm:$0xff]
    %v1411 = vld [vmem:[#allocation26 + $0x350] sm:$0xff]
    %v1412 = vld [vmem:[#allocation26 + $0x358] sm:$0xff]
    %v1413 = vld [vmem:[#allocation26 + $0x360] sm:$0xff]
    %v1414 = vld [vmem:[#allocation26 + $0x368] sm:$0xff]
    %v1415 = vld [vmem:[#allocation26 + $0x370] sm:$0xff]
    %v1416 = vld [vmem:[#allocation26 + $0x378] sm:$0xff]
    %v1417 = vld [vmem:[#allocation26 + $0x380] sm:$0xff]
    %v1418 = vld [vmem:[#allocation26 + $0x388] sm:$0xff]
    %v1419 = vld [vmem:[#allocation26 + $0x390] sm:$0xff]
    %v1420 = vld [vmem:[#allocation26 + $0x398] sm:$0xff]
    %v1421 = vld [vmem:[#allocation26 + $0x3a0] sm:$0xff]
    %v1422 = vld [vmem:[#allocation26 + $0x3a8] sm:$0xff]
    %v1423 = vld [vmem:[#allocation26 + $0x3b0] sm:$0xff]
    %v1424 = vld [vmem:[#allocation26 + $0x3b8] sm:$0xff]
    %v1425 = vld [vmem:[#allocation26 + $0x3c0] sm:$0xff]
    %v1426 = vld [vmem:[#allocation26 + $0x3c8] sm:$0xff]
    %v1427 = vld [vmem:[#allocation26 + $0x3d0] sm:$0xff]
    %v1428 = vld [vmem:[#allocation26 + $0x3d8] sm:$0xff]
    %v1429 = vld [vmem:[#allocation26 + $0x3e0] sm:$0xff]
    %v1430 = vld [vmem:[#allocation26 + $0x3e8] sm:$0xff]
    %v1431 = vld [vmem:[#allocation26 + $0x3f0] sm:$0xff]
    %v1432 = vld [vmem:[#allocation26 + $0x3f8] sm:$0xff]
    %v1433 = vld [vmem:[#allocation26 + $0x400] sm:$0xff]
    %v1434 = vld [vmem:[#allocation26 + $0x408] sm:$0xff]
    %v1435 = vld [vmem:[#allocation26 + $0x410] sm:$0xff]
    %v1436 = vld [vmem:[#allocation26 + $0x418] sm:$0xff]
    %v1437 = vld [vmem:[#allocation26 + $0x420] sm:$0xff]
    %v1438 = vld [vmem:[#allocation26 + $0x428] sm:$0xff]
    %v1439 = vld [vmem:[#allocation26 + $0x430] sm:$0xff]
    %v1440 = vld [vmem:[#allocation26 + $0x438] sm:$0xff]
    %v1441 = vld [vmem:[#allocation26 + $0x440] sm:$0xff]
    %v1442 = vld [vmem:[#allocation26 + $0x448] sm:$0xff]
    %v1443 = vld [vmem:[#allocation26 + $0x450] sm:$0xff]
    %v1444 = vld [vmem:[#allocation26 + $0x458] sm:$0xff]
    %v1445 = vld [vmem:[#allocation26 + $0x460] sm:$0xff]
    %v1446 = vld [vmem:[#allocation26 + $0x468] sm:$0xff]
    %v1447 = vld [vmem:[#allocation26 + $0x470] sm:$0xff]
    %v1448 = vld [vmem:[#allocation26 + $0x478] sm:$0xff]
    %v1449 = vld [vmem:[#allocation26 + $0x480] sm:$0xff]
    %v1450 = vld [vmem:[#allocation26 + $0x488] sm:$0xff]
    %v1451 = vld [vmem:[#allocation26 + $0x490] sm:$0xff]
    %v1452 = vld [vmem:[#allocation26 + $0x498] sm:$0xff]
    %v1453 = vld [vmem:[#allocation26 + $0x4a0] sm:$0xff]
    %v1454 = vld [vmem:[#allocation26 + $0x4a8] sm:$0xff]
    %v1455 = vld [vmem:[#allocation26 + $0x4b0] sm:$0xff]
    %v1456 = vld [vmem:[#allocation26 + $0x4b8] sm:$0xff]
    %v1457 = vld [vmem:[#allocation26 + $0x4c0] sm:$0xff]
    %v1458 = vld [vmem:[#allocation26 + $0x4c8] sm:$0xff]
    %v1459 = vld [vmem:[#allocation26 + $0x4d0] sm:$0xff]
    %v1460 = vld [vmem:[#allocation26 + $0x4d8] sm:$0xff]
    %v1461 = vld [vmem:[#allocation26 + $0x4e0] sm:$0xff]
    %v1462 = vld [vmem:[#allocation26 + $0x4e8] sm:$0xff]
    %v1463 = vld [vmem:[#allocation26 + $0x4f0] sm:$0xff]
    %v1464 = vld [vmem:[#allocation26 + $0x4f8] sm:$0xff]
    %v1465 = vld [vmem:[#allocation26 + $0x500] sm:$0xff]
    %v1466 = vld [vmem:[#allocation26 + $0x508] sm:$0xff]
    %v1467 = vld [vmem:[#allocation26 + $0x510] sm:$0xff]
    %v1468 = vld [vmem:[#allocation26 + $0x518] sm:$0xff]
    %v1469 = vld [vmem:[#allocation26 + $0x520] sm:$0xff]
    %v1470 = vld [vmem:[#allocation26 + $0x528] sm:$0xff]
    %v1471 = vld [vmem:[#allocation26 + $0x530] sm:$0xff]
    %v1472 = vld [vmem:[#allocation26 + $0x538] sm:$0xff]
    %v1473 = vld [vmem:[#allocation26 + $0x540] sm:$0xff]
    %v1474 = vld [vmem:[#allocation26 + $0x548] sm:$0xff]
    %v1475 = vld [vmem:[#allocation26 + $0x550] sm:$0xff]
    %v1476 = vld [vmem:[#allocation26 + $0x558] sm:$0xff]
    %v1477 = vld [vmem:[#allocation26 + $0x560] sm:$0xff]
    %v1478 = vld [vmem:[#allocation26 + $0x568] sm:$0xff]
    %v1479 = vld [vmem:[#allocation26 + $0x570] sm:$0xff]
    %v1480 = vld [vmem:[#allocation26 + $0x578] sm:$0xff]
    %v1481 = vld [vmem:[#allocation26 + $0x580] sm:$0xff]
    %v1482 = vld [vmem:[#allocation26 + $0x588] sm:$0xff]
    %v1483 = vld [vmem:[#allocation26 + $0x590] sm:$0xff]
    %v1484 = vld [vmem:[#allocation26 + $0x598] sm:$0xff]
    %v1485 = vld [vmem:[#allocation26 + $0x5a0] sm:$0xff]
    %v1486 = vld [vmem:[#allocation26 + $0x5a8] sm:$0xff]
    %v1487 = vld [vmem:[#allocation26 + $0x5b0] sm:$0xff]
    %v1488 = vld [vmem:[#allocation26 + $0x5b8] sm:$0xff]
    %v1489 = vld [vmem:[#allocation26 + $0x5c0] sm:$0xff]
    %v1490 = vld [vmem:[#allocation26 + $0x5c8] sm:$0xff]
    %v1491 = vld [vmem:[#allocation26 + $0x5d0] sm:$0xff]
    %v1492 = vld [vmem:[#allocation26 + $0x5d8] sm:$0xff]
    %v1493 = vld [vmem:[#allocation26 + $0x5e0] sm:$0xff]
    %v1494 = vld [vmem:[#allocation26 + $0x5e8] sm:$0xff]
    %v1495 = vld [vmem:[#allocation26 + $0x5f0] sm:$0xff]
    %v1496 = vld [vmem:[#allocation26 + $0x5f8] sm:$0xff]
    %v1497 = vld [vmem:[#allocation26 + $0x600] sm:$0xff]
    %v1498 = vld [vmem:[#allocation26 + $0x608] sm:$0xff]
    %v1499 = vld [vmem:[#allocation26 + $0x610] sm:$0xff]
    %v1500 = vld [vmem:[#allocation26 + $0x618] sm:$0xff]
    %v1501 = vld [vmem:[#allocation26 + $0x620] sm:$0xff]
    %v1502 = vld [vmem:[#allocation26 + $0x628] sm:$0xff]
    %v1503 = vld [vmem:[#allocation26 + $0x630] sm:$0xff]
    %v1504 = vld [vmem:[#allocation26 + $0x638] sm:$0xff]
    %v1505 = vld [vmem:[#allocation26 + $0x640] sm:$0xff]
    %v1506 = vld [vmem:[#allocation26 + $0x648] sm:$0xff]
    %v1507 = vld [vmem:[#allocation26 + $0x650] sm:$0xff]
    %v1508 = vld [vmem:[#allocation26 + $0x658] sm:$0xff]
    %v1509 = vld [vmem:[#allocation26 + $0x660] sm:$0xff]
    %v1510 = vld [vmem:[#allocation26 + $0x668] sm:$0xff]
    %v1511 = vld [vmem:[#allocation26 + $0x670] sm:$0xff]
    %v1512 = vld [vmem:[#allocation26 + $0x678] sm:$0xff]
    %v1513 = vld [vmem:[#allocation26 + $0x680] sm:$0xff]
    %v1514 = vld [vmem:[#allocation26 + $0x688] sm:$0xff]
    %v1515 = vld [vmem:[#allocation26 + $0x690] sm:$0xff]
    %v1516 = vld [vmem:[#allocation26 + $0x698] sm:$0xff]
    %v1517 = vld [vmem:[#allocation26 + $0x6a0] sm:$0xff]
    %v1518 = vld [vmem:[#allocation26 + $0x6a8] sm:$0xff]
    %v1519 = vld [vmem:[#allocation26 + $0x6b0] sm:$0xff]
    %v1520 = vld [vmem:[#allocation26 + $0x6b8] sm:$0xff]
    %v1521 = vld [vmem:[#allocation26 + $0x6c0] sm:$0xff]
    %v1522 = vld [vmem:[#allocation26 + $0x6c8] sm:$0xff]
    %v1523 = vld [vmem:[#allocation26 + $0x6d0] sm:$0xff]
    %v1524 = vld [vmem:[#allocation26 + $0x6d8] sm:$0xff]
    %v1525 = vld [vmem:[#allocation26 + $0x6e0] sm:$0xff]
    %v1526 = vld [vmem:[#allocation26 + $0x6e8] sm:$0xff]
    %v1527 = vld [vmem:[#allocation26 + $0x6f0] sm:$0xff]
    %v1528 = vld [vmem:[#allocation26 + $0x6f8] sm:$0xff]
    %v1529 = vld [vmem:[#allocation26 + $0x700] sm:$0xff]
    %v1530 = vld [vmem:[#allocation26 + $0x708] sm:$0xff]
    %v1531 = vld [vmem:[#allocation26 + $0x710] sm:$0xff]
    %v1532 = vld [vmem:[#allocation26 + $0x718] sm:$0xff]
    %v1533 = vld [vmem:[#allocation26 + $0x720] sm:$0xff]
    %v1534 = vld [vmem:[#allocation26 + $0x728] sm:$0xff]
    %v1535 = vld [vmem:[#allocation26 + $0x730] sm:$0xff]
    %v1536 = vld [vmem:[#allocation26 + $0x738] sm:$0xff]
    %v1537 = vld [vmem:[#allocation26 + $0x740] sm:$0xff]
    %v1538 = vld [vmem:[#allocation26 + $0x748] sm:$0xff]
    %v1539 = vld [vmem:[#allocation26 + $0x750] sm:$0xff]
    %v1540 = vld [vmem:[#allocation26 + $0x758] sm:$0xff]
    %v1541 = vld [vmem:[#allocation26 + $0x760] sm:$0xff]
    %v1542 = vld [vmem:[#allocation26 + $0x768] sm:$0xff]
    %v1543 = vld [vmem:[#allocation26 + $0x770] sm:$0xff]
    %v1544 = vld [vmem:[#allocation26 + $0x778] sm:$0xff]
    %v1545 = vld [vmem:[#allocation26 + $0x780] sm:$0xff]
    %v1546 = vld [vmem:[#allocation26 + $0x788] sm:$0xff]
    %v1547 = vld [vmem:[#allocation26 + $0x790] sm:$0xff]
    %v1548 = vld [vmem:[#allocation26 + $0x798] sm:$0xff]
    %v1549 = vld [vmem:[#allocation26 + $0x7a0] sm:$0xff]
    %v1550 = vld [vmem:[#allocation26 + $0x7a8] sm:$0xff]
    %v1551 = vld [vmem:[#allocation26 + $0x7b0] sm:$0xff]
    %v1552 = vld [vmem:[#allocation26 + $0x7b8] sm:$0xff]
    %v1553 = vld [vmem:[#allocation26 + $0x7c0] sm:$0xff]
    %v1554 = vld [vmem:[#allocation26 + $0x7c8] sm:$0xff]
    %v1555 = vld [vmem:[#allocation26 + $0x7d0] sm:$0xff]
    %v1556 = vld [vmem:[#allocation26 + $0x7d8] sm:$0xff]
    %v1557 = vld [vmem:[#allocation26 + $0x7e0] sm:$0xff]
    %v1558 = vld [vmem:[#allocation26 + $0x7e8] sm:$0xff]
    %v1559 = vld [vmem:[#allocation26 + $0x7f0] sm:$0xff]
    %v1560 = vld [vmem:[#allocation26 + $0x7f8] sm:$0xff]
    %v1561 = vld [vmem:[#allocation27] sm:$0xf]
    %v1563 = vperm.slane %v1561, 0
    %v1564 = vperm.slane %v1561, 1
    %v1565 = vperm.slane %v1561, 2
    %v1566 = vperm.slane %v1561, 3
    %1571 = vmatpush.msra.mxu0 %v1365
    %1572 = vmatpush.msra.mxu0 %v1361
    %1573 = vmatpush.msra.mxu0 %v1357
    %1574 = vmatpush.msra.mxu0 %v1353
    %1575 = vmatpush.msra.mxu0 %v1349
    %1576 = vmatpush.msra.mxu0 %v1345
    %1577 = vmatpush.msra.mxu0 %v1341
    %1578 = vmatpush.msra.mxu0 %v1337
    %1579 = vmatpush.msra.mxu0 %v1333
    %1580 = vmatpush.msra.mxu0 %v1329
    %1581 = vmatpush.msra.mxu0 %v1325
    %1582 = vmatpush.msra.mxu0 %v1321
    %1583 = vmatpush.msra.mxu0 %v1317
    %1584 = vmatpush.msra.mxu0 %v1313
    %1585 = vmatpush.msra.mxu0 %v1309
    %1586 = vmatpush.msra.mxu0 %v1305
    %1587 = vmatmul.f32.gmra.mxu0 %v1301
    %v1588 = vpop.f32.mrf.mxu0
    %v1589 = vadd.f32 %v1563, %v1588
    %1590 = vdwg.mxu0
    %1591 = vmatpush.msra.mxu0 %v1429
    %1592 = vmatpush.msra.mxu0 %v1425
    %1593 = vmatpush.msra.mxu0 %v1421
    %1594 = vmatpush.msra.mxu0 %v1417
    %1595 = vmatpush.msra.mxu0 %v1413
    %1596 = vmatpush.msra.mxu0 %v1409
    %1597 = vmatpush.msra.mxu0 %v1405
    %1598 = vmatpush.msra.mxu0 %v1401
    %1599 = vmatpush.msra.mxu0 %v1397
    %1600 = vmatpush.msra.mxu0 %v1393
    %1601 = vmatpush.msra.mxu0 %v1389
    %1602 = vmatpush.msra.mxu0 %v1385
    %1603 = vmatpush.msra.mxu0 %v1381
    %1604 = vmatpush.msra.mxu0 %v1377
    %1605 = vmatpush.msra.mxu0 %v1373
    %1606 = vmatpush.msra.mxu0 %v1369
    %1607 = vmatmul.f32.gmra.mxu0 %v1302
    %v1608 = vpop.f32.mrf.mxu0
    %v1609 = vadd.f32 %v1589, %v1608
    %1610 = vdwg.mxu0
    %1611 = vmatpush.msra.mxu0 %v1493
    %1612 = vmatpush.msra.mxu0 %v1489
    %1613 = vmatpush.msra.mxu0 %v1485
    %1614 = vmatpush.msra.mxu0 %v1481
    %1615 = vmatpush.msra.mxu0 %v1477
    %1616 = vmatpush.msra.mxu0 %v1473
    %1617 = vmatpush.msra.mxu0 %v1469
    %1618 = vmatpush.msra.mxu0 %v1465
    %1619 = vmatpush.msra.mxu0 %v1461
    %1620 = vmatpush.msra.mxu0 %v1457
    %1621 = vmatpush.msra.mxu0 %v1453
    %1622 = vmatpush.msra.mxu0 %v1449
    %1623 = vmatpush.msra.mxu0 %v1445
    %1624 = vmatpush.msra.mxu0 %v1441
    %1625 = vmatpush.msra.mxu0 %v1437
    %1626 = vmatpush.msra.mxu0 %v1433
    %1627 = vmatmul.f32.gmra.mxu0 %v1303
    %v1628 = vpop.f32.mrf.mxu0
    %v1629 = vadd.f32 %v1609, %v1628
    %1630 = vdwg.mxu0
    %1631 = vmatpush.msra.mxu0 %v1557
    %1632 = vmatpush.msra.mxu0 %v1553
    %1633 = vmatpush.msra.mxu0 %v1549
    %1634 = vmatpush.msra.mxu0 %v1545
    %1635 = vmatpush.msra.mxu0 %v1541
    %1636 = vmatpush.msra.mxu0 %v1537
    %1637 = vmatpush.msra.mxu0 %v1533
    %1638 = vmatpush.msra.mxu0 %v1529
    %1639 = vmatpush.msra.mxu0 %v1525
    %1640 = vmatpush.msra.mxu0 %v1521
    %1641 = vmatpush.msra.mxu0 %v1517
    %1642 = vmatpush.msra.mxu0 %v1513
    %1643 = vmatpush.msra.mxu0 %v1509
    %1644 = vmatpush.msra.mxu0 %v1505
    %1645 = vmatpush.msra.mxu0 %v1501
    %1646 = vmatpush.msra.mxu0 %v1497
    %1647 = vmatmul.f32.gmra.mxu0 %v1304
    %v1648 = vpop.f32.mrf.mxu0
    %v1649 = vadd.f32 %v1629, %v1648
    %1650 = vdwg.mxu0
    %1651 = vmatpush.msra.mxu0 %v1366
    %1652 = vmatpush.msra.mxu0 %v1362
    %1653 = vmatpush.msra.mxu0 %v1358
    %1654 = vmatpush.msra.mxu0 %v1354
    %1655 = vmatpush.msra.mxu0 %v1350
    %1656 = vmatpush.msra.mxu0 %v1346
    %1657 = vmatpush.msra.mxu0 %v1342
    %1658 = vmatpush.msra.mxu0 %v1338
    %1659 = vmatpush.msra.mxu0 %v1334
    %1660 = vmatpush.msra.mxu0 %v1330
    %1661 = vmatpush.msra.mxu0 %v1326
    %1662 = vmatpush.msra.mxu0 %v1322
    %1663 = vmatpush.msra.mxu0 %v1318
    %1664 = vmatpush.msra.mxu0 %v1314
    %1665 = vmatpush.msra.mxu0 %v1310
    %1666 = vmatpush.msra.mxu0 %v1306
    %1667 = vmatmul.f32.gmra.mxu0 %v1301
    %v1668 = vpop.f32.mrf.mxu0
    %v1669 = vadd.f32 %v1564, %v1668
    %1670 = vdwg.mxu0
    %1671 = vmatpush.msra.mxu0 %v1430
    %1672 = vmatpush.msra.mxu0 %v1426
    %1673 = vmatpush.msra.mxu0 %v1422
    %1674 = vmatpush.msra.mxu0 %v1418
    %1675 = vmatpush.msra.mxu0 %v1414
    %1676 = vmatpush.msra.mxu0 %v1410
    %1677 = vmatpush.msra.mxu0 %v1406
    %1678 = vmatpush.msra.mxu0 %v1402
    %1679 = vmatpush.msra.mxu0 %v1398
    %1680 = vmatpush.msra.mxu0 %v1394
    %1681 = vmatpush.msra.mxu0 %v1390
    %1682 = vmatpush.msra.mxu0 %v1386
    %1683 = vmatpush.msra.mxu0 %v1382
    %1684 = vmatpush.msra.mxu0 %v1378
    %1685 = vmatpush.msra.mxu0 %v1374
    %1686 = vmatpush.msra.mxu0 %v1370
    %1687 = vmatmul.f32.gmra.mxu0 %v1302
    %v1688 = vpop.f32.mrf.mxu0
    %v1689 = vadd.f32 %v1669, %v1688
    %1690 = vdwg.mxu0
    %1691 = vmatpush.msra.mxu0 %v1494
    %1692 = vmatpush.msra.mxu0 %v1490
    %1693 = vmatpush.msra.mxu0 %v1486
    %1694 = vmatpush.msra.mxu0 %v1482
    %1695 = vmatpush.msra.mxu0 %v1478
    %1696 = vmatpush.msra.mxu0 %v1474
    %1697 = vmatpush.msra.mxu0 %v1470
    %1698 = vmatpush.msra.mxu0 %v1466
    %1699 = vmatpush.msra.mxu0 %v1462
    %1700 = vmatpush.msra.mxu0 %v1458
    %1701 = vmatpush.msra.mxu0 %v1454
    %1702 = vmatpush.msra.mxu0 %v1450
    %1703 = vmatpush.msra.mxu0 %v1446
    %1704 = vmatpush.msra.mxu0 %v1442
    %1705 = vmatpush.msra.mxu0 %v1438
    %1706 = vmatpush.msra.mxu0 %v1434
    %1707 = vmatmul.f32.gmra.mxu0 %v1303
    %v1708 = vpop.f32.mrf.mxu0
    %v1709 = vadd.f32 %v1689, %v1708
    %1710 = vdwg.mxu0
    %1711 = vmatpush.msra.mxu0 %v1558
    %1712 = vmatpush.msra.mxu0 %v1554
    %1713 = vmatpush.msra.mxu0 %v1550
    %1714 = vmatpush.msra.mxu0 %v1546
    %1715 = vmatpush.msra.mxu0 %v1542
    %1716 = vmatpush.msra.mxu0 %v1538
    %1717 = vmatpush.msra.mxu0 %v1534
    %1718 = vmatpush.msra.mxu0 %v1530
    %1719 = vmatpush.msra.mxu0 %v1526
    %1720 = vmatpush.msra.mxu0 %v1522
    %1721 = vmatpush.msra.mxu0 %v1518
    %1722 = vmatpush.msra.mxu0 %v1514
    %1723 = vmatpush.msra.mxu0 %v1510
    %1724 = vmatpush.msra.mxu0 %v1506
    %1725 = vmatpush.msra.mxu0 %v1502
    %1726 = vmatpush.msra.mxu0 %v1498
    %1727 = vmatmul.f32.gmra.mxu0 %v1304
    %v1728 = vpop.f32.mrf.mxu0
    %v1729 = vadd.f32 %v1709, %v1728
    %1730 = vdwg.mxu0
    %1731 = vmatpush.msra.mxu0 %v1367
    %1732 = vmatpush.msra.mxu0 %v1363
    %1733 = vmatpush.msra.mxu0 %v1359
    %1734 = vmatpush.msra.mxu0 %v1355
    %1735 = vmatpush.msra.mxu0 %v1351
    %1736 = vmatpush.msra.mxu0 %v1347
    %1737 = vmatpush.msra.mxu0 %v1343
    %1738 = vmatpush.msra.mxu0 %v1339
    %1739 = vmatpush.msra.mxu0 %v1335
    %1740 = vmatpush.msra.mxu0 %v1331
    %1741 = vmatpush.msra.mxu0 %v1327
    %1742 = vmatpush.msra.mxu0 %v1323
    %1743 = vmatpush.msra.mxu0 %v1319
    %1744 = vmatpush.msra.mxu0 %v1315
    %1745 = vmatpush.msra.mxu0 %v1311
    %1746 = vmatpush.msra.mxu0 %v1307
    %1747 = vmatmul.f32.gmra.mxu0 %v1301
    %v1748 = vpop.f32.mrf.mxu0
    %v1749 = vadd.f32 %v1565, %v1748
    %1750 = vdwg.mxu0
    %1751 = vmatpush.msra.mxu0 %v1431
    %1752 = vmatpush.msra.mxu0 %v1427
    %1753 = vmatpush.msra.mxu0 %v1423
    %1754 = vmatpush.msra.mxu0 %v1419
    %1755 = vmatpush.msra.mxu0 %v1415
    %1756 = vmatpush.msra.mxu0 %v1411
    %1757 = vmatpush.msra.mxu0 %v1407
    %1758 = vmatpush.msra.mxu0 %v1403
    %1759 = vmatpush.msra.mxu0 %v1399
    %1760 = vmatpush.msra.mxu0 %v1395
    %1761 = vmatpush.msra.mxu0 %v1391
    %1762 = vmatpush.msra.mxu0 %v1387
    %1763 = vmatpush.msra.mxu0 %v1383
    %1764 = vmatpush.msra.mxu0 %v1379
    %1765 = vmatpush.msra.mxu0 %v1375
    %1766 = vmatpush.msra.mxu0 %v1371
    %1767 = vmatmul.f32.gmra.mxu0 %v1302
    %v1768 = vpop.f32.mrf.mxu0
    %v1769 = vadd.f32 %v1749, %v1768
    %1770 = vdwg.mxu0
    %1771 = vmatpush.msra.mxu0 %v1495
    %1772 = vmatpush.msra.mxu0 %v1491
    %1773 = vmatpush.msra.mxu0 %v1487
    %1774 = vmatpush.msra.mxu0 %v1483
    %1775 = vmatpush.msra.mxu0 %v1479
    %1776 = vmatpush.msra.mxu0 %v1475
    %1777 = vmatpush.msra.mxu0 %v1471
    %1778 = vmatpush.msra.mxu0 %v1467
    %1779 = vmatpush.msra.mxu0 %v1463
    %1780 = vmatpush.msra.mxu0 %v1459
    %1781 = vmatpush.msra.mxu0 %v1455
    %1782 = vmatpush.msra.mxu0 %v1451
    %1783 = vmatpush.msra.mxu0 %v1447
    %1784 = vmatpush.msra.mxu0 %v1443
    %1785 = vmatpush.msra.mxu0 %v1439
    %1786 = vmatpush.msra.mxu0 %v1435
    %1787 = vmatmul.f32.gmra.mxu0 %v1303
    %v1788 = vpop.f32.mrf.mxu0
    %v1789 = vadd.f32 %v1769, %v1788
    %1790 = vdwg.mxu0
    %1791 = vmatpush.msra.mxu0 %v1559
    %1792 = vmatpush.msra.mxu0 %v1555
    %1793 = vmatpush.msra.mxu0 %v1551
    %1794 = vmatpush.msra.mxu0 %v1547
    %1795 = vmatpush.msra.mxu0 %v1543
    %1796 = vmatpush.msra.mxu0 %v1539
    %1797 = vmatpush.msra.mxu0 %v1535
    %1798 = vmatpush.msra.mxu0 %v1531
    %1799 = vmatpush.msra.mxu0 %v1527
    %1800 = vmatpush.msra.mxu0 %v1523
    %1801 = vmatpush.msra.mxu0 %v1519
    %1802 = vmatpush.msra.mxu0 %v1515
    %1803 = vmatpush.msra.mxu0 %v1511
    %1804 = vmatpush.msra.mxu0 %v1507
    %1805 = vmatpush.msra.mxu0 %v1503
    %1806 = vmatpush.msra.mxu0 %v1499
    %1807 = vmatmul.f32.gmra.mxu0 %v1304
    %v1808 = vpop.f32.mrf.mxu0
    %v1809 = vadd.f32 %v1789, %v1808
    %1810 = vdwg.mxu0
    %1811 = vmatpush.msra.mxu0 %v1368
    %1812 = vmatpush.msra.mxu0 %v1364
    %1813 = vmatpush.msra.mxu0 %v1360
    %1814 = vmatpush.msra.mxu0 %v1356
    %1815 = vmatpush.msra.mxu0 %v1352
    %1816 = vmatpush.msra.mxu0 %v1348
    %1817 = vmatpush.msra.mxu0 %v1344
    %1818 = vmatpush.msra.mxu0 %v1340
    %1819 = vmatpush.msra.mxu0 %v1336
    %1820 = vmatpush.msra.mxu0 %v1332
    %1821 = vmatpush.msra.mxu0 %v1328
    %1822 = vmatpush.msra.mxu0 %v1324
    %1823 = vmatpush.msra.mxu0 %v1320
    %1824 = vmatpush.msra.mxu0 %v1316
    %1825 = vmatpush.msra.mxu0 %v1312
    %1826 = vmatpush.msra.mxu0 %v1308
    %1827 = vmatmul.f32.gmra.mxu0 %v1301
    %v1828 = vpop.f32.mrf.mxu0
    %v1829 = vadd.f32 %v1566, %v1828
    %1830 = vdwg.mxu0
    %1831 = vmatpush.msra.mxu0 %v1432
    %1832 = vmatpush.msra.mxu0 %v1428
    %1833 = vmatpush.msra.mxu0 %v1424
    %1834 = vmatpush.msra.mxu0 %v1420
    %1835 = vmatpush.msra.mxu0 %v1416
    %1836 = vmatpush.msra.mxu0 %v1412
    %1837 = vmatpush.msra.mxu0 %v1408
    %1838 = vmatpush.msra.mxu0 %v1404
    %1839 = vmatpush.msra.mxu0 %v1400
    %1840 = vmatpush.msra.mxu0 %v1396
    %1841 = vmatpush.msra.mxu0 %v1392
    %1842 = vmatpush.msra.mxu0 %v1388
    %1843 = vmatpush.msra.mxu0 %v1384
    %1844 = vmatpush.msra.mxu0 %v1380
    %1845 = vmatpush.msra.mxu0 %v1376
    %1846 = vmatpush.msra.mxu0 %v1372
    %1847 = vmatmul.f32.gmra.mxu0 %v1302
    %v1848 = vpop.f32.mrf.mxu0
    %v1849 = vadd.f32 %v1829, %v1848
    %1850 = vdwg.mxu0
    %1851 = vmatpush.msra.mxu0 %v1496
    %1852 = vmatpush.msra.mxu0 %v1492
    %1853 = vmatpush.msra.mxu0 %v1488
    %1854 = vmatpush.msra.mxu0 %v1484
    %1855 = vmatpush.msra.mxu0 %v1480
    %1856 = vmatpush.msra.mxu0 %v1476
    %1857 = vmatpush.msra.mxu0 %v1472
    %1858 = vmatpush.msra.mxu0 %v1468
    %1859 = vmatpush.msra.mxu0 %v1464
    %1860 = vmatpush.msra.mxu0 %v1460
    %1861 = vmatpush.msra.mxu0 %v1456
    %1862 = vmatpush.msra.mxu0 %v1452
    %1863 = vmatpush.msra.mxu0 %v1448
    %1864 = vmatpush.msra.mxu0 %v1444
    %1865 = vmatpush.msra.mxu0 %v1440
    %1866 = vmatpush.msra.mxu0 %v1436
    %1867 = vmatmul.f32.gmra.mxu0 %v1303
    %v1868 = vpop.f32.mrf.mxu0
    %v1869 = vadd.f32 %v1849, %v1868
    %1870 = vdwg.mxu0
    %1871 = vmatpush.msra.mxu0 %v1560
    %1872 = vmatpush.msra.mxu0 %v1556
    %1873 = vmatpush.msra.mxu0 %v1552
    %1874 = vmatpush.msra.mxu0 %v1548
    %1875 = vmatpush.msra.mxu0 %v1544
    %1876 = vmatpush.msra.mxu0 %v1540
    %1877 = vmatpush.msra.mxu0 %v1536
    %1878 = vmatpush.msra.mxu0 %v1532
    %1879 = vmatpush.msra.mxu0 %v1528
    %1880 = vmatpush.msra.mxu0 %v1524
    %1881 = vmatpush.msra.mxu0 %v1520
    %1882 = vmatpush.msra.mxu0 %v1516
    %1883 = vmatpush.msra.mxu0 %v1512
    %1884 = vmatpush.msra.mxu0 %v1508
    %1885 = vmatpush.msra.mxu0 %v1504
    %1886 = vmatpush.msra.mxu0 %v1500
    %1887 = vmatmul.f32.gmra.mxu0 %v1304
    %v1888 = vpop.f32.mrf.mxu0
    %v1889 = vadd.f32 %v1869, %v1888
    %1890 = vdwg.mxu0
    %vm1891 = vcmp.gt.f32.partialorder %v1649, 0.0
    %vm1892 = vcmp.gt.f32.partialorder %v1729, 0.0
    %vm1893 = vcmp.gt.f32.partialorder %v1809, 0.0
    %vm1894 = vcmp.gt.f32.partialorder %v1889, 0.0
    %v1895 = vmul.f32 %v1649, 0.1
    %v1896 = vmul.f32 %v1729, 0.1
    %v1897 = vmul.f32 %v1809, 0.1
    %v1898 = vmul.f32 %v1889, 0.1
    %v1899 = vsel %vm1891, %v1649, %v1895
    %v1900 = vsel %vm1892, %v1729, %v1896
    %v1901 = vsel %vm1893, %v1809, %v1897
    %v1902 = vsel %vm1894, %v1889, %v1898
    %1903 = vst [vmem:[#allocation2] sm:$0x1] %v1899
    %1904 = vst [vmem:[#allocation2 + $0x1] sm:$0x1] %v1900
    %1905 = vst [vmem:[#allocation2 + $0x2] sm:$0x1] %v1901
    %1906 = vst [vmem:[#allocation2 + $0x3] sm:$0x1] %v1902
    %1907 = vst [vmem:[#allocation2 + $0x3] sm:$0x2] %v1899
    %1908 = vst [vmem:[#allocation2 + $0x4] sm:$0x2] %v1900
    %1909 = vst [vmem:[#allocation2 + $0x5] sm:$0x2] %v1901
    %1910 = vst [vmem:[#allocation2 + $0x6] sm:$0x2] %v1902
    %v1911 = vld [vmem:[#allocation2] sm:$0xff]
    %v1912 = vld [vmem:[#allocation29] sm:$0xff]
    %v1913 = vld [vmem:[#allocation29 + $0x8] sm:$0xff]
    %v1914 = vld [vmem:[#allocation29 + $0x10] sm:$0xff]
    %v1915 = vld [vmem:[#allocation29 + $0x18] sm:$0xff]
    %v1916 = vld [vmem:[#allocation29 + $0x20] sm:$0xff]
    %v1917 = vld [vmem:[#allocation29 + $0x28] sm:$0xff]
    %v1918 = vld [vmem:[#allocation29 + $0x30] sm:$0xff]
    %v1919 = vld [vmem:[#allocation29 + $0x38] sm:$0xff]
    %v1920 = vld [vmem:[#allocation29 + $0x40] sm:$0xff]
    %v1921 = vld [vmem:[#allocation29 + $0x48] sm:$0xff]
    %v1922 = vld [vmem:[#allocation29 + $0x50] sm:$0xff]
    %v1923 = vld [vmem:[#allocation29 + $0x58] sm:$0xff]
    %v1924 = vld [vmem:[#allocation29 + $0x60] sm:$0xff]
    %v1925 = vld [vmem:[#allocation29 + $0x68] sm:$0xff]
    %v1926 = vld [vmem:[#allocation29 + $0x70] sm:$0xff]
    %v1927 = vld [vmem:[#allocation29 + $0x78] sm:$0xff]
    %v1928 = vld [vmem:[#allocation29 + $0x80] sm:$0xff]
    %v1929 = vld [vmem:[#allocation29 + $0x88] sm:$0xff]
    %v1930 = vld [vmem:[#allocation29 + $0x90] sm:$0xff]
    %v1931 = vld [vmem:[#allocation29 + $0x98] sm:$0xff]
    %v1932 = vld [vmem:[#allocation29 + $0xa0] sm:$0xff]
    %v1933 = vld [vmem:[#allocation29 + $0xa8] sm:$0xff]
    %v1934 = vld [vmem:[#allocation29 + $0xb0] sm:$0xff]
    %v1935 = vld [vmem:[#allocation29 + $0xb8] sm:$0xff]
    %v1936 = vld [vmem:[#allocation29 + $0xc0] sm:$0xff]
    %v1937 = vld [vmem:[#allocation29 + $0xc8] sm:$0xff]
    %v1938 = vld [vmem:[#allocation29 + $0xd0] sm:$0xff]
    %v1939 = vld [vmem:[#allocation29 + $0xd8] sm:$0xff]
    %v1940 = vld [vmem:[#allocation29 + $0xe0] sm:$0xff]
    %v1941 = vld [vmem:[#allocation29 + $0xe8] sm:$0xff]
    %v1942 = vld [vmem:[#allocation29 + $0xf0] sm:$0xff]
    %v1943 = vld [vmem:[#allocation29 + $0xf8] sm:$0xff]
    %v1944 = vld [vmem:[#allocation29 + $0x100] sm:$0xff]
    %v1945 = vld [vmem:[#allocation29 + $0x108] sm:$0xff]
    %v1946 = vld [vmem:[#allocation29 + $0x110] sm:$0xff]
    %v1947 = vld [vmem:[#allocation29 + $0x118] sm:$0xff]
    %v1948 = vld [vmem:[#allocation29 + $0x120] sm:$0xff]
    %v1949 = vld [vmem:[#allocation29 + $0x128] sm:$0xff]
    %v1950 = vld [vmem:[#allocation29 + $0x130] sm:$0xff]
    %v1951 = vld [vmem:[#allocation29 + $0x138] sm:$0xff]
    %v1952 = vld [vmem:[#allocation29 + $0x140] sm:$0xff]
    %v1953 = vld [vmem:[#allocation29 + $0x148] sm:$0xff]
    %v1954 = vld [vmem:[#allocation29 + $0x150] sm:$0xff]
    %v1955 = vld [vmem:[#allocation29 + $0x158] sm:$0xff]
    %v1956 = vld [vmem:[#allocation29 + $0x160] sm:$0xff]
    %v1957 = vld [vmem:[#allocation29 + $0x168] sm:$0xff]
    %v1958 = vld [vmem:[#allocation29 + $0x170] sm:$0xff]
    %v1959 = vld [vmem:[#allocation29 + $0x178] sm:$0xff]
    %v1960 = vld [vmem:[#allocation29 + $0x180] sm:$0xff]
    %v1961 = vld [vmem:[#allocation29 + $0x188] sm:$0xff]
    %v1962 = vld [vmem:[#allocation29 + $0x190] sm:$0xff]
    %v1963 = vld [vmem:[#allocation29 + $0x198] sm:$0xff]
    %v1964 = vld [vmem:[#allocation29 + $0x1a0] sm:$0xff]
    %v1965 = vld [vmem:[#allocation29 + $0x1a8] sm:$0xff]
    %v1966 = vld [vmem:[#allocation29 + $0x1b0] sm:$0xff]
    %v1967 = vld [vmem:[#allocation29 + $0x1b8] sm:$0xff]
    %v1968 = vld [vmem:[#allocation29 + $0x1c0] sm:$0xff]
    %v1969 = vld [vmem:[#allocation29 + $0x1c8] sm:$0xff]
    %v1970 = vld [vmem:[#allocation29 + $0x1d0] sm:$0xff]
    %v1971 = vld [vmem:[#allocation29 + $0x1d8] sm:$0xff]
    %v1972 = vld [vmem:[#allocation29 + $0x1e0] sm:$0xff]
    %v1973 = vld [vmem:[#allocation29 + $0x1e8] sm:$0xff]
    %v1974 = vld [vmem:[#allocation29 + $0x1f0] sm:$0xff]
    %v1975 = vld [vmem:[#allocation29 + $0x1f8] sm:$0xff]
    %v1976 = vld [vmem:[#allocation29 + $0x200] sm:$0xff]
    %v1977 = vld [vmem:[#allocation29 + $0x208] sm:$0xff]
    %v1978 = vld [vmem:[#allocation29 + $0x210] sm:$0xff]
    %v1979 = vld [vmem:[#allocation29 + $0x218] sm:$0xff]
    %v1980 = vld [vmem:[#allocation29 + $0x220] sm:$0xff]
    %v1981 = vld [vmem:[#allocation29 + $0x228] sm:$0xff]
    %v1982 = vld [vmem:[#allocation29 + $0x230] sm:$0xff]
    %v1983 = vld [vmem:[#allocation29 + $0x238] sm:$0xff]
    %v1984 = vld [vmem:[#allocation29 + $0x240] sm:$0xff]
    %v1985 = vld [vmem:[#allocation29 + $0x248] sm:$0xff]
    %v1986 = vld [vmem:[#allocation29 + $0x250] sm:$0xff]
    %v1987 = vld [vmem:[#allocation29 + $0x258] sm:$0xff]
    %v1988 = vld [vmem:[#allocation29 + $0x260] sm:$0xff]
    %v1989 = vld [vmem:[#allocation29 + $0x268] sm:$0xff]
    %v1990 = vld [vmem:[#allocation29 + $0x270] sm:$0xff]
    %v1991 = vld [vmem:[#allocation29 + $0x278] sm:$0xff]
    %v1992 = vld [vmem:[#allocation29 + $0x280] sm:$0xff]
    %v1993 = vld [vmem:[#allocation29 + $0x288] sm:$0xff]
    %v1994 = vld [vmem:[#allocation29 + $0x290] sm:$0xff]
    %v1995 = vld [vmem:[#allocation29 + $0x298] sm:$0xff]
    %v1996 = vld [vmem:[#allocation29 + $0x2a0] sm:$0xff]
    %v1997 = vld [vmem:[#allocation29 + $0x2a8] sm:$0xff]
    %v1998 = vld [vmem:[#allocation29 + $0x2b0] sm:$0xff]
    %v1999 = vld [vmem:[#allocation29 + $0x2b8] sm:$0xff]
    %v2000 = vld [vmem:[#allocation29 + $0x2c0] sm:$0xff]
    %v2001 = vld [vmem:[#allocation29 + $0x2c8] sm:$0xff]
    %v2002 = vld [vmem:[#allocation29 + $0x2d0] sm:$0xff]
    %v2003 = vld [vmem:[#allocation29 + $0x2d8] sm:$0xff]
    %v2004 = vld [vmem:[#allocation29 + $0x2e0] sm:$0xff]
    %v2005 = vld [vmem:[#allocation29 + $0x2e8] sm:$0xff]
    %v2006 = vld [vmem:[#allocation29 + $0x2f0] sm:$0xff]
    %v2007 = vld [vmem:[#allocation29 + $0x2f8] sm:$0xff]
    %v2008 = vld [vmem:[#allocation29 + $0x300] sm:$0xff]
    %v2009 = vld [vmem:[#allocation29 + $0x308] sm:$0xff]
    %v2010 = vld [vmem:[#allocation29 + $0x310] sm:$0xff]
    %v2011 = vld [vmem:[#allocation29 + $0x318] sm:$0xff]
    %v2012 = vld [vmem:[#allocation29 + $0x320] sm:$0xff]
    %v2013 = vld [vmem:[#allocation29 + $0x328] sm:$0xff]
    %v2014 = vld [vmem:[#allocation29 + $0x330] sm:$0xff]
    %v2015 = vld [vmem:[#allocation29 + $0x338] sm:$0xff]
    %v2016 = vld [vmem:[#allocation29 + $0x340] sm:$0xff]
    %v2017 = vld [vmem:[#allocation29 + $0x348] sm:$0xff]
    %v2018 = vld [vmem:[#allocation29 + $0x350] sm:$0xff]
    %v2019 = vld [vmem:[#allocation29 + $0x358] sm:$0xff]
    %v2020 = vld [vmem:[#allocation29 + $0x360] sm:$0xff]
    %v2021 = vld [vmem:[#allocation29 + $0x368] sm:$0xff]
    %v2022 = vld [vmem:[#allocation29 + $0x370] sm:$0xff]
    %v2023 = vld [vmem:[#allocation29 + $0x378] sm:$0xff]
    %v2024 = vld [vmem:[#allocation29 + $0x380] sm:$0xff]
    %v2025 = vld [vmem:[#allocation29 + $0x388] sm:$0xff]
    %v2026 = vld [vmem:[#allocation29 + $0x390] sm:$0xff]
    %v2027 = vld [vmem:[#allocation29 + $0x398] sm:$0xff]
    %v2028 = vld [vmem:[#allocation29 + $0x3a0] sm:$0xff]
    %v2029 = vld [vmem:[#allocation29 + $0x3a8] sm:$0xff]
    %v2030 = vld [vmem:[#allocation29 + $0x3b0] sm:$0xff]
    %v2031 = vld [vmem:[#allocation29 + $0x3b8] sm:$0xff]
    %v2032 = vld [vmem:[#allocation29 + $0x3c0] sm:$0xff]
    %v2033 = vld [vmem:[#allocation29 + $0x3c8] sm:$0xff]
    %v2034 = vld [vmem:[#allocation29 + $0x3d0] sm:$0xff]
    %v2035 = vld [vmem:[#allocation29 + $0x3d8] sm:$0xff]
    %v2036 = vld [vmem:[#allocation29 + $0x3e0] sm:$0xff]
    %v2037 = vld [vmem:[#allocation29 + $0x3e8] sm:$0xff]
    %v2038 = vld [vmem:[#allocation29 + $0x3f0] sm:$0xff]
    %v2039 = vld [vmem:[#allocation29 + $0x3f8] sm:$0xff]
    %v2040 = vld [vmem:[#allocation29 + $0x400] sm:$0xff]
    %v2041 = vld [vmem:[#allocation29 + $0x408] sm:$0xff]
    %v2042 = vld [vmem:[#allocation29 + $0x410] sm:$0xff]
    %v2043 = vld [vmem:[#allocation29 + $0x418] sm:$0xff]
    %v2044 = vld [vmem:[#allocation29 + $0x420] sm:$0xff]
    %v2045 = vld [vmem:[#allocation29 + $0x428] sm:$0xff]
    %v2046 = vld [vmem:[#allocation29 + $0x430] sm:$0xff]
    %v2047 = vld [vmem:[#allocation29 + $0x438] sm:$0xff]
    %v2048 = vld [vmem:[#allocation29 + $0x440] sm:$0xff]
    %v2049 = vld [vmem:[#allocation29 + $0x448] sm:$0xff]
    %v2050 = vld [vmem:[#allocation29 + $0x450] sm:$0xff]
    %v2051 = vld [vmem:[#allocation29 + $0x458] sm:$0xff]
    %v2052 = vld [vmem:[#allocation29 + $0x460] sm:$0xff]
    %v2053 = vld [vmem:[#allocation29 + $0x468] sm:$0xff]
    %v2054 = vld [vmem:[#allocation29 + $0x470] sm:$0xff]
    %v2055 = vld [vmem:[#allocation29 + $0x478] sm:$0xff]
    %v2056 = vld [vmem:[#allocation29 + $0x480] sm:$0xff]
    %v2057 = vld [vmem:[#allocation29 + $0x488] sm:$0xff]
    %v2058 = vld [vmem:[#allocation29 + $0x490] sm:$0xff]
    %v2059 = vld [vmem:[#allocation29 + $0x498] sm:$0xff]
    %v2060 = vld [vmem:[#allocation29 + $0x4a0] sm:$0xff]
    %v2061 = vld [vmem:[#allocation29 + $0x4a8] sm:$0xff]
    %v2062 = vld [vmem:[#allocation29 + $0x4b0] sm:$0xff]
    %v2063 = vld [vmem:[#allocation29 + $0x4b8] sm:$0xff]
    %v2064 = vld [vmem:[#allocation29 + $0x4c0] sm:$0xff]
    %v2065 = vld [vmem:[#allocation29 + $0x4c8] sm:$0xff]
    %v2066 = vld [vmem:[#allocation29 + $0x4d0] sm:$0xff]
    %v2067 = vld [vmem:[#allocation29 + $0x4d8] sm:$0xff]
    %v2068 = vld [vmem:[#allocation29 + $0x4e0] sm:$0xff]
    %v2069 = vld [vmem:[#allocation29 + $0x4e8] sm:$0xff]
    %v2070 = vld [vmem:[#allocation29 + $0x4f0] sm:$0xff]
    %v2071 = vld [vmem:[#allocation29 + $0x4f8] sm:$0xff]
    %v2072 = vld [vmem:[#allocation29 + $0x500] sm:$0xff]
    %v2073 = vld [vmem:[#allocation29 + $0x508] sm:$0xff]
    %v2074 = vld [vmem:[#allocation29 + $0x510] sm:$0xff]
    %v2075 = vld [vmem:[#allocation29 + $0x518] sm:$0xff]
    %v2076 = vld [vmem:[#allocation29 + $0x520] sm:$0xff]
    %v2077 = vld [vmem:[#allocation29 + $0x528] sm:$0xff]
    %v2078 = vld [vmem:[#allocation29 + $0x530] sm:$0xff]
    %v2079 = vld [vmem:[#allocation29 + $0x538] sm:$0xff]
    %v2080 = vld [vmem:[#allocation29 + $0x540] sm:$0xff]
    %v2081 = vld [vmem:[#allocation29 + $0x548] sm:$0xff]
    %v2082 = vld [vmem:[#allocation29 + $0x550] sm:$0xff]
    %v2083 = vld [vmem:[#allocation29 + $0x558] sm:$0xff]
    %v2084 = vld [vmem:[#allocation29 + $0x560] sm:$0xff]
    %v2085 = vld [vmem:[#allocation29 + $0x568] sm:$0xff]
    %v2086 = vld [vmem:[#allocation29 + $0x570] sm:$0xff]
    %v2087 = vld [vmem:[#allocation29 + $0x578] sm:$0xff]
    %v2088 = vld [vmem:[#allocation29 + $0x580] sm:$0xff]
    %v2089 = vld [vmem:[#allocation29 + $0x588] sm:$0xff]
    %v2090 = vld [vmem:[#allocation29 + $0x590] sm:$0xff]
    %v2091 = vld [vmem:[#allocation29 + $0x598] sm:$0xff]
    %v2092 = vld [vmem:[#allocation29 + $0x5a0] sm:$0xff]
    %v2093 = vld [vmem:[#allocation29 + $0x5a8] sm:$0xff]
    %v2094 = vld [vmem:[#allocation29 + $0x5b0] sm:$0xff]
    %v2095 = vld [vmem:[#allocation29 + $0x5b8] sm:$0xff]
    %v2096 = vld [vmem:[#allocation29 + $0x5c0] sm:$0xff]
    %v2097 = vld [vmem:[#allocation29 + $0x5c8] sm:$0xff]
    %v2098 = vld [vmem:[#allocation29 + $0x5d0] sm:$0xff]
    %v2099 = vld [vmem:[#allocation29 + $0x5d8] sm:$0xff]
    %v2100 = vld [vmem:[#allocation29 + $0x5e0] sm:$0xff]
    %v2101 = vld [vmem:[#allocation29 + $0x5e8] sm:$0xff]
    %v2102 = vld [vmem:[#allocation29 + $0x5f0] sm:$0xff]
    %v2103 = vld [vmem:[#allocation29 + $0x5f8] sm:$0xff]
    %2104 = vmatpush.msra.mxu0 %v2092
    %2105 = vmatpush.msra.mxu0 %v2080
    %2106 = vmatpush.msra.mxu0 %v2068
    %2107 = vmatpush.msra.mxu0 %v2056
    %2108 = vmatpush.msra.mxu0 %v2044
    %2109 = vmatpush.msra.mxu0 %v2032
    %2110 = vmatpush.msra.mxu0 %v2020
    %2111 = vmatpush.msra.mxu0 %v2008
    %2112 = vmatpush.msra.mxu0 %v1996
    %2113 = vmatpush.msra.mxu0 %v1984
    %2114 = vmatpush.msra.mxu0 %v1972
    %2115 = vmatpush.msra.mxu0 %v1960
    %2116 = vmatpush.msra.mxu0 %v1948
    %2117 = vmatpush.msra.mxu0 %v1936
    %2118 = vmatpush.msra.mxu0 %v1924
    %2119 = vmatpush.msra.mxu0 %v1912
    %2120 = vmatmul.f32.gmra.mxu0 %v1911
    %v2121 = vpop.f32.mrf.mxu0
    %v2122 = vadd.f32 0.0, %v2121
    %2123 = vdwg.mxu0
    %2124 = vmatpush.msra.mxu0 %v2093
    %2125 = vmatpush.msra.mxu0 %v2081
    %2126 = vmatpush.msra.mxu0 %v2069
    %2127 = vmatpush.msra.mxu0 %v2057
    %2128 = vmatpush.msra.mxu0 %v2045
    %2129 = vmatpush.msra.mxu0 %v2033
    %2130 = vmatpush.msra.mxu0 %v2021
    %2131 = vmatpush.msra.mxu0 %v2009
    %2132 = vmatpush.msra.mxu0 %v1997
    %2133 = vmatpush.msra.mxu0 %v1985
    %2134 = vmatpush.msra.mxu0 %v1973
    %2135 = vmatpush.msra.mxu0 %v1961
    %2136 = vmatpush.msra.mxu0 %v1949
    %2137 = vmatpush.msra.mxu0 %v1937
    %2138 = vmatpush.msra.mxu0 %v1925
    %2139 = vmatpush.msra.mxu0 %v1913
    %2140 = vmatmul.f32.gmra.mxu0 %v1911
    %v2141 = vpop.f32.mrf.mxu0
    %v2142 = vadd.f32 0.0, %v2141
    %2143 = vdwg.mxu0
    %2144 = vmatpush.msra.mxu0 %v2094
    %2145 = vmatpush.msra.mxu0 %v2082
    %2146 = vmatpush.msra.mxu0 %v2070
    %2147 = vmatpush.msra.mxu0 %v2058
    %2148 = vmatpush.msra.mxu0 %v2046
    %2149 = vmatpush.msra.mxu0 %v2034
    %2150 = vmatpush.msra.mxu0 %v2022
    %2151 = vmatpush.msra.mxu0 %v2010
    %2152 = vmatpush.msra.mxu0 %v1998
    %2153 = vmatpush.msra.mxu0 %v1986
    %2154 = vmatpush.msra.mxu0 %v1974
    %2155 = vmatpush.msra.mxu0 %v1962
    %2156 = vmatpush.msra.mxu0 %v1950
    %2157 = vmatpush.msra.mxu0 %v1938
    %2158 = vmatpush.msra.mxu0 %v1926
    %2159 = vmatpush.msra.mxu0 %v1914
    %2160 = vmatmul.f32.gmra.mxu0 %v1911
    %v2161 = vpop.f32.mrf.mxu0
    %v2162 = vadd.f32 0.0, %v2161
    %2163 = vdwg.mxu0
    %2164 = vmatpush.msra.mxu0 %v2095
    %2165 = vmatpush.msra.mxu0 %v2083
    %2166 = vmatpush.msra.mxu0 %v2071
    %2167 = vmatpush.msra.mxu0 %v2059
    %2168 = vmatpush.msra.mxu0 %v2047
    %2169 = vmatpush.msra.mxu0 %v2035
    %2170 = vmatpush.msra.mxu0 %v2023
    %2171 = vmatpush.msra.mxu0 %v2011
    %2172 = vmatpush.msra.mxu0 %v1999
    %2173 = vmatpush.msra.mxu0 %v1987
    %2174 = vmatpush.msra.mxu0 %v1975
    %2175 = vmatpush.msra.mxu0 %v1963
    %2176 = vmatpush.msra.mxu0 %v1951
    %2177 = vmatpush.msra.mxu0 %v1939
    %2178 = vmatpush.msra.mxu0 %v1927
    %2179 = vmatpush.msra.mxu0 %v1915
    %2180 = vmatmul.f32.gmra.mxu0 %v1911
    %v2181 = vpop.f32.mrf.mxu0
    %v2182 = vadd.f32 0.0, %v2181
    %2183 = vdwg.mxu0
    %2184 = vmatpush.msra.mxu0 %v2096
    %2185 = vmatpush.msra.mxu0 %v2084
    %2186 = vmatpush.msra.mxu0 %v2072
    %2187 = vmatpush.msra.mxu0 %v2060
    %2188 = vmatpush.msra.mxu0 %v2048
    %2189 = vmatpush.msra.mxu0 %v2036
    %2190 = vmatpush.msra.mxu0 %v2024
    %2191 = vmatpush.msra.mxu0 %v2012
    %2192 = vmatpush.msra.mxu0 %v2000
    %2193 = vmatpush.msra.mxu0 %v1988
    %2194 = vmatpush.msra.mxu0 %v1976
    %2195 = vmatpush.msra.mxu0 %v1964
    %2196 = vmatpush.msra.mxu0 %v1952
    %2197 = vmatpush.msra.mxu0 %v1940
    %2198 = vmatpush.msra.mxu0 %v1928
    %2199 = vmatpush.msra.mxu0 %v1916
    %2200 = vmatmul.f32.gmra.mxu0 %v1911
    %v2201 = vpop.f32.mrf.mxu0
    %v2202 = vadd.f32 0.0, %v2201
    %2203 = vdwg.mxu0
    %2204 = vmatpush.msra.mxu0 %v2097
    %2205 = vmatpush.msra.mxu0 %v2085
    %2206 = vmatpush.msra.mxu0 %v2073
    %2207 = vmatpush.msra.mxu0 %v2061
    %2208 = vmatpush.msra.mxu0 %v2049
    %2209 = vmatpush.msra.mxu0 %v2037
    %2210 = vmatpush.msra.mxu0 %v2025
    %2211 = vmatpush.msra.mxu0 %v2013
    %2212 = vmatpush.msra.mxu0 %v2001
    %2213 = vmatpush.msra.mxu0 %v1989
    %2214 = vmatpush.msra.mxu0 %v1977
    %2215 = vmatpush.msra.mxu0 %v1965
    %2216 = vmatpush.msra.mxu0 %v1953
    %2217 = vmatpush.msra.mxu0 %v1941
    %2218 = vmatpush.msra.mxu0 %v1929
    %2219 = vmatpush.msra.mxu0 %v1917
    %2220 = vmatmul.f32.gmra.mxu0 %v1911
    %v2221 = vpop.f32.mrf.mxu0
    %v2222 = vadd.f32 0.0, %v2221
    %2223 = vdwg.mxu0
    %2224 = vmatpush.msra.mxu0 %v2098
    %2225 = vmatpush.msra.mxu0 %v2086
    %2226 = vmatpush.msra.mxu0 %v2074
    %2227 = vmatpush.msra.mxu0 %v2062
    %2228 = vmatpush.msra.mxu0 %v2050
    %2229 = vmatpush.msra.mxu0 %v2038
    %2230 = vmatpush.msra.mxu0 %v2026
    %2231 = vmatpush.msra.mxu0 %v2014
    %2232 = vmatpush.msra.mxu0 %v2002
    %2233 = vmatpush.msra.mxu0 %v1990
    %2234 = vmatpush.msra.mxu0 %v1978
    %2235 = vmatpush.msra.mxu0 %v1966
    %2236 = vmatpush.msra.mxu0 %v1954
    %2237 = vmatpush.msra.mxu0 %v1942
    %2238 = vmatpush.msra.mxu0 %v1930
    %2239 = vmatpush.msra.mxu0 %v1918
    %2240 = vmatmul.f32.gmra.mxu0 %v1911
    %v2241 = vpop.f32.mrf.mxu0
    %v2242 = vadd.f32 0.0, %v2241
    %2243 = vdwg.mxu0
    %2244 = vmatpush.msra.mxu0 %v2099
    %2245 = vmatpush.msra.mxu0 %v2087
    %2246 = vmatpush.msra.mxu0 %v2075
    %2247 = vmatpush.msra.mxu0 %v2063
    %2248 = vmatpush.msra.mxu0 %v2051
    %2249 = vmatpush.msra.mxu0 %v2039
    %2250 = vmatpush.msra.mxu0 %v2027
    %2251 = vmatpush.msra.mxu0 %v2015
    %2252 = vmatpush.msra.mxu0 %v2003
    %2253 = vmatpush.msra.mxu0 %v1991
    %2254 = vmatpush.msra.mxu0 %v1979
    %2255 = vmatpush.msra.mxu0 %v1967
    %2256 = vmatpush.msra.mxu0 %v1955
    %2257 = vmatpush.msra.mxu0 %v1943
    %2258 = vmatpush.msra.mxu0 %v1931
    %2259 = vmatpush.msra.mxu0 %v1919
    %2260 = vmatmul.f32.gmra.mxu0 %v1911
    %v2261 = vpop.f32.mrf.mxu0
    %v2262 = vadd.f32 0.0, %v2261
    %2263 = vdwg.mxu0
    %2264 = vmatpush.msra.mxu0 %v2100
    %2265 = vmatpush.msra.mxu0 %v2088
    %2266 = vmatpush.msra.mxu0 %v2076
    %2267 = vmatpush.msra.mxu0 %v2064
    %2268 = vmatpush.msra.mxu0 %v2052
    %2269 = vmatpush.msra.mxu0 %v2040
    %2270 = vmatpush.msra.mxu0 %v2028
    %2271 = vmatpush.msra.mxu0 %v2016
    %2272 = vmatpush.msra.mxu0 %v2004
    %2273 = vmatpush.msra.mxu0 %v1992
    %2274 = vmatpush.msra.mxu0 %v1980
    %2275 = vmatpush.msra.mxu0 %v1968
    %2276 = vmatpush.msra.mxu0 %v1956
    %2277 = vmatpush.msra.mxu0 %v1944
    %2278 = vmatpush.msra.mxu0 %v1932
    %2279 = vmatpush.msra.mxu0 %v1920
    %2280 = vmatmul.f32.gmra.mxu0 %v1911
    %v2281 = vpop.f32.mrf.mxu0
    %v2282 = vadd.f32 0.0, %v2281
    %2283 = vdwg.mxu0
    %2284 = vmatpush.msra.mxu0 %v2101
    %2285 = vmatpush.msra.mxu0 %v2089
    %2286 = vmatpush.msra.mxu0 %v2077
    %2287 = vmatpush.msra.mxu0 %v2065
    %2288 = vmatpush.msra.mxu0 %v2053
    %2289 = vmatpush.msra.mxu0 %v2041
    %2290 = vmatpush.msra.mxu0 %v2029
    %2291 = vmatpush.msra.mxu0 %v2017
    %2292 = vmatpush.msra.mxu0 %v2005
    %2293 = vmatpush.msra.mxu0 %v1993
    %2294 = vmatpush.msra.mxu0 %v1981
    %2295 = vmatpush.msra.mxu0 %v1969
    %2296 = vmatpush.msra.mxu0 %v1957
    %2297 = vmatpush.msra.mxu0 %v1945
    %2298 = vmatpush.msra.mxu0 %v1933
    %2299 = vmatpush.msra.mxu0 %v1921
    %2300 = vmatmul.f32.gmra.mxu0 %v1911
    %v2301 = vpop.f32.mrf.mxu0
    %v2302 = vadd.f32 0.0, %v2301
    %2303 = vdwg.mxu0
    %2304 = vmatpush.msra.mxu0 %v2102
    %2305 = vmatpush.msra.mxu0 %v2090
    %2306 = vmatpush.msra.mxu0 %v2078
    %2307 = vmatpush.msra.mxu0 %v2066
    %2308 = vmatpush.msra.mxu0 %v2054
    %2309 = vmatpush.msra.mxu0 %v2042
    %2310 = vmatpush.msra.mxu0 %v2030
    %2311 = vmatpush.msra.mxu0 %v2018
    %2312 = vmatpush.msra.mxu0 %v2006
    %2313 = vmatpush.msra.mxu0 %v1994
    %2314 = vmatpush.msra.mxu0 %v1982
    %2315 = vmatpush.msra.mxu0 %v1970
    %2316 = vmatpush.msra.mxu0 %v1958
    %2317 = vmatpush.msra.mxu0 %v1946
    %2318 = vmatpush.msra.mxu0 %v1934
    %2319 = vmatpush.msra.mxu0 %v1922
    %2320 = vmatmul.f32.gmra.mxu0 %v1911
    %v2321 = vpop.f32.mrf.mxu0
    %v2322 = vadd.f32 0.0, %v2321
    %2323 = vdwg.mxu0
    %2324 = vmatpush.msra.mxu0 %v2103
    %2325 = vmatpush.msra.mxu0 %v2091
    %2326 = vmatpush.msra.mxu0 %v2079
    %2327 = vmatpush.msra.mxu0 %v2067
    %2328 = vmatpush.msra.mxu0 %v2055
    %2329 = vmatpush.msra.mxu0 %v2043
    %2330 = vmatpush.msra.mxu0 %v2031
    %2331 = vmatpush.msra.mxu0 %v2019
    %2332 = vmatpush.msra.mxu0 %v2007
    %2333 = vmatpush.msra.mxu0 %v1995
    %2334 = vmatpush.msra.mxu0 %v1983
    %2335 = vmatpush.msra.mxu0 %v1971
    %2336 = vmatpush.msra.mxu0 %v1959
    %2337 = vmatpush.msra.mxu0 %v1947
    %2338 = vmatpush.msra.mxu0 %v1935
    %2339 = vmatpush.msra.mxu0 %v1923
    %2340 = vmatmul.f32.gmra.mxu0 %v1911
    %v2341 = vpop.f32.mrf.mxu0
    %v2342 = vadd.f32 0.0, %v2341
    %2343 = vdwg.mxu0
    %2344 = vst [vmem:[#allocation3] sm:$0xff] %v2122
    %2345 = vst [vmem:[#allocation3 + $0x8] sm:$0xff] %v2142
    %2346 = vst [vmem:[#allocation3 + $0x10] sm:$0xff] %v2162
    %2347 = vst [vmem:[#allocation3 + $0x18] sm:$0xff] %v2182
    %2348 = vst [vmem:[#allocation3 + $0x20] sm:$0xff] %v2202
    %2349 = vst [vmem:[#allocation3 + $0x28] sm:$0xff] %v2222
    %2350 = vst [vmem:[#allocation3 + $0x30] sm:$0xff] %v2242
    %2351 = vst [vmem:[#allocation3 + $0x38] sm:$0xff] %v2262
    %2352 = vst [vmem:[#allocation3 + $0x40] sm:$0xff] %v2282
    %2353 = vst [vmem:[#allocation3 + $0x48] sm:$0xff] %v2302
    %2354 = vst [vmem:[#allocation3 + $0x50] sm:$0xff] %v2322
    %2355 = vst [vmem:[#allocation3 + $0x58] sm:$0xff] %v2342
    %v2356 = vld [vmem:[#allocation30] sm:$0xff]
    %v2357 = vld [vmem:[#allocation30 + $0x8] sm:$0xff]
    %v2358 = vld [vmem:[#allocation30 + $0x10] sm:$0x3f]
    %v2359 = vld [vmem:[#allocation3] sm:$0xff]
    %v2360 = vld [vmem:[#allocation3 + $0x8] sm:$0xff]
    %v2361 = vld [vmem:[#allocation3 + $0x10] sm:$0xff]
    %v2362 = vld [vmem:[#allocation3 + $0x18] sm:$0xff]
    %v2363 = vld [vmem:[#allocation3 + $0x20] sm:$0xff]
    %v2364 = vld [vmem:[#allocation3 + $0x28] sm:$0xff]
    %v2365 = vld [vmem:[#allocation3 + $0x30] sm:$0xff]
    %v2366 = vld [vmem:[#allocation3 + $0x38] sm:$0xff]
    %v2367 = vld [vmem:[#allocation3 + $0x40] sm:$0xff]
    %v2368 = vld [vmem:[#allocation3 + $0x48] sm:$0xff]
    %v2369 = vld [vmem:[#allocation3 + $0x50] sm:$0xff]
    %v2370 = vld [vmem:[#allocation3 + $0x58] sm:$0xff]
    %v2371 = vld [vmem:[#allocation32] sm:$0x7]
    %v2373 = vperm.slane %v2371, 0
    %v2374 = vperm.slane %v2371, 1
    %v2375 = vperm.slane %v2371, 2
    %v2380 = vsel %vm464, %v2356, 0
    %v2383 = vsel %vm464, %v2357, 0
    %v2386 = vsel %vm464, %v2358, 0
    %2388 = vmatpush.msra.mxu0 0.0
    %2389 = vmatpush.msra.mxu0 0.0
    %2390 = vmatpush.msra.mxu0 0.0
    %2391 = vmatpush.msra.mxu0 0.0
    %2392 = vmatpush.msra.mxu0 0.0
    %2393 = vmatpush.msra.mxu0 0.0
    %2394 = vmatpush.msra.mxu0 0.0
    %2395 = vmatpush.msra.mxu0 0.0
    %2396 = vmatpush.msra.mxu0 0.0
    %2397 = vmatpush.msra.mxu0 0.0
    %2398 = vmatpush.msra.mxu0 0.0
    %2399 = vmatpush.msra.mxu0 0.0
    %2400 = vmatpush.msra.mxu0 %v2368
    %2401 = vmatpush.msra.mxu0 %v2365
    %2402 = vmatpush.msra.mxu0 %v2362
    %2403 = vmatpush.msra.mxu0 %v2359
    %2404 = vmatmul.f32.gmra.mxu0 %v2380
    %v2405 = vpop.f32.mrf.mxu0
    %v2406 = vadd.f32 %v2373, %v2405
    %2407 = vmatmul.f32.gmra.mxu0 %v2383
    %v2408 = vpop.f32.mrf.mxu0
    %v2409 = vadd.f32 %v2373, %v2408
    %2410 = vmatmul.f32.gmra.mxu0 %v2386
    %v2411 = vpop.f32.mrf.mxu0
    %v2412 = vadd.f32 %v2373, %v2411
    %2413 = vdwg.mxu0
    %2414 = vmatpush.msra.mxu0 0.0
    %2415 = vmatpush.msra.mxu0 0.0
    %2416 = vmatpush.msra.mxu0 0.0
    %2417 = vmatpush.msra.mxu0 0.0
    %2418 = vmatpush.msra.mxu0 0.0
    %2419 = vmatpush.msra.mxu0 0.0
    %2420 = vmatpush.msra.mxu0 0.0
    %2421 = vmatpush.msra.mxu0 0.0
    %2422 = vmatpush.msra.mxu0 0.0
    %2423 = vmatpush.msra.mxu0 0.0
    %2424 = vmatpush.msra.mxu0 0.0
    %2425 = vmatpush.msra.mxu0 0.0
    %2426 = vmatpush.msra.mxu0 %v2369
    %2427 = vmatpush.msra.mxu0 %v2366
    %2428 = vmatpush.msra.mxu0 %v2363
    %2429 = vmatpush.msra.mxu0 %v2360
    %2430 = vmatmul.f32.gmra.mxu0 %v2380
    %v2431 = vpop.f32.mrf.mxu0
    %v2432 = vadd.f32 %v2374, %v2431
    %2433 = vmatmul.f32.gmra.mxu0 %v2383
    %v2434 = vpop.f32.mrf.mxu0
    %v2435 = vadd.f32 %v2374, %v2434
    %2436 = vmatmul.f32.gmra.mxu0 %v2386
    %v2437 = vpop.f32.mrf.mxu0
    %v2438 = vadd.f32 %v2374, %v2437
    %2439 = vdwg.mxu0
    %2440 = vmatpush.msra.mxu0 0.0
    %2441 = vmatpush.msra.mxu0 0.0
    %2442 = vmatpush.msra.mxu0 0.0
    %2443 = vmatpush.msra.mxu0 0.0
    %2444 = vmatpush.msra.mxu0 0.0
    %2445 = vmatpush.msra.mxu0 0.0
    %2446 = vmatpush.msra.mxu0 0.0
    %2447 = vmatpush.msra.mxu0 0.0
    %2448 = vmatpush.msra.mxu0 0.0
    %2449 = vmatpush.msra.mxu0 0.0
    %2450 = vmatpush.msra.mxu0 0.0
    %2451 = vmatpush.msra.mxu0 0.0
    %2452 = vmatpush.msra.mxu0 %v2370
    %2453 = vmatpush.msra.mxu0 %v2367
    %2454 = vmatpush.msra.mxu0 %v2364
    %2455 = vmatpush.msra.mxu0 %v2361
    %2456 = vmatmul.f32.gmra.mxu0 %v2380
    %v2457 = vpop.f32.mrf.mxu0
    %v2458 = vadd.f32 %v2375, %v2457
    %2459 = vmatmul.f32.gmra.mxu0 %v2383
    %v2460 = vpop.f32.mrf.mxu0
    %v2461 = vadd.f32 %v2375, %v2460
    %2462 = vmatmul.f32.gmra.mxu0 %v2386
    %v2463 = vpop.f32.mrf.mxu0
    %v2464 = vadd.f32 %v2375, %v2463
    %2465 = vdwg.mxu0
    %vm2466 = vcmp.gt.f32.partialorder %v2406, 0.0
    %vm2467 = vcmp.gt.f32.partialorder %v2432, 0.0
    %vm2468 = vcmp.gt.f32.partialorder %v2458, 0.0
    %vm2469 = vcmp.gt.f32.partialorder %v2409, 0.0
    %vm2470 = vcmp.gt.f32.partialorder %v2435, 0.0
    %vm2471 = vcmp.gt.f32.partialorder %v2461, 0.0
    %vm2472 = vcmp.gt.f32.partialorder %v2412, 0.0
    %vm2473 = vcmp.gt.f32.partialorder %v2438, 0.0
    %vm2474 = vcmp.gt.f32.partialorder %v2464, 0.0
    %v2475 = vmul.f32 %v2406, 0.1
    %v2476 = vmul.f32 %v2432, 0.1
    %v2477 = vmul.f32 %v2458, 0.1
    %v2478 = vmul.f32 %v2409, 0.1
    %v2479 = vmul.f32 %v2435, 0.1
    %v2480 = vmul.f32 %v2461, 0.1
    %v2481 = vmul.f32 %v2412, 0.1
    %v2482 = vmul.f32 %v2438, 0.1
    %v2483 = vmul.f32 %v2464, 0.1
    %v2484 = vsel %vm2466, %v2406, %v2475
    %v2485 = vsel %vm2467, %v2432, %v2476
    %v2486 = vsel %vm2468, %v2458, %v2477
    %v2487 = vsel %vm2469, %v2409, %v2478
    %v2488 = vsel %vm2470, %v2435, %v2479
    %v2489 = vsel %vm2471, %v2461, %v2480
    %v2490 = vsel %vm2472, %v2412, %v2481
    %v2491 = vsel %vm2473, %v2438, %v2482
    %v2492 = vsel %vm2474, %v2464, %v2483
    %v2493 = vld [vmem:[#allocation33] sm:$0xff]
    %v2494 = vld [vmem:[#allocation33 + $0x8] sm:$0xff]
    %v2495 = vld [vmem:[#allocation33 + $0x10] sm:$0xff]
    %v2496 = vld [vmem:[#allocation33 + $0x18] sm:$0xff]
    %v2497 = vld [vmem:[#allocation33 + $0x20] sm:$0xff]
    %v2498 = vld [vmem:[#allocation33 + $0x28] sm:$0xff]
    %v2499 = vld [vmem:[#allocation33 + $0x30] sm:$0xff]
    %v2500 = vld [vmem:[#allocation33 + $0x38] sm:$0xff]
    %v2501 = vld [vmem:[#allocation33 + $0x40] sm:$0xff]
    %v2502 = vld [vmem:[#allocation33 + $0x48] sm:$0xff]
    %v2503 = vld [vmem:[#allocation33 + $0x50] sm:$0xff]
    %v2504 = vld [vmem:[#allocation33 + $0x58] sm:$0xff]
    %v2505 = vld [vmem:[#allocation33 + $0x60] sm:$0xff]
    %v2506 = vld [vmem:[#allocation33 + $0x68] sm:$0xff]
    %v2507 = vld [vmem:[#allocation33 + $0x70] sm:$0xff]
    %v2508 = vld [vmem:[#allocation33 + $0x78] sm:$0xff]
    %v2509 = vld [vmem:[#allocation33 + $0x80] sm:$0xff]
    %v2510 = vld [vmem:[#allocation33 + $0x88] sm:$0xff]
    %v2511 = vld [vmem:[#allocation33 + $0x90] sm:$0xff]
    %v2512 = vld [vmem:[#allocation33 + $0x98] sm:$0xff]
    %v2513 = vld [vmem:[#allocation33 + $0xa0] sm:$0xff]
    %v2514 = vld [vmem:[#allocation33 + $0xa8] sm:$0xff]
    %v2515 = vld [vmem:[#allocation33 + $0xb0] sm:$0xff]
    %v2516 = vld [vmem:[#allocation33 + $0xb8] sm:$0xff]
    %v2517 = vld [vmem:[#allocation33 + $0xc0] sm:$0xff]
    %v2518 = vld [vmem:[#allocation33 + $0xc8] sm:$0xff]
    %v2519 = vld [vmem:[#allocation33 + $0xd0] sm:$0xff]
    %v2520 = vld [vmem:[#allocation33 + $0xd8] sm:$0xff]
    %v2521 = vld [vmem:[#allocation33 + $0xe0] sm:$0xff]
    %v2522 = vld [vmem:[#allocation33 + $0xe8] sm:$0xff]
    %v2523 = vld [vmem:[#allocation33 + $0xf0] sm:$0xff]
    %v2524 = vld [vmem:[#allocation33 + $0xf8] sm:$0xff]
    %v2525 = vld [vmem:[#allocation33 + $0x100] sm:$0xff]
    %v2526 = vld [vmem:[#allocation33 + $0x108] sm:$0xff]
    %v2527 = vld [vmem:[#allocation33 + $0x110] sm:$0xff]
    %v2528 = vld [vmem:[#allocation33 + $0x118] sm:$0xff]
    %v2529 = vld [vmem:[#allocation33 + $0x120] sm:$0xff]
    %v2530 = vld [vmem:[#allocation33 + $0x128] sm:$0xff]
    %v2531 = vld [vmem:[#allocation33 + $0x130] sm:$0xff]
    %v2532 = vld [vmem:[#allocation33 + $0x138] sm:$0xff]
    %v2533 = vld [vmem:[#allocation33 + $0x140] sm:$0xff]
    %v2534 = vld [vmem:[#allocation33 + $0x148] sm:$0xff]
    %v2535 = vld [vmem:[#allocation33 + $0x150] sm:$0xff]
    %v2536 = vld [vmem:[#allocation33 + $0x158] sm:$0xff]
    %v2537 = vld [vmem:[#allocation33 + $0x160] sm:$0xff]
    %v2538 = vld [vmem:[#allocation33 + $0x168] sm:$0xff]
    %v2539 = vld [vmem:[#allocation33 + $0x170] sm:$0xff]
    %v2540 = vld [vmem:[#allocation33 + $0x178] sm:$0xff]
    %v2541 = vld [vmem:[#allocation33 + $0x180] sm:$0xff]
    %v2542 = vld [vmem:[#allocation33 + $0x188] sm:$0xff]
    %v2543 = vld [vmem:[#allocation33 + $0x190] sm:$0xff]
    %v2544 = vld [vmem:[#allocation33 + $0x198] sm:$0xff]
    %v2545 = vld [vmem:[#allocation33 + $0x1a0] sm:$0xff]
    %v2546 = vld [vmem:[#allocation33 + $0x1a8] sm:$0xff]
    %v2547 = vld [vmem:[#allocation33 + $0x1b0] sm:$0xff]
    %v2548 = vld [vmem:[#allocation33 + $0x1b8] sm:$0xff]
    %v2549 = vld [vmem:[#allocation33 + $0x1c0] sm:$0xff]
    %v2550 = vld [vmem:[#allocation33 + $0x1c8] sm:$0xff]
    %v2551 = vld [vmem:[#allocation33 + $0x1d0] sm:$0xff]
    %v2552 = vld [vmem:[#allocation33 + $0x1d8] sm:$0xff]
    %v2553 = vld [vmem:[#allocation33 + $0x1e0] sm:$0xff]
    %v2554 = vld [vmem:[#allocation33 + $0x1e8] sm:$0xff]
    %v2555 = vld [vmem:[#allocation33 + $0x1f0] sm:$0xff]
    %v2556 = vld [vmem:[#allocation33 + $0x1f8] sm:$0xff]
    %v2557 = vld [vmem:[#allocation33 + $0x200] sm:$0xff]
    %v2558 = vld [vmem:[#allocation33 + $0x208] sm:$0xff]
    %v2559 = vld [vmem:[#allocation33 + $0x210] sm:$0xff]
    %v2560 = vld [vmem:[#allocation33 + $0x218] sm:$0xff]
    %v2561 = vld [vmem:[#allocation33 + $0x220] sm:$0xff]
    %v2562 = vld [vmem:[#allocation33 + $0x228] sm:$0xff]
    %v2563 = vld [vmem:[#allocation33 + $0x230] sm:$0xff]
    %v2564 = vld [vmem:[#allocation33 + $0x238] sm:$0xff]
    %v2565 = vld [vmem:[#allocation33 + $0x240] sm:$0xff]
    %v2566 = vld [vmem:[#allocation33 + $0x248] sm:$0xff]
    %v2567 = vld [vmem:[#allocation33 + $0x250] sm:$0xff]
    %v2568 = vld [vmem:[#allocation33 + $0x258] sm:$0xff]
    %v2569 = vld [vmem:[#allocation33 + $0x260] sm:$0xff]
    %v2570 = vld [vmem:[#allocation33 + $0x268] sm:$0xff]
    %v2571 = vld [vmem:[#allocation33 + $0x270] sm:$0xff]
    %v2572 = vld [vmem:[#allocation33 + $0x278] sm:$0xff]
    %v2573 = vld [vmem:[#allocation33 + $0x280] sm:$0xff]
    %v2574 = vld [vmem:[#allocation33 + $0x288] sm:$0xff]
    %v2575 = vld [vmem:[#allocation33 + $0x290] sm:$0xff]
    %v2576 = vld [vmem:[#allocation33 + $0x298] sm:$0xff]
    %v2577 = vld [vmem:[#allocation33 + $0x2a0] sm:$0xff]
    %v2578 = vld [vmem:[#allocation33 + $0x2a8] sm:$0xff]
    %v2579 = vld [vmem:[#allocation33 + $0x2b0] sm:$0xff]
    %v2580 = vld [vmem:[#allocation33 + $0x2b8] sm:$0xff]
    %v2581 = vld [vmem:[#allocation33 + $0x2c0] sm:$0xff]
    %v2582 = vld [vmem:[#allocation33 + $0x2c8] sm:$0xff]
    %v2583 = vld [vmem:[#allocation33 + $0x2d0] sm:$0xff]
    %v2584 = vld [vmem:[#allocation33 + $0x2d8] sm:$0xff]
    %v2585 = vld [vmem:[#allocation33 + $0x2e0] sm:$0xff]
    %v2586 = vld [vmem:[#allocation33 + $0x2e8] sm:$0xff]
    %v2587 = vld [vmem:[#allocation33 + $0x2f0] sm:$0xff]
    %v2588 = vld [vmem:[#allocation33 + $0x2f8] sm:$0xff]
    %v2589 = vld [vmem:[#allocation33 + $0x300] sm:$0xff]
    %v2590 = vld [vmem:[#allocation33 + $0x308] sm:$0xff]
    %v2591 = vld [vmem:[#allocation33 + $0x310] sm:$0xff]
    %v2592 = vld [vmem:[#allocation33 + $0x318] sm:$0xff]
    %v2593 = vld [vmem:[#allocation33 + $0x320] sm:$0xff]
    %v2594 = vld [vmem:[#allocation33 + $0x328] sm:$0xff]
    %v2595 = vld [vmem:[#allocation33 + $0x330] sm:$0xff]
    %v2596 = vld [vmem:[#allocation33 + $0x338] sm:$0xff]
    %v2597 = vld [vmem:[#allocation33 + $0x340] sm:$0xff]
    %v2598 = vld [vmem:[#allocation33 + $0x348] sm:$0xff]
    %v2599 = vld [vmem:[#allocation33 + $0x350] sm:$0xff]
    %v2600 = vld [vmem:[#allocation33 + $0x358] sm:$0xff]
    %v2601 = vld [vmem:[#allocation33 + $0x360] sm:$0xff]
    %v2602 = vld [vmem:[#allocation33 + $0x368] sm:$0xff]
    %v2603 = vld [vmem:[#allocation33 + $0x370] sm:$0xff]
    %v2604 = vld [vmem:[#allocation33 + $0x378] sm:$0xff]
    %v2605 = vld [vmem:[#allocation33 + $0x380] sm:$0xff]
    %v2606 = vld [vmem:[#allocation33 + $0x388] sm:$0xff]
    %v2607 = vld [vmem:[#allocation33 + $0x390] sm:$0xff]
    %v2608 = vld [vmem:[#allocation33 + $0x398] sm:$0xff]
    %v2609 = vld [vmem:[#allocation33 + $0x3a0] sm:$0xff]
    %v2610 = vld [vmem:[#allocation33 + $0x3a8] sm:$0xff]
    %v2611 = vld [vmem:[#allocation33 + $0x3b0] sm:$0xff]
    %v2612 = vld [vmem:[#allocation33 + $0x3b8] sm:$0xff]
    %v2613 = vld [vmem:[#allocation33 + $0x3c0] sm:$0xff]
    %v2614 = vld [vmem:[#allocation33 + $0x3c8] sm:$0xff]
    %v2615 = vld [vmem:[#allocation33 + $0x3d0] sm:$0xff]
    %v2616 = vld [vmem:[#allocation33 + $0x3d8] sm:$0xff]
    %v2617 = vld [vmem:[#allocation33 + $0x3e0] sm:$0xff]
    %v2618 = vld [vmem:[#allocation33 + $0x3e8] sm:$0xff]
    %v2619 = vld [vmem:[#allocation33 + $0x3f0] sm:$0xff]
    %v2620 = vld [vmem:[#allocation33 + $0x3f8] sm:$0xff]
    %v2621 = vld [vmem:[#allocation33 + $0x400] sm:$0xff]
    %v2622 = vld [vmem:[#allocation33 + $0x408] sm:$0xff]
    %v2623 = vld [vmem:[#allocation33 + $0x410] sm:$0xff]
    %v2624 = vld [vmem:[#allocation33 + $0x418] sm:$0xff]
    %v2625 = vld [vmem:[#allocation33 + $0x420] sm:$0xff]
    %v2626 = vld [vmem:[#allocation33 + $0x428] sm:$0xff]
    %v2627 = vld [vmem:[#allocation33 + $0x430] sm:$0xff]
    %v2628 = vld [vmem:[#allocation33 + $0x438] sm:$0xff]
    %v2629 = vld [vmem:[#allocation33 + $0x440] sm:$0xff]
    %v2630 = vld [vmem:[#allocation33 + $0x448] sm:$0xff]
    %v2631 = vld [vmem:[#allocation33 + $0x450] sm:$0xff]
    %v2632 = vld [vmem:[#allocation33 + $0x458] sm:$0xff]
    %v2633 = vld [vmem:[#allocation33 + $0x460] sm:$0xff]
    %v2634 = vld [vmem:[#allocation33 + $0x468] sm:$0xff]
    %v2635 = vld [vmem:[#allocation33 + $0x470] sm:$0xff]
    %v2636 = vld [vmem:[#allocation33 + $0x478] sm:$0xff]
    %v2637 = vld [vmem:[#allocation33 + $0x480] sm:$0xff]
    %v2638 = vld [vmem:[#allocation33 + $0x488] sm:$0xff]
    %v2639 = vld [vmem:[#allocation33 + $0x490] sm:$0xff]
    %v2640 = vld [vmem:[#allocation33 + $0x498] sm:$0xff]
    %v2641 = vld [vmem:[#allocation33 + $0x4a0] sm:$0xff]
    %v2642 = vld [vmem:[#allocation33 + $0x4a8] sm:$0xff]
    %v2643 = vld [vmem:[#allocation33 + $0x4b0] sm:$0xff]
    %v2644 = vld [vmem:[#allocation33 + $0x4b8] sm:$0xff]
    %v2645 = vld [vmem:[#allocation33 + $0x4c0] sm:$0xff]
    %v2646 = vld [vmem:[#allocation33 + $0x4c8] sm:$0xff]
    %v2647 = vld [vmem:[#allocation33 + $0x4d0] sm:$0xff]
    %v2648 = vld [vmem:[#allocation33 + $0x4d8] sm:$0xff]
    %v2649 = vld [vmem:[#allocation33 + $0x4e0] sm:$0xff]
    %v2650 = vld [vmem:[#allocation33 + $0x4e8] sm:$0xff]
    %v2651 = vld [vmem:[#allocation33 + $0x4f0] sm:$0xff]
    %v2652 = vld [vmem:[#allocation33 + $0x4f8] sm:$0xff]
    %v2653 = vld [vmem:[#allocation33 + $0x500] sm:$0xff]
    %v2654 = vld [vmem:[#allocation33 + $0x508] sm:$0xff]
    %v2655 = vld [vmem:[#allocation33 + $0x510] sm:$0xff]
    %v2656 = vld [vmem:[#allocation33 + $0x518] sm:$0xff]
    %v2657 = vld [vmem:[#allocation33 + $0x520] sm:$0xff]
    %v2658 = vld [vmem:[#allocation33 + $0x528] sm:$0xff]
    %v2659 = vld [vmem:[#allocation33 + $0x530] sm:$0xff]
    %v2660 = vld [vmem:[#allocation33 + $0x538] sm:$0xff]
    %v2661 = vld [vmem:[#allocation33 + $0x540] sm:$0xff]
    %v2662 = vld [vmem:[#allocation33 + $0x548] sm:$0xff]
    %v2663 = vld [vmem:[#allocation33 + $0x550] sm:$0xff]
    %v2664 = vld [vmem:[#allocation33 + $0x558] sm:$0xff]
    %v2665 = vld [vmem:[#allocation33 + $0x560] sm:$0xff]
    %v2666 = vld [vmem:[#allocation33 + $0x568] sm:$0xff]
    %v2667 = vld [vmem:[#allocation33 + $0x570] sm:$0xff]
    %v2668 = vld [vmem:[#allocation33 + $0x578] sm:$0xff]
    %v2669 = vld [vmem:[#allocation33 + $0x580] sm:$0xff]
    %v2670 = vld [vmem:[#allocation33 + $0x588] sm:$0xff]
    %v2671 = vld [vmem:[#allocation33 + $0x590] sm:$0xff]
    %v2672 = vld [vmem:[#allocation33 + $0x598] sm:$0xff]
    %v2673 = vld [vmem:[#allocation33 + $0x5a0] sm:$0xff]
    %v2674 = vld [vmem:[#allocation33 + $0x5a8] sm:$0xff]
    %v2675 = vld [vmem:[#allocation33 + $0x5b0] sm:$0xff]
    %v2676 = vld [vmem:[#allocation33 + $0x5b8] sm:$0xff]
    %v2677 = vld [vmem:[#allocation33 + $0x5c0] sm:$0xff]
    %v2678 = vld [vmem:[#allocation33 + $0x5c8] sm:$0xff]
    %v2679 = vld [vmem:[#allocation33 + $0x5d0] sm:$0xff]
    %v2680 = vld [vmem:[#allocation33 + $0x5d8] sm:$0xff]
    %v2681 = vld [vmem:[#allocation33 + $0x5e0] sm:$0xff]
    %v2682 = vld [vmem:[#allocation33 + $0x5e8] sm:$0xff]
    %v2683 = vld [vmem:[#allocation33 + $0x5f0] sm:$0xff]
    %v2684 = vld [vmem:[#allocation33 + $0x5f8] sm:$0xff]
    %v2685 = vld [vmem:[#allocation33 + $0x600] sm:$0xff]
    %v2686 = vld [vmem:[#allocation33 + $0x608] sm:$0xff]
    %v2687 = vld [vmem:[#allocation33 + $0x610] sm:$0xff]
    %v2688 = vld [vmem:[#allocation33 + $0x618] sm:$0xff]
    %v2689 = vld [vmem:[#allocation33 + $0x620] sm:$0xff]
    %v2690 = vld [vmem:[#allocation33 + $0x628] sm:$0xff]
    %v2691 = vld [vmem:[#allocation33 + $0x630] sm:$0xff]
    %v2692 = vld [vmem:[#allocation33 + $0x638] sm:$0xff]
    %v2693 = vld [vmem:[#allocation33 + $0x640] sm:$0xff]
    %v2694 = vld [vmem:[#allocation33 + $0x648] sm:$0xff]
    %v2695 = vld [vmem:[#allocation33 + $0x650] sm:$0xff]
    %v2696 = vld [vmem:[#allocation33 + $0x658] sm:$0xff]
    %v2697 = vld [vmem:[#allocation33 + $0x660] sm:$0xff]
    %v2698 = vld [vmem:[#allocation33 + $0x668] sm:$0xff]
    %v2699 = vld [vmem:[#allocation33 + $0x670] sm:$0xff]
    %v2700 = vld [vmem:[#allocation33 + $0x678] sm:$0xff]
    %v2701 = vld [vmem:[#allocation33 + $0x680] sm:$0xff]
    %v2702 = vld [vmem:[#allocation33 + $0x688] sm:$0xff]
    %v2703 = vld [vmem:[#allocation33 + $0x690] sm:$0xff]
    %v2704 = vld [vmem:[#allocation33 + $0x698] sm:$0xff]
    %v2705 = vld [vmem:[#allocation33 + $0x6a0] sm:$0xff]
    %v2706 = vld [vmem:[#allocation33 + $0x6a8] sm:$0xff]
    %v2707 = vld [vmem:[#allocation33 + $0x6b0] sm:$0xff]
    %v2708 = vld [vmem:[#allocation33 + $0x6b8] sm:$0xff]
    %v2709 = vld [vmem:[#allocation33 + $0x6c0] sm:$0xff]
    %v2710 = vld [vmem:[#allocation33 + $0x6c8] sm:$0xff]
    %v2711 = vld [vmem:[#allocation33 + $0x6d0] sm:$0xff]
    %v2712 = vld [vmem:[#allocation33 + $0x6d8] sm:$0xff]
    %v2713 = vld [vmem:[#allocation33 + $0x6e0] sm:$0xff]
    %v2714 = vld [vmem:[#allocation33 + $0x6e8] sm:$0xff]
    %v2715 = vld [vmem:[#allocation33 + $0x6f0] sm:$0xff]
    %v2716 = vld [vmem:[#allocation33 + $0x6f8] sm:$0xff]
    %v2717 = vld [vmem:[#allocation33 + $0x700] sm:$0xff]
    %v2718 = vld [vmem:[#allocation33 + $0x708] sm:$0xff]
    %v2719 = vld [vmem:[#allocation33 + $0x710] sm:$0xff]
    %v2720 = vld [vmem:[#allocation33 + $0x718] sm:$0xff]
    %v2721 = vld [vmem:[#allocation33 + $0x720] sm:$0xff]
    %v2722 = vld [vmem:[#allocation33 + $0x728] sm:$0xff]
    %v2723 = vld [vmem:[#allocation33 + $0x730] sm:$0xff]
    %v2724 = vld [vmem:[#allocation33 + $0x738] sm:$0xff]
    %v2725 = vld [vmem:[#allocation33 + $0x740] sm:$0xff]
    %v2726 = vld [vmem:[#allocation33 + $0x748] sm:$0xff]
    %v2727 = vld [vmem:[#allocation33 + $0x750] sm:$0xff]
    %v2728 = vld [vmem:[#allocation33 + $0x758] sm:$0xff]
    %v2729 = vld [vmem:[#allocation33 + $0x760] sm:$0xff]
    %v2730 = vld [vmem:[#allocation33 + $0x768] sm:$0xff]
    %v2731 = vld [vmem:[#allocation33 + $0x770] sm:$0xff]
    %v2732 = vld [vmem:[#allocation33 + $0x778] sm:$0xff]
    %v2733 = vld [vmem:[#allocation33 + $0x780] sm:$0xff]
    %v2734 = vld [vmem:[#allocation33 + $0x788] sm:$0xff]
    %v2735 = vld [vmem:[#allocation33 + $0x790] sm:$0xff]
    %v2736 = vld [vmem:[#allocation33 + $0x798] sm:$0xff]
    %v2737 = vld [vmem:[#allocation33 + $0x7a0] sm:$0xff]
    %v2738 = vld [vmem:[#allocation33 + $0x7a8] sm:$0xff]
    %v2739 = vld [vmem:[#allocation33 + $0x7b0] sm:$0xff]
    %v2740 = vld [vmem:[#allocation33 + $0x7b8] sm:$0xff]
    %v2741 = vld [vmem:[#allocation33 + $0x7c0] sm:$0xff]
    %v2742 = vld [vmem:[#allocation33 + $0x7c8] sm:$0xff]
    %v2743 = vld [vmem:[#allocation33 + $0x7d0] sm:$0xff]
    %v2744 = vld [vmem:[#allocation33 + $0x7d8] sm:$0xff]
    %v2745 = vld [vmem:[#allocation33 + $0x7e0] sm:$0xff]
    %v2746 = vld [vmem:[#allocation33 + $0x7e8] sm:$0xff]
    %v2747 = vld [vmem:[#allocation33 + $0x7f0] sm:$0xff]
    %v2748 = vld [vmem:[#allocation33 + $0x7f8] sm:$0xff]
    %v2749 = vld [vmem:[#allocation33 + $0x800] sm:$0xff]
    %v2750 = vld [vmem:[#allocation33 + $0x808] sm:$0xff]
    %v2751 = vld [vmem:[#allocation33 + $0x810] sm:$0xff]
    %v2752 = vld [vmem:[#allocation33 + $0x818] sm:$0xff]
    %v2753 = vld [vmem:[#allocation33 + $0x820] sm:$0xff]
    %v2754 = vld [vmem:[#allocation33 + $0x828] sm:$0xff]
    %v2755 = vld [vmem:[#allocation33 + $0x830] sm:$0xff]
    %v2756 = vld [vmem:[#allocation33 + $0x838] sm:$0xff]
    %v2757 = vld [vmem:[#allocation33 + $0x840] sm:$0xff]
    %v2758 = vld [vmem:[#allocation33 + $0x848] sm:$0xff]
    %v2759 = vld [vmem:[#allocation33 + $0x850] sm:$0xff]
    %v2760 = vld [vmem:[#allocation33 + $0x858] sm:$0xff]
    %v2761 = vld [vmem:[#allocation33 + $0x860] sm:$0xff]
    %v2762 = vld [vmem:[#allocation33 + $0x868] sm:$0xff]
    %v2763 = vld [vmem:[#allocation33 + $0x870] sm:$0xff]
    %v2764 = vld [vmem:[#allocation33 + $0x878] sm:$0xff]
    %v2765 = vld [vmem:[#allocation33 + $0x880] sm:$0xff]
    %v2766 = vld [vmem:[#allocation33 + $0x888] sm:$0xff]
    %v2767 = vld [vmem:[#allocation33 + $0x890] sm:$0xff]
    %v2768 = vld [vmem:[#allocation33 + $0x898] sm:$0xff]
    %v2769 = vld [vmem:[#allocation33 + $0x8a0] sm:$0xff]
    %v2770 = vld [vmem:[#allocation33 + $0x8a8] sm:$0xff]
    %v2771 = vld [vmem:[#allocation33 + $0x8b0] sm:$0xff]
    %v2772 = vld [vmem:[#allocation33 + $0x8b8] sm:$0xff]
    %v2773 = vld [vmem:[#allocation33 + $0x8c0] sm:$0xff]
    %v2774 = vld [vmem:[#allocation33 + $0x8c8] sm:$0xff]
    %v2775 = vld [vmem:[#allocation33 + $0x8d0] sm:$0xff]
    %v2776 = vld [vmem:[#allocation33 + $0x8d8] sm:$0xff]
    %v2777 = vld [vmem:[#allocation33 + $0x8e0] sm:$0xff]
    %v2778 = vld [vmem:[#allocation33 + $0x8e8] sm:$0xff]
    %v2779 = vld [vmem:[#allocation33 + $0x8f0] sm:$0xff]
    %v2780 = vld [vmem:[#allocation33 + $0x8f8] sm:$0xff]
    %v2781 = vld [vmem:[#allocation33 + $0x900] sm:$0xff]
    %v2782 = vld [vmem:[#allocation33 + $0x908] sm:$0xff]
    %v2783 = vld [vmem:[#allocation33 + $0x910] sm:$0xff]
    %v2784 = vld [vmem:[#allocation33 + $0x918] sm:$0xff]
    %v2785 = vld [vmem:[#allocation33 + $0x920] sm:$0xff]
    %v2786 = vld [vmem:[#allocation33 + $0x928] sm:$0xff]
    %v2787 = vld [vmem:[#allocation33 + $0x930] sm:$0xff]
    %v2788 = vld [vmem:[#allocation33 + $0x938] sm:$0xff]
    %v2789 = vld [vmem:[#allocation33 + $0x940] sm:$0xff]
    %v2790 = vld [vmem:[#allocation33 + $0x948] sm:$0xff]
    %v2791 = vld [vmem:[#allocation33 + $0x950] sm:$0xff]
    %v2792 = vld [vmem:[#allocation33 + $0x958] sm:$0xff]
    %v2793 = vld [vmem:[#allocation33 + $0x960] sm:$0xff]
    %v2794 = vld [vmem:[#allocation33 + $0x968] sm:$0xff]
    %v2795 = vld [vmem:[#allocation33 + $0x970] sm:$0xff]
    %v2796 = vld [vmem:[#allocation33 + $0x978] sm:$0xff]
    %v2797 = vld [vmem:[#allocation33 + $0x980] sm:$0xff]
    %v2798 = vld [vmem:[#allocation33 + $0x988] sm:$0xff]
    %v2799 = vld [vmem:[#allocation33 + $0x990] sm:$0xff]
    %v2800 = vld [vmem:[#allocation33 + $0x998] sm:$0xff]
    %v2801 = vld [vmem:[#allocation33 + $0x9a0] sm:$0xff]
    %v2802 = vld [vmem:[#allocation33 + $0x9a8] sm:$0xff]
    %v2803 = vld [vmem:[#allocation33 + $0x9b0] sm:$0xff]
    %v2804 = vld [vmem:[#allocation33 + $0x9b8] sm:$0xff]
    %v2805 = vld [vmem:[#allocation33 + $0x9c0] sm:$0xff]
    %v2806 = vld [vmem:[#allocation33 + $0x9c8] sm:$0xff]
    %v2807 = vld [vmem:[#allocation33 + $0x9d0] sm:$0xff]
    %v2808 = vld [vmem:[#allocation33 + $0x9d8] sm:$0xff]
    %v2809 = vld [vmem:[#allocation33 + $0x9e0] sm:$0xff]
    %v2810 = vld [vmem:[#allocation33 + $0x9e8] sm:$0xff]
    %v2811 = vld [vmem:[#allocation33 + $0x9f0] sm:$0xff]
    %v2812 = vld [vmem:[#allocation33 + $0x9f8] sm:$0xff]
    %v2813 = vld [vmem:[#allocation33 + $0xa00] sm:$0xff]
    %v2814 = vld [vmem:[#allocation33 + $0xa08] sm:$0xff]
    %v2815 = vld [vmem:[#allocation33 + $0xa10] sm:$0xff]
    %v2816 = vld [vmem:[#allocation33 + $0xa18] sm:$0xff]
    %v2817 = vld [vmem:[#allocation33 + $0xa20] sm:$0xff]
    %v2818 = vld [vmem:[#allocation33 + $0xa28] sm:$0xff]
    %v2819 = vld [vmem:[#allocation33 + $0xa30] sm:$0xff]
    %v2820 = vld [vmem:[#allocation33 + $0xa38] sm:$0xff]
    %v2821 = vld [vmem:[#allocation33 + $0xa40] sm:$0xff]
    %v2822 = vld [vmem:[#allocation33 + $0xa48] sm:$0xff]
    %v2823 = vld [vmem:[#allocation33 + $0xa50] sm:$0xff]
    %v2824 = vld [vmem:[#allocation33 + $0xa58] sm:$0xff]
    %v2825 = vld [vmem:[#allocation33 + $0xa60] sm:$0xff]
    %v2826 = vld [vmem:[#allocation33 + $0xa68] sm:$0xff]
    %v2827 = vld [vmem:[#allocation33 + $0xa70] sm:$0xff]
    %v2828 = vld [vmem:[#allocation33 + $0xa78] sm:$0xff]
    %v2829 = vld [vmem:[#allocation33 + $0xa80] sm:$0xff]
    %v2830 = vld [vmem:[#allocation33 + $0xa88] sm:$0xff]
    %v2831 = vld [vmem:[#allocation33 + $0xa90] sm:$0xff]
    %v2832 = vld [vmem:[#allocation33 + $0xa98] sm:$0xff]
    %v2833 = vld [vmem:[#allocation33 + $0xaa0] sm:$0xff]
    %v2834 = vld [vmem:[#allocation33 + $0xaa8] sm:$0xff]
    %v2835 = vld [vmem:[#allocation33 + $0xab0] sm:$0xff]
    %v2836 = vld [vmem:[#allocation33 + $0xab8] sm:$0xff]
    %v2837 = vld [vmem:[#allocation33 + $0xac0] sm:$0xff]
    %v2838 = vld [vmem:[#allocation33 + $0xac8] sm:$0xff]
    %v2839 = vld [vmem:[#allocation33 + $0xad0] sm:$0xff]
    %v2840 = vld [vmem:[#allocation33 + $0xad8] sm:$0xff]
    %v2841 = vld [vmem:[#allocation33 + $0xae0] sm:$0xff]
    %v2842 = vld [vmem:[#allocation33 + $0xae8] sm:$0xff]
    %v2843 = vld [vmem:[#allocation33 + $0xaf0] sm:$0xff]
    %v2844 = vld [vmem:[#allocation33 + $0xaf8] sm:$0xff]
    %v2845 = vld [vmem:[#allocation33 + $0xb00] sm:$0xff]
    %v2846 = vld [vmem:[#allocation33 + $0xb08] sm:$0xff]
    %v2847 = vld [vmem:[#allocation33 + $0xb10] sm:$0xff]
    %v2848 = vld [vmem:[#allocation33 + $0xb18] sm:$0xff]
    %v2849 = vld [vmem:[#allocation33 + $0xb20] sm:$0xff]
    %v2850 = vld [vmem:[#allocation33 + $0xb28] sm:$0xff]
    %v2851 = vld [vmem:[#allocation33 + $0xb30] sm:$0xff]
    %v2852 = vld [vmem:[#allocation33 + $0xb38] sm:$0xff]
    %v2853 = vld [vmem:[#allocation33 + $0xb40] sm:$0xff]
    %v2854 = vld [vmem:[#allocation33 + $0xb48] sm:$0xff]
    %v2855 = vld [vmem:[#allocation33 + $0xb50] sm:$0xff]
    %v2856 = vld [vmem:[#allocation33 + $0xb58] sm:$0xff]
    %v2857 = vld [vmem:[#allocation33 + $0xb60] sm:$0xff]
    %v2858 = vld [vmem:[#allocation33 + $0xb68] sm:$0xff]
    %v2859 = vld [vmem:[#allocation33 + $0xb70] sm:$0xff]
    %v2860 = vld [vmem:[#allocation33 + $0xb78] sm:$0xff]
    %v2861 = vld [vmem:[#allocation33 + $0xb80] sm:$0xff]
    %v2862 = vld [vmem:[#allocation33 + $0xb88] sm:$0xff]
    %v2863 = vld [vmem:[#allocation33 + $0xb90] sm:$0xff]
    %v2864 = vld [vmem:[#allocation33 + $0xb98] sm:$0xff]
    %v2865 = vld [vmem:[#allocation33 + $0xba0] sm:$0xff]
    %v2866 = vld [vmem:[#allocation33 + $0xba8] sm:$0xff]
    %v2867 = vld [vmem:[#allocation33 + $0xbb0] sm:$0xff]
    %v2868 = vld [vmem:[#allocation33 + $0xbb8] sm:$0xff]
    %v2869 = vld [vmem:[#allocation33 + $0xbc0] sm:$0xff]
    %v2870 = vld [vmem:[#allocation33 + $0xbc8] sm:$0xff]
    %v2871 = vld [vmem:[#allocation33 + $0xbd0] sm:$0xff]
    %v2872 = vld [vmem:[#allocation33 + $0xbd8] sm:$0xff]
    %v2873 = vld [vmem:[#allocation33 + $0xbe0] sm:$0xff]
    %v2874 = vld [vmem:[#allocation33 + $0xbe8] sm:$0xff]
    %v2875 = vld [vmem:[#allocation33 + $0xbf0] sm:$0xff]
    %v2876 = vld [vmem:[#allocation33 + $0xbf8] sm:$0xff]
    %v2877 = vld [vmem:[#allocation33 + $0xc00] sm:$0xff]
    %v2878 = vld [vmem:[#allocation33 + $0xc08] sm:$0xff]
    %v2879 = vld [vmem:[#allocation33 + $0xc10] sm:$0xff]
    %v2880 = vld [vmem:[#allocation33 + $0xc18] sm:$0xff]
    %v2881 = vld [vmem:[#allocation33 + $0xc20] sm:$0xff]
    %v2882 = vld [vmem:[#allocation33 + $0xc28] sm:$0xff]
    %v2883 = vld [vmem:[#allocation33 + $0xc30] sm:$0xff]
    %v2884 = vld [vmem:[#allocation33 + $0xc38] sm:$0xff]
    %v2885 = vld [vmem:[#allocation33 + $0xc40] sm:$0xff]
    %v2886 = vld [vmem:[#allocation33 + $0xc48] sm:$0xff]
    %v2887 = vld [vmem:[#allocation33 + $0xc50] sm:$0xff]
    %v2888 = vld [vmem:[#allocation33 + $0xc58] sm:$0xff]
    %v2889 = vld [vmem:[#allocation33 + $0xc60] sm:$0xff]
    %v2890 = vld [vmem:[#allocation33 + $0xc68] sm:$0xff]
    %v2891 = vld [vmem:[#allocation33 + $0xc70] sm:$0xff]
    %v2892 = vld [vmem:[#allocation33 + $0xc78] sm:$0xff]
    %v2893 = vld [vmem:[#allocation33 + $0xc80] sm:$0xff]
    %v2894 = vld [vmem:[#allocation33 + $0xc88] sm:$0xff]
    %v2895 = vld [vmem:[#allocation33 + $0xc90] sm:$0xff]
    %v2896 = vld [vmem:[#allocation33 + $0xc98] sm:$0xff]
    %v2897 = vld [vmem:[#allocation33 + $0xca0] sm:$0xff]
    %v2898 = vld [vmem:[#allocation33 + $0xca8] sm:$0xff]
    %v2899 = vld [vmem:[#allocation33 + $0xcb0] sm:$0xff]
    %v2900 = vld [vmem:[#allocation33 + $0xcb8] sm:$0xff]
    %v2901 = vld [vmem:[#allocation33 + $0xcc0] sm:$0xff]
    %v2902 = vld [vmem:[#allocation33 + $0xcc8] sm:$0xff]
    %v2903 = vld [vmem:[#allocation33 + $0xcd0] sm:$0xff]
    %v2904 = vld [vmem:[#allocation33 + $0xcd8] sm:$0xff]
    %v2905 = vld [vmem:[#allocation33 + $0xce0] sm:$0xff]
    %v2906 = vld [vmem:[#allocation33 + $0xce8] sm:$0xff]
    %v2907 = vld [vmem:[#allocation33 + $0xcf0] sm:$0xff]
    %v2908 = vld [vmem:[#allocation33 + $0xcf8] sm:$0xff]
    %v2909 = vld [vmem:[#allocation33 + $0xd00] sm:$0xff]
    %v2910 = vld [vmem:[#allocation33 + $0xd08] sm:$0xff]
    %v2911 = vld [vmem:[#allocation33 + $0xd10] sm:$0xff]
    %v2912 = vld [vmem:[#allocation33 + $0xd18] sm:$0xff]
    %v2913 = vld [vmem:[#allocation33 + $0xd20] sm:$0xff]
    %v2914 = vld [vmem:[#allocation33 + $0xd28] sm:$0xff]
    %v2915 = vld [vmem:[#allocation33 + $0xd30] sm:$0xff]
    %v2916 = vld [vmem:[#allocation33 + $0xd38] sm:$0xff]
    %v2917 = vld [vmem:[#allocation33 + $0xd40] sm:$0xff]
    %v2918 = vld [vmem:[#allocation33 + $0xd48] sm:$0xff]
    %v2919 = vld [vmem:[#allocation33 + $0xd50] sm:$0xff]
    %v2920 = vld [vmem:[#allocation33 + $0xd58] sm:$0xff]
    %v2921 = vld [vmem:[#allocation33 + $0xd60] sm:$0xff]
    %v2922 = vld [vmem:[#allocation33 + $0xd68] sm:$0xff]
    %v2923 = vld [vmem:[#allocation33 + $0xd70] sm:$0xff]
    %v2924 = vld [vmem:[#allocation33 + $0xd78] sm:$0xff]
    %v2925 = vld [vmem:[#allocation33 + $0xd80] sm:$0xff]
    %v2926 = vld [vmem:[#allocation33 + $0xd88] sm:$0xff]
    %v2927 = vld [vmem:[#allocation33 + $0xd90] sm:$0xff]
    %v2928 = vld [vmem:[#allocation33 + $0xd98] sm:$0xff]
    %v2929 = vld [vmem:[#allocation33 + $0xda0] sm:$0xff]
    %v2930 = vld [vmem:[#allocation33 + $0xda8] sm:$0xff]
    %v2931 = vld [vmem:[#allocation33 + $0xdb0] sm:$0xff]
    %v2932 = vld [vmem:[#allocation33 + $0xdb8] sm:$0xff]
    %v2933 = vld [vmem:[#allocation33 + $0xdc0] sm:$0xff]
    %v2934 = vld [vmem:[#allocation33 + $0xdc8] sm:$0xff]
    %v2935 = vld [vmem:[#allocation33 + $0xdd0] sm:$0xff]
    %v2936 = vld [vmem:[#allocation33 + $0xdd8] sm:$0xff]
    %v2937 = vld [vmem:[#allocation33 + $0xde0] sm:$0xff]
    %v2938 = vld [vmem:[#allocation33 + $0xde8] sm:$0xff]
    %v2939 = vld [vmem:[#allocation33 + $0xdf0] sm:$0xff]
    %v2940 = vld [vmem:[#allocation33 + $0xdf8] sm:$0xff]
    %v2941 = vld [vmem:[#allocation33 + $0xe00] sm:$0xff]
    %v2942 = vld [vmem:[#allocation33 + $0xe08] sm:$0xff]
    %v2943 = vld [vmem:[#allocation33 + $0xe10] sm:$0xff]
    %v2944 = vld [vmem:[#allocation33 + $0xe18] sm:$0xff]
    %v2945 = vld [vmem:[#allocation33 + $0xe20] sm:$0xff]
    %v2946 = vld [vmem:[#allocation33 + $0xe28] sm:$0xff]
    %v2947 = vld [vmem:[#allocation33 + $0xe30] sm:$0xff]
    %v2948 = vld [vmem:[#allocation33 + $0xe38] sm:$0xff]
    %v2949 = vld [vmem:[#allocation33 + $0xe40] sm:$0xff]
    %v2950 = vld [vmem:[#allocation33 + $0xe48] sm:$0xff]
    %v2951 = vld [vmem:[#allocation33 + $0xe50] sm:$0xff]
    %v2952 = vld [vmem:[#allocation33 + $0xe58] sm:$0xff]
    %v2953 = vld [vmem:[#allocation33 + $0xe60] sm:$0xff]
    %v2954 = vld [vmem:[#allocation33 + $0xe68] sm:$0xff]
    %v2955 = vld [vmem:[#allocation33 + $0xe70] sm:$0xff]
    %v2956 = vld [vmem:[#allocation33 + $0xe78] sm:$0xff]
    %v2957 = vld [vmem:[#allocation33 + $0xe80] sm:$0xff]
    %v2958 = vld [vmem:[#allocation33 + $0xe88] sm:$0xff]
    %v2959 = vld [vmem:[#allocation33 + $0xe90] sm:$0xff]
    %v2960 = vld [vmem:[#allocation33 + $0xe98] sm:$0xff]
    %v2961 = vld [vmem:[#allocation33 + $0xea0] sm:$0xff]
    %v2962 = vld [vmem:[#allocation33 + $0xea8] sm:$0xff]
    %v2963 = vld [vmem:[#allocation33 + $0xeb0] sm:$0xff]
    %v2964 = vld [vmem:[#allocation33 + $0xeb8] sm:$0xff]
    %v2965 = vld [vmem:[#allocation33 + $0xec0] sm:$0xff]
    %v2966 = vld [vmem:[#allocation33 + $0xec8] sm:$0xff]
    %v2967 = vld [vmem:[#allocation33 + $0xed0] sm:$0xff]
    %v2968 = vld [vmem:[#allocation33 + $0xed8] sm:$0xff]
    %v2969 = vld [vmem:[#allocation33 + $0xee0] sm:$0xff]
    %v2970 = vld [vmem:[#allocation33 + $0xee8] sm:$0xff]
    %v2971 = vld [vmem:[#allocation33 + $0xef0] sm:$0xff]
    %v2972 = vld [vmem:[#allocation33 + $0xef8] sm:$0xff]
    %v2973 = vld [vmem:[#allocation33 + $0xf00] sm:$0xff]
    %v2974 = vld [vmem:[#allocation33 + $0xf08] sm:$0xff]
    %v2975 = vld [vmem:[#allocation33 + $0xf10] sm:$0xff]
    %v2976 = vld [vmem:[#allocation33 + $0xf18] sm:$0xff]
    %v2977 = vld [vmem:[#allocation33 + $0xf20] sm:$0xff]
    %v2978 = vld [vmem:[#allocation33 + $0xf28] sm:$0xff]
    %v2979 = vld [vmem:[#allocation33 + $0xf30] sm:$0xff]
    %v2980 = vld [vmem:[#allocation33 + $0xf38] sm:$0xff]
    %v2981 = vld [vmem:[#allocation33 + $0xf40] sm:$0xff]
    %v2982 = vld [vmem:[#allocation33 + $0xf48] sm:$0xff]
    %v2983 = vld [vmem:[#allocation33 + $0xf50] sm:$0xff]
    %v2984 = vld [vmem:[#allocation33 + $0xf58] sm:$0xff]
    %v2985 = vld [vmem:[#allocation33 + $0xf60] sm:$0xff]
    %v2986 = vld [vmem:[#allocation33 + $0xf68] sm:$0xff]
    %v2987 = vld [vmem:[#allocation33 + $0xf70] sm:$0xff]
    %v2988 = vld [vmem:[#allocation33 + $0xf78] sm:$0xff]
    %v2989 = vld [vmem:[#allocation33 + $0xf80] sm:$0xff]
    %v2990 = vld [vmem:[#allocation33 + $0xf88] sm:$0xff]
    %v2991 = vld [vmem:[#allocation33 + $0xf90] sm:$0xff]
    %v2992 = vld [vmem:[#allocation33 + $0xf98] sm:$0xff]
    %v2993 = vld [vmem:[#allocation33 + $0xfa0] sm:$0xff]
    %v2994 = vld [vmem:[#allocation33 + $0xfa8] sm:$0xff]
    %v2995 = vld [vmem:[#allocation33 + $0xfb0] sm:$0xff]
    %v2996 = vld [vmem:[#allocation33 + $0xfb8] sm:$0xff]
    %v2997 = vld [vmem:[#allocation33 + $0xfc0] sm:$0xff]
    %v2998 = vld [vmem:[#allocation33 + $0xfc8] sm:$0xff]
    %v2999 = vld [vmem:[#allocation33 + $0xfd0] sm:$0xff]
    %v3000 = vld [vmem:[#allocation33 + $0xfd8] sm:$0xff]
    %v3001 = vld [vmem:[#allocation33 + $0xfe0] sm:$0xff]
    %v3002 = vld [vmem:[#allocation33 + $0xfe8] sm:$0xff]
    %v3003 = vld [vmem:[#allocation33 + $0xff0] sm:$0xff]
    %v3004 = vld [vmem:[#allocation33 + $0xff8] sm:$0xff]
    %v3005 = vld [vmem:[#allocation33 + $0x1000] sm:$0xff]
    %v3006 = vld [vmem:[#allocation33 + $0x1008] sm:$0xff]
    %v3007 = vld [vmem:[#allocation33 + $0x1010] sm:$0xff]
    %v3008 = vld [vmem:[#allocation33 + $0x1018] sm:$0xff]
    %v3009 = vld [vmem:[#allocation33 + $0x1020] sm:$0xff]
    %v3010 = vld [vmem:[#allocation33 + $0x1028] sm:$0xff]
    %v3011 = vld [vmem:[#allocation33 + $0x1030] sm:$0xff]
    %v3012 = vld [vmem:[#allocation33 + $0x1038] sm:$0xff]
    %v3013 = vld [vmem:[#allocation33 + $0x1040] sm:$0xff]
    %v3014 = vld [vmem:[#allocation33 + $0x1048] sm:$0xff]
    %v3015 = vld [vmem:[#allocation33 + $0x1050] sm:$0xff]
    %v3016 = vld [vmem:[#allocation33 + $0x1058] sm:$0xff]
    %v3017 = vld [vmem:[#allocation33 + $0x1060] sm:$0xff]
    %v3018 = vld [vmem:[#allocation33 + $0x1068] sm:$0xff]
    %v3019 = vld [vmem:[#allocation33 + $0x1070] sm:$0xff]
    %v3020 = vld [vmem:[#allocation33 + $0x1078] sm:$0xff]
    %v3021 = vld [vmem:[#allocation33 + $0x1080] sm:$0xff]
    %v3022 = vld [vmem:[#allocation33 + $0x1088] sm:$0xff]
    %v3023 = vld [vmem:[#allocation33 + $0x1090] sm:$0xff]
    %v3024 = vld [vmem:[#allocation33 + $0x1098] sm:$0xff]
    %v3025 = vld [vmem:[#allocation33 + $0x10a0] sm:$0xff]
    %v3026 = vld [vmem:[#allocation33 + $0x10a8] sm:$0xff]
    %v3027 = vld [vmem:[#allocation33 + $0x10b0] sm:$0xff]
    %v3028 = vld [vmem:[#allocation33 + $0x10b8] sm:$0xff]
    %v3029 = vld [vmem:[#allocation33 + $0x10c0] sm:$0xff]
    %v3030 = vld [vmem:[#allocation33 + $0x10c8] sm:$0xff]
    %v3031 = vld [vmem:[#allocation33 + $0x10d0] sm:$0xff]
    %v3032 = vld [vmem:[#allocation33 + $0x10d8] sm:$0xff]
    %v3033 = vld [vmem:[#allocation33 + $0x10e0] sm:$0xff]
    %v3034 = vld [vmem:[#allocation33 + $0x10e8] sm:$0xff]
    %v3035 = vld [vmem:[#allocation33 + $0x10f0] sm:$0xff]
    %v3036 = vld [vmem:[#allocation33 + $0x10f8] sm:$0xff]
    %v3037 = vld [vmem:[#allocation33 + $0x1100] sm:$0xff]
    %v3038 = vld [vmem:[#allocation33 + $0x1108] sm:$0xff]
    %v3039 = vld [vmem:[#allocation33 + $0x1110] sm:$0xff]
    %v3040 = vld [vmem:[#allocation33 + $0x1118] sm:$0xff]
    %v3041 = vld [vmem:[#allocation33 + $0x1120] sm:$0xff]
    %v3042 = vld [vmem:[#allocation33 + $0x1128] sm:$0xff]
    %v3043 = vld [vmem:[#allocation33 + $0x1130] sm:$0xff]
    %v3044 = vld [vmem:[#allocation33 + $0x1138] sm:$0xff]
    %v3045 = vld [vmem:[#allocation33 + $0x1140] sm:$0xff]
    %v3046 = vld [vmem:[#allocation33 + $0x1148] sm:$0xff]
    %v3047 = vld [vmem:[#allocation33 + $0x1150] sm:$0xff]
    %v3048 = vld [vmem:[#allocation33 + $0x1158] sm:$0xff]
    %v3049 = vld [vmem:[#allocation33 + $0x1160] sm:$0xff]
    %v3050 = vld [vmem:[#allocation33 + $0x1168] sm:$0xff]
    %v3051 = vld [vmem:[#allocation33 + $0x1170] sm:$0xff]
    %v3052 = vld [vmem:[#allocation33 + $0x1178] sm:$0xff]
    %v3053 = vld [vmem:[#allocation33 + $0x1180] sm:$0xff]
    %v3054 = vld [vmem:[#allocation33 + $0x1188] sm:$0xff]
    %v3055 = vld [vmem:[#allocation33 + $0x1190] sm:$0xff]
    %v3056 = vld [vmem:[#allocation33 + $0x1198] sm:$0xff]
    %v3057 = vld [vmem:[#allocation33 + $0x11a0] sm:$0xff]
    %v3058 = vld [vmem:[#allocation33 + $0x11a8] sm:$0xff]
    %v3059 = vld [vmem:[#allocation33 + $0x11b0] sm:$0xff]
    %v3060 = vld [vmem:[#allocation33 + $0x11b8] sm:$0xff]
    %v3061 = vld [vmem:[#allocation33 + $0x11c0] sm:$0xff]
    %v3062 = vld [vmem:[#allocation33 + $0x11c8] sm:$0xff]
    %v3063 = vld [vmem:[#allocation33 + $0x11d0] sm:$0xff]
    %v3064 = vld [vmem:[#allocation33 + $0x11d8] sm:$0xff]
    %v3065 = vld [vmem:[#allocation33 + $0x11e0] sm:$0xff]
    %v3066 = vld [vmem:[#allocation33 + $0x11e8] sm:$0xff]
    %v3067 = vld [vmem:[#allocation33 + $0x11f0] sm:$0xff]
    %v3068 = vld [vmem:[#allocation33 + $0x11f8] sm:$0xff]
    %v3069 = vld [vmem:[#allocation33 + $0x1200] sm:$0xff]
    %v3070 = vld [vmem:[#allocation33 + $0x1208] sm:$0xff]
    %v3071 = vld [vmem:[#allocation33 + $0x1210] sm:$0xff]
    %v3072 = vld [vmem:[#allocation33 + $0x1218] sm:$0xff]
    %v3073 = vld [vmem:[#allocation33 + $0x1220] sm:$0xff]
    %v3074 = vld [vmem:[#allocation33 + $0x1228] sm:$0xff]
    %v3075 = vld [vmem:[#allocation33 + $0x1230] sm:$0xff]
    %v3076 = vld [vmem:[#allocation33 + $0x1238] sm:$0xff]
    %v3077 = vld [vmem:[#allocation33 + $0x1240] sm:$0xff]
    %v3078 = vld [vmem:[#allocation33 + $0x1248] sm:$0xff]
    %v3079 = vld [vmem:[#allocation33 + $0x1250] sm:$0xff]
    %v3080 = vld [vmem:[#allocation33 + $0x1258] sm:$0xff]
    %v3081 = vld [vmem:[#allocation33 + $0x1260] sm:$0xff]
    %v3082 = vld [vmem:[#allocation33 + $0x1268] sm:$0xff]
    %v3083 = vld [vmem:[#allocation33 + $0x1270] sm:$0xff]
    %v3084 = vld [vmem:[#allocation33 + $0x1278] sm:$0xff]
    %v3085 = vld [vmem:[#allocation33 + $0x1280] sm:$0xff]
    %v3086 = vld [vmem:[#allocation33 + $0x1288] sm:$0xff]
    %v3087 = vld [vmem:[#allocation33 + $0x1290] sm:$0xff]
    %v3088 = vld [vmem:[#allocation33 + $0x1298] sm:$0xff]
    %v3089 = vld [vmem:[#allocation33 + $0x12a0] sm:$0xff]
    %v3090 = vld [vmem:[#allocation33 + $0x12a8] sm:$0xff]
    %v3091 = vld [vmem:[#allocation33 + $0x12b0] sm:$0xff]
    %v3092 = vld [vmem:[#allocation33 + $0x12b8] sm:$0xff]
    %v3093 = vld [vmem:[#allocation33 + $0x12c0] sm:$0xff]
    %v3094 = vld [vmem:[#allocation33 + $0x12c8] sm:$0xff]
    %v3095 = vld [vmem:[#allocation33 + $0x12d0] sm:$0xff]
    %v3096 = vld [vmem:[#allocation33 + $0x12d8] sm:$0xff]
    %v3097 = vld [vmem:[#allocation33 + $0x12e0] sm:$0xff]
    %v3098 = vld [vmem:[#allocation33 + $0x12e8] sm:$0xff]
    %v3099 = vld [vmem:[#allocation33 + $0x12f0] sm:$0xff]
    %v3100 = vld [vmem:[#allocation33 + $0x12f8] sm:$0xff]
    %v3101 = vld [vmem:[#allocation33 + $0x1300] sm:$0xff]
    %v3102 = vld [vmem:[#allocation33 + $0x1308] sm:$0xff]
    %v3103 = vld [vmem:[#allocation33 + $0x1310] sm:$0xff]
    %v3104 = vld [vmem:[#allocation33 + $0x1318] sm:$0xff]
    %v3105 = vld [vmem:[#allocation33 + $0x1320] sm:$0xff]
    %v3106 = vld [vmem:[#allocation33 + $0x1328] sm:$0xff]
    %v3107 = vld [vmem:[#allocation33 + $0x1330] sm:$0xff]
    %v3108 = vld [vmem:[#allocation33 + $0x1338] sm:$0xff]
    %v3109 = vld [vmem:[#allocation33 + $0x1340] sm:$0xff]
    %v3110 = vld [vmem:[#allocation33 + $0x1348] sm:$0xff]
    %v3111 = vld [vmem:[#allocation33 + $0x1350] sm:$0xff]
    %v3112 = vld [vmem:[#allocation33 + $0x1358] sm:$0xff]
    %v3113 = vld [vmem:[#allocation33 + $0x1360] sm:$0xff]
    %v3114 = vld [vmem:[#allocation33 + $0x1368] sm:$0xff]
    %v3115 = vld [vmem:[#allocation33 + $0x1370] sm:$0xff]
    %v3116 = vld [vmem:[#allocation33 + $0x1378] sm:$0xff]
    %v3117 = vld [vmem:[#allocation33 + $0x1380] sm:$0xff]
    %v3118 = vld [vmem:[#allocation33 + $0x1388] sm:$0xff]
    %v3119 = vld [vmem:[#allocation33 + $0x1390] sm:$0xff]
    %v3120 = vld [vmem:[#allocation33 + $0x1398] sm:$0xff]
    %v3121 = vld [vmem:[#allocation33 + $0x13a0] sm:$0xff]
    %v3122 = vld [vmem:[#allocation33 + $0x13a8] sm:$0xff]
    %v3123 = vld [vmem:[#allocation33 + $0x13b0] sm:$0xff]
    %v3124 = vld [vmem:[#allocation33 + $0x13b8] sm:$0xff]
    %v3125 = vld [vmem:[#allocation33 + $0x13c0] sm:$0xff]
    %v3126 = vld [vmem:[#allocation33 + $0x13c8] sm:$0xff]
    %v3127 = vld [vmem:[#allocation33 + $0x13d0] sm:$0xff]
    %v3128 = vld [vmem:[#allocation33 + $0x13d8] sm:$0xff]
    %v3129 = vld [vmem:[#allocation33 + $0x13e0] sm:$0xff]
    %v3130 = vld [vmem:[#allocation33 + $0x13e8] sm:$0xff]
    %v3131 = vld [vmem:[#allocation33 + $0x13f0] sm:$0xff]
    %v3132 = vld [vmem:[#allocation33 + $0x13f8] sm:$0xff]
    %v3133 = vld [vmem:[#allocation33 + $0x1400] sm:$0xff]
    %v3134 = vld [vmem:[#allocation33 + $0x1408] sm:$0xff]
    %v3135 = vld [vmem:[#allocation33 + $0x1410] sm:$0xff]
    %v3136 = vld [vmem:[#allocation33 + $0x1418] sm:$0xff]
    %v3137 = vld [vmem:[#allocation33 + $0x1420] sm:$0xff]
    %v3138 = vld [vmem:[#allocation33 + $0x1428] sm:$0xff]
    %v3139 = vld [vmem:[#allocation33 + $0x1430] sm:$0xff]
    %v3140 = vld [vmem:[#allocation33 + $0x1438] sm:$0xff]
    %v3141 = vld [vmem:[#allocation33 + $0x1440] sm:$0xff]
    %v3142 = vld [vmem:[#allocation33 + $0x1448] sm:$0xff]
    %v3143 = vld [vmem:[#allocation33 + $0x1450] sm:$0xff]
    %v3144 = vld [vmem:[#allocation33 + $0x1458] sm:$0xff]
    %v3145 = vld [vmem:[#allocation33 + $0x1460] sm:$0xff]
    %v3146 = vld [vmem:[#allocation33 + $0x1468] sm:$0xff]
    %v3147 = vld [vmem:[#allocation33 + $0x1470] sm:$0xff]
    %v3148 = vld [vmem:[#allocation33 + $0x1478] sm:$0xff]
    %v3149 = vld [vmem:[#allocation33 + $0x1480] sm:$0xff]
    %v3150 = vld [vmem:[#allocation33 + $0x1488] sm:$0xff]
    %v3151 = vld [vmem:[#allocation33 + $0x1490] sm:$0xff]
    %v3152 = vld [vmem:[#allocation33 + $0x1498] sm:$0xff]
    %v3153 = vld [vmem:[#allocation33 + $0x14a0] sm:$0xff]
    %v3154 = vld [vmem:[#allocation33 + $0x14a8] sm:$0xff]
    %v3155 = vld [vmem:[#allocation33 + $0x14b0] sm:$0xff]
    %v3156 = vld [vmem:[#allocation33 + $0x14b8] sm:$0xff]
    %v3157 = vld [vmem:[#allocation33 + $0x14c0] sm:$0xff]
    %v3158 = vld [vmem:[#allocation33 + $0x14c8] sm:$0xff]
    %v3159 = vld [vmem:[#allocation33 + $0x14d0] sm:$0xff]
    %v3160 = vld [vmem:[#allocation33 + $0x14d8] sm:$0xff]
    %v3161 = vld [vmem:[#allocation33 + $0x14e0] sm:$0xff]
    %v3162 = vld [vmem:[#allocation33 + $0x14e8] sm:$0xff]
    %v3163 = vld [vmem:[#allocation33 + $0x14f0] sm:$0xff]
    %v3164 = vld [vmem:[#allocation33 + $0x14f8] sm:$0xff]
    %v3165 = vld [vmem:[#allocation33 + $0x1500] sm:$0xff]
    %v3166 = vld [vmem:[#allocation33 + $0x1508] sm:$0xff]
    %v3167 = vld [vmem:[#allocation33 + $0x1510] sm:$0xff]
    %v3168 = vld [vmem:[#allocation33 + $0x1518] sm:$0xff]
    %v3169 = vld [vmem:[#allocation33 + $0x1520] sm:$0xff]
    %v3170 = vld [vmem:[#allocation33 + $0x1528] sm:$0xff]
    %v3171 = vld [vmem:[#allocation33 + $0x1530] sm:$0xff]
    %v3172 = vld [vmem:[#allocation33 + $0x1538] sm:$0xff]
    %v3173 = vld [vmem:[#allocation33 + $0x1540] sm:$0xff]
    %v3174 = vld [vmem:[#allocation33 + $0x1548] sm:$0xff]
    %v3175 = vld [vmem:[#allocation33 + $0x1550] sm:$0xff]
    %v3176 = vld [vmem:[#allocation33 + $0x1558] sm:$0xff]
    %v3177 = vld [vmem:[#allocation33 + $0x1560] sm:$0xff]
    %v3178 = vld [vmem:[#allocation33 + $0x1568] sm:$0xff]
    %v3179 = vld [vmem:[#allocation33 + $0x1570] sm:$0xff]
    %v3180 = vld [vmem:[#allocation33 + $0x1578] sm:$0xff]
    %v3181 = vld [vmem:[#allocation33 + $0x1580] sm:$0xff]
    %v3182 = vld [vmem:[#allocation33 + $0x1588] sm:$0xff]
    %v3183 = vld [vmem:[#allocation33 + $0x1590] sm:$0xff]
    %v3184 = vld [vmem:[#allocation33 + $0x1598] sm:$0xff]
    %v3185 = vld [vmem:[#allocation33 + $0x15a0] sm:$0xff]
    %v3186 = vld [vmem:[#allocation33 + $0x15a8] sm:$0xff]
    %v3187 = vld [vmem:[#allocation33 + $0x15b0] sm:$0xff]
    %v3188 = vld [vmem:[#allocation33 + $0x15b8] sm:$0xff]
    %v3189 = vld [vmem:[#allocation33 + $0x15c0] sm:$0xff]
    %v3190 = vld [vmem:[#allocation33 + $0x15c8] sm:$0xff]
    %v3191 = vld [vmem:[#allocation33 + $0x15d0] sm:$0xff]
    %v3192 = vld [vmem:[#allocation33 + $0x15d8] sm:$0xff]
    %v3193 = vld [vmem:[#allocation33 + $0x15e0] sm:$0xff]
    %v3194 = vld [vmem:[#allocation33 + $0x15e8] sm:$0xff]
    %v3195 = vld [vmem:[#allocation33 + $0x15f0] sm:$0xff]
    %v3196 = vld [vmem:[#allocation33 + $0x15f8] sm:$0xff]
    %v3197 = vld [vmem:[#allocation33 + $0x1600] sm:$0xff]
    %v3198 = vld [vmem:[#allocation33 + $0x1608] sm:$0xff]
    %v3199 = vld [vmem:[#allocation33 + $0x1610] sm:$0xff]
    %v3200 = vld [vmem:[#allocation33 + $0x1618] sm:$0xff]
    %v3201 = vld [vmem:[#allocation33 + $0x1620] sm:$0xff]
    %v3202 = vld [vmem:[#allocation33 + $0x1628] sm:$0xff]
    %v3203 = vld [vmem:[#allocation33 + $0x1630] sm:$0xff]
    %v3204 = vld [vmem:[#allocation33 + $0x1638] sm:$0xff]
    %v3205 = vld [vmem:[#allocation33 + $0x1640] sm:$0xff]
    %v3206 = vld [vmem:[#allocation33 + $0x1648] sm:$0xff]
    %v3207 = vld [vmem:[#allocation33 + $0x1650] sm:$0xff]
    %v3208 = vld [vmem:[#allocation33 + $0x1658] sm:$0xff]
    %v3209 = vld [vmem:[#allocation33 + $0x1660] sm:$0xff]
    %v3210 = vld [vmem:[#allocation33 + $0x1668] sm:$0xff]
    %v3211 = vld [vmem:[#allocation33 + $0x1670] sm:$0xff]
    %v3212 = vld [vmem:[#allocation33 + $0x1678] sm:$0xff]
    %v3213 = vld [vmem:[#allocation33 + $0x1680] sm:$0xff]
    %v3214 = vld [vmem:[#allocation33 + $0x1688] sm:$0xff]
    %v3215 = vld [vmem:[#allocation33 + $0x1690] sm:$0xff]
    %v3216 = vld [vmem:[#allocation33 + $0x1698] sm:$0xff]
    %v3217 = vld [vmem:[#allocation33 + $0x16a0] sm:$0xff]
    %v3218 = vld [vmem:[#allocation33 + $0x16a8] sm:$0xff]
    %v3219 = vld [vmem:[#allocation33 + $0x16b0] sm:$0xff]
    %v3220 = vld [vmem:[#allocation33 + $0x16b8] sm:$0xff]
    %v3221 = vld [vmem:[#allocation33 + $0x16c0] sm:$0xff]
    %v3222 = vld [vmem:[#allocation33 + $0x16c8] sm:$0xff]
    %v3223 = vld [vmem:[#allocation33 + $0x16d0] sm:$0xff]
    %v3224 = vld [vmem:[#allocation33 + $0x16d8] sm:$0xff]
    %v3225 = vld [vmem:[#allocation33 + $0x16e0] sm:$0xff]
    %v3226 = vld [vmem:[#allocation33 + $0x16e8] sm:$0xff]
    %v3227 = vld [vmem:[#allocation33 + $0x16f0] sm:$0xff]
    %v3228 = vld [vmem:[#allocation33 + $0x16f8] sm:$0xff]
    %v3229 = vld [vmem:[#allocation33 + $0x1700] sm:$0xff]
    %v3230 = vld [vmem:[#allocation33 + $0x1708] sm:$0xff]
    %v3231 = vld [vmem:[#allocation33 + $0x1710] sm:$0xff]
    %v3232 = vld [vmem:[#allocation33 + $0x1718] sm:$0xff]
    %v3233 = vld [vmem:[#allocation33 + $0x1720] sm:$0xff]
    %v3234 = vld [vmem:[#allocation33 + $0x1728] sm:$0xff]
    %v3235 = vld [vmem:[#allocation33 + $0x1730] sm:$0xff]
    %v3236 = vld [vmem:[#allocation33 + $0x1738] sm:$0xff]
    %v3237 = vld [vmem:[#allocation33 + $0x1740] sm:$0xff]
    %v3238 = vld [vmem:[#allocation33 + $0x1748] sm:$0xff]
    %v3239 = vld [vmem:[#allocation33 + $0x1750] sm:$0xff]
    %v3240 = vld [vmem:[#allocation33 + $0x1758] sm:$0xff]
    %v3241 = vld [vmem:[#allocation33 + $0x1760] sm:$0xff]
    %v3242 = vld [vmem:[#allocation33 + $0x1768] sm:$0xff]
    %v3243 = vld [vmem:[#allocation33 + $0x1770] sm:$0xff]
    %v3244 = vld [vmem:[#allocation33 + $0x1778] sm:$0xff]
    %v3245 = vld [vmem:[#allocation33 + $0x1780] sm:$0xff]
    %v3246 = vld [vmem:[#allocation33 + $0x1788] sm:$0xff]
    %v3247 = vld [vmem:[#allocation33 + $0x1790] sm:$0xff]
    %v3248 = vld [vmem:[#allocation33 + $0x1798] sm:$0xff]
    %v3249 = vld [vmem:[#allocation33 + $0x17a0] sm:$0xff]
    %v3250 = vld [vmem:[#allocation33 + $0x17a8] sm:$0xff]
    %v3251 = vld [vmem:[#allocation33 + $0x17b0] sm:$0xff]
    %v3252 = vld [vmem:[#allocation33 + $0x17b8] sm:$0xff]
    %v3253 = vld [vmem:[#allocation33 + $0x17c0] sm:$0xff]
    %v3254 = vld [vmem:[#allocation33 + $0x17c8] sm:$0xff]
    %v3255 = vld [vmem:[#allocation33 + $0x17d0] sm:$0xff]
    %v3256 = vld [vmem:[#allocation33 + $0x17d8] sm:$0xff]
    %v3257 = vld [vmem:[#allocation33 + $0x17e0] sm:$0xff]
    %v3258 = vld [vmem:[#allocation33 + $0x17e8] sm:$0xff]
    %v3259 = vld [vmem:[#allocation33 + $0x17f0] sm:$0xff]
    %v3260 = vld [vmem:[#allocation33 + $0x17f8] sm:$0xff]
    %v3261 = vld [vmem:[#allocation33 + $0x1800] sm:$0xff]
    %v3262 = vld [vmem:[#allocation33 + $0x1808] sm:$0xff]
    %v3263 = vld [vmem:[#allocation33 + $0x1810] sm:$0xff]
    %v3264 = vld [vmem:[#allocation33 + $0x1818] sm:$0xff]
    %v3265 = vld [vmem:[#allocation33 + $0x1820] sm:$0xff]
    %v3266 = vld [vmem:[#allocation33 + $0x1828] sm:$0xff]
    %v3267 = vld [vmem:[#allocation33 + $0x1830] sm:$0xff]
    %v3268 = vld [vmem:[#allocation33 + $0x1838] sm:$0xff]
    %v3269 = vld [vmem:[#allocation33 + $0x1840] sm:$0xff]
    %v3270 = vld [vmem:[#allocation33 + $0x1848] sm:$0xff]
    %v3271 = vld [vmem:[#allocation33 + $0x1850] sm:$0xff]
    %v3272 = vld [vmem:[#allocation33 + $0x1858] sm:$0xff]
    %v3273 = vld [vmem:[#allocation33 + $0x1860] sm:$0xff]
    %v3274 = vld [vmem:[#allocation33 + $0x1868] sm:$0xff]
    %v3275 = vld [vmem:[#allocation33 + $0x1870] sm:$0xff]
    %v3276 = vld [vmem:[#allocation33 + $0x1878] sm:$0xff]
    %v3277 = vld [vmem:[#allocation33 + $0x1880] sm:$0xff]
    %v3278 = vld [vmem:[#allocation33 + $0x1888] sm:$0xff]
    %v3279 = vld [vmem:[#allocation33 + $0x1890] sm:$0xff]
    %v3280 = vld [vmem:[#allocation33 + $0x1898] sm:$0xff]
    %v3281 = vld [vmem:[#allocation33 + $0x18a0] sm:$0xff]
    %v3282 = vld [vmem:[#allocation33 + $0x18a8] sm:$0xff]
    %v3283 = vld [vmem:[#allocation33 + $0x18b0] sm:$0xff]
    %v3284 = vld [vmem:[#allocation33 + $0x18b8] sm:$0xff]
    %v3285 = vld [vmem:[#allocation33 + $0x18c0] sm:$0xff]
    %v3286 = vld [vmem:[#allocation33 + $0x18c8] sm:$0xff]
    %v3287 = vld [vmem:[#allocation33 + $0x18d0] sm:$0xff]
    %v3288 = vld [vmem:[#allocation33 + $0x18d8] sm:$0xff]
    %v3289 = vld [vmem:[#allocation33 + $0x18e0] sm:$0xff]
    %v3290 = vld [vmem:[#allocation33 + $0x18e8] sm:$0xff]
    %v3291 = vld [vmem:[#allocation33 + $0x18f0] sm:$0xff]
    %v3292 = vld [vmem:[#allocation33 + $0x18f8] sm:$0xff]
    %v3293 = vld [vmem:[#allocation33 + $0x1900] sm:$0xff]
    %v3294 = vld [vmem:[#allocation33 + $0x1908] sm:$0xff]
    %v3295 = vld [vmem:[#allocation33 + $0x1910] sm:$0xff]
    %v3296 = vld [vmem:[#allocation33 + $0x1918] sm:$0xff]
    %v3297 = vld [vmem:[#allocation33 + $0x1920] sm:$0xff]
    %v3298 = vld [vmem:[#allocation33 + $0x1928] sm:$0xff]
    %v3299 = vld [vmem:[#allocation33 + $0x1930] sm:$0xff]
    %v3300 = vld [vmem:[#allocation33 + $0x1938] sm:$0xff]
    %v3301 = vld [vmem:[#allocation33 + $0x1940] sm:$0xff]
    %v3302 = vld [vmem:[#allocation33 + $0x1948] sm:$0xff]
    %v3303 = vld [vmem:[#allocation33 + $0x1950] sm:$0xff]
    %v3304 = vld [vmem:[#allocation33 + $0x1958] sm:$0xff]
    %v3305 = vld [vmem:[#allocation33 + $0x1960] sm:$0xff]
    %v3306 = vld [vmem:[#allocation33 + $0x1968] sm:$0xff]
    %v3307 = vld [vmem:[#allocation33 + $0x1970] sm:$0xff]
    %v3308 = vld [vmem:[#allocation33 + $0x1978] sm:$0xff]
    %v3309 = vld [vmem:[#allocation33 + $0x1980] sm:$0xff]
    %v3310 = vld [vmem:[#allocation33 + $0x1988] sm:$0xff]
    %v3311 = vld [vmem:[#allocation33 + $0x1990] sm:$0xff]
    %v3312 = vld [vmem:[#allocation33 + $0x1998] sm:$0xff]
    %v3313 = vld [vmem:[#allocation33 + $0x19a0] sm:$0xff]
    %v3314 = vld [vmem:[#allocation33 + $0x19a8] sm:$0xff]
    %v3315 = vld [vmem:[#allocation33 + $0x19b0] sm:$0xff]
    %v3316 = vld [vmem:[#allocation33 + $0x19b8] sm:$0xff]
    %v3317 = vld [vmem:[#allocation33 + $0x19c0] sm:$0xff]
    %v3318 = vld [vmem:[#allocation33 + $0x19c8] sm:$0xff]
    %v3319 = vld [vmem:[#allocation33 + $0x19d0] sm:$0xff]
    %v3320 = vld [vmem:[#allocation33 + $0x19d8] sm:$0xff]
    %v3321 = vld [vmem:[#allocation33 + $0x19e0] sm:$0xff]
    %v3322 = vld [vmem:[#allocation33 + $0x19e8] sm:$0xff]
    %v3323 = vld [vmem:[#allocation33 + $0x19f0] sm:$0xff]
    %v3324 = vld [vmem:[#allocation33 + $0x19f8] sm:$0xff]
    %v3325 = vld [vmem:[#allocation33 + $0x1a00] sm:$0xff]
    %v3326 = vld [vmem:[#allocation33 + $0x1a08] sm:$0xff]
    %v3327 = vld [vmem:[#allocation33 + $0x1a10] sm:$0xff]
    %v3328 = vld [vmem:[#allocation33 + $0x1a18] sm:$0xff]
    %v3329 = vld [vmem:[#allocation33 + $0x1a20] sm:$0xff]
    %v3330 = vld [vmem:[#allocation33 + $0x1a28] sm:$0xff]
    %v3331 = vld [vmem:[#allocation33 + $0x1a30] sm:$0xff]
    %v3332 = vld [vmem:[#allocation33 + $0x1a38] sm:$0xff]
    %v3333 = vld [vmem:[#allocation33 + $0x1a40] sm:$0xff]
    %v3334 = vld [vmem:[#allocation33 + $0x1a48] sm:$0xff]
    %v3335 = vld [vmem:[#allocation33 + $0x1a50] sm:$0xff]
    %v3336 = vld [vmem:[#allocation33 + $0x1a58] sm:$0xff]
    %v3337 = vld [vmem:[#allocation33 + $0x1a60] sm:$0xff]
    %v3338 = vld [vmem:[#allocation33 + $0x1a68] sm:$0xff]
    %v3339 = vld [vmem:[#allocation33 + $0x1a70] sm:$0xff]
    %v3340 = vld [vmem:[#allocation33 + $0x1a78] sm:$0xff]
    %v3341 = vld [vmem:[#allocation33 + $0x1a80] sm:$0xff]
    %v3342 = vld [vmem:[#allocation33 + $0x1a88] sm:$0xff]
    %v3343 = vld [vmem:[#allocation33 + $0x1a90] sm:$0xff]
    %v3344 = vld [vmem:[#allocation33 + $0x1a98] sm:$0xff]
    %v3345 = vld [vmem:[#allocation33 + $0x1aa0] sm:$0xff]
    %v3346 = vld [vmem:[#allocation33 + $0x1aa8] sm:$0xff]
    %v3347 = vld [vmem:[#allocation33 + $0x1ab0] sm:$0xff]
    %v3348 = vld [vmem:[#allocation33 + $0x1ab8] sm:$0xff]
    %v3349 = vld [vmem:[#allocation33 + $0x1ac0] sm:$0xff]
    %v3350 = vld [vmem:[#allocation33 + $0x1ac8] sm:$0xff]
    %v3351 = vld [vmem:[#allocation33 + $0x1ad0] sm:$0xff]
    %v3352 = vld [vmem:[#allocation33 + $0x1ad8] sm:$0xff]
    %v3353 = vld [vmem:[#allocation33 + $0x1ae0] sm:$0xff]
    %v3354 = vld [vmem:[#allocation33 + $0x1ae8] sm:$0xff]
    %v3355 = vld [vmem:[#allocation33 + $0x1af0] sm:$0xff]
    %v3356 = vld [vmem:[#allocation33 + $0x1af8] sm:$0xff]
    %v3357 = vld [vmem:[#allocation33 + $0x1b00] sm:$0xff]
    %v3358 = vld [vmem:[#allocation33 + $0x1b08] sm:$0xff]
    %v3359 = vld [vmem:[#allocation33 + $0x1b10] sm:$0xff]
    %v3360 = vld [vmem:[#allocation33 + $0x1b18] sm:$0xff]
    %v3361 = vld [vmem:[#allocation33 + $0x1b20] sm:$0xff]
    %v3362 = vld [vmem:[#allocation33 + $0x1b28] sm:$0xff]
    %v3363 = vld [vmem:[#allocation33 + $0x1b30] sm:$0xff]
    %v3364 = vld [vmem:[#allocation33 + $0x1b38] sm:$0xff]
    %v3365 = vld [vmem:[#allocation33 + $0x1b40] sm:$0xff]
    %v3366 = vld [vmem:[#allocation33 + $0x1b48] sm:$0xff]
    %v3367 = vld [vmem:[#allocation33 + $0x1b50] sm:$0xff]
    %v3368 = vld [vmem:[#allocation33 + $0x1b58] sm:$0xff]
    %v3369 = vld [vmem:[#allocation33 + $0x1b60] sm:$0xff]
    %v3370 = vld [vmem:[#allocation33 + $0x1b68] sm:$0xff]
    %v3371 = vld [vmem:[#allocation33 + $0x1b70] sm:$0xff]
    %v3372 = vld [vmem:[#allocation33 + $0x1b78] sm:$0xff]
    %v3373 = vld [vmem:[#allocation33 + $0x1b80] sm:$0xff]
    %v3374 = vld [vmem:[#allocation33 + $0x1b88] sm:$0xff]
    %v3375 = vld [vmem:[#allocation33 + $0x1b90] sm:$0xff]
    %v3376 = vld [vmem:[#allocation33 + $0x1b98] sm:$0xff]
    %v3377 = vld [vmem:[#allocation33 + $0x1ba0] sm:$0xff]
    %v3378 = vld [vmem:[#allocation33 + $0x1ba8] sm:$0xff]
    %v3379 = vld [vmem:[#allocation33 + $0x1bb0] sm:$0xff]
    %v3380 = vld [vmem:[#allocation33 + $0x1bb8] sm:$0xff]
    %v3381 = vld [vmem:[#allocation33 + $0x1bc0] sm:$0xff]
    %v3382 = vld [vmem:[#allocation33 + $0x1bc8] sm:$0xff]
    %v3383 = vld [vmem:[#allocation33 + $0x1bd0] sm:$0xff]
    %v3384 = vld [vmem:[#allocation33 + $0x1bd8] sm:$0xff]
    %v3385 = vld [vmem:[#allocation33 + $0x1be0] sm:$0xff]
    %v3386 = vld [vmem:[#allocation33 + $0x1be8] sm:$0xff]
    %v3387 = vld [vmem:[#allocation33 + $0x1bf0] sm:$0xff]
    %v3388 = vld [vmem:[#allocation33 + $0x1bf8] sm:$0xff]
    %v3389 = vld [vmem:[#allocation33 + $0x1c00] sm:$0xff]
    %v3390 = vld [vmem:[#allocation33 + $0x1c08] sm:$0xff]
    %v3391 = vld [vmem:[#allocation33 + $0x1c10] sm:$0xff]
    %v3392 = vld [vmem:[#allocation33 + $0x1c18] sm:$0xff]
    %v3393 = vld [vmem:[#allocation33 + $0x1c20] sm:$0xff]
    %v3394 = vld [vmem:[#allocation33 + $0x1c28] sm:$0xff]
    %v3395 = vld [vmem:[#allocation33 + $0x1c30] sm:$0xff]
    %v3396 = vld [vmem:[#allocation33 + $0x1c38] sm:$0xff]
    %v3397 = vld [vmem:[#allocation33 + $0x1c40] sm:$0xff]
    %v3398 = vld [vmem:[#allocation33 + $0x1c48] sm:$0xff]
    %v3399 = vld [vmem:[#allocation33 + $0x1c50] sm:$0xff]
    %v3400 = vld [vmem:[#allocation33 + $0x1c58] sm:$0xff]
    %v3401 = vld [vmem:[#allocation33 + $0x1c60] sm:$0xff]
    %v3402 = vld [vmem:[#allocation33 + $0x1c68] sm:$0xff]
    %v3403 = vld [vmem:[#allocation33 + $0x1c70] sm:$0xff]
    %v3404 = vld [vmem:[#allocation33 + $0x1c78] sm:$0xff]
    %v3405 = vld [vmem:[#allocation33 + $0x1c80] sm:$0xff]
    %v3406 = vld [vmem:[#allocation33 + $0x1c88] sm:$0xff]
    %v3407 = vld [vmem:[#allocation33 + $0x1c90] sm:$0xff]
    %v3408 = vld [vmem:[#allocation33 + $0x1c98] sm:$0xff]
    %v3409 = vld [vmem:[#allocation33 + $0x1ca0] sm:$0xff]
    %v3410 = vld [vmem:[#allocation33 + $0x1ca8] sm:$0xff]
    %v3411 = vld [vmem:[#allocation33 + $0x1cb0] sm:$0xff]
    %v3412 = vld [vmem:[#allocation33 + $0x1cb8] sm:$0xff]
    %v3413 = vld [vmem:[#allocation33 + $0x1cc0] sm:$0xff]
    %v3414 = vld [vmem:[#allocation33 + $0x1cc8] sm:$0xff]
    %v3415 = vld [vmem:[#allocation33 + $0x1cd0] sm:$0xff]
    %v3416 = vld [vmem:[#allocation33 + $0x1cd8] sm:$0xff]
    %v3417 = vld [vmem:[#allocation33 + $0x1ce0] sm:$0xff]
    %v3418 = vld [vmem:[#allocation33 + $0x1ce8] sm:$0xff]
    %v3419 = vld [vmem:[#allocation33 + $0x1cf0] sm:$0xff]
    %v3420 = vld [vmem:[#allocation33 + $0x1cf8] sm:$0xff]
    %v3421 = vld [vmem:[#allocation33 + $0x1d00] sm:$0xff]
    %v3422 = vld [vmem:[#allocation33 + $0x1d08] sm:$0xff]
    %v3423 = vld [vmem:[#allocation33 + $0x1d10] sm:$0xff]
    %v3424 = vld [vmem:[#allocation33 + $0x1d18] sm:$0xff]
    %v3425 = vld [vmem:[#allocation33 + $0x1d20] sm:$0xff]
    %v3426 = vld [vmem:[#allocation33 + $0x1d28] sm:$0xff]
    %v3427 = vld [vmem:[#allocation33 + $0x1d30] sm:$0xff]
    %v3428 = vld [vmem:[#allocation33 + $0x1d38] sm:$0xff]
    %v3429 = vld [vmem:[#allocation33 + $0x1d40] sm:$0xff]
    %v3430 = vld [vmem:[#allocation33 + $0x1d48] sm:$0xff]
    %v3431 = vld [vmem:[#allocation33 + $0x1d50] sm:$0xff]
    %v3432 = vld [vmem:[#allocation33 + $0x1d58] sm:$0xff]
    %v3433 = vld [vmem:[#allocation33 + $0x1d60] sm:$0xff]
    %v3434 = vld [vmem:[#allocation33 + $0x1d68] sm:$0xff]
    %v3435 = vld [vmem:[#allocation33 + $0x1d70] sm:$0xff]
    %v3436 = vld [vmem:[#allocation33 + $0x1d78] sm:$0xff]
    %v3437 = vld [vmem:[#allocation33 + $0x1d80] sm:$0xff]
    %v3438 = vld [vmem:[#allocation33 + $0x1d88] sm:$0xff]
    %v3439 = vld [vmem:[#allocation33 + $0x1d90] sm:$0xff]
    %v3440 = vld [vmem:[#allocation33 + $0x1d98] sm:$0xff]
    %v3441 = vld [vmem:[#allocation33 + $0x1da0] sm:$0xff]
    %v3442 = vld [vmem:[#allocation33 + $0x1da8] sm:$0xff]
    %v3443 = vld [vmem:[#allocation33 + $0x1db0] sm:$0xff]
    %v3444 = vld [vmem:[#allocation33 + $0x1db8] sm:$0xff]
    %v3445 = vld [vmem:[#allocation33 + $0x1dc0] sm:$0xff]
    %v3446 = vld [vmem:[#allocation33 + $0x1dc8] sm:$0xff]
    %v3447 = vld [vmem:[#allocation33 + $0x1dd0] sm:$0xff]
    %v3448 = vld [vmem:[#allocation33 + $0x1dd8] sm:$0xff]
    %v3449 = vld [vmem:[#allocation33 + $0x1de0] sm:$0xff]
    %v3450 = vld [vmem:[#allocation33 + $0x1de8] sm:$0xff]
    %v3451 = vld [vmem:[#allocation33 + $0x1df0] sm:$0xff]
    %v3452 = vld [vmem:[#allocation33 + $0x1df8] sm:$0xff]
    %v3453 = vld [vmem:[#allocation33 + $0x1e00] sm:$0xff]
    %v3454 = vld [vmem:[#allocation33 + $0x1e08] sm:$0xff]
    %v3455 = vld [vmem:[#allocation33 + $0x1e10] sm:$0xff]
    %v3456 = vld [vmem:[#allocation33 + $0x1e18] sm:$0xff]
    %v3457 = vld [vmem:[#allocation33 + $0x1e20] sm:$0xff]
    %v3458 = vld [vmem:[#allocation33 + $0x1e28] sm:$0xff]
    %v3459 = vld [vmem:[#allocation33 + $0x1e30] sm:$0xff]
    %v3460 = vld [vmem:[#allocation33 + $0x1e38] sm:$0xff]
    %v3461 = vld [vmem:[#allocation33 + $0x1e40] sm:$0xff]
    %v3462 = vld [vmem:[#allocation33 + $0x1e48] sm:$0xff]
    %v3463 = vld [vmem:[#allocation33 + $0x1e50] sm:$0xff]
    %v3464 = vld [vmem:[#allocation33 + $0x1e58] sm:$0xff]
    %v3465 = vld [vmem:[#allocation33 + $0x1e60] sm:$0xff]
    %v3466 = vld [vmem:[#allocation33 + $0x1e68] sm:$0xff]
    %v3467 = vld [vmem:[#allocation33 + $0x1e70] sm:$0xff]
    %v3468 = vld [vmem:[#allocation33 + $0x1e78] sm:$0xff]
    %v3469 = vld [vmem:[#allocation33 + $0x1e80] sm:$0xff]
    %v3470 = vld [vmem:[#allocation33 + $0x1e88] sm:$0xff]
    %v3471 = vld [vmem:[#allocation33 + $0x1e90] sm:$0xff]
    %v3472 = vld [vmem:[#allocation33 + $0x1e98] sm:$0xff]
    %v3473 = vld [vmem:[#allocation33 + $0x1ea0] sm:$0xff]
    %v3474 = vld [vmem:[#allocation33 + $0x1ea8] sm:$0xff]
    %v3475 = vld [vmem:[#allocation33 + $0x1eb0] sm:$0xff]
    %v3476 = vld [vmem:[#allocation33 + $0x1eb8] sm:$0xff]
    %v3477 = vld [vmem:[#allocation33 + $0x1ec0] sm:$0xff]
    %v3478 = vld [vmem:[#allocation33 + $0x1ec8] sm:$0xff]
    %v3479 = vld [vmem:[#allocation33 + $0x1ed0] sm:$0xff]
    %v3480 = vld [vmem:[#allocation33 + $0x1ed8] sm:$0xff]
    %v3481 = vld [vmem:[#allocation33 + $0x1ee0] sm:$0xff]
    %v3482 = vld [vmem:[#allocation33 + $0x1ee8] sm:$0xff]
    %v3483 = vld [vmem:[#allocation33 + $0x1ef0] sm:$0xff]
    %v3484 = vld [vmem:[#allocation33 + $0x1ef8] sm:$0xff]
    %v3485 = vld [vmem:[#allocation33 + $0x1f00] sm:$0xff]
    %v3486 = vld [vmem:[#allocation33 + $0x1f08] sm:$0xff]
    %v3487 = vld [vmem:[#allocation33 + $0x1f10] sm:$0xff]
    %v3488 = vld [vmem:[#allocation33 + $0x1f18] sm:$0xff]
    %v3489 = vld [vmem:[#allocation33 + $0x1f20] sm:$0xff]
    %v3490 = vld [vmem:[#allocation33 + $0x1f28] sm:$0xff]
    %v3491 = vld [vmem:[#allocation33 + $0x1f30] sm:$0xff]
    %v3492 = vld [vmem:[#allocation33 + $0x1f38] sm:$0xff]
    %v3493 = vld [vmem:[#allocation33 + $0x1f40] sm:$0xff]
    %v3494 = vld [vmem:[#allocation33 + $0x1f48] sm:$0xff]
    %v3495 = vld [vmem:[#allocation33 + $0x1f50] sm:$0xff]
    %v3496 = vld [vmem:[#allocation33 + $0x1f58] sm:$0xff]
    %v3497 = vld [vmem:[#allocation33 + $0x1f60] sm:$0xff]
    %v3498 = vld [vmem:[#allocation33 + $0x1f68] sm:$0xff]
    %v3499 = vld [vmem:[#allocation33 + $0x1f70] sm:$0xff]
    %v3500 = vld [vmem:[#allocation33 + $0x1f78] sm:$0xff]
    %v3501 = vld [vmem:[#allocation33 + $0x1f80] sm:$0xff]
    %v3502 = vld [vmem:[#allocation33 + $0x1f88] sm:$0xff]
    %v3503 = vld [vmem:[#allocation33 + $0x1f90] sm:$0xff]
    %v3504 = vld [vmem:[#allocation33 + $0x1f98] sm:$0xff]
    %v3505 = vld [vmem:[#allocation33 + $0x1fa0] sm:$0xff]
    %v3506 = vld [vmem:[#allocation33 + $0x1fa8] sm:$0xff]
    %v3507 = vld [vmem:[#allocation33 + $0x1fb0] sm:$0xff]
    %v3508 = vld [vmem:[#allocation33 + $0x1fb8] sm:$0xff]
    %v3509 = vld [vmem:[#allocation33 + $0x1fc0] sm:$0xff]
    %v3510 = vld [vmem:[#allocation33 + $0x1fc8] sm:$0xff]
    %v3511 = vld [vmem:[#allocation33 + $0x1fd0] sm:$0xff]
    %v3512 = vld [vmem:[#allocation33 + $0x1fd8] sm:$0xff]
    %v3513 = vld [vmem:[#allocation33 + $0x1fe0] sm:$0xff]
    %v3514 = vld [vmem:[#allocation33 + $0x1fe8] sm:$0xff]
    %v3515 = vld [vmem:[#allocation33 + $0x1ff0] sm:$0xff]
    %v3516 = vld [vmem:[#allocation33 + $0x1ff8] sm:$0xff]
    %v3517 = vld [vmem:[#allocation33 + $0x2000] sm:$0xff]
    %v3518 = vld [vmem:[#allocation33 + $0x2008] sm:$0xff]
    %v3519 = vld [vmem:[#allocation33 + $0x2010] sm:$0xff]
    %v3520 = vld [vmem:[#allocation33 + $0x2018] sm:$0xff]
    %v3521 = vld [vmem:[#allocation33 + $0x2020] sm:$0xff]
    %v3522 = vld [vmem:[#allocation33 + $0x2028] sm:$0xff]
    %v3523 = vld [vmem:[#allocation33 + $0x2030] sm:$0xff]
    %v3524 = vld [vmem:[#allocation33 + $0x2038] sm:$0xff]
    %v3525 = vld [vmem:[#allocation33 + $0x2040] sm:$0xff]
    %v3526 = vld [vmem:[#allocation33 + $0x2048] sm:$0xff]
    %v3527 = vld [vmem:[#allocation33 + $0x2050] sm:$0xff]
    %v3528 = vld [vmem:[#allocation33 + $0x2058] sm:$0xff]
    %v3529 = vld [vmem:[#allocation33 + $0x2060] sm:$0xff]
    %v3530 = vld [vmem:[#allocation33 + $0x2068] sm:$0xff]
    %v3531 = vld [vmem:[#allocation33 + $0x2070] sm:$0xff]
    %v3532 = vld [vmem:[#allocation33 + $0x2078] sm:$0xff]
    %v3533 = vld [vmem:[#allocation33 + $0x2080] sm:$0xff]
    %v3534 = vld [vmem:[#allocation33 + $0x2088] sm:$0xff]
    %v3535 = vld [vmem:[#allocation33 + $0x2090] sm:$0xff]
    %v3536 = vld [vmem:[#allocation33 + $0x2098] sm:$0xff]
    %v3537 = vld [vmem:[#allocation33 + $0x20a0] sm:$0xff]
    %v3538 = vld [vmem:[#allocation33 + $0x20a8] sm:$0xff]
    %v3539 = vld [vmem:[#allocation33 + $0x20b0] sm:$0xff]
    %v3540 = vld [vmem:[#allocation33 + $0x20b8] sm:$0xff]
    %v3541 = vld [vmem:[#allocation33 + $0x20c0] sm:$0xff]
    %v3542 = vld [vmem:[#allocation33 + $0x20c8] sm:$0xff]
    %v3543 = vld [vmem:[#allocation33 + $0x20d0] sm:$0xff]
    %v3544 = vld [vmem:[#allocation33 + $0x20d8] sm:$0xff]
    %v3545 = vld [vmem:[#allocation33 + $0x20e0] sm:$0xff]
    %v3546 = vld [vmem:[#allocation33 + $0x20e8] sm:$0xff]
    %v3547 = vld [vmem:[#allocation33 + $0x20f0] sm:$0xff]
    %v3548 = vld [vmem:[#allocation33 + $0x20f8] sm:$0xff]
    %v3549 = vld [vmem:[#allocation33 + $0x2100] sm:$0xff]
    %v3550 = vld [vmem:[#allocation33 + $0x2108] sm:$0xff]
    %v3551 = vld [vmem:[#allocation33 + $0x2110] sm:$0xff]
    %v3552 = vld [vmem:[#allocation33 + $0x2118] sm:$0xff]
    %v3553 = vld [vmem:[#allocation33 + $0x2120] sm:$0xff]
    %v3554 = vld [vmem:[#allocation33 + $0x2128] sm:$0xff]
    %v3555 = vld [vmem:[#allocation33 + $0x2130] sm:$0xff]
    %v3556 = vld [vmem:[#allocation33 + $0x2138] sm:$0xff]
    %v3557 = vld [vmem:[#allocation33 + $0x2140] sm:$0xff]
    %v3558 = vld [vmem:[#allocation33 + $0x2148] sm:$0xff]
    %v3559 = vld [vmem:[#allocation33 + $0x2150] sm:$0xff]
    %v3560 = vld [vmem:[#allocation33 + $0x2158] sm:$0xff]
    %v3561 = vld [vmem:[#allocation33 + $0x2160] sm:$0xff]
    %v3562 = vld [vmem:[#allocation33 + $0x2168] sm:$0xff]
    %v3563 = vld [vmem:[#allocation33 + $0x2170] sm:$0xff]
    %v3564 = vld [vmem:[#allocation33 + $0x2178] sm:$0xff]
    %v3565 = vld [vmem:[#allocation33 + $0x2180] sm:$0xff]
    %v3566 = vld [vmem:[#allocation33 + $0x2188] sm:$0xff]
    %v3567 = vld [vmem:[#allocation33 + $0x2190] sm:$0xff]
    %v3568 = vld [vmem:[#allocation33 + $0x2198] sm:$0xff]
    %v3569 = vld [vmem:[#allocation33 + $0x21a0] sm:$0xff]
    %v3570 = vld [vmem:[#allocation33 + $0x21a8] sm:$0xff]
    %v3571 = vld [vmem:[#allocation33 + $0x21b0] sm:$0xff]
    %v3572 = vld [vmem:[#allocation33 + $0x21b8] sm:$0xff]
    %v3573 = vld [vmem:[#allocation33 + $0x21c0] sm:$0xff]
    %v3574 = vld [vmem:[#allocation33 + $0x21c8] sm:$0xff]
    %v3575 = vld [vmem:[#allocation33 + $0x21d0] sm:$0xff]
    %v3576 = vld [vmem:[#allocation33 + $0x21d8] sm:$0xff]
    %v3577 = vld [vmem:[#allocation33 + $0x21e0] sm:$0xff]
    %v3578 = vld [vmem:[#allocation33 + $0x21e8] sm:$0xff]
    %v3579 = vld [vmem:[#allocation33 + $0x21f0] sm:$0xff]
    %v3580 = vld [vmem:[#allocation33 + $0x21f8] sm:$0xff]
    %v3581 = vld [vmem:[#allocation33 + $0x2200] sm:$0xff]
    %v3582 = vld [vmem:[#allocation33 + $0x2208] sm:$0xff]
    %v3583 = vld [vmem:[#allocation33 + $0x2210] sm:$0xff]
    %v3584 = vld [vmem:[#allocation33 + $0x2218] sm:$0xff]
    %v3585 = vld [vmem:[#allocation33 + $0x2220] sm:$0xff]
    %v3586 = vld [vmem:[#allocation33 + $0x2228] sm:$0xff]
    %v3587 = vld [vmem:[#allocation33 + $0x2230] sm:$0xff]
    %v3588 = vld [vmem:[#allocation33 + $0x2238] sm:$0xff]
    %v3589 = vld [vmem:[#allocation33 + $0x2240] sm:$0xff]
    %v3590 = vld [vmem:[#allocation33 + $0x2248] sm:$0xff]
    %v3591 = vld [vmem:[#allocation33 + $0x2250] sm:$0xff]
    %v3592 = vld [vmem:[#allocation33 + $0x2258] sm:$0xff]
    %v3593 = vld [vmem:[#allocation33 + $0x2260] sm:$0xff]
    %v3594 = vld [vmem:[#allocation33 + $0x2268] sm:$0xff]
    %v3595 = vld [vmem:[#allocation33 + $0x2270] sm:$0xff]
    %v3596 = vld [vmem:[#allocation33 + $0x2278] sm:$0xff]
    %v3597 = vld [vmem:[#allocation33 + $0x2280] sm:$0xff]
    %v3598 = vld [vmem:[#allocation33 + $0x2288] sm:$0xff]
    %v3599 = vld [vmem:[#allocation33 + $0x2290] sm:$0xff]
    %v3600 = vld [vmem:[#allocation33 + $0x2298] sm:$0xff]
    %v3601 = vld [vmem:[#allocation33 + $0x22a0] sm:$0xff]
    %v3602 = vld [vmem:[#allocation33 + $0x22a8] sm:$0xff]
    %v3603 = vld [vmem:[#allocation33 + $0x22b0] sm:$0xff]
    %v3604 = vld [vmem:[#allocation33 + $0x22b8] sm:$0xff]
    %v3605 = vld [vmem:[#allocation33 + $0x22c0] sm:$0xff]
    %v3606 = vld [vmem:[#allocation33 + $0x22c8] sm:$0xff]
    %v3607 = vld [vmem:[#allocation33 + $0x22d0] sm:$0xff]
    %v3608 = vld [vmem:[#allocation33 + $0x22d8] sm:$0xff]
    %v3609 = vld [vmem:[#allocation33 + $0x22e0] sm:$0xff]
    %v3610 = vld [vmem:[#allocation33 + $0x22e8] sm:$0xff]
    %v3611 = vld [vmem:[#allocation33 + $0x22f0] sm:$0xff]
    %v3612 = vld [vmem:[#allocation33 + $0x22f8] sm:$0xff]
    %v3613 = vld [vmem:[#allocation33 + $0x2300] sm:$0xff]
    %v3614 = vld [vmem:[#allocation33 + $0x2308] sm:$0xff]
    %v3615 = vld [vmem:[#allocation33 + $0x2310] sm:$0xff]
    %v3616 = vld [vmem:[#allocation33 + $0x2318] sm:$0xff]
    %v3617 = vld [vmem:[#allocation33 + $0x2320] sm:$0xff]
    %v3618 = vld [vmem:[#allocation33 + $0x2328] sm:$0xff]
    %v3619 = vld [vmem:[#allocation33 + $0x2330] sm:$0xff]
    %v3620 = vld [vmem:[#allocation33 + $0x2338] sm:$0xff]
    %v3621 = vld [vmem:[#allocation33 + $0x2340] sm:$0xff]
    %v3622 = vld [vmem:[#allocation33 + $0x2348] sm:$0xff]
    %v3623 = vld [vmem:[#allocation33 + $0x2350] sm:$0xff]
    %v3624 = vld [vmem:[#allocation33 + $0x2358] sm:$0xff]
    %v3625 = vld [vmem:[#allocation33 + $0x2360] sm:$0xff]
    %v3626 = vld [vmem:[#allocation33 + $0x2368] sm:$0xff]
    %v3627 = vld [vmem:[#allocation33 + $0x2370] sm:$0xff]
    %v3628 = vld [vmem:[#allocation33 + $0x2378] sm:$0xff]
    %v3629 = vld [vmem:[#allocation33 + $0x2380] sm:$0xff]
    %v3630 = vld [vmem:[#allocation33 + $0x2388] sm:$0xff]
    %v3631 = vld [vmem:[#allocation33 + $0x2390] sm:$0xff]
    %v3632 = vld [vmem:[#allocation33 + $0x2398] sm:$0xff]
    %v3633 = vld [vmem:[#allocation33 + $0x23a0] sm:$0xff]
    %v3634 = vld [vmem:[#allocation33 + $0x23a8] sm:$0xff]
    %v3635 = vld [vmem:[#allocation33 + $0x23b0] sm:$0xff]
    %v3636 = vld [vmem:[#allocation33 + $0x23b8] sm:$0xff]
    %v3637 = vld [vmem:[#allocation33 + $0x23c0] sm:$0xff]
    %v3638 = vld [vmem:[#allocation33 + $0x23c8] sm:$0xff]
    %v3639 = vld [vmem:[#allocation33 + $0x23d0] sm:$0xff]
    %v3640 = vld [vmem:[#allocation33 + $0x23d8] sm:$0xff]
    %v3641 = vld [vmem:[#allocation33 + $0x23e0] sm:$0xff]
    %v3642 = vld [vmem:[#allocation33 + $0x23e8] sm:$0xff]
    %v3643 = vld [vmem:[#allocation33 + $0x23f0] sm:$0xff]
    %v3644 = vld [vmem:[#allocation33 + $0x23f8] sm:$0xff]
    %3645 = vmatpush.msra.mxu0 %v2853
    %3646 = vmatpush.msra.mxu0 %v2829
    %3647 = vmatpush.msra.mxu0 %v2805
    %3648 = vmatpush.msra.mxu0 %v2781
    %3649 = vmatpush.msra.mxu0 %v2757
    %3650 = vmatpush.msra.mxu0 %v2733
    %3651 = vmatpush.msra.mxu0 %v2709
    %3652 = vmatpush.msra.mxu0 %v2685
    %3653 = vmatpush.msra.mxu0 %v2661
    %3654 = vmatpush.msra.mxu0 %v2637
    %3655 = vmatpush.msra.mxu0 %v2613
    %3656 = vmatpush.msra.mxu0 %v2589
    %3657 = vmatpush.msra.mxu0 %v2565
    %3658 = vmatpush.msra.mxu0 %v2541
    %3659 = vmatpush.msra.mxu0 %v2517
    %3660 = vmatpush.msra.mxu0 %v2493
    %3661 = vmatmul.f32.gmra.mxu0 %v2484
    %v3662 = vpop.f32.mrf.mxu0
    %v3663 = vadd.f32 0.0, %v3662
    %3664 = vmatmul.f32.gmra.mxu0 %v2487
    %v3665 = vpop.f32.mrf.mxu0
    %v3666 = vadd.f32 0.0, %v3665
    %3667 = vmatmul.f32.gmra.mxu0 %v2490
    %v3668 = vpop.f32.mrf.mxu0
    %v3669 = vadd.f32 0.0, %v3668
    %3670 = vdwg.mxu0
    %3671 = vmatpush.msra.mxu0 %v3237
    %3672 = vmatpush.msra.mxu0 %v3213
    %3673 = vmatpush.msra.mxu0 %v3189
    %3674 = vmatpush.msra.mxu0 %v3165
    %3675 = vmatpush.msra.mxu0 %v3141
    %3676 = vmatpush.msra.mxu0 %v3117
    %3677 = vmatpush.msra.mxu0 %v3093
    %3678 = vmatpush.msra.mxu0 %v3069
    %3679 = vmatpush.msra.mxu0 %v3045
    %3680 = vmatpush.msra.mxu0 %v3021
    %3681 = vmatpush.msra.mxu0 %v2997
    %3682 = vmatpush.msra.mxu0 %v2973
    %3683 = vmatpush.msra.mxu0 %v2949
    %3684 = vmatpush.msra.mxu0 %v2925
    %3685 = vmatpush.msra.mxu0 %v2901
    %3686 = vmatpush.msra.mxu0 %v2877
    %3687 = vmatmul.f32.gmra.mxu0 %v2485
    %v3688 = vpop.f32.mrf.mxu0
    %v3689 = vadd.f32 %v3663, %v3688
    %3690 = vmatmul.f32.gmra.mxu0 %v2488
    %v3691 = vpop.f32.mrf.mxu0
    %v3692 = vadd.f32 %v3666, %v3691
    %3693 = vmatmul.f32.gmra.mxu0 %v2491
    %v3694 = vpop.f32.mrf.mxu0
    %v3695 = vadd.f32 %v3669, %v3694
    %3696 = vdwg.mxu0
    %3697 = vmatpush.msra.mxu0 %v3621
    %3698 = vmatpush.msra.mxu0 %v3597
    %3699 = vmatpush.msra.mxu0 %v3573
    %3700 = vmatpush.msra.mxu0 %v3549
    %3701 = vmatpush.msra.mxu0 %v3525
    %3702 = vmatpush.msra.mxu0 %v3501
    %3703 = vmatpush.msra.mxu0 %v3477
    %3704 = vmatpush.msra.mxu0 %v3453
    %3705 = vmatpush.msra.mxu0 %v3429
    %3706 = vmatpush.msra.mxu0 %v3405
    %3707 = vmatpush.msra.mxu0 %v3381
    %3708 = vmatpush.msra.mxu0 %v3357
    %3709 = vmatpush.msra.mxu0 %v3333
    %3710 = vmatpush.msra.mxu0 %v3309
    %3711 = vmatpush.msra.mxu0 %v3285
    %3712 = vmatpush.msra.mxu0 %v3261
    %3713 = vmatmul.f32.gmra.mxu0 %v2486
    %v3714 = vpop.f32.mrf.mxu0
    %v3715 = vadd.f32 %v3689, %v3714
    %3716 = vmatmul.f32.gmra.mxu0 %v2489
    %v3717 = vpop.f32.mrf.mxu0
    %v3718 = vadd.f32 %v3692, %v3717
    %3719 = vmatmul.f32.gmra.mxu0 %v2492
    %v3720 = vpop.f32.mrf.mxu0
    %v3721 = vadd.f32 %v3695, %v3720
    %3722 = vdwg.mxu0
    %3723 = vmatpush.msra.mxu0 %v2854
    %3724 = vmatpush.msra.mxu0 %v2830
    %3725 = vmatpush.msra.mxu0 %v2806
    %3726 = vmatpush.msra.mxu0 %v2782
    %3727 = vmatpush.msra.mxu0 %v2758
    %3728 = vmatpush.msra.mxu0 %v2734
    %3729 = vmatpush.msra.mxu0 %v2710
    %3730 = vmatpush.msra.mxu0 %v2686
    %3731 = vmatpush.msra.mxu0 %v2662
    %3732 = vmatpush.msra.mxu0 %v2638
    %3733 = vmatpush.msra.mxu0 %v2614
    %3734 = vmatpush.msra.mxu0 %v2590
    %3735 = vmatpush.msra.mxu0 %v2566
    %3736 = vmatpush.msra.mxu0 %v2542
    %3737 = vmatpush.msra.mxu0 %v2518
    %3738 = vmatpush.msra.mxu0 %v2494
    %3739 = vmatmul.f32.gmra.mxu0 %v2484
    %v3740 = vpop.f32.mrf.mxu0
    %v3741 = vadd.f32 0.0, %v3740
    %3742 = vmatmul.f32.gmra.mxu0 %v2487
    %v3743 = vpop.f32.mrf.mxu0
    %v3744 = vadd.f32 0.0, %v3743
    %3745 = vmatmul.f32.gmra.mxu0 %v2490
    %v3746 = vpop.f32.mrf.mxu0
    %v3747 = vadd.f32 0.0, %v3746
    %3748 = vdwg.mxu0
    %3749 = vmatpush.msra.mxu0 %v3238
    %3750 = vmatpush.msra.mxu0 %v3214
    %3751 = vmatpush.msra.mxu0 %v3190
    %3752 = vmatpush.msra.mxu0 %v3166
    %3753 = vmatpush.msra.mxu0 %v3142
    %3754 = vmatpush.msra.mxu0 %v3118
    %3755 = vmatpush.msra.mxu0 %v3094
    %3756 = vmatpush.msra.mxu0 %v3070
    %3757 = vmatpush.msra.mxu0 %v3046
    %3758 = vmatpush.msra.mxu0 %v3022
    %3759 = vmatpush.msra.mxu0 %v2998
    %3760 = vmatpush.msra.mxu0 %v2974
    %3761 = vmatpush.msra.mxu0 %v2950
    %3762 = vmatpush.msra.mxu0 %v2926
    %3763 = vmatpush.msra.mxu0 %v2902
    %3764 = vmatpush.msra.mxu0 %v2878
    %3765 = vmatmul.f32.gmra.mxu0 %v2485
    %v3766 = vpop.f32.mrf.mxu0
    %v3767 = vadd.f32 %v3741, %v3766
    %3768 = vmatmul.f32.gmra.mxu0 %v2488
    %v3769 = vpop.f32.mrf.mxu0
    %v3770 = vadd.f32 %v3744, %v3769
    %3771 = vmatmul.f32.gmra.mxu0 %v2491
    %v3772 = vpop.f32.mrf.mxu0
    %v3773 = vadd.f32 %v3747, %v3772
    %3774 = vdwg.mxu0
    %3775 = vmatpush.msra.mxu0 %v3622
    %3776 = vmatpush.msra.mxu0 %v3598
    %3777 = vmatpush.msra.mxu0 %v3574
    %3778 = vmatpush.msra.mxu0 %v3550
    %3779 = vmatpush.msra.mxu0 %v3526
    %3780 = vmatpush.msra.mxu0 %v3502
    %3781 = vmatpush.msra.mxu0 %v3478
    %3782 = vmatpush.msra.mxu0 %v3454
    %3783 = vmatpush.msra.mxu0 %v3430
    %3784 = vmatpush.msra.mxu0 %v3406
    %3785 = vmatpush.msra.mxu0 %v3382
    %3786 = vmatpush.msra.mxu0 %v3358
    %3787 = vmatpush.msra.mxu0 %v3334
    %3788 = vmatpush.msra.mxu0 %v3310
    %3789 = vmatpush.msra.mxu0 %v3286
    %3790 = vmatpush.msra.mxu0 %v3262
    %3791 = vmatmul.f32.gmra.mxu0 %v2486
    %v3792 = vpop.f32.mrf.mxu0
    %v3793 = vadd.f32 %v3767, %v3792
    %3794 = vmatmul.f32.gmra.mxu0 %v2489
    %v3795 = vpop.f32.mrf.mxu0
    %v3796 = vadd.f32 %v3770, %v3795
    %3797 = vmatmul.f32.gmra.mxu0 %v2492
    %v3798 = vpop.f32.mrf.mxu0
    %v3799 = vadd.f32 %v3773, %v3798
    %3800 = vdwg.mxu0
    %3801 = vmatpush.msra.mxu0 %v2855
    %3802 = vmatpush.msra.mxu0 %v2831
    %3803 = vmatpush.msra.mxu0 %v2807
    %3804 = vmatpush.msra.mxu0 %v2783
    %3805 = vmatpush.msra.mxu0 %v2759
    %3806 = vmatpush.msra.mxu0 %v2735
    %3807 = vmatpush.msra.mxu0 %v2711
    %3808 = vmatpush.msra.mxu0 %v2687
    %3809 = vmatpush.msra.mxu0 %v2663
    %3810 = vmatpush.msra.mxu0 %v2639
    %3811 = vmatpush.msra.mxu0 %v2615
    %3812 = vmatpush.msra.mxu0 %v2591
    %3813 = vmatpush.msra.mxu0 %v2567
    %3814 = vmatpush.msra.mxu0 %v2543
    %3815 = vmatpush.msra.mxu0 %v2519
    %3816 = vmatpush.msra.mxu0 %v2495
    %3817 = vmatmul.f32.gmra.mxu0 %v2484
    %v3818 = vpop.f32.mrf.mxu0
    %v3819 = vadd.f32 0.0, %v3818
    %3820 = vmatmul.f32.gmra.mxu0 %v2487
    %v3821 = vpop.f32.mrf.mxu0
    %v3822 = vadd.f32 0.0, %v3821
    %3823 = vmatmul.f32.gmra.mxu0 %v2490
    %v3824 = vpop.f32.mrf.mxu0
    %v3825 = vadd.f32 0.0, %v3824
    %3826 = vdwg.mxu0
    %3827 = vmatpush.msra.mxu0 %v3239
    %3828 = vmatpush.msra.mxu0 %v3215
    %3829 = vmatpush.msra.mxu0 %v3191
    %3830 = vmatpush.msra.mxu0 %v3167
    %3831 = vmatpush.msra.mxu0 %v3143
    %3832 = vmatpush.msra.mxu0 %v3119
    %3833 = vmatpush.msra.mxu0 %v3095
    %3834 = vmatpush.msra.mxu0 %v3071
    %3835 = vmatpush.msra.mxu0 %v3047
    %3836 = vmatpush.msra.mxu0 %v3023
    %3837 = vmatpush.msra.mxu0 %v2999
    %3838 = vmatpush.msra.mxu0 %v2975
    %3839 = vmatpush.msra.mxu0 %v2951
    %3840 = vmatpush.msra.mxu0 %v2927
    %3841 = vmatpush.msra.mxu0 %v2903
    %3842 = vmatpush.msra.mxu0 %v2879
    %3843 = vmatmul.f32.gmra.mxu0 %v2485
    %v3844 = vpop.f32.mrf.mxu0
    %v3845 = vadd.f32 %v3819, %v3844
    %3846 = vmatmul.f32.gmra.mxu0 %v2488
    %v3847 = vpop.f32.mrf.mxu0
    %v3848 = vadd.f32 %v3822, %v3847
    %3849 = vmatmul.f32.gmra.mxu0 %v2491
    %v3850 = vpop.f32.mrf.mxu0
    %v3851 = vadd.f32 %v3825, %v3850
    %3852 = vdwg.mxu0
    %3853 = vmatpush.msra.mxu0 %v3623
    %3854 = vmatpush.msra.mxu0 %v3599
    %3855 = vmatpush.msra.mxu0 %v3575
    %3856 = vmatpush.msra.mxu0 %v3551
    %3857 = vmatpush.msra.mxu0 %v3527
    %3858 = vmatpush.msra.mxu0 %v3503
    %3859 = vmatpush.msra.mxu0 %v3479
    %3860 = vmatpush.msra.mxu0 %v3455
    %3861 = vmatpush.msra.mxu0 %v3431
    %3862 = vmatpush.msra.mxu0 %v3407
    %3863 = vmatpush.msra.mxu0 %v3383
    %3864 = vmatpush.msra.mxu0 %v3359
    %3865 = vmatpush.msra.mxu0 %v3335
    %3866 = vmatpush.msra.mxu0 %v3311
    %3867 = vmatpush.msra.mxu0 %v3287
    %3868 = vmatpush.msra.mxu0 %v3263
    %3869 = vmatmul.f32.gmra.mxu0 %v2486
    %v3870 = vpop.f32.mrf.mxu0
    %v3871 = vadd.f32 %v3845, %v3870
    %3872 = vmatmul.f32.gmra.mxu0 %v2489
    %v3873 = vpop.f32.mrf.mxu0
    %v3874 = vadd.f32 %v3848, %v3873
    %3875 = vmatmul.f32.gmra.mxu0 %v2492
    %v3876 = vpop.f32.mrf.mxu0
    %v3877 = vadd.f32 %v3851, %v3876
    %3878 = vdwg.mxu0
    %3879 = vmatpush.msra.mxu0 %v2856
    %3880 = vmatpush.msra.mxu0 %v2832
    %3881 = vmatpush.msra.mxu0 %v2808
    %3882 = vmatpush.msra.mxu0 %v2784
    %3883 = vmatpush.msra.mxu0 %v2760
    %3884 = vmatpush.msra.mxu0 %v2736
    %3885 = vmatpush.msra.mxu0 %v2712
    %3886 = vmatpush.msra.mxu0 %v2688
    %3887 = vmatpush.msra.mxu0 %v2664
    %3888 = vmatpush.msra.mxu0 %v2640
    %3889 = vmatpush.msra.mxu0 %v2616
    %3890 = vmatpush.msra.mxu0 %v2592
    %3891 = vmatpush.msra.mxu0 %v2568
    %3892 = vmatpush.msra.mxu0 %v2544
    %3893 = vmatpush.msra.mxu0 %v2520
    %3894 = vmatpush.msra.mxu0 %v2496
    %3895 = vmatmul.f32.gmra.mxu0 %v2484
    %v3896 = vpop.f32.mrf.mxu0
    %v3897 = vadd.f32 0.0, %v3896
    %3898 = vmatmul.f32.gmra.mxu0 %v2487
    %v3899 = vpop.f32.mrf.mxu0
    %v3900 = vadd.f32 0.0, %v3899
    %3901 = vmatmul.f32.gmra.mxu0 %v2490
    %v3902 = vpop.f32.mrf.mxu0
    %v3903 = vadd.f32 0.0, %v3902
    %3904 = vdwg.mxu0
    %3905 = vmatpush.msra.mxu0 %v3240
    %3906 = vmatpush.msra.mxu0 %v3216
    %3907 = vmatpush.msra.mxu0 %v3192
    %3908 = vmatpush.msra.mxu0 %v3168
    %3909 = vmatpush.msra.mxu0 %v3144
    %3910 = vmatpush.msra.mxu0 %v3120
    %3911 = vmatpush.msra.mxu0 %v3096
    %3912 = vmatpush.msra.mxu0 %v3072
    %3913 = vmatpush.msra.mxu0 %v3048
    %3914 = vmatpush.msra.mxu0 %v3024
    %3915 = vmatpush.msra.mxu0 %v3000
    %3916 = vmatpush.msra.mxu0 %v2976
    %3917 = vmatpush.msra.mxu0 %v2952
    %3918 = vmatpush.msra.mxu0 %v2928
    %3919 = vmatpush.msra.mxu0 %v2904
    %3920 = vmatpush.msra.mxu0 %v2880
    %3921 = vmatmul.f32.gmra.mxu0 %v2485
    %v3922 = vpop.f32.mrf.mxu0
    %v3923 = vadd.f32 %v3897, %v3922
    %3924 = vmatmul.f32.gmra.mxu0 %v2488
    %v3925 = vpop.f32.mrf.mxu0
    %v3926 = vadd.f32 %v3900, %v3925
    %3927 = vmatmul.f32.gmra.mxu0 %v2491
    %v3928 = vpop.f32.mrf.mxu0
    %v3929 = vadd.f32 %v3903, %v3928
    %3930 = vdwg.mxu0
    %3931 = vmatpush.msra.mxu0 %v3624
    %3932 = vmatpush.msra.mxu0 %v3600
    %3933 = vmatpush.msra.mxu0 %v3576
    %3934 = vmatpush.msra.mxu0 %v3552
    %3935 = vmatpush.msra.mxu0 %v3528
    %3936 = vmatpush.msra.mxu0 %v3504
    %3937 = vmatpush.msra.mxu0 %v3480
    %3938 = vmatpush.msra.mxu0 %v3456
    %3939 = vmatpush.msra.mxu0 %v3432
    %3940 = vmatpush.msra.mxu0 %v3408
    %3941 = vmatpush.msra.mxu0 %v3384
    %3942 = vmatpush.msra.mxu0 %v3360
    %3943 = vmatpush.msra.mxu0 %v3336
    %3944 = vmatpush.msra.mxu0 %v3312
    %3945 = vmatpush.msra.mxu0 %v3288
    %3946 = vmatpush.msra.mxu0 %v3264
    %3947 = vmatmul.f32.gmra.mxu0 %v2486
    %v3948 = vpop.f32.mrf.mxu0
    %v3949 = vadd.f32 %v3923, %v3948
    %3950 = vmatmul.f32.gmra.mxu0 %v2489
    %v3951 = vpop.f32.mrf.mxu0
    %v3952 = vadd.f32 %v3926, %v3951
    %3953 = vmatmul.f32.gmra.mxu0 %v2492
    %v3954 = vpop.f32.mrf.mxu0
    %v3955 = vadd.f32 %v3929, %v3954
    %3956 = vdwg.mxu0
    %3957 = vmatpush.msra.mxu0 %v2857
    %3958 = vmatpush.msra.mxu0 %v2833
    %3959 = vmatpush.msra.mxu0 %v2809
    %3960 = vmatpush.msra.mxu0 %v2785
    %3961 = vmatpush.msra.mxu0 %v2761
    %3962 = vmatpush.msra.mxu0 %v2737
    %3963 = vmatpush.msra.mxu0 %v2713
    %3964 = vmatpush.msra.mxu0 %v2689
    %3965 = vmatpush.msra.mxu0 %v2665
    %3966 = vmatpush.msra.mxu0 %v2641
    %3967 = vmatpush.msra.mxu0 %v2617
    %3968 = vmatpush.msra.mxu0 %v2593
    %3969 = vmatpush.msra.mxu0 %v2569
    %3970 = vmatpush.msra.mxu0 %v2545
    %3971 = vmatpush.msra.mxu0 %v2521
    %3972 = vmatpush.msra.mxu0 %v2497
    %3973 = vmatmul.f32.gmra.mxu0 %v2484
    %v3974 = vpop.f32.mrf.mxu0
    %v3975 = vadd.f32 0.0, %v3974
    %3976 = vmatmul.f32.gmra.mxu0 %v2487
    %v3977 = vpop.f32.mrf.mxu0
    %v3978 = vadd.f32 0.0, %v3977
    %3979 = vmatmul.f32.gmra.mxu0 %v2490
    %v3980 = vpop.f32.mrf.mxu0
    %v3981 = vadd.f32 0.0, %v3980
    %3982 = vdwg.mxu0
    %3983 = vmatpush.msra.mxu0 %v3241
    %3984 = vmatpush.msra.mxu0 %v3217
    %3985 = vmatpush.msra.mxu0 %v3193
    %3986 = vmatpush.msra.mxu0 %v3169
    %3987 = vmatpush.msra.mxu0 %v3145
    %3988 = vmatpush.msra.mxu0 %v3121
    %3989 = vmatpush.msra.mxu0 %v3097
    %3990 = vmatpush.msra.mxu0 %v3073
    %3991 = vmatpush.msra.mxu0 %v3049
    %3992 = vmatpush.msra.mxu0 %v3025
    %3993 = vmatpush.msra.mxu0 %v3001
    %3994 = vmatpush.msra.mxu0 %v2977
    %3995 = vmatpush.msra.mxu0 %v2953
    %3996 = vmatpush.msra.mxu0 %v2929
    %3997 = vmatpush.msra.mxu0 %v2905
    %3998 = vmatpush.msra.mxu0 %v2881
    %3999 = vmatmul.f32.gmra.mxu0 %v2485
    %v4000 = vpop.f32.mrf.mxu0
    %v4001 = vadd.f32 %v3975, %v4000
    %4002 = vmatmul.f32.gmra.mxu0 %v2488
    %v4003 = vpop.f32.mrf.mxu0
    %v4004 = vadd.f32 %v3978, %v4003
    %4005 = vmatmul.f32.gmra.mxu0 %v2491
    %v4006 = vpop.f32.mrf.mxu0
    %v4007 = vadd.f32 %v3981, %v4006
    %4008 = vdwg.mxu0
    %4009 = vmatpush.msra.mxu0 %v3625
    %4010 = vmatpush.msra.mxu0 %v3601
    %4011 = vmatpush.msra.mxu0 %v3577
    %4012 = vmatpush.msra.mxu0 %v3553
    %4013 = vmatpush.msra.mxu0 %v3529
    %4014 = vmatpush.msra.mxu0 %v3505
    %4015 = vmatpush.msra.mxu0 %v3481
    %4016 = vmatpush.msra.mxu0 %v3457
    %4017 = vmatpush.msra.mxu0 %v3433
    %4018 = vmatpush.msra.mxu0 %v3409
    %4019 = vmatpush.msra.mxu0 %v3385
    %4020 = vmatpush.msra.mxu0 %v3361
    %4021 = vmatpush.msra.mxu0 %v3337
    %4022 = vmatpush.msra.mxu0 %v3313
    %4023 = vmatpush.msra.mxu0 %v3289
    %4024 = vmatpush.msra.mxu0 %v3265
    %4025 = vmatmul.f32.gmra.mxu0 %v2486
    %v4026 = vpop.f32.mrf.mxu0
    %v4027 = vadd.f32 %v4001, %v4026
    %4028 = vmatmul.f32.gmra.mxu0 %v2489
    %v4029 = vpop.f32.mrf.mxu0
    %v4030 = vadd.f32 %v4004, %v4029
    %4031 = vmatmul.f32.gmra.mxu0 %v2492
    %v4032 = vpop.f32.mrf.mxu0
    %v4033 = vadd.f32 %v4007, %v4032
    %4034 = vdwg.mxu0
    %4035 = vmatpush.msra.mxu0 %v2858
    %4036 = vmatpush.msra.mxu0 %v2834
    %4037 = vmatpush.msra.mxu0 %v2810
    %4038 = vmatpush.msra.mxu0 %v2786
    %4039 = vmatpush.msra.mxu0 %v2762
    %4040 = vmatpush.msra.mxu0 %v2738
    %4041 = vmatpush.msra.mxu0 %v2714
    %4042 = vmatpush.msra.mxu0 %v2690
    %4043 = vmatpush.msra.mxu0 %v2666
    %4044 = vmatpush.msra.mxu0 %v2642
    %4045 = vmatpush.msra.mxu0 %v2618
    %4046 = vmatpush.msra.mxu0 %v2594
    %4047 = vmatpush.msra.mxu0 %v2570
    %4048 = vmatpush.msra.mxu0 %v2546
    %4049 = vmatpush.msra.mxu0 %v2522
    %4050 = vmatpush.msra.mxu0 %v2498
    %4051 = vmatmul.f32.gmra.mxu0 %v2484
    %v4052 = vpop.f32.mrf.mxu0
    %v4053 = vadd.f32 0.0, %v4052
    %4054 = vmatmul.f32.gmra.mxu0 %v2487
    %v4055 = vpop.f32.mrf.mxu0
    %v4056 = vadd.f32 0.0, %v4055
    %4057 = vmatmul.f32.gmra.mxu0 %v2490
    %v4058 = vpop.f32.mrf.mxu0
    %v4059 = vadd.f32 0.0, %v4058
    %4060 = vdwg.mxu0
    %4061 = vmatpush.msra.mxu0 %v3242
    %4062 = vmatpush.msra.mxu0 %v3218
    %4063 = vmatpush.msra.mxu0 %v3194
    %4064 = vmatpush.msra.mxu0 %v3170
    %4065 = vmatpush.msra.mxu0 %v3146
    %4066 = vmatpush.msra.mxu0 %v3122
    %4067 = vmatpush.msra.mxu0 %v3098
    %4068 = vmatpush.msra.mxu0 %v3074
    %4069 = vmatpush.msra.mxu0 %v3050
    %4070 = vmatpush.msra.mxu0 %v3026
    %4071 = vmatpush.msra.mxu0 %v3002
    %4072 = vmatpush.msra.mxu0 %v2978
    %4073 = vmatpush.msra.mxu0 %v2954
    %4074 = vmatpush.msra.mxu0 %v2930
    %4075 = vmatpush.msra.mxu0 %v2906
    %4076 = vmatpush.msra.mxu0 %v2882
    %4077 = vmatmul.f32.gmra.mxu0 %v2485
    %v4078 = vpop.f32.mrf.mxu0
    %v4079 = vadd.f32 %v4053, %v4078
    %4080 = vmatmul.f32.gmra.mxu0 %v2488
    %v4081 = vpop.f32.mrf.mxu0
    %v4082 = vadd.f32 %v4056, %v4081
    %4083 = vmatmul.f32.gmra.mxu0 %v2491
    %v4084 = vpop.f32.mrf.mxu0
    %v4085 = vadd.f32 %v4059, %v4084
    %4086 = vdwg.mxu0
    %4087 = vmatpush.msra.mxu0 %v3626
    %4088 = vmatpush.msra.mxu0 %v3602
    %4089 = vmatpush.msra.mxu0 %v3578
    %4090 = vmatpush.msra.mxu0 %v3554
    %4091 = vmatpush.msra.mxu0 %v3530
    %4092 = vmatpush.msra.mxu0 %v3506
    %4093 = vmatpush.msra.mxu0 %v3482
    %4094 = vmatpush.msra.mxu0 %v3458
    %4095 = vmatpush.msra.mxu0 %v3434
    %4096 = vmatpush.msra.mxu0 %v3410
    %4097 = vmatpush.msra.mxu0 %v3386
    %4098 = vmatpush.msra.mxu0 %v3362
    %4099 = vmatpush.msra.mxu0 %v3338
    %4100 = vmatpush.msra.mxu0 %v3314
    %4101 = vmatpush.msra.mxu0 %v3290
    %4102 = vmatpush.msra.mxu0 %v3266
    %4103 = vmatmul.f32.gmra.mxu0 %v2486
    %v4104 = vpop.f32.mrf.mxu0
    %v4105 = vadd.f32 %v4079, %v4104
    %4106 = vmatmul.f32.gmra.mxu0 %v2489
    %v4107 = vpop.f32.mrf.mxu0
    %v4108 = vadd.f32 %v4082, %v4107
    %4109 = vmatmul.f32.gmra.mxu0 %v2492
    %v4110 = vpop.f32.mrf.mxu0
    %v4111 = vadd.f32 %v4085, %v4110
    %4112 = vdwg.mxu0
    %4113 = vmatpush.msra.mxu0 %v2859
    %4114 = vmatpush.msra.mxu0 %v2835
    %4115 = vmatpush.msra.mxu0 %v2811
    %4116 = vmatpush.msra.mxu0 %v2787
    %4117 = vmatpush.msra.mxu0 %v2763
    %4118 = vmatpush.msra.mxu0 %v2739
    %4119 = vmatpush.msra.mxu0 %v2715
    %4120 = vmatpush.msra.mxu0 %v2691
    %4121 = vmatpush.msra.mxu0 %v2667
    %4122 = vmatpush.msra.mxu0 %v2643
    %4123 = vmatpush.msra.mxu0 %v2619
    %4124 = vmatpush.msra.mxu0 %v2595
    %4125 = vmatpush.msra.mxu0 %v2571
    %4126 = vmatpush.msra.mxu0 %v2547
    %4127 = vmatpush.msra.mxu0 %v2523
    %4128 = vmatpush.msra.mxu0 %v2499
    %4129 = vmatmul.f32.gmra.mxu0 %v2484
    %v4130 = vpop.f32.mrf.mxu0
    %v4131 = vadd.f32 0.0, %v4130
    %4132 = vmatmul.f32.gmra.mxu0 %v2487
    %v4133 = vpop.f32.mrf.mxu0
    %v4134 = vadd.f32 0.0, %v4133
    %4135 = vmatmul.f32.gmra.mxu0 %v2490
    %v4136 = vpop.f32.mrf.mxu0
    %v4137 = vadd.f32 0.0, %v4136
    %4138 = vdwg.mxu0
    %4139 = vmatpush.msra.mxu0 %v3243
    %4140 = vmatpush.msra.mxu0 %v3219
    %4141 = vmatpush.msra.mxu0 %v3195
    %4142 = vmatpush.msra.mxu0 %v3171
    %4143 = vmatpush.msra.mxu0 %v3147
    %4144 = vmatpush.msra.mxu0 %v3123
    %4145 = vmatpush.msra.mxu0 %v3099
    %4146 = vmatpush.msra.mxu0 %v3075
    %4147 = vmatpush.msra.mxu0 %v3051
    %4148 = vmatpush.msra.mxu0 %v3027
    %4149 = vmatpush.msra.mxu0 %v3003
    %4150 = vmatpush.msra.mxu0 %v2979
    %4151 = vmatpush.msra.mxu0 %v2955
    %4152 = vmatpush.msra.mxu0 %v2931
    %4153 = vmatpush.msra.mxu0 %v2907
    %4154 = vmatpush.msra.mxu0 %v2883
    %4155 = vmatmul.f32.gmra.mxu0 %v2485
    %v4156 = vpop.f32.mrf.mxu0
    %v4157 = vadd.f32 %v4131, %v4156
    %4158 = vmatmul.f32.gmra.mxu0 %v2488
    %v4159 = vpop.f32.mrf.mxu0
    %v4160 = vadd.f32 %v4134, %v4159
    %4161 = vmatmul.f32.gmra.mxu0 %v2491
    %v4162 = vpop.f32.mrf.mxu0
    %v4163 = vadd.f32 %v4137, %v4162
    %4164 = vdwg.mxu0
    %4165 = vmatpush.msra.mxu0 %v3627
    %4166 = vmatpush.msra.mxu0 %v3603
    %4167 = vmatpush.msra.mxu0 %v3579
    %4168 = vmatpush.msra.mxu0 %v3555
    %4169 = vmatpush.msra.mxu0 %v3531
    %4170 = vmatpush.msra.mxu0 %v3507
    %4171 = vmatpush.msra.mxu0 %v3483
    %4172 = vmatpush.msra.mxu0 %v3459
    %4173 = vmatpush.msra.mxu0 %v3435
    %4174 = vmatpush.msra.mxu0 %v3411
    %4175 = vmatpush.msra.mxu0 %v3387
    %4176 = vmatpush.msra.mxu0 %v3363
    %4177 = vmatpush.msra.mxu0 %v3339
    %4178 = vmatpush.msra.mxu0 %v3315
    %4179 = vmatpush.msra.mxu0 %v3291
    %4180 = vmatpush.msra.mxu0 %v3267
    %4181 = vmatmul.f32.gmra.mxu0 %v2486
    %v4182 = vpop.f32.mrf.mxu0
    %v4183 = vadd.f32 %v4157, %v4182
    %4184 = vmatmul.f32.gmra.mxu0 %v2489
    %v4185 = vpop.f32.mrf.mxu0
    %v4186 = vadd.f32 %v4160, %v4185
    %4187 = vmatmul.f32.gmra.mxu0 %v2492
    %v4188 = vpop.f32.mrf.mxu0
    %v4189 = vadd.f32 %v4163, %v4188
    %4190 = vdwg.mxu0
    %4191 = vmatpush.msra.mxu0 %v2860
    %4192 = vmatpush.msra.mxu0 %v2836
    %4193 = vmatpush.msra.mxu0 %v2812
    %4194 = vmatpush.msra.mxu0 %v2788
    %4195 = vmatpush.msra.mxu0 %v2764
    %4196 = vmatpush.msra.mxu0 %v2740
    %4197 = vmatpush.msra.mxu0 %v2716
    %4198 = vmatpush.msra.mxu0 %v2692
    %4199 = vmatpush.msra.mxu0 %v2668
    %4200 = vmatpush.msra.mxu0 %v2644
    %4201 = vmatpush.msra.mxu0 %v2620
    %4202 = vmatpush.msra.mxu0 %v2596
    %4203 = vmatpush.msra.mxu0 %v2572
    %4204 = vmatpush.msra.mxu0 %v2548
    %4205 = vmatpush.msra.mxu0 %v2524
    %4206 = vmatpush.msra.mxu0 %v2500
    %4207 = vmatmul.f32.gmra.mxu0 %v2484
    %v4208 = vpop.f32.mrf.mxu0
    %v4209 = vadd.f32 0.0, %v4208
    %4210 = vmatmul.f32.gmra.mxu0 %v2487
    %v4211 = vpop.f32.mrf.mxu0
    %v4212 = vadd.f32 0.0, %v4211
    %4213 = vmatmul.f32.gmra.mxu0 %v2490
    %v4214 = vpop.f32.mrf.mxu0
    %v4215 = vadd.f32 0.0, %v4214
    %4216 = vdwg.mxu0
    %4217 = vmatpush.msra.mxu0 %v3244
    %4218 = vmatpush.msra.mxu0 %v3220
    %4219 = vmatpush.msra.mxu0 %v3196
    %4220 = vmatpush.msra.mxu0 %v3172
    %4221 = vmatpush.msra.mxu0 %v3148
    %4222 = vmatpush.msra.mxu0 %v3124
    %4223 = vmatpush.msra.mxu0 %v3100
    %4224 = vmatpush.msra.mxu0 %v3076
    %4225 = vmatpush.msra.mxu0 %v3052
    %4226 = vmatpush.msra.mxu0 %v3028
    %4227 = vmatpush.msra.mxu0 %v3004
    %4228 = vmatpush.msra.mxu0 %v2980
    %4229 = vmatpush.msra.mxu0 %v2956
    %4230 = vmatpush.msra.mxu0 %v2932
    %4231 = vmatpush.msra.mxu0 %v2908
    %4232 = vmatpush.msra.mxu0 %v2884
    %4233 = vmatmul.f32.gmra.mxu0 %v2485
    %v4234 = vpop.f32.mrf.mxu0
    %v4235 = vadd.f32 %v4209, %v4234
    %4236 = vmatmul.f32.gmra.mxu0 %v2488
    %v4237 = vpop.f32.mrf.mxu0
    %v4238 = vadd.f32 %v4212, %v4237
    %4239 = vmatmul.f32.gmra.mxu0 %v2491
    %v4240 = vpop.f32.mrf.mxu0
    %v4241 = vadd.f32 %v4215, %v4240
    %4242 = vdwg.mxu0
    %4243 = vmatpush.msra.mxu0 %v3628
    %4244 = vmatpush.msra.mxu0 %v3604
    %4245 = vmatpush.msra.mxu0 %v3580
    %4246 = vmatpush.msra.mxu0 %v3556
    %4247 = vmatpush.msra.mxu0 %v3532
    %4248 = vmatpush.msra.mxu0 %v3508
    %4249 = vmatpush.msra.mxu0 %v3484
    %4250 = vmatpush.msra.mxu0 %v3460
    %4251 = vmatpush.msra.mxu0 %v3436
    %4252 = vmatpush.msra.mxu0 %v3412
    %4253 = vmatpush.msra.mxu0 %v3388
    %4254 = vmatpush.msra.mxu0 %v3364
    %4255 = vmatpush.msra.mxu0 %v3340
    %4256 = vmatpush.msra.mxu0 %v3316
    %4257 = vmatpush.msra.mxu0 %v3292
    %4258 = vmatpush.msra.mxu0 %v3268
    %4259 = vmatmul.f32.gmra.mxu0 %v2486
    %v4260 = vpop.f32.mrf.mxu0
    %v4261 = vadd.f32 %v4235, %v4260
    %4262 = vmatmul.f32.gmra.mxu0 %v2489
    %v4263 = vpop.f32.mrf.mxu0
    %v4264 = vadd.f32 %v4238, %v4263
    %4265 = vmatmul.f32.gmra.mxu0 %v2492
    %v4266 = vpop.f32.mrf.mxu0
    %v4267 = vadd.f32 %v4241, %v4266
    %4268 = vdwg.mxu0
    %4269 = vmatpush.msra.mxu0 %v2861
    %4270 = vmatpush.msra.mxu0 %v2837
    %4271 = vmatpush.msra.mxu0 %v2813
    %4272 = vmatpush.msra.mxu0 %v2789
    %4273 = vmatpush.msra.mxu0 %v2765
    %4274 = vmatpush.msra.mxu0 %v2741
    %4275 = vmatpush.msra.mxu0 %v2717
    %4276 = vmatpush.msra.mxu0 %v2693
    %4277 = vmatpush.msra.mxu0 %v2669
    %4278 = vmatpush.msra.mxu0 %v2645
    %4279 = vmatpush.msra.mxu0 %v2621
    %4280 = vmatpush.msra.mxu0 %v2597
    %4281 = vmatpush.msra.mxu0 %v2573
    %4282 = vmatpush.msra.mxu0 %v2549
    %4283 = vmatpush.msra.mxu0 %v2525
    %4284 = vmatpush.msra.mxu0 %v2501
    %4285 = vmatmul.f32.gmra.mxu0 %v2484
    %v4286 = vpop.f32.mrf.mxu0
    %v4287 = vadd.f32 0.0, %v4286
    %4288 = vmatmul.f32.gmra.mxu0 %v2487
    %v4289 = vpop.f32.mrf.mxu0
    %v4290 = vadd.f32 0.0, %v4289
    %4291 = vmatmul.f32.gmra.mxu0 %v2490
    %v4292 = vpop.f32.mrf.mxu0
    %v4293 = vadd.f32 0.0, %v4292
    %4294 = vdwg.mxu0
    %4295 = vmatpush.msra.mxu0 %v3245
    %4296 = vmatpush.msra.mxu0 %v3221
    %4297 = vmatpush.msra.mxu0 %v3197
    %4298 = vmatpush.msra.mxu0 %v3173
    %4299 = vmatpush.msra.mxu0 %v3149
    %4300 = vmatpush.msra.mxu0 %v3125
    %4301 = vmatpush.msra.mxu0 %v3101
    %4302 = vmatpush.msra.mxu0 %v3077
    %4303 = vmatpush.msra.mxu0 %v3053
    %4304 = vmatpush.msra.mxu0 %v3029
    %4305 = vmatpush.msra.mxu0 %v3005
    %4306 = vmatpush.msra.mxu0 %v2981
    %4307 = vmatpush.msra.mxu0 %v2957
    %4308 = vmatpush.msra.mxu0 %v2933
    %4309 = vmatpush.msra.mxu0 %v2909
    %4310 = vmatpush.msra.mxu0 %v2885
    %4311 = vmatmul.f32.gmra.mxu0 %v2485
    %v4312 = vpop.f32.mrf.mxu0
    %v4313 = vadd.f32 %v4287, %v4312
    %4314 = vmatmul.f32.gmra.mxu0 %v2488
    %v4315 = vpop.f32.mrf.mxu0
    %v4316 = vadd.f32 %v4290, %v4315
    %4317 = vmatmul.f32.gmra.mxu0 %v2491
    %v4318 = vpop.f32.mrf.mxu0
    %v4319 = vadd.f32 %v4293, %v4318
    %4320 = vdwg.mxu0
    %4321 = vmatpush.msra.mxu0 %v3629
    %4322 = vmatpush.msra.mxu0 %v3605
    %4323 = vmatpush.msra.mxu0 %v3581
    %4324 = vmatpush.msra.mxu0 %v3557
    %4325 = vmatpush.msra.mxu0 %v3533
    %4326 = vmatpush.msra.mxu0 %v3509
    %4327 = vmatpush.msra.mxu0 %v3485
    %4328 = vmatpush.msra.mxu0 %v3461
    %4329 = vmatpush.msra.mxu0 %v3437
    %4330 = vmatpush.msra.mxu0 %v3413
    %4331 = vmatpush.msra.mxu0 %v3389
    %4332 = vmatpush.msra.mxu0 %v3365
    %4333 = vmatpush.msra.mxu0 %v3341
    %4334 = vmatpush.msra.mxu0 %v3317
    %4335 = vmatpush.msra.mxu0 %v3293
    %4336 = vmatpush.msra.mxu0 %v3269
    %4337 = vmatmul.f32.gmra.mxu0 %v2486
    %v4338 = vpop.f32.mrf.mxu0
    %v4339 = vadd.f32 %v4313, %v4338
    %4340 = vmatmul.f32.gmra.mxu0 %v2489
    %v4341 = vpop.f32.mrf.mxu0
    %v4342 = vadd.f32 %v4316, %v4341
    %4343 = vmatmul.f32.gmra.mxu0 %v2492
    %v4344 = vpop.f32.mrf.mxu0
    %v4345 = vadd.f32 %v4319, %v4344
    %4346 = vdwg.mxu0
    %4347 = vmatpush.msra.mxu0 %v2862
    %4348 = vmatpush.msra.mxu0 %v2838
    %4349 = vmatpush.msra.mxu0 %v2814
    %4350 = vmatpush.msra.mxu0 %v2790
    %4351 = vmatpush.msra.mxu0 %v2766
    %4352 = vmatpush.msra.mxu0 %v2742
    %4353 = vmatpush.msra.mxu0 %v2718
    %4354 = vmatpush.msra.mxu0 %v2694
    %4355 = vmatpush.msra.mxu0 %v2670
    %4356 = vmatpush.msra.mxu0 %v2646
    %4357 = vmatpush.msra.mxu0 %v2622
    %4358 = vmatpush.msra.mxu0 %v2598
    %4359 = vmatpush.msra.mxu0 %v2574
    %4360 = vmatpush.msra.mxu0 %v2550
    %4361 = vmatpush.msra.mxu0 %v2526
    %4362 = vmatpush.msra.mxu0 %v2502
    %4363 = vmatmul.f32.gmra.mxu0 %v2484
    %v4364 = vpop.f32.mrf.mxu0
    %v4365 = vadd.f32 0.0, %v4364
    %4366 = vmatmul.f32.gmra.mxu0 %v2487
    %v4367 = vpop.f32.mrf.mxu0
    %v4368 = vadd.f32 0.0, %v4367
    %4369 = vmatmul.f32.gmra.mxu0 %v2490
    %v4370 = vpop.f32.mrf.mxu0
    %v4371 = vadd.f32 0.0, %v4370
    %4372 = vdwg.mxu0
    %4373 = vmatpush.msra.mxu0 %v3246
    %4374 = vmatpush.msra.mxu0 %v3222
    %4375 = vmatpush.msra.mxu0 %v3198
    %4376 = vmatpush.msra.mxu0 %v3174
    %4377 = vmatpush.msra.mxu0 %v3150
    %4378 = vmatpush.msra.mxu0 %v3126
    %4379 = vmatpush.msra.mxu0 %v3102
    %4380 = vmatpush.msra.mxu0 %v3078
    %4381 = vmatpush.msra.mxu0 %v3054
    %4382 = vmatpush.msra.mxu0 %v3030
    %4383 = vmatpush.msra.mxu0 %v3006
    %4384 = vmatpush.msra.mxu0 %v2982
    %4385 = vmatpush.msra.mxu0 %v2958
    %4386 = vmatpush.msra.mxu0 %v2934
    %4387 = vmatpush.msra.mxu0 %v2910
    %4388 = vmatpush.msra.mxu0 %v2886
    %4389 = vmatmul.f32.gmra.mxu0 %v2485
    %v4390 = vpop.f32.mrf.mxu0
    %v4391 = vadd.f32 %v4365, %v4390
    %4392 = vmatmul.f32.gmra.mxu0 %v2488
    %v4393 = vpop.f32.mrf.mxu0
    %v4394 = vadd.f32 %v4368, %v4393
    %4395 = vmatmul.f32.gmra.mxu0 %v2491
    %v4396 = vpop.f32.mrf.mxu0
    %v4397 = vadd.f32 %v4371, %v4396
    %4398 = vdwg.mxu0
    %4399 = vmatpush.msra.mxu0 %v3630
    %4400 = vmatpush.msra.mxu0 %v3606
    %4401 = vmatpush.msra.mxu0 %v3582
    %4402 = vmatpush.msra.mxu0 %v3558
    %4403 = vmatpush.msra.mxu0 %v3534
    %4404 = vmatpush.msra.mxu0 %v3510
    %4405 = vmatpush.msra.mxu0 %v3486
    %4406 = vmatpush.msra.mxu0 %v3462
    %4407 = vmatpush.msra.mxu0 %v3438
    %4408 = vmatpush.msra.mxu0 %v3414
    %4409 = vmatpush.msra.mxu0 %v3390
    %4410 = vmatpush.msra.mxu0 %v3366
    %4411 = vmatpush.msra.mxu0 %v3342
    %4412 = vmatpush.msra.mxu0 %v3318
    %4413 = vmatpush.msra.mxu0 %v3294
    %4414 = vmatpush.msra.mxu0 %v3270
    %4415 = vmatmul.f32.gmra.mxu0 %v2486
    %v4416 = vpop.f32.mrf.mxu0
    %v4417 = vadd.f32 %v4391, %v4416
    %4418 = vmatmul.f32.gmra.mxu0 %v2489
    %v4419 = vpop.f32.mrf.mxu0
    %v4420 = vadd.f32 %v4394, %v4419
    %4421 = vmatmul.f32.gmra.mxu0 %v2492
    %v4422 = vpop.f32.mrf.mxu0
    %v4423 = vadd.f32 %v4397, %v4422
    %4424 = vdwg.mxu0
    %4425 = vmatpush.msra.mxu0 %v2863
    %4426 = vmatpush.msra.mxu0 %v2839
    %4427 = vmatpush.msra.mxu0 %v2815
    %4428 = vmatpush.msra.mxu0 %v2791
    %4429 = vmatpush.msra.mxu0 %v2767
    %4430 = vmatpush.msra.mxu0 %v2743
    %4431 = vmatpush.msra.mxu0 %v2719
    %4432 = vmatpush.msra.mxu0 %v2695
    %4433 = vmatpush.msra.mxu0 %v2671
    %4434 = vmatpush.msra.mxu0 %v2647
    %4435 = vmatpush.msra.mxu0 %v2623
    %4436 = vmatpush.msra.mxu0 %v2599
    %4437 = vmatpush.msra.mxu0 %v2575
    %4438 = vmatpush.msra.mxu0 %v2551
    %4439 = vmatpush.msra.mxu0 %v2527
    %4440 = vmatpush.msra.mxu0 %v2503
    %4441 = vmatmul.f32.gmra.mxu0 %v2484
    %v4442 = vpop.f32.mrf.mxu0
    %v4443 = vadd.f32 0.0, %v4442
    %4444 = vmatmul.f32.gmra.mxu0 %v2487
    %v4445 = vpop.f32.mrf.mxu0
    %v4446 = vadd.f32 0.0, %v4445
    %4447 = vmatmul.f32.gmra.mxu0 %v2490
    %v4448 = vpop.f32.mrf.mxu0
    %v4449 = vadd.f32 0.0, %v4448
    %4450 = vdwg.mxu0
    %4451 = vmatpush.msra.mxu0 %v3247
    %4452 = vmatpush.msra.mxu0 %v3223
    %4453 = vmatpush.msra.mxu0 %v3199
    %4454 = vmatpush.msra.mxu0 %v3175
    %4455 = vmatpush.msra.mxu0 %v3151
    %4456 = vmatpush.msra.mxu0 %v3127
    %4457 = vmatpush.msra.mxu0 %v3103
    %4458 = vmatpush.msra.mxu0 %v3079
    %4459 = vmatpush.msra.mxu0 %v3055
    %4460 = vmatpush.msra.mxu0 %v3031
    %4461 = vmatpush.msra.mxu0 %v3007
    %4462 = vmatpush.msra.mxu0 %v2983
    %4463 = vmatpush.msra.mxu0 %v2959
    %4464 = vmatpush.msra.mxu0 %v2935
    %4465 = vmatpush.msra.mxu0 %v2911
    %4466 = vmatpush.msra.mxu0 %v2887
    %4467 = vmatmul.f32.gmra.mxu0 %v2485
    %v4468 = vpop.f32.mrf.mxu0
    %v4469 = vadd.f32 %v4443, %v4468
    %4470 = vmatmul.f32.gmra.mxu0 %v2488
    %v4471 = vpop.f32.mrf.mxu0
    %v4472 = vadd.f32 %v4446, %v4471
    %4473 = vmatmul.f32.gmra.mxu0 %v2491
    %v4474 = vpop.f32.mrf.mxu0
    %v4475 = vadd.f32 %v4449, %v4474
    %4476 = vdwg.mxu0
    %4477 = vmatpush.msra.mxu0 %v3631
    %4478 = vmatpush.msra.mxu0 %v3607
    %4479 = vmatpush.msra.mxu0 %v3583
    %4480 = vmatpush.msra.mxu0 %v3559
    %4481 = vmatpush.msra.mxu0 %v3535
    %4482 = vmatpush.msra.mxu0 %v3511
    %4483 = vmatpush.msra.mxu0 %v3487
    %4484 = vmatpush.msra.mxu0 %v3463
    %4485 = vmatpush.msra.mxu0 %v3439
    %4486 = vmatpush.msra.mxu0 %v3415
    %4487 = vmatpush.msra.mxu0 %v3391
    %4488 = vmatpush.msra.mxu0 %v3367
    %4489 = vmatpush.msra.mxu0 %v3343
    %4490 = vmatpush.msra.mxu0 %v3319
    %4491 = vmatpush.msra.mxu0 %v3295
    %4492 = vmatpush.msra.mxu0 %v3271
    %4493 = vmatmul.f32.gmra.mxu0 %v2486
    %v4494 = vpop.f32.mrf.mxu0
    %v4495 = vadd.f32 %v4469, %v4494
    %4496 = vmatmul.f32.gmra.mxu0 %v2489
    %v4497 = vpop.f32.mrf.mxu0
    %v4498 = vadd.f32 %v4472, %v4497
    %4499 = vmatmul.f32.gmra.mxu0 %v2492
    %v4500 = vpop.f32.mrf.mxu0
    %v4501 = vadd.f32 %v4475, %v4500
    %4502 = vdwg.mxu0
    %4503 = vmatpush.msra.mxu0 %v2864
    %4504 = vmatpush.msra.mxu0 %v2840
    %4505 = vmatpush.msra.mxu0 %v2816
    %4506 = vmatpush.msra.mxu0 %v2792
    %4507 = vmatpush.msra.mxu0 %v2768
    %4508 = vmatpush.msra.mxu0 %v2744
    %4509 = vmatpush.msra.mxu0 %v2720
    %4510 = vmatpush.msra.mxu0 %v2696
    %4511 = vmatpush.msra.mxu0 %v2672
    %4512 = vmatpush.msra.mxu0 %v2648
    %4513 = vmatpush.msra.mxu0 %v2624
    %4514 = vmatpush.msra.mxu0 %v2600
    %4515 = vmatpush.msra.mxu0 %v2576
    %4516 = vmatpush.msra.mxu0 %v2552
    %4517 = vmatpush.msra.mxu0 %v2528
    %4518 = vmatpush.msra.mxu0 %v2504
    %4519 = vmatmul.f32.gmra.mxu0 %v2484
    %v4520 = vpop.f32.mrf.mxu0
    %v4521 = vadd.f32 0.0, %v4520
    %4522 = vmatmul.f32.gmra.mxu0 %v2487
    %v4523 = vpop.f32.mrf.mxu0
    %v4524 = vadd.f32 0.0, %v4523
    %4525 = vmatmul.f32.gmra.mxu0 %v2490
    %v4526 = vpop.f32.mrf.mxu0
    %v4527 = vadd.f32 0.0, %v4526
    %4528 = vdwg.mxu0
    %4529 = vmatpush.msra.mxu0 %v3248
    %4530 = vmatpush.msra.mxu0 %v3224
    %4531 = vmatpush.msra.mxu0 %v3200
    %4532 = vmatpush.msra.mxu0 %v3176
    %4533 = vmatpush.msra.mxu0 %v3152
    %4534 = vmatpush.msra.mxu0 %v3128
    %4535 = vmatpush.msra.mxu0 %v3104
    %4536 = vmatpush.msra.mxu0 %v3080
    %4537 = vmatpush.msra.mxu0 %v3056
    %4538 = vmatpush.msra.mxu0 %v3032
    %4539 = vmatpush.msra.mxu0 %v3008
    %4540 = vmatpush.msra.mxu0 %v2984
    %4541 = vmatpush.msra.mxu0 %v2960
    %4542 = vmatpush.msra.mxu0 %v2936
    %4543 = vmatpush.msra.mxu0 %v2912
    %4544 = vmatpush.msra.mxu0 %v2888
    %4545 = vmatmul.f32.gmra.mxu0 %v2485
    %v4546 = vpop.f32.mrf.mxu0
    %v4547 = vadd.f32 %v4521, %v4546
    %4548 = vmatmul.f32.gmra.mxu0 %v2488
    %v4549 = vpop.f32.mrf.mxu0
    %v4550 = vadd.f32 %v4524, %v4549
    %4551 = vmatmul.f32.gmra.mxu0 %v2491
    %v4552 = vpop.f32.mrf.mxu0
    %v4553 = vadd.f32 %v4527, %v4552
    %4554 = vdwg.mxu0
    %4555 = vmatpush.msra.mxu0 %v3632
    %4556 = vmatpush.msra.mxu0 %v3608
    %4557 = vmatpush.msra.mxu0 %v3584
    %4558 = vmatpush.msra.mxu0 %v3560
    %4559 = vmatpush.msra.mxu0 %v3536
    %4560 = vmatpush.msra.mxu0 %v3512
    %4561 = vmatpush.msra.mxu0 %v3488
    %4562 = vmatpush.msra.mxu0 %v3464
    %4563 = vmatpush.msra.mxu0 %v3440
    %4564 = vmatpush.msra.mxu0 %v3416
    %4565 = vmatpush.msra.mxu0 %v3392
    %4566 = vmatpush.msra.mxu0 %v3368
    %4567 = vmatpush.msra.mxu0 %v3344
    %4568 = vmatpush.msra.mxu0 %v3320
    %4569 = vmatpush.msra.mxu0 %v3296
    %4570 = vmatpush.msra.mxu0 %v3272
    %4571 = vmatmul.f32.gmra.mxu0 %v2486
    %v4572 = vpop.f32.mrf.mxu0
    %v4573 = vadd.f32 %v4547, %v4572
    %4574 = vmatmul.f32.gmra.mxu0 %v2489
    %v4575 = vpop.f32.mrf.mxu0
    %v4576 = vadd.f32 %v4550, %v4575
    %4577 = vmatmul.f32.gmra.mxu0 %v2492
    %v4578 = vpop.f32.mrf.mxu0
    %v4579 = vadd.f32 %v4553, %v4578
    %4580 = vdwg.mxu0
    %4581 = vmatpush.msra.mxu0 %v2865
    %4582 = vmatpush.msra.mxu0 %v2841
    %4583 = vmatpush.msra.mxu0 %v2817
    %4584 = vmatpush.msra.mxu0 %v2793
    %4585 = vmatpush.msra.mxu0 %v2769
    %4586 = vmatpush.msra.mxu0 %v2745
    %4587 = vmatpush.msra.mxu0 %v2721
    %4588 = vmatpush.msra.mxu0 %v2697
    %4589 = vmatpush.msra.mxu0 %v2673
    %4590 = vmatpush.msra.mxu0 %v2649
    %4591 = vmatpush.msra.mxu0 %v2625
    %4592 = vmatpush.msra.mxu0 %v2601
    %4593 = vmatpush.msra.mxu0 %v2577
    %4594 = vmatpush.msra.mxu0 %v2553
    %4595 = vmatpush.msra.mxu0 %v2529
    %4596 = vmatpush.msra.mxu0 %v2505
    %4597 = vmatmul.f32.gmra.mxu0 %v2484
    %v4598 = vpop.f32.mrf.mxu0
    %v4599 = vadd.f32 0.0, %v4598
    %4600 = vmatmul.f32.gmra.mxu0 %v2487
    %v4601 = vpop.f32.mrf.mxu0
    %v4602 = vadd.f32 0.0, %v4601
    %4603 = vmatmul.f32.gmra.mxu0 %v2490
    %v4604 = vpop.f32.mrf.mxu0
    %v4605 = vadd.f32 0.0, %v4604
    %4606 = vdwg.mxu0
    %4607 = vmatpush.msra.mxu0 %v3249
    %4608 = vmatpush.msra.mxu0 %v3225
    %4609 = vmatpush.msra.mxu0 %v3201
    %4610 = vmatpush.msra.mxu0 %v3177
    %4611 = vmatpush.msra.mxu0 %v3153
    %4612 = vmatpush.msra.mxu0 %v3129
    %4613 = vmatpush.msra.mxu0 %v3105
    %4614 = vmatpush.msra.mxu0 %v3081
    %4615 = vmatpush.msra.mxu0 %v3057
    %4616 = vmatpush.msra.mxu0 %v3033
    %4617 = vmatpush.msra.mxu0 %v3009
    %4618 = vmatpush.msra.mxu0 %v2985
    %4619 = vmatpush.msra.mxu0 %v2961
    %4620 = vmatpush.msra.mxu0 %v2937
    %4621 = vmatpush.msra.mxu0 %v2913
    %4622 = vmatpush.msra.mxu0 %v2889
    %4623 = vmatmul.f32.gmra.mxu0 %v2485
    %v4624 = vpop.f32.mrf.mxu0
    %v4625 = vadd.f32 %v4599, %v4624
    %4626 = vmatmul.f32.gmra.mxu0 %v2488
    %v4627 = vpop.f32.mrf.mxu0
    %v4628 = vadd.f32 %v4602, %v4627
    %4629 = vmatmul.f32.gmra.mxu0 %v2491
    %v4630 = vpop.f32.mrf.mxu0
    %v4631 = vadd.f32 %v4605, %v4630
    %4632 = vdwg.mxu0
    %4633 = vmatpush.msra.mxu0 %v3633
    %4634 = vmatpush.msra.mxu0 %v3609
    %4635 = vmatpush.msra.mxu0 %v3585
    %4636 = vmatpush.msra.mxu0 %v3561
    %4637 = vmatpush.msra.mxu0 %v3537
    %4638 = vmatpush.msra.mxu0 %v3513
    %4639 = vmatpush.msra.mxu0 %v3489
    %4640 = vmatpush.msra.mxu0 %v3465
    %4641 = vmatpush.msra.mxu0 %v3441
    %4642 = vmatpush.msra.mxu0 %v3417
    %4643 = vmatpush.msra.mxu0 %v3393
    %4644 = vmatpush.msra.mxu0 %v3369
    %4645 = vmatpush.msra.mxu0 %v3345
    %4646 = vmatpush.msra.mxu0 %v3321
    %4647 = vmatpush.msra.mxu0 %v3297
    %4648 = vmatpush.msra.mxu0 %v3273
    %4649 = vmatmul.f32.gmra.mxu0 %v2486
    %v4650 = vpop.f32.mrf.mxu0
    %v4651 = vadd.f32 %v4625, %v4650
    %4652 = vmatmul.f32.gmra.mxu0 %v2489
    %v4653 = vpop.f32.mrf.mxu0
    %v4654 = vadd.f32 %v4628, %v4653
    %4655 = vmatmul.f32.gmra.mxu0 %v2492
    %v4656 = vpop.f32.mrf.mxu0
    %v4657 = vadd.f32 %v4631, %v4656
    %4658 = vdwg.mxu0
    %4659 = vmatpush.msra.mxu0 %v2866
    %4660 = vmatpush.msra.mxu0 %v2842
    %4661 = vmatpush.msra.mxu0 %v2818
    %4662 = vmatpush.msra.mxu0 %v2794
    %4663 = vmatpush.msra.mxu0 %v2770
    %4664 = vmatpush.msra.mxu0 %v2746
    %4665 = vmatpush.msra.mxu0 %v2722
    %4666 = vmatpush.msra.mxu0 %v2698
    %4667 = vmatpush.msra.mxu0 %v2674
    %4668 = vmatpush.msra.mxu0 %v2650
    %4669 = vmatpush.msra.mxu0 %v2626
    %4670 = vmatpush.msra.mxu0 %v2602
    %4671 = vmatpush.msra.mxu0 %v2578
    %4672 = vmatpush.msra.mxu0 %v2554
    %4673 = vmatpush.msra.mxu0 %v2530
    %4674 = vmatpush.msra.mxu0 %v2506
    %4675 = vmatmul.f32.gmra.mxu0 %v2484
    %v4676 = vpop.f32.mrf.mxu0
    %v4677 = vadd.f32 0.0, %v4676
    %4678 = vmatmul.f32.gmra.mxu0 %v2487
    %v4679 = vpop.f32.mrf.mxu0
    %v4680 = vadd.f32 0.0, %v4679
    %4681 = vmatmul.f32.gmra.mxu0 %v2490
    %v4682 = vpop.f32.mrf.mxu0
    %v4683 = vadd.f32 0.0, %v4682
    %4684 = vdwg.mxu0
    %4685 = vmatpush.msra.mxu0 %v3250
    %4686 = vmatpush.msra.mxu0 %v3226
    %4687 = vmatpush.msra.mxu0 %v3202
    %4688 = vmatpush.msra.mxu0 %v3178
    %4689 = vmatpush.msra.mxu0 %v3154
    %4690 = vmatpush.msra.mxu0 %v3130
    %4691 = vmatpush.msra.mxu0 %v3106
    %4692 = vmatpush.msra.mxu0 %v3082
    %4693 = vmatpush.msra.mxu0 %v3058
    %4694 = vmatpush.msra.mxu0 %v3034
    %4695 = vmatpush.msra.mxu0 %v3010
    %4696 = vmatpush.msra.mxu0 %v2986
    %4697 = vmatpush.msra.mxu0 %v2962
    %4698 = vmatpush.msra.mxu0 %v2938
    %4699 = vmatpush.msra.mxu0 %v2914
    %4700 = vmatpush.msra.mxu0 %v2890
    %4701 = vmatmul.f32.gmra.mxu0 %v2485
    %v4702 = vpop.f32.mrf.mxu0
    %v4703 = vadd.f32 %v4677, %v4702
    %4704 = vmatmul.f32.gmra.mxu0 %v2488
    %v4705 = vpop.f32.mrf.mxu0
    %v4706 = vadd.f32 %v4680, %v4705
    %4707 = vmatmul.f32.gmra.mxu0 %v2491
    %v4708 = vpop.f32.mrf.mxu0
    %v4709 = vadd.f32 %v4683, %v4708
    %4710 = vdwg.mxu0
    %4711 = vmatpush.msra.mxu0 %v3634
    %4712 = vmatpush.msra.mxu0 %v3610
    %4713 = vmatpush.msra.mxu0 %v3586
    %4714 = vmatpush.msra.mxu0 %v3562
    %4715 = vmatpush.msra.mxu0 %v3538
    %4716 = vmatpush.msra.mxu0 %v3514
    %4717 = vmatpush.msra.mxu0 %v3490
    %4718 = vmatpush.msra.mxu0 %v3466
    %4719 = vmatpush.msra.mxu0 %v3442
    %4720 = vmatpush.msra.mxu0 %v3418
    %4721 = vmatpush.msra.mxu0 %v3394
    %4722 = vmatpush.msra.mxu0 %v3370
    %4723 = vmatpush.msra.mxu0 %v3346
    %4724 = vmatpush.msra.mxu0 %v3322
    %4725 = vmatpush.msra.mxu0 %v3298
    %4726 = vmatpush.msra.mxu0 %v3274
    %4727 = vmatmul.f32.gmra.mxu0 %v2486
    %v4728 = vpop.f32.mrf.mxu0
    %v4729 = vadd.f32 %v4703, %v4728
    %4730 = vmatmul.f32.gmra.mxu0 %v2489
    %v4731 = vpop.f32.mrf.mxu0
    %v4732 = vadd.f32 %v4706, %v4731
    %4733 = vmatmul.f32.gmra.mxu0 %v2492
    %v4734 = vpop.f32.mrf.mxu0
    %v4735 = vadd.f32 %v4709, %v4734
    %4736 = vdwg.mxu0
    %4737 = vmatpush.msra.mxu0 %v2867
    %4738 = vmatpush.msra.mxu0 %v2843
    %4739 = vmatpush.msra.mxu0 %v2819
    %4740 = vmatpush.msra.mxu0 %v2795
    %4741 = vmatpush.msra.mxu0 %v2771
    %4742 = vmatpush.msra.mxu0 %v2747
    %4743 = vmatpush.msra.mxu0 %v2723
    %4744 = vmatpush.msra.mxu0 %v2699
    %4745 = vmatpush.msra.mxu0 %v2675
    %4746 = vmatpush.msra.mxu0 %v2651
    %4747 = vmatpush.msra.mxu0 %v2627
    %4748 = vmatpush.msra.mxu0 %v2603
    %4749 = vmatpush.msra.mxu0 %v2579
    %4750 = vmatpush.msra.mxu0 %v2555
    %4751 = vmatpush.msra.mxu0 %v2531
    %4752 = vmatpush.msra.mxu0 %v2507
    %4753 = vmatmul.f32.gmra.mxu0 %v2484
    %v4754 = vpop.f32.mrf.mxu0
    %v4755 = vadd.f32 0.0, %v4754
    %4756 = vmatmul.f32.gmra.mxu0 %v2487
    %v4757 = vpop.f32.mrf.mxu0
    %v4758 = vadd.f32 0.0, %v4757
    %4759 = vmatmul.f32.gmra.mxu0 %v2490
    %v4760 = vpop.f32.mrf.mxu0
    %v4761 = vadd.f32 0.0, %v4760
    %4762 = vdwg.mxu0
    %4763 = vmatpush.msra.mxu0 %v3251
    %4764 = vmatpush.msra.mxu0 %v3227
    %4765 = vmatpush.msra.mxu0 %v3203
    %4766 = vmatpush.msra.mxu0 %v3179
    %4767 = vmatpush.msra.mxu0 %v3155
    %4768 = vmatpush.msra.mxu0 %v3131
    %4769 = vmatpush.msra.mxu0 %v3107
    %4770 = vmatpush.msra.mxu0 %v3083
    %4771 = vmatpush.msra.mxu0 %v3059
    %4772 = vmatpush.msra.mxu0 %v3035
    %4773 = vmatpush.msra.mxu0 %v3011
    %4774 = vmatpush.msra.mxu0 %v2987
    %4775 = vmatpush.msra.mxu0 %v2963
    %4776 = vmatpush.msra.mxu0 %v2939
    %4777 = vmatpush.msra.mxu0 %v2915
    %4778 = vmatpush.msra.mxu0 %v2891
    %4779 = vmatmul.f32.gmra.mxu0 %v2485
    %v4780 = vpop.f32.mrf.mxu0
    %v4781 = vadd.f32 %v4755, %v4780
    %4782 = vmatmul.f32.gmra.mxu0 %v2488
    %v4783 = vpop.f32.mrf.mxu0
    %v4784 = vadd.f32 %v4758, %v4783
    %4785 = vmatmul.f32.gmra.mxu0 %v2491
    %v4786 = vpop.f32.mrf.mxu0
    %v4787 = vadd.f32 %v4761, %v4786
    %4788 = vdwg.mxu0
    %4789 = vmatpush.msra.mxu0 %v3635
    %4790 = vmatpush.msra.mxu0 %v3611
    %4791 = vmatpush.msra.mxu0 %v3587
    %4792 = vmatpush.msra.mxu0 %v3563
    %4793 = vmatpush.msra.mxu0 %v3539
    %4794 = vmatpush.msra.mxu0 %v3515
    %4795 = vmatpush.msra.mxu0 %v3491
    %4796 = vmatpush.msra.mxu0 %v3467
    %4797 = vmatpush.msra.mxu0 %v3443
    %4798 = vmatpush.msra.mxu0 %v3419
    %4799 = vmatpush.msra.mxu0 %v3395
    %4800 = vmatpush.msra.mxu0 %v3371
    %4801 = vmatpush.msra.mxu0 %v3347
    %4802 = vmatpush.msra.mxu0 %v3323
    %4803 = vmatpush.msra.mxu0 %v3299
    %4804 = vmatpush.msra.mxu0 %v3275
    %4805 = vmatmul.f32.gmra.mxu0 %v2486
    %v4806 = vpop.f32.mrf.mxu0
    %v4807 = vadd.f32 %v4781, %v4806
    %4808 = vmatmul.f32.gmra.mxu0 %v2489
    %v4809 = vpop.f32.mrf.mxu0
    %v4810 = vadd.f32 %v4784, %v4809
    %4811 = vmatmul.f32.gmra.mxu0 %v2492
    %v4812 = vpop.f32.mrf.mxu0
    %v4813 = vadd.f32 %v4787, %v4812
    %4814 = vdwg.mxu0
    %4815 = vmatpush.msra.mxu0 %v2868
    %4816 = vmatpush.msra.mxu0 %v2844
    %4817 = vmatpush.msra.mxu0 %v2820
    %4818 = vmatpush.msra.mxu0 %v2796
    %4819 = vmatpush.msra.mxu0 %v2772
    %4820 = vmatpush.msra.mxu0 %v2748
    %4821 = vmatpush.msra.mxu0 %v2724
    %4822 = vmatpush.msra.mxu0 %v2700
    %4823 = vmatpush.msra.mxu0 %v2676
    %4824 = vmatpush.msra.mxu0 %v2652
    %4825 = vmatpush.msra.mxu0 %v2628
    %4826 = vmatpush.msra.mxu0 %v2604
    %4827 = vmatpush.msra.mxu0 %v2580
    %4828 = vmatpush.msra.mxu0 %v2556
    %4829 = vmatpush.msra.mxu0 %v2532
    %4830 = vmatpush.msra.mxu0 %v2508
    %4831 = vmatmul.f32.gmra.mxu0 %v2484
    %v4832 = vpop.f32.mrf.mxu0
    %v4833 = vadd.f32 0.0, %v4832
    %4834 = vmatmul.f32.gmra.mxu0 %v2487
    %v4835 = vpop.f32.mrf.mxu0
    %v4836 = vadd.f32 0.0, %v4835
    %4837 = vmatmul.f32.gmra.mxu0 %v2490
    %v4838 = vpop.f32.mrf.mxu0
    %v4839 = vadd.f32 0.0, %v4838
    %4840 = vdwg.mxu0
    %4841 = vmatpush.msra.mxu0 %v3252
    %4842 = vmatpush.msra.mxu0 %v3228
    %4843 = vmatpush.msra.mxu0 %v3204
    %4844 = vmatpush.msra.mxu0 %v3180
    %4845 = vmatpush.msra.mxu0 %v3156
    %4846 = vmatpush.msra.mxu0 %v3132
    %4847 = vmatpush.msra.mxu0 %v3108
    %4848 = vmatpush.msra.mxu0 %v3084
    %4849 = vmatpush.msra.mxu0 %v3060
    %4850 = vmatpush.msra.mxu0 %v3036
    %4851 = vmatpush.msra.mxu0 %v3012
    %4852 = vmatpush.msra.mxu0 %v2988
    %4853 = vmatpush.msra.mxu0 %v2964
    %4854 = vmatpush.msra.mxu0 %v2940
    %4855 = vmatpush.msra.mxu0 %v2916
    %4856 = vmatpush.msra.mxu0 %v2892
    %4857 = vmatmul.f32.gmra.mxu0 %v2485
    %v4858 = vpop.f32.mrf.mxu0
    %v4859 = vadd.f32 %v4833, %v4858
    %4860 = vmatmul.f32.gmra.mxu0 %v2488
    %v4861 = vpop.f32.mrf.mxu0
    %v4862 = vadd.f32 %v4836, %v4861
    %4863 = vmatmul.f32.gmra.mxu0 %v2491
    %v4864 = vpop.f32.mrf.mxu0
    %v4865 = vadd.f32 %v4839, %v4864
    %4866 = vdwg.mxu0
    %4867 = vmatpush.msra.mxu0 %v3636
    %4868 = vmatpush.msra.mxu0 %v3612
    %4869 = vmatpush.msra.mxu0 %v3588
    %4870 = vmatpush.msra.mxu0 %v3564
    %4871 = vmatpush.msra.mxu0 %v3540
    %4872 = vmatpush.msra.mxu0 %v3516
    %4873 = vmatpush.msra.mxu0 %v3492
    %4874 = vmatpush.msra.mxu0 %v3468
    %4875 = vmatpush.msra.mxu0 %v3444
    %4876 = vmatpush.msra.mxu0 %v3420
    %4877 = vmatpush.msra.mxu0 %v3396
    %4878 = vmatpush.msra.mxu0 %v3372
    %4879 = vmatpush.msra.mxu0 %v3348
    %4880 = vmatpush.msra.mxu0 %v3324
    %4881 = vmatpush.msra.mxu0 %v3300
    %4882 = vmatpush.msra.mxu0 %v3276
    %4883 = vmatmul.f32.gmra.mxu0 %v2486
    %v4884 = vpop.f32.mrf.mxu0
    %v4885 = vadd.f32 %v4859, %v4884
    %4886 = vmatmul.f32.gmra.mxu0 %v2489
    %v4887 = vpop.f32.mrf.mxu0
    %v4888 = vadd.f32 %v4862, %v4887
    %4889 = vmatmul.f32.gmra.mxu0 %v2492
    %v4890 = vpop.f32.mrf.mxu0
    %v4891 = vadd.f32 %v4865, %v4890
    %4892 = vdwg.mxu0
    %4893 = vmatpush.msra.mxu0 %v2869
    %4894 = vmatpush.msra.mxu0 %v2845
    %4895 = vmatpush.msra.mxu0 %v2821
    %4896 = vmatpush.msra.mxu0 %v2797
    %4897 = vmatpush.msra.mxu0 %v2773
    %4898 = vmatpush.msra.mxu0 %v2749
    %4899 = vmatpush.msra.mxu0 %v2725
    %4900 = vmatpush.msra.mxu0 %v2701
    %4901 = vmatpush.msra.mxu0 %v2677
    %4902 = vmatpush.msra.mxu0 %v2653
    %4903 = vmatpush.msra.mxu0 %v2629
    %4904 = vmatpush.msra.mxu0 %v2605
    %4905 = vmatpush.msra.mxu0 %v2581
    %4906 = vmatpush.msra.mxu0 %v2557
    %4907 = vmatpush.msra.mxu0 %v2533
    %4908 = vmatpush.msra.mxu0 %v2509
    %4909 = vmatmul.f32.gmra.mxu0 %v2484
    %v4910 = vpop.f32.mrf.mxu0
    %v4911 = vadd.f32 0.0, %v4910
    %4912 = vmatmul.f32.gmra.mxu0 %v2487
    %v4913 = vpop.f32.mrf.mxu0
    %v4914 = vadd.f32 0.0, %v4913
    %4915 = vmatmul.f32.gmra.mxu0 %v2490
    %v4916 = vpop.f32.mrf.mxu0
    %v4917 = vadd.f32 0.0, %v4916
    %4918 = vdwg.mxu0
    %4919 = vmatpush.msra.mxu0 %v3253
    %4920 = vmatpush.msra.mxu0 %v3229
    %4921 = vmatpush.msra.mxu0 %v3205
    %4922 = vmatpush.msra.mxu0 %v3181
    %4923 = vmatpush.msra.mxu0 %v3157
    %4924 = vmatpush.msra.mxu0 %v3133
    %4925 = vmatpush.msra.mxu0 %v3109
    %4926 = vmatpush.msra.mxu0 %v3085
    %4927 = vmatpush.msra.mxu0 %v3061
    %4928 = vmatpush.msra.mxu0 %v3037
    %4929 = vmatpush.msra.mxu0 %v3013
    %4930 = vmatpush.msra.mxu0 %v2989
    %4931 = vmatpush.msra.mxu0 %v2965
    %4932 = vmatpush.msra.mxu0 %v2941
    %4933 = vmatpush.msra.mxu0 %v2917
    %4934 = vmatpush.msra.mxu0 %v2893
    %4935 = vmatmul.f32.gmra.mxu0 %v2485
    %v4936 = vpop.f32.mrf.mxu0
    %v4937 = vadd.f32 %v4911, %v4936
    %4938 = vmatmul.f32.gmra.mxu0 %v2488
    %v4939 = vpop.f32.mrf.mxu0
    %v4940 = vadd.f32 %v4914, %v4939
    %4941 = vmatmul.f32.gmra.mxu0 %v2491
    %v4942 = vpop.f32.mrf.mxu0
    %v4943 = vadd.f32 %v4917, %v4942
    %4944 = vdwg.mxu0
    %4945 = vmatpush.msra.mxu0 %v3637
    %4946 = vmatpush.msra.mxu0 %v3613
    %4947 = vmatpush.msra.mxu0 %v3589
    %4948 = vmatpush.msra.mxu0 %v3565
    %4949 = vmatpush.msra.mxu0 %v3541
    %4950 = vmatpush.msra.mxu0 %v3517
    %4951 = vmatpush.msra.mxu0 %v3493
    %4952 = vmatpush.msra.mxu0 %v3469
    %4953 = vmatpush.msra.mxu0 %v3445
    %4954 = vmatpush.msra.mxu0 %v3421
    %4955 = vmatpush.msra.mxu0 %v3397
    %4956 = vmatpush.msra.mxu0 %v3373
    %4957 = vmatpush.msra.mxu0 %v3349
    %4958 = vmatpush.msra.mxu0 %v3325
    %4959 = vmatpush.msra.mxu0 %v3301
    %4960 = vmatpush.msra.mxu0 %v3277
    %4961 = vmatmul.f32.gmra.mxu0 %v2486
    %v4962 = vpop.f32.mrf.mxu0
    %v4963 = vadd.f32 %v4937, %v4962
    %4964 = vmatmul.f32.gmra.mxu0 %v2489
    %v4965 = vpop.f32.mrf.mxu0
    %v4966 = vadd.f32 %v4940, %v4965
    %4967 = vmatmul.f32.gmra.mxu0 %v2492
    %v4968 = vpop.f32.mrf.mxu0
    %v4969 = vadd.f32 %v4943, %v4968
    %4970 = vdwg.mxu0
    %4971 = vmatpush.msra.mxu0 %v2870
    %4972 = vmatpush.msra.mxu0 %v2846
    %4973 = vmatpush.msra.mxu0 %v2822
    %4974 = vmatpush.msra.mxu0 %v2798
    %4975 = vmatpush.msra.mxu0 %v2774
    %4976 = vmatpush.msra.mxu0 %v2750
    %4977 = vmatpush.msra.mxu0 %v2726
    %4978 = vmatpush.msra.mxu0 %v2702
    %4979 = vmatpush.msra.mxu0 %v2678
    %4980 = vmatpush.msra.mxu0 %v2654
    %4981 = vmatpush.msra.mxu0 %v2630
    %4982 = vmatpush.msra.mxu0 %v2606
    %4983 = vmatpush.msra.mxu0 %v2582
    %4984 = vmatpush.msra.mxu0 %v2558
    %4985 = vmatpush.msra.mxu0 %v2534
    %4986 = vmatpush.msra.mxu0 %v2510
    %4987 = vmatmul.f32.gmra.mxu0 %v2484
    %v4988 = vpop.f32.mrf.mxu0
    %v4989 = vadd.f32 0.0, %v4988
    %4990 = vmatmul.f32.gmra.mxu0 %v2487
    %v4991 = vpop.f32.mrf.mxu0
    %v4992 = vadd.f32 0.0, %v4991
    %4993 = vmatmul.f32.gmra.mxu0 %v2490
    %v4994 = vpop.f32.mrf.mxu0
    %v4995 = vadd.f32 0.0, %v4994
    %4996 = vdwg.mxu0
    %4997 = vmatpush.msra.mxu0 %v3254
    %4998 = vmatpush.msra.mxu0 %v3230
    %4999 = vmatpush.msra.mxu0 %v3206
    %5000 = vmatpush.msra.mxu0 %v3182
    %5001 = vmatpush.msra.mxu0 %v3158
    %5002 = vmatpush.msra.mxu0 %v3134
    %5003 = vmatpush.msra.mxu0 %v3110
    %5004 = vmatpush.msra.mxu0 %v3086
    %5005 = vmatpush.msra.mxu0 %v3062
    %5006 = vmatpush.msra.mxu0 %v3038
    %5007 = vmatpush.msra.mxu0 %v3014
    %5008 = vmatpush.msra.mxu0 %v2990
    %5009 = vmatpush.msra.mxu0 %v2966
    %5010 = vmatpush.msra.mxu0 %v2942
    %5011 = vmatpush.msra.mxu0 %v2918
    %5012 = vmatpush.msra.mxu0 %v2894
    %5013 = vmatmul.f32.gmra.mxu0 %v2485
    %v5014 = vpop.f32.mrf.mxu0
    %v5015 = vadd.f32 %v4989, %v5014
    %5016 = vmatmul.f32.gmra.mxu0 %v2488
    %v5017 = vpop.f32.mrf.mxu0
    %v5018 = vadd.f32 %v4992, %v5017
    %5019 = vmatmul.f32.gmra.mxu0 %v2491
    %v5020 = vpop.f32.mrf.mxu0
    %v5021 = vadd.f32 %v4995, %v5020
    %5022 = vdwg.mxu0
    %5023 = vmatpush.msra.mxu0 %v3638
    %5024 = vmatpush.msra.mxu0 %v3614
    %5025 = vmatpush.msra.mxu0 %v3590
    %5026 = vmatpush.msra.mxu0 %v3566
    %5027 = vmatpush.msra.mxu0 %v3542
    %5028 = vmatpush.msra.mxu0 %v3518
    %5029 = vmatpush.msra.mxu0 %v3494
    %5030 = vmatpush.msra.mxu0 %v3470
    %5031 = vmatpush.msra.mxu0 %v3446
    %5032 = vmatpush.msra.mxu0 %v3422
    %5033 = vmatpush.msra.mxu0 %v3398
    %5034 = vmatpush.msra.mxu0 %v3374
    %5035 = vmatpush.msra.mxu0 %v3350
    %5036 = vmatpush.msra.mxu0 %v3326
    %5037 = vmatpush.msra.mxu0 %v3302
    %5038 = vmatpush.msra.mxu0 %v3278
    %5039 = vmatmul.f32.gmra.mxu0 %v2486
    %v5040 = vpop.f32.mrf.mxu0
    %v5041 = vadd.f32 %v5015, %v5040
    %5042 = vmatmul.f32.gmra.mxu0 %v2489
    %v5043 = vpop.f32.mrf.mxu0
    %v5044 = vadd.f32 %v5018, %v5043
    %5045 = vmatmul.f32.gmra.mxu0 %v2492
    %v5046 = vpop.f32.mrf.mxu0
    %v5047 = vadd.f32 %v5021, %v5046
    %5048 = vdwg.mxu0
    %5049 = vmatpush.msra.mxu0 %v2871
    %5050 = vmatpush.msra.mxu0 %v2847
    %5051 = vmatpush.msra.mxu0 %v2823
    %5052 = vmatpush.msra.mxu0 %v2799
    %5053 = vmatpush.msra.mxu0 %v2775
    %5054 = vmatpush.msra.mxu0 %v2751
    %5055 = vmatpush.msra.mxu0 %v2727
    %5056 = vmatpush.msra.mxu0 %v2703
    %5057 = vmatpush.msra.mxu0 %v2679
    %5058 = vmatpush.msra.mxu0 %v2655
    %5059 = vmatpush.msra.mxu0 %v2631
    %5060 = vmatpush.msra.mxu0 %v2607
    %5061 = vmatpush.msra.mxu0 %v2583
    %5062 = vmatpush.msra.mxu0 %v2559
    %5063 = vmatpush.msra.mxu0 %v2535
    %5064 = vmatpush.msra.mxu0 %v2511
    %5065 = vmatmul.f32.gmra.mxu0 %v2484
    %v5066 = vpop.f32.mrf.mxu0
    %v5067 = vadd.f32 0.0, %v5066
    %5068 = vmatmul.f32.gmra.mxu0 %v2487
    %v5069 = vpop.f32.mrf.mxu0
    %v5070 = vadd.f32 0.0, %v5069
    %5071 = vmatmul.f32.gmra.mxu0 %v2490
    %v5072 = vpop.f32.mrf.mxu0
    %v5073 = vadd.f32 0.0, %v5072
    %5074 = vdwg.mxu0
    %5075 = vmatpush.msra.mxu0 %v3255
    %5076 = vmatpush.msra.mxu0 %v3231
    %5077 = vmatpush.msra.mxu0 %v3207
    %5078 = vmatpush.msra.mxu0 %v3183
    %5079 = vmatpush.msra.mxu0 %v3159
    %5080 = vmatpush.msra.mxu0 %v3135
    %5081 = vmatpush.msra.mxu0 %v3111
    %5082 = vmatpush.msra.mxu0 %v3087
    %5083 = vmatpush.msra.mxu0 %v3063
    %5084 = vmatpush.msra.mxu0 %v3039
    %5085 = vmatpush.msra.mxu0 %v3015
    %5086 = vmatpush.msra.mxu0 %v2991
    %5087 = vmatpush.msra.mxu0 %v2967
    %5088 = vmatpush.msra.mxu0 %v2943
    %5089 = vmatpush.msra.mxu0 %v2919
    %5090 = vmatpush.msra.mxu0 %v2895
    %5091 = vmatmul.f32.gmra.mxu0 %v2485
    %v5092 = vpop.f32.mrf.mxu0
    %v5093 = vadd.f32 %v5067, %v5092
    %5094 = vmatmul.f32.gmra.mxu0 %v2488
    %v5095 = vpop.f32.mrf.mxu0
    %v5096 = vadd.f32 %v5070, %v5095
    %5097 = vmatmul.f32.gmra.mxu0 %v2491
    %v5098 = vpop.f32.mrf.mxu0
    %v5099 = vadd.f32 %v5073, %v5098
    %5100 = vdwg.mxu0
    %5101 = vmatpush.msra.mxu0 %v3639
    %5102 = vmatpush.msra.mxu0 %v3615
    %5103 = vmatpush.msra.mxu0 %v3591
    %5104 = vmatpush.msra.mxu0 %v3567
    %5105 = vmatpush.msra.mxu0 %v3543
    %5106 = vmatpush.msra.mxu0 %v3519
    %5107 = vmatpush.msra.mxu0 %v3495
    %5108 = vmatpush.msra.mxu0 %v3471
    %5109 = vmatpush.msra.mxu0 %v3447
    %5110 = vmatpush.msra.mxu0 %v3423
    %5111 = vmatpush.msra.mxu0 %v3399
    %5112 = vmatpush.msra.mxu0 %v3375
    %5113 = vmatpush.msra.mxu0 %v3351
    %5114 = vmatpush.msra.mxu0 %v3327
    %5115 = vmatpush.msra.mxu0 %v3303
    %5116 = vmatpush.msra.mxu0 %v3279
    %5117 = vmatmul.f32.gmra.mxu0 %v2486
    %v5118 = vpop.f32.mrf.mxu0
    %v5119 = vadd.f32 %v5093, %v5118
    %5120 = vmatmul.f32.gmra.mxu0 %v2489
    %v5121 = vpop.f32.mrf.mxu0
    %v5122 = vadd.f32 %v5096, %v5121
    %5123 = vmatmul.f32.gmra.mxu0 %v2492
    %v5124 = vpop.f32.mrf.mxu0
    %v5125 = vadd.f32 %v5099, %v5124
    %5126 = vdwg.mxu0
    %5127 = vmatpush.msra.mxu0 %v2872
    %5128 = vmatpush.msra.mxu0 %v2848
    %5129 = vmatpush.msra.mxu0 %v2824
    %5130 = vmatpush.msra.mxu0 %v2800
    %5131 = vmatpush.msra.mxu0 %v2776
    %5132 = vmatpush.msra.mxu0 %v2752
    %5133 = vmatpush.msra.mxu0 %v2728
    %5134 = vmatpush.msra.mxu0 %v2704
    %5135 = vmatpush.msra.mxu0 %v2680
    %5136 = vmatpush.msra.mxu0 %v2656
    %5137 = vmatpush.msra.mxu0 %v2632
    %5138 = vmatpush.msra.mxu0 %v2608
    %5139 = vmatpush.msra.mxu0 %v2584
    %5140 = vmatpush.msra.mxu0 %v2560
    %5141 = vmatpush.msra.mxu0 %v2536
    %5142 = vmatpush.msra.mxu0 %v2512
    %5143 = vmatmul.f32.gmra.mxu0 %v2484
    %v5144 = vpop.f32.mrf.mxu0
    %v5145 = vadd.f32 0.0, %v5144
    %5146 = vmatmul.f32.gmra.mxu0 %v2487
    %v5147 = vpop.f32.mrf.mxu0
    %v5148 = vadd.f32 0.0, %v5147
    %5149 = vmatmul.f32.gmra.mxu0 %v2490
    %v5150 = vpop.f32.mrf.mxu0
    %v5151 = vadd.f32 0.0, %v5150
    %5152 = vdwg.mxu0
    %5153 = vmatpush.msra.mxu0 %v3256
    %5154 = vmatpush.msra.mxu0 %v3232
    %5155 = vmatpush.msra.mxu0 %v3208
    %5156 = vmatpush.msra.mxu0 %v3184
    %5157 = vmatpush.msra.mxu0 %v3160
    %5158 = vmatpush.msra.mxu0 %v3136
    %5159 = vmatpush.msra.mxu0 %v3112
    %5160 = vmatpush.msra.mxu0 %v3088
    %5161 = vmatpush.msra.mxu0 %v3064
    %5162 = vmatpush.msra.mxu0 %v3040
    %5163 = vmatpush.msra.mxu0 %v3016
    %5164 = vmatpush.msra.mxu0 %v2992
    %5165 = vmatpush.msra.mxu0 %v2968
    %5166 = vmatpush.msra.mxu0 %v2944
    %5167 = vmatpush.msra.mxu0 %v2920
    %5168 = vmatpush.msra.mxu0 %v2896
    %5169 = vmatmul.f32.gmra.mxu0 %v2485
    %v5170 = vpop.f32.mrf.mxu0
    %v5171 = vadd.f32 %v5145, %v5170
    %5172 = vmatmul.f32.gmra.mxu0 %v2488
    %v5173 = vpop.f32.mrf.mxu0
    %v5174 = vadd.f32 %v5148, %v5173
    %5175 = vmatmul.f32.gmra.mxu0 %v2491
    %v5176 = vpop.f32.mrf.mxu0
    %v5177 = vadd.f32 %v5151, %v5176
    %5178 = vdwg.mxu0
    %5179 = vmatpush.msra.mxu0 %v3640
    %5180 = vmatpush.msra.mxu0 %v3616
    %5181 = vmatpush.msra.mxu0 %v3592
    %5182 = vmatpush.msra.mxu0 %v3568
    %5183 = vmatpush.msra.mxu0 %v3544
    %5184 = vmatpush.msra.mxu0 %v3520
    %5185 = vmatpush.msra.mxu0 %v3496
    %5186 = vmatpush.msra.mxu0 %v3472
    %5187 = vmatpush.msra.mxu0 %v3448
    %5188 = vmatpush.msra.mxu0 %v3424
    %5189 = vmatpush.msra.mxu0 %v3400
    %5190 = vmatpush.msra.mxu0 %v3376
    %5191 = vmatpush.msra.mxu0 %v3352
    %5192 = vmatpush.msra.mxu0 %v3328
    %5193 = vmatpush.msra.mxu0 %v3304
    %5194 = vmatpush.msra.mxu0 %v3280
    %5195 = vmatmul.f32.gmra.mxu0 %v2486
    %v5196 = vpop.f32.mrf.mxu0
    %v5197 = vadd.f32 %v5171, %v5196
    %5198 = vmatmul.f32.gmra.mxu0 %v2489
    %v5199 = vpop.f32.mrf.mxu0
    %v5200 = vadd.f32 %v5174, %v5199
    %5201 = vmatmul.f32.gmra.mxu0 %v2492
    %v5202 = vpop.f32.mrf.mxu0
    %v5203 = vadd.f32 %v5177, %v5202
    %5204 = vdwg.mxu0
    %5205 = vmatpush.msra.mxu0 %v2873
    %5206 = vmatpush.msra.mxu0 %v2849
    %5207 = vmatpush.msra.mxu0 %v2825
    %5208 = vmatpush.msra.mxu0 %v2801
    %5209 = vmatpush.msra.mxu0 %v2777
    %5210 = vmatpush.msra.mxu0 %v2753
    %5211 = vmatpush.msra.mxu0 %v2729
    %5212 = vmatpush.msra.mxu0 %v2705
    %5213 = vmatpush.msra.mxu0 %v2681
    %5214 = vmatpush.msra.mxu0 %v2657
    %5215 = vmatpush.msra.mxu0 %v2633
    %5216 = vmatpush.msra.mxu0 %v2609
    %5217 = vmatpush.msra.mxu0 %v2585
    %5218 = vmatpush.msra.mxu0 %v2561
    %5219 = vmatpush.msra.mxu0 %v2537
    %5220 = vmatpush.msra.mxu0 %v2513
    %5221 = vmatmul.f32.gmra.mxu0 %v2484
    %v5222 = vpop.f32.mrf.mxu0
    %v5223 = vadd.f32 0.0, %v5222
    %5224 = vmatmul.f32.gmra.mxu0 %v2487
    %v5225 = vpop.f32.mrf.mxu0
    %v5226 = vadd.f32 0.0, %v5225
    %5227 = vmatmul.f32.gmra.mxu0 %v2490
    %v5228 = vpop.f32.mrf.mxu0
    %v5229 = vadd.f32 0.0, %v5228
    %5230 = vdwg.mxu0
    %5231 = vmatpush.msra.mxu0 %v3257
    %5232 = vmatpush.msra.mxu0 %v3233
    %5233 = vmatpush.msra.mxu0 %v3209
    %5234 = vmatpush.msra.mxu0 %v3185
    %5235 = vmatpush.msra.mxu0 %v3161
    %5236 = vmatpush.msra.mxu0 %v3137
    %5237 = vmatpush.msra.mxu0 %v3113
    %5238 = vmatpush.msra.mxu0 %v3089
    %5239 = vmatpush.msra.mxu0 %v3065
    %5240 = vmatpush.msra.mxu0 %v3041
    %5241 = vmatpush.msra.mxu0 %v3017
    %5242 = vmatpush.msra.mxu0 %v2993
    %5243 = vmatpush.msra.mxu0 %v2969
    %5244 = vmatpush.msra.mxu0 %v2945
    %5245 = vmatpush.msra.mxu0 %v2921
    %5246 = vmatpush.msra.mxu0 %v2897
    %5247 = vmatmul.f32.gmra.mxu0 %v2485
    %v5248 = vpop.f32.mrf.mxu0
    %v5249 = vadd.f32 %v5223, %v5248
    %5250 = vmatmul.f32.gmra.mxu0 %v2488
    %v5251 = vpop.f32.mrf.mxu0
    %v5252 = vadd.f32 %v5226, %v5251
    %5253 = vmatmul.f32.gmra.mxu0 %v2491
    %v5254 = vpop.f32.mrf.mxu0
    %v5255 = vadd.f32 %v5229, %v5254
    %5256 = vdwg.mxu0
    %5257 = vmatpush.msra.mxu0 %v3641
    %5258 = vmatpush.msra.mxu0 %v3617
    %5259 = vmatpush.msra.mxu0 %v3593
    %5260 = vmatpush.msra.mxu0 %v3569
    %5261 = vmatpush.msra.mxu0 %v3545
    %5262 = vmatpush.msra.mxu0 %v3521
    %5263 = vmatpush.msra.mxu0 %v3497
    %5264 = vmatpush.msra.mxu0 %v3473
    %5265 = vmatpush.msra.mxu0 %v3449
    %5266 = vmatpush.msra.mxu0 %v3425
    %5267 = vmatpush.msra.mxu0 %v3401
    %5268 = vmatpush.msra.mxu0 %v3377
    %5269 = vmatpush.msra.mxu0 %v3353
    %5270 = vmatpush.msra.mxu0 %v3329
    %5271 = vmatpush.msra.mxu0 %v3305
    %5272 = vmatpush.msra.mxu0 %v3281
    %5273 = vmatmul.f32.gmra.mxu0 %v2486
    %v5274 = vpop.f32.mrf.mxu0
    %v5275 = vadd.f32 %v5249, %v5274
    %5276 = vmatmul.f32.gmra.mxu0 %v2489
    %v5277 = vpop.f32.mrf.mxu0
    %v5278 = vadd.f32 %v5252, %v5277
    %5279 = vmatmul.f32.gmra.mxu0 %v2492
    %v5280 = vpop.f32.mrf.mxu0
    %v5281 = vadd.f32 %v5255, %v5280
    %5282 = vdwg.mxu0
    %5283 = vmatpush.msra.mxu0 %v2874
    %5284 = vmatpush.msra.mxu0 %v2850
    %5285 = vmatpush.msra.mxu0 %v2826
    %5286 = vmatpush.msra.mxu0 %v2802
    %5287 = vmatpush.msra.mxu0 %v2778
    %5288 = vmatpush.msra.mxu0 %v2754
    %5289 = vmatpush.msra.mxu0 %v2730
    %5290 = vmatpush.msra.mxu0 %v2706
    %5291 = vmatpush.msra.mxu0 %v2682
    %5292 = vmatpush.msra.mxu0 %v2658
    %5293 = vmatpush.msra.mxu0 %v2634
    %5294 = vmatpush.msra.mxu0 %v2610
    %5295 = vmatpush.msra.mxu0 %v2586
    %5296 = vmatpush.msra.mxu0 %v2562
    %5297 = vmatpush.msra.mxu0 %v2538
    %5298 = vmatpush.msra.mxu0 %v2514
    %5299 = vmatmul.f32.gmra.mxu0 %v2484
    %v5300 = vpop.f32.mrf.mxu0
    %v5301 = vadd.f32 0.0, %v5300
    %5302 = vmatmul.f32.gmra.mxu0 %v2487
    %v5303 = vpop.f32.mrf.mxu0
    %v5304 = vadd.f32 0.0, %v5303
    %5305 = vmatmul.f32.gmra.mxu0 %v2490
    %v5306 = vpop.f32.mrf.mxu0
    %v5307 = vadd.f32 0.0, %v5306
    %5308 = vdwg.mxu0
    %5309 = vmatpush.msra.mxu0 %v3258
    %5310 = vmatpush.msra.mxu0 %v3234
    %5311 = vmatpush.msra.mxu0 %v3210
    %5312 = vmatpush.msra.mxu0 %v3186
    %5313 = vmatpush.msra.mxu0 %v3162
    %5314 = vmatpush.msra.mxu0 %v3138
    %5315 = vmatpush.msra.mxu0 %v3114
    %5316 = vmatpush.msra.mxu0 %v3090
    %5317 = vmatpush.msra.mxu0 %v3066
    %5318 = vmatpush.msra.mxu0 %v3042
    %5319 = vmatpush.msra.mxu0 %v3018
    %5320 = vmatpush.msra.mxu0 %v2994
    %5321 = vmatpush.msra.mxu0 %v2970
    %5322 = vmatpush.msra.mxu0 %v2946
    %5323 = vmatpush.msra.mxu0 %v2922
    %5324 = vmatpush.msra.mxu0 %v2898
    %5325 = vmatmul.f32.gmra.mxu0 %v2485
    %v5326 = vpop.f32.mrf.mxu0
    %v5327 = vadd.f32 %v5301, %v5326
    %5328 = vmatmul.f32.gmra.mxu0 %v2488
    %v5329 = vpop.f32.mrf.mxu0
    %v5330 = vadd.f32 %v5304, %v5329
    %5331 = vmatmul.f32.gmra.mxu0 %v2491
    %v5332 = vpop.f32.mrf.mxu0
    %v5333 = vadd.f32 %v5307, %v5332
    %5334 = vdwg.mxu0
    %5335 = vmatpush.msra.mxu0 %v3642
    %5336 = vmatpush.msra.mxu0 %v3618
    %5337 = vmatpush.msra.mxu0 %v3594
    %5338 = vmatpush.msra.mxu0 %v3570
    %5339 = vmatpush.msra.mxu0 %v3546
    %5340 = vmatpush.msra.mxu0 %v3522
    %5341 = vmatpush.msra.mxu0 %v3498
    %5342 = vmatpush.msra.mxu0 %v3474
    %5343 = vmatpush.msra.mxu0 %v3450
    %5344 = vmatpush.msra.mxu0 %v3426
    %5345 = vmatpush.msra.mxu0 %v3402
    %5346 = vmatpush.msra.mxu0 %v3378
    %5347 = vmatpush.msra.mxu0 %v3354
    %5348 = vmatpush.msra.mxu0 %v3330
    %5349 = vmatpush.msra.mxu0 %v3306
    %5350 = vmatpush.msra.mxu0 %v3282
    %5351 = vmatmul.f32.gmra.mxu0 %v2486
    %v5352 = vpop.f32.mrf.mxu0
    %v5353 = vadd.f32 %v5327, %v5352
    %5354 = vmatmul.f32.gmra.mxu0 %v2489
    %v5355 = vpop.f32.mrf.mxu0
    %v5356 = vadd.f32 %v5330, %v5355
    %5357 = vmatmul.f32.gmra.mxu0 %v2492
    %v5358 = vpop.f32.mrf.mxu0
    %v5359 = vadd.f32 %v5333, %v5358
    %5360 = vdwg.mxu0
    %5361 = vmatpush.msra.mxu0 %v2875
    %5362 = vmatpush.msra.mxu0 %v2851
    %5363 = vmatpush.msra.mxu0 %v2827
    %5364 = vmatpush.msra.mxu0 %v2803
    %5365 = vmatpush.msra.mxu0 %v2779
    %5366 = vmatpush.msra.mxu0 %v2755
    %5367 = vmatpush.msra.mxu0 %v2731
    %5368 = vmatpush.msra.mxu0 %v2707
    %5369 = vmatpush.msra.mxu0 %v2683
    %5370 = vmatpush.msra.mxu0 %v2659
    %5371 = vmatpush.msra.mxu0 %v2635
    %5372 = vmatpush.msra.mxu0 %v2611
    %5373 = vmatpush.msra.mxu0 %v2587
    %5374 = vmatpush.msra.mxu0 %v2563
    %5375 = vmatpush.msra.mxu0 %v2539
    %5376 = vmatpush.msra.mxu0 %v2515
    %5377 = vmatmul.f32.gmra.mxu0 %v2484
    %v5378 = vpop.f32.mrf.mxu0
    %v5379 = vadd.f32 0.0, %v5378
    %5380 = vmatmul.f32.gmra.mxu0 %v2487
    %v5381 = vpop.f32.mrf.mxu0
    %v5382 = vadd.f32 0.0, %v5381
    %5383 = vmatmul.f32.gmra.mxu0 %v2490
    %v5384 = vpop.f32.mrf.mxu0
    %v5385 = vadd.f32 0.0, %v5384
    %5386 = vdwg.mxu0
    %5387 = vmatpush.msra.mxu0 %v3259
    %5388 = vmatpush.msra.mxu0 %v3235
    %5389 = vmatpush.msra.mxu0 %v3211
    %5390 = vmatpush.msra.mxu0 %v3187
    %5391 = vmatpush.msra.mxu0 %v3163
    %5392 = vmatpush.msra.mxu0 %v3139
    %5393 = vmatpush.msra.mxu0 %v3115
    %5394 = vmatpush.msra.mxu0 %v3091
    %5395 = vmatpush.msra.mxu0 %v3067
    %5396 = vmatpush.msra.mxu0 %v3043
    %5397 = vmatpush.msra.mxu0 %v3019
    %5398 = vmatpush.msra.mxu0 %v2995
    %5399 = vmatpush.msra.mxu0 %v2971
    %5400 = vmatpush.msra.mxu0 %v2947
    %5401 = vmatpush.msra.mxu0 %v2923
    %5402 = vmatpush.msra.mxu0 %v2899
    %5403 = vmatmul.f32.gmra.mxu0 %v2485
    %v5404 = vpop.f32.mrf.mxu0
    %v5405 = vadd.f32 %v5379, %v5404
    %5406 = vmatmul.f32.gmra.mxu0 %v2488
    %v5407 = vpop.f32.mrf.mxu0
    %v5408 = vadd.f32 %v5382, %v5407
    %5409 = vmatmul.f32.gmra.mxu0 %v2491
    %v5410 = vpop.f32.mrf.mxu0
    %v5411 = vadd.f32 %v5385, %v5410
    %5412 = vdwg.mxu0
    %5413 = vmatpush.msra.mxu0 %v3643
    %5414 = vmatpush.msra.mxu0 %v3619
    %5415 = vmatpush.msra.mxu0 %v3595
    %5416 = vmatpush.msra.mxu0 %v3571
    %5417 = vmatpush.msra.mxu0 %v3547
    %5418 = vmatpush.msra.mxu0 %v3523
    %5419 = vmatpush.msra.mxu0 %v3499
    %5420 = vmatpush.msra.mxu0 %v3475
    %5421 = vmatpush.msra.mxu0 %v3451
    %5422 = vmatpush.msra.mxu0 %v3427
    %5423 = vmatpush.msra.mxu0 %v3403
    %5424 = vmatpush.msra.mxu0 %v3379
    %5425 = vmatpush.msra.mxu0 %v3355
    %5426 = vmatpush.msra.mxu0 %v3331
    %5427 = vmatpush.msra.mxu0 %v3307
    %5428 = vmatpush.msra.mxu0 %v3283
    %5429 = vmatmul.f32.gmra.mxu0 %v2486
    %v5430 = vpop.f32.mrf.mxu0
    %v5431 = vadd.f32 %v5405, %v5430
    %5432 = vmatmul.f32.gmra.mxu0 %v2489
    %v5433 = vpop.f32.mrf.mxu0
    %v5434 = vadd.f32 %v5408, %v5433
    %5435 = vmatmul.f32.gmra.mxu0 %v2492
    %v5436 = vpop.f32.mrf.mxu0
    %v5437 = vadd.f32 %v5411, %v5436
    %5438 = vdwg.mxu0
    %5439 = vmatpush.msra.mxu0 %v2876
    %5440 = vmatpush.msra.mxu0 %v2852
    %5441 = vmatpush.msra.mxu0 %v2828
    %5442 = vmatpush.msra.mxu0 %v2804
    %5443 = vmatpush.msra.mxu0 %v2780
    %5444 = vmatpush.msra.mxu0 %v2756
    %5445 = vmatpush.msra.mxu0 %v2732
    %5446 = vmatpush.msra.mxu0 %v2708
    %5447 = vmatpush.msra.mxu0 %v2684
    %5448 = vmatpush.msra.mxu0 %v2660
    %5449 = vmatpush.msra.mxu0 %v2636
    %5450 = vmatpush.msra.mxu0 %v2612
    %5451 = vmatpush.msra.mxu0 %v2588
    %5452 = vmatpush.msra.mxu0 %v2564
    %5453 = vmatpush.msra.mxu0 %v2540
    %5454 = vmatpush.msra.mxu0 %v2516
    %5455 = vmatmul.f32.gmra.mxu0 %v2484
    %v5456 = vpop.f32.mrf.mxu0
    %v5457 = vadd.f32 0.0, %v5456
    %5458 = vmatmul.f32.gmra.mxu0 %v2487
    %v5459 = vpop.f32.mrf.mxu0
    %v5460 = vadd.f32 0.0, %v5459
    %5461 = vmatmul.f32.gmra.mxu0 %v2490
    %v5462 = vpop.f32.mrf.mxu0
    %v5463 = vadd.f32 0.0, %v5462
    %5464 = vdwg.mxu0
    %5465 = vmatpush.msra.mxu0 %v3260
    %5466 = vmatpush.msra.mxu0 %v3236
    %5467 = vmatpush.msra.mxu0 %v3212
    %5468 = vmatpush.msra.mxu0 %v3188
    %5469 = vmatpush.msra.mxu0 %v3164
    %5470 = vmatpush.msra.mxu0 %v3140
    %5471 = vmatpush.msra.mxu0 %v3116
    %5472 = vmatpush.msra.mxu0 %v3092
    %5473 = vmatpush.msra.mxu0 %v3068
    %5474 = vmatpush.msra.mxu0 %v3044
    %5475 = vmatpush.msra.mxu0 %v3020
    %5476 = vmatpush.msra.mxu0 %v2996
    %5477 = vmatpush.msra.mxu0 %v2972
    %5478 = vmatpush.msra.mxu0 %v2948
    %5479 = vmatpush.msra.mxu0 %v2924
    %5480 = vmatpush.msra.mxu0 %v2900
    %5481 = vmatmul.f32.gmra.mxu0 %v2485
    %v5482 = vpop.f32.mrf.mxu0
    %v5483 = vadd.f32 %v5457, %v5482
    %5484 = vmatmul.f32.gmra.mxu0 %v2488
    %v5485 = vpop.f32.mrf.mxu0
    %v5486 = vadd.f32 %v5460, %v5485
    %5487 = vmatmul.f32.gmra.mxu0 %v2491
    %v5488 = vpop.f32.mrf.mxu0
    %v5489 = vadd.f32 %v5463, %v5488
    %5490 = vdwg.mxu0
    %5491 = vmatpush.msra.mxu0 %v3644
    %5492 = vmatpush.msra.mxu0 %v3620
    %5493 = vmatpush.msra.mxu0 %v3596
    %5494 = vmatpush.msra.mxu0 %v3572
    %5495 = vmatpush.msra.mxu0 %v3548
    %5496 = vmatpush.msra.mxu0 %v3524
    %5497 = vmatpush.msra.mxu0 %v3500
    %5498 = vmatpush.msra.mxu0 %v3476
    %5499 = vmatpush.msra.mxu0 %v3452
    %5500 = vmatpush.msra.mxu0 %v3428
    %5501 = vmatpush.msra.mxu0 %v3404
    %5502 = vmatpush.msra.mxu0 %v3380
    %5503 = vmatpush.msra.mxu0 %v3356
    %5504 = vmatpush.msra.mxu0 %v3332
    %5505 = vmatpush.msra.mxu0 %v3308
    %5506 = vmatpush.msra.mxu0 %v3284
    %5507 = vmatmul.f32.gmra.mxu0 %v2486
    %v5508 = vpop.f32.mrf.mxu0
    %v5509 = vadd.f32 %v5483, %v5508
    %5510 = vmatmul.f32.gmra.mxu0 %v2489
    %v5511 = vpop.f32.mrf.mxu0
    %v5512 = vadd.f32 %v5486, %v5511
    %5513 = vmatmul.f32.gmra.mxu0 %v2492
    %v5514 = vpop.f32.mrf.mxu0
    %v5515 = vadd.f32 %v5489, %v5514
    %5516 = vdwg.mxu0
    %5517 = vst [vmem:[#allocation4] sm:$0xff] %v3715
    %5518 = vst [vmem:[#allocation4 + $0x8] sm:$0xff] %v3793
    %5519 = vst [vmem:[#allocation4 + $0x10] sm:$0xff] %v3871
    %5520 = vst [vmem:[#allocation4 + $0x18] sm:$0xff] %v3949
    %5521 = vst [vmem:[#allocation4 + $0x20] sm:$0xff] %v4027
    %5522 = vst [vmem:[#allocation4 + $0x28] sm:$0xff] %v4105
    %5523 = vst [vmem:[#allocation4 + $0x30] sm:$0xff] %v3718
    %5524 = vst [vmem:[#allocation4 + $0x38] sm:$0xff] %v3796
    %5525 = vst [vmem:[#allocation4 + $0x40] sm:$0xff] %v3874
    %5526 = vst [vmem:[#allocation4 + $0x48] sm:$0xff] %v3952
    %5527 = vst [vmem:[#allocation4 + $0x50] sm:$0xff] %v4030
    %5528 = vst [vmem:[#allocation4 + $0x58] sm:$0xff] %v4108
    %5529 = vst [vmem:[#allocation4 + $0x60] sm:$0x3f] %v3721
    %5530 = vst [vmem:[#allocation4 + $0x68] sm:$0x3f] %v3799
    %5531 = vst [vmem:[#allocation4 + $0x70] sm:$0x3f] %v3877
    %5532 = vst [vmem:[#allocation4 + $0x78] sm:$0x3f] %v3955
    %5533 = vst [vmem:[#allocation4 + $0x80] sm:$0x3f] %v4033
    %5534 = vst [vmem:[#allocation4 + $0x88] sm:$0x3f] %v4111
    %vm5553 = vcmask 1045504
    %v5554 = vrot.slane %v4183, 2
    %v5555 = vrot.slane %v4261, 2
    %v5556 = vrot.slane %v4339, 2
    %v5557 = vrot.slane %v4417, 2
    %v5558 = vrot.slane %v4495, 2
    %v5559 = vrot.slane %v4573, 2
    %v5560 = vrot.slane %v4186, 2
    %v5561 = vsel %vm5553, %v5554, %v5560
    %v5562 = vrot.slane %v4264, 2
    %v5563 = vsel %vm5553, %v5555, %v5562
    %v5564 = vrot.slane %v4342, 2
    %v5565 = vsel %vm5553, %v5556, %v5564
    %v5566 = vrot.slane %v4420, 2
    %v5567 = vsel %vm5553, %v5557, %v5566
    %v5568 = vrot.slane %v4498, 2
    %v5569 = vsel %vm5553, %v5558, %v5568
    %v5570 = vrot.slane %v4576, 2
    %v5571 = vsel %vm5553, %v5559, %v5570
    %v5572 = vrot.slane %v4189, 2
    %v5573 = vsel %vm5553, %v5560, %v5572
    %v5574 = vrot.slane %v4267, 2
    %v5575 = vsel %vm5553, %v5562, %v5574
    %v5576 = vrot.slane %v4345, 2
    %v5577 = vsel %vm5553, %v5564, %v5576
    %v5578 = vrot.slane %v4423, 2
    %v5579 = vsel %vm5553, %v5566, %v5578
    %v5580 = vrot.slane %v4501, 2
    %v5581 = vsel %vm5553, %v5568, %v5580
    %v5582 = vrot.slane %v4579, 2
    %v5583 = vsel %vm5553, %v5570, %v5582
    %5608 = vst [vmem:[#allocation4 + $0x60] sm:$0xc0] %v5554
    %5609 = vst [vmem:[#allocation4 + $0x68] sm:$0xc0] %v5555
    %5610 = vst [vmem:[#allocation4 + $0x70] sm:$0xc0] %v5556
    %5611 = vst [vmem:[#allocation4 + $0x78] sm:$0xc0] %v5557
    %5612 = vst [vmem:[#allocation4 + $0x80] sm:$0xc0] %v5558
    %5613 = vst [vmem:[#allocation4 + $0x88] sm:$0xc0] %v5559
    %5614 = vst [vmem:[#allocation4 + $0x90] sm:$0xff] %v5561
    %5615 = vst [vmem:[#allocation4 + $0x98] sm:$0xff] %v5563
    %5616 = vst [vmem:[#allocation4 + $0xa0] sm:$0xff] %v5565
    %5617 = vst [vmem:[#allocation4 + $0xa8] sm:$0xff] %v5567
    %5618 = vst [vmem:[#allocation4 + $0xb0] sm:$0xff] %v5569
    %5619 = vst [vmem:[#allocation4 + $0xb8] sm:$0xff] %v5571
    %5620 = vst [vmem:[#allocation4 + $0xc0] sm:$0xff] %v5573
    %5621 = vst [vmem:[#allocation4 + $0xc8] sm:$0xff] %v5575
    %5622 = vst [vmem:[#allocation4 + $0xd0] sm:$0xff] %v5577
    %5623 = vst [vmem:[#allocation4 + $0xd8] sm:$0xff] %v5579
    %5624 = vst [vmem:[#allocation4 + $0xe0] sm:$0xff] %v5581
    %5625 = vst [vmem:[#allocation4 + $0xe8] sm:$0xff] %v5583
    %5626 = vst [vmem:[#allocation4 + $0xf0] sm:$0xf] %v5572
    %5627 = vst [vmem:[#allocation4 + $0xf8] sm:$0xf] %v5574
    %5628 = vst [vmem:[#allocation4 + $0x100] sm:$0xf] %v5576
    %5629 = vst [vmem:[#allocation4 + $0x108] sm:$0xf] %v5578
    %5630 = vst [vmem:[#allocation4 + $0x110] sm:$0xf] %v5580
    %5631 = vst [vmem:[#allocation4 + $0x118] sm:$0xf] %v5582
    %v5650 = vrot.slane %v4651, 4
    %v5651 = vrot.slane %v4729, 4
    %v5652 = vrot.slane %v4807, 4
    %v5653 = vrot.slane %v4885, 4
    %v5654 = vrot.slane %v4963, 4
    %v5655 = vrot.slane %v5041, 4
    %v5656 = vrot.slane %v4654, 4
    %v5657 = vsel %vm429, %v5650, %v5656
    %v5658 = vrot.slane %v4732, 4
    %v5659 = vsel %vm429, %v5651, %v5658
    %v5660 = vrot.slane %v4810, 4
    %v5661 = vsel %vm429, %v5652, %v5660
    %v5662 = vrot.slane %v4888, 4
    %v5663 = vsel %vm429, %v5653, %v5662
    %v5664 = vrot.slane %v4966, 4
    %v5665 = vsel %vm429, %v5654, %v5664
    %v5666 = vrot.slane %v5044, 4
    %v5667 = vsel %vm429, %v5655, %v5666
    %v5668 = vrot.slane %v4657, 4
    %v5669 = vsel %vm429, %v5656, %v5668
    %v5670 = vrot.slane %v4735, 4
    %v5671 = vsel %vm429, %v5658, %v5670
    %v5672 = vrot.slane %v4813, 4
    %v5673 = vsel %vm429, %v5660, %v5672
    %v5674 = vrot.slane %v4891, 4
    %v5675 = vsel %vm429, %v5662, %v5674
    %v5676 = vrot.slane %v4969, 4
    %v5677 = vsel %vm429, %v5664, %v5676
    %v5678 = vrot.slane %v5047, 4
    %v5679 = vsel %vm429, %v5666, %v5678
    %5704 = vst [vmem:[#allocation4 + $0xf0] sm:$0xf0] %v5650
    %5705 = vst [vmem:[#allocation4 + $0xf8] sm:$0xf0] %v5651
    %5706 = vst [vmem:[#allocation4 + $0x100] sm:$0xf0] %v5652
    %5707 = vst [vmem:[#allocation4 + $0x108] sm:$0xf0] %v5653
    %5708 = vst [vmem:[#allocation4 + $0x110] sm:$0xf0] %v5654
    %5709 = vst [vmem:[#allocation4 + $0x118] sm:$0xf0] %v5655
    %5710 = vst [vmem:[#allocation4 + $0x120] sm:$0xff] %v5657
    %5711 = vst [vmem:[#allocation4 + $0x128] sm:$0xff] %v5659
    %5712 = vst [vmem:[#allocation4 + $0x130] sm:$0xff] %v5661
    %5713 = vst [vmem:[#allocation4 + $0x138] sm:$0xff] %v5663
    %5714 = vst [vmem:[#allocation4 + $0x140] sm:$0xff] %v5665
    %5715 = vst [vmem:[#allocation4 + $0x148] sm:$0xff] %v5667
    %5716 = vst [vmem:[#allocation4 + $0x150] sm:$0xff] %v5669
    %5717 = vst [vmem:[#allocation4 + $0x158] sm:$0xff] %v5671
    %5718 = vst [vmem:[#allocation4 + $0x160] sm:$0xff] %v5673
    %5719 = vst [vmem:[#allocation4 + $0x168] sm:$0xff] %v5675
    %5720 = vst [vmem:[#allocation4 + $0x170] sm:$0xff] %v5677
    %5721 = vst [vmem:[#allocation4 + $0x178] sm:$0xff] %v5679
    %5722 = vst [vmem:[#allocation4 + $0x180] sm:$0x3] %v5668
    %5723 = vst [vmem:[#allocation4 + $0x188] sm:$0x3] %v5670
    %5724 = vst [vmem:[#allocation4 + $0x190] sm:$0x3] %v5672
    %5725 = vst [vmem:[#allocation4 + $0x198] sm:$0x3] %v5674
    %5726 = vst [vmem:[#allocation4 + $0x1a0] sm:$0x3] %v5676
    %5727 = vst [vmem:[#allocation4 + $0x1a8] sm:$0x3] %v5678
    %v5746 = vrot.slane %v5119, 6
    %v5747 = vrot.slane %v5197, 6
    %v5748 = vrot.slane %v5275, 6
    %v5749 = vrot.slane %v5353, 6
    %v5750 = vrot.slane %v5431, 6
    %v5751 = vrot.slane %v5509, 6
    %v5752 = vrot.slane %v5122, 6
    %v5753 = vsel %vm497, %v5746, %v5752
    %v5754 = vrot.slane %v5200, 6
    %v5755 = vsel %vm497, %v5747, %v5754
    %v5756 = vrot.slane %v5278, 6
    %v5757 = vsel %vm497, %v5748, %v5756
    %v5758 = vrot.slane %v5356, 6
    %v5759 = vsel %vm497, %v5749, %v5758
    %v5760 = vrot.slane %v5434, 6
    %v5761 = vsel %vm497, %v5750, %v5760
    %v5762 = vrot.slane %v5512, 6
    %v5763 = vsel %vm497, %v5751, %v5762
    %v5764 = vrot.slane %v5125, 6
    %v5765 = vsel %vm497, %v5752, %v5764
    %v5766 = vrot.slane %v5203, 6
    %v5767 = vsel %vm497, %v5754, %v5766
    %v5768 = vrot.slane %v5281, 6
    %v5769 = vsel %vm497, %v5756, %v5768
    %v5770 = vrot.slane %v5359, 6
    %v5771 = vsel %vm497, %v5758, %v5770
    %v5772 = vrot.slane %v5437, 6
    %v5773 = vsel %vm497, %v5760, %v5772
    %v5774 = vrot.slane %v5515, 6
    %v5775 = vsel %vm497, %v5762, %v5774
    %5794 = vst [vmem:[#allocation4 + $0x180] sm:$0xfc] %v5746
    %5795 = vst [vmem:[#allocation4 + $0x188] sm:$0xfc] %v5747
    %5796 = vst [vmem:[#allocation4 + $0x190] sm:$0xfc] %v5748
    %5797 = vst [vmem:[#allocation4 + $0x198] sm:$0xfc] %v5749
    %5798 = vst [vmem:[#allocation4 + $0x1a0] sm:$0xfc] %v5750
    %5799 = vst [vmem:[#allocation4 + $0x1a8] sm:$0xfc] %v5751
    %5800 = vst [vmem:[#allocation4 + $0x1b0] sm:$0xff] %v5753
    %5801 = vst [vmem:[#allocation4 + $0x1b8] sm:$0xff] %v5755
    %5802 = vst [vmem:[#allocation4 + $0x1c0] sm:$0xff] %v5757
    %5803 = vst [vmem:[#allocation4 + $0x1c8] sm:$0xff] %v5759
    %5804 = vst [vmem:[#allocation4 + $0x1d0] sm:$0xff] %v5761
    %5805 = vst [vmem:[#allocation4 + $0x1d8] sm:$0xff] %v5763
    %5806 = vst [vmem:[#allocation4 + $0x1e0] sm:$0xff] %v5765
    %5807 = vst [vmem:[#allocation4 + $0x1e8] sm:$0xff] %v5767
    %5808 = vst [vmem:[#allocation4 + $0x1f0] sm:$0xff] %v5769
    %5809 = vst [vmem:[#allocation4 + $0x1f8] sm:$0xff] %v5771
    %5810 = vst [vmem:[#allocation4 + $0x200] sm:$0xff] %v5773
    %5811 = vst [vmem:[#allocation4 + $0x208] sm:$0xff] %v5775
    %v5812 = vld [vmem:[#allocation35] sm:$0xff]
    %v5813 = vld [vmem:[#allocation35 + $0x8] sm:$0xff]
    %v5814 = vld [vmem:[#allocation35 + $0x10] sm:$0xff]
    %v5815 = vld [vmem:[#allocation35 + $0x18] sm:$0xff]
    %v5816 = vld [vmem:[#allocation35 + $0x20] sm:$0xff]
    %v5817 = vld [vmem:[#allocation35 + $0x28] sm:$0xf]
    %v5818 = vld [vmem:[#allocation4] sm:$0xff]
    %v5819 = vld [vmem:[#allocation4 + $0x8] sm:$0xff]
    %v5820 = vld [vmem:[#allocation4 + $0x10] sm:$0xff]
    %v5821 = vld [vmem:[#allocation4 + $0x18] sm:$0xff]
    %v5822 = vld [vmem:[#allocation4 + $0x20] sm:$0xff]
    %v5823 = vld [vmem:[#allocation4 + $0x28] sm:$0xff]
    %v5824 = vld [vmem:[#allocation4 + $0x30] sm:$0xff]
    %v5825 = vld [vmem:[#allocation4 + $0x38] sm:$0xff]
    %v5826 = vld [vmem:[#allocation4 + $0x40] sm:$0xff]
    %v5827 = vld [vmem:[#allocation4 + $0x48] sm:$0xff]
    %v5828 = vld [vmem:[#allocation4 + $0x50] sm:$0xff]
    %v5829 = vld [vmem:[#allocation4 + $0x58] sm:$0xff]
    %v5830 = vld [vmem:[#allocation4 + $0x60] sm:$0xff]
    %v5831 = vld [vmem:[#allocation4 + $0x68] sm:$0xff]
    %v5832 = vld [vmem:[#allocation4 + $0x70] sm:$0xff]
    %v5833 = vld [vmem:[#allocation4 + $0x78] sm:$0xff]
    %v5834 = vld [vmem:[#allocation4 + $0x80] sm:$0xff]
    %v5835 = vld [vmem:[#allocation4 + $0x88] sm:$0xff]
    %v5836 = vld [vmem:[#allocation4 + $0x90] sm:$0xff]
    %v5837 = vld [vmem:[#allocation4 + $0x98] sm:$0xff]
    %v5838 = vld [vmem:[#allocation4 + $0xa0] sm:$0xff]
    %v5839 = vld [vmem:[#allocation4 + $0xa8] sm:$0xff]
    %v5840 = vld [vmem:[#allocation4 + $0xb0] sm:$0xff]
    %v5841 = vld [vmem:[#allocation4 + $0xb8] sm:$0xff]
    %v5842 = vld [vmem:[#allocation4 + $0xc0] sm:$0xff]
    %v5843 = vld [vmem:[#allocation4 + $0xc8] sm:$0xff]
    %v5844 = vld [vmem:[#allocation4 + $0xd0] sm:$0xff]
    %v5845 = vld [vmem:[#allocation4 + $0xd8] sm:$0xff]
    %v5846 = vld [vmem:[#allocation4 + $0xe0] sm:$0xff]
    %v5847 = vld [vmem:[#allocation4 + $0xe8] sm:$0xff]
    %v5848 = vld [vmem:[#allocation4 + $0xf0] sm:$0xff]
    %v5849 = vld [vmem:[#allocation4 + $0xf8] sm:$0xff]
    %v5850 = vld [vmem:[#allocation4 + $0x100] sm:$0xff]
    %v5851 = vld [vmem:[#allocation4 + $0x108] sm:$0xff]
    %v5852 = vld [vmem:[#allocation4 + $0x110] sm:$0xff]
    %v5853 = vld [vmem:[#allocation4 + $0x118] sm:$0xff]
    %v5854 = vld [vmem:[#allocation4 + $0x120] sm:$0xff]
    %v5855 = vld [vmem:[#allocation4 + $0x128] sm:$0xff]
    %v5856 = vld [vmem:[#allocation4 + $0x130] sm:$0xff]
    %v5857 = vld [vmem:[#allocation4 + $0x138] sm:$0xff]
    %v5858 = vld [vmem:[#allocation4 + $0x140] sm:$0xff]
    %v5859 = vld [vmem:[#allocation4 + $0x148] sm:$0xff]
    %v5860 = vld [vmem:[#allocation4 + $0x150] sm:$0xff]
    %v5861 = vld [vmem:[#allocation4 + $0x158] sm:$0xff]
    %v5862 = vld [vmem:[#allocation4 + $0x160] sm:$0xff]
    %v5863 = vld [vmem:[#allocation4 + $0x168] sm:$0xff]
    %v5864 = vld [vmem:[#allocation4 + $0x170] sm:$0xff]
    %v5865 = vld [vmem:[#allocation4 + $0x178] sm:$0xff]
    %v5866 = vld [vmem:[#allocation4 + $0x180] sm:$0xff]
    %v5867 = vld [vmem:[#allocation4 + $0x188] sm:$0xff]
    %v5868 = vld [vmem:[#allocation4 + $0x190] sm:$0xff]
    %v5869 = vld [vmem:[#allocation4 + $0x198] sm:$0xff]
    %v5870 = vld [vmem:[#allocation4 + $0x1a0] sm:$0xff]
    %v5871 = vld [vmem:[#allocation4 + $0x1a8] sm:$0xff]
    %v5872 = vld [vmem:[#allocation4 + $0x1b0] sm:$0xff]
    %v5873 = vld [vmem:[#allocation4 + $0x1b8] sm:$0xff]
    %v5874 = vld [vmem:[#allocation4 + $0x1c0] sm:$0xff]
    %v5875 = vld [vmem:[#allocation4 + $0x1c8] sm:$0xff]
    %v5876 = vld [vmem:[#allocation4 + $0x1d0] sm:$0xff]
    %v5877 = vld [vmem:[#allocation4 + $0x1d8] sm:$0xff]
    %v5878 = vld [vmem:[#allocation4 + $0x1e0] sm:$0xff]
    %v5879 = vld [vmem:[#allocation4 + $0x1e8] sm:$0xff]
    %v5880 = vld [vmem:[#allocation4 + $0x1f0] sm:$0xff]
    %v5881 = vld [vmem:[#allocation4 + $0x1f8] sm:$0xff]
    %v5882 = vld [vmem:[#allocation4 + $0x200] sm:$0xff]
    %v5883 = vld [vmem:[#allocation4 + $0x208] sm:$0xff]
    %v5884 = vld [vmem:[#allocation36] sm:$0x3f]
    %v5886 = vperm.slane %v5884, 0
    %v5887 = vperm.slane %v5884, 1
    %v5888 = vperm.slane %v5884, 2
    %v5889 = vperm.slane %v5884, 3
    %v5890 = vperm.slane %v5884, 4
    %v5891 = vperm.slane %v5884, 5
    %vm5898 = vcmask 719872
    %v5900 = vsel %vm5898, %v5812, 0
    %v5903 = vsel %vm5898, %v5813, 0
    %v5906 = vsel %vm5898, %v5814, 0
    %v5909 = vsel %vm5898, %v5815, 0
    %v5912 = vsel %vm5898, %v5816, 0
    %v5915 = vsel %vm5898, %v5817, 0
    %5917 = vmatpush.msra.mxu0 0.0
    %5918 = vmatpush.msra.mxu0 0.0
    %5919 = vmatpush.msra.mxu0 0.0
    %5920 = vmatpush.msra.mxu0 0.0
    %5921 = vmatpush.msra.mxu0 0.0
    %5922 = vmatpush.msra.mxu0 %v5878
    %5923 = vmatpush.msra.mxu0 %v5872
    %5924 = vmatpush.msra.mxu0 %v5866
    %5925 = vmatpush.msra.mxu0 %v5860
    %5926 = vmatpush.msra.mxu0 %v5854
    %5927 = vmatpush.msra.mxu0 %v5848
    %5928 = vmatpush.msra.mxu0 %v5842
    %5929 = vmatpush.msra.mxu0 %v5836
    %5930 = vmatpush.msra.mxu0 %v5830
    %5931 = vmatpush.msra.mxu0 %v5824
    %5932 = vmatpush.msra.mxu0 %v5818
    %5933 = vmatmul.f32.gmra.mxu0 %v5900
    %v5934 = vpop.f32.mrf.mxu0
    %v5935 = vadd.f32 %v5886, %v5934
    %5936 = vmatmul.f32.gmra.mxu0 %v5903
    %v5937 = vpop.f32.mrf.mxu0
    %v5938 = vadd.f32 %v5886, %v5937
    %5939 = vmatmul.f32.gmra.mxu0 %v5906
    %v5940 = vpop.f32.mrf.mxu0
    %v5941 = vadd.f32 %v5886, %v5940
    %5942 = vmatmul.f32.gmra.mxu0 %v5909
    %v5943 = vpop.f32.mrf.mxu0
    %v5944 = vadd.f32 %v5886, %v5943
    %5945 = vmatmul.f32.gmra.mxu0 %v5912
    %v5946 = vpop.f32.mrf.mxu0
    %v5947 = vadd.f32 %v5886, %v5946
    %5948 = vmatmul.f32.gmra.mxu0 %v5915
    %v5949 = vpop.f32.mrf.mxu0
    %v5950 = vadd.f32 %v5886, %v5949
    %5951 = vdwg.mxu0
    %5952 = vmatpush.msra.mxu0 0.0
    %5953 = vmatpush.msra.mxu0 0.0
    %5954 = vmatpush.msra.mxu0 0.0
    %5955 = vmatpush.msra.mxu0 0.0
    %5956 = vmatpush.msra.mxu0 0.0
    %5957 = vmatpush.msra.mxu0 %v5879
    %5958 = vmatpush.msra.mxu0 %v5873
    %5959 = vmatpush.msra.mxu0 %v5867
    %5960 = vmatpush.msra.mxu0 %v5861
    %5961 = vmatpush.msra.mxu0 %v5855
    %5962 = vmatpush.msra.mxu0 %v5849
    %5963 = vmatpush.msra.mxu0 %v5843
    %5964 = vmatpush.msra.mxu0 %v5837
    %5965 = vmatpush.msra.mxu0 %v5831
    %5966 = vmatpush.msra.mxu0 %v5825
    %5967 = vmatpush.msra.mxu0 %v5819
    %5968 = vmatmul.f32.gmra.mxu0 %v5900
    %v5969 = vpop.f32.mrf.mxu0
    %v5970 = vadd.f32 %v5887, %v5969
    %5971 = vmatmul.f32.gmra.mxu0 %v5903
    %v5972 = vpop.f32.mrf.mxu0
    %v5973 = vadd.f32 %v5887, %v5972
    %5974 = vmatmul.f32.gmra.mxu0 %v5906
    %v5975 = vpop.f32.mrf.mxu0
    %v5976 = vadd.f32 %v5887, %v5975
    %5977 = vmatmul.f32.gmra.mxu0 %v5909
    %v5978 = vpop.f32.mrf.mxu0
    %v5979 = vadd.f32 %v5887, %v5978
    %5980 = vmatmul.f32.gmra.mxu0 %v5912
    %v5981 = vpop.f32.mrf.mxu0
    %v5982 = vadd.f32 %v5887, %v5981
    %5983 = vmatmul.f32.gmra.mxu0 %v5915
    %v5984 = vpop.f32.mrf.mxu0
    %v5985 = vadd.f32 %v5887, %v5984
    %5986 = vdwg.mxu0
    %5987 = vmatpush.msra.mxu0 0.0
    %5988 = vmatpush.msra.mxu0 0.0
    %5989 = vmatpush.msra.mxu0 0.0
    %5990 = vmatpush.msra.mxu0 0.0
    %5991 = vmatpush.msra.mxu0 0.0
    %5992 = vmatpush.msra.mxu0 %v5880
    %5993 = vmatpush.msra.mxu0 %v5874
    %5994 = vmatpush.msra.mxu0 %v5868
    %5995 = vmatpush.msra.mxu0 %v5862
    %5996 = vmatpush.msra.mxu0 %v5856
    %5997 = vmatpush.msra.mxu0 %v5850
    %5998 = vmatpush.msra.mxu0 %v5844
    %5999 = vmatpush.msra.mxu0 %v5838
    %6000 = vmatpush.msra.mxu0 %v5832
    %6001 = vmatpush.msra.mxu0 %v5826
    %6002 = vmatpush.msra.mxu0 %v5820
    %6003 = vmatmul.f32.gmra.mxu0 %v5900
    %v6004 = vpop.f32.mrf.mxu0
    %v6005 = vadd.f32 %v5888, %v6004
    %6006 = vmatmul.f32.gmra.mxu0 %v5903
    %v6007 = vpop.f32.mrf.mxu0
    %v6008 = vadd.f32 %v5888, %v6007
    %6009 = vmatmul.f32.gmra.mxu0 %v5906
    %v6010 = vpop.f32.mrf.mxu0
    %v6011 = vadd.f32 %v5888, %v6010
    %6012 = vmatmul.f32.gmra.mxu0 %v5909
    %v6013 = vpop.f32.mrf.mxu0
    %v6014 = vadd.f32 %v5888, %v6013
    %6015 = vmatmul.f32.gmra.mxu0 %v5912
    %v6016 = vpop.f32.mrf.mxu0
    %v6017 = vadd.f32 %v5888, %v6016
    %6018 = vmatmul.f32.gmra.mxu0 %v5915
    %v6019 = vpop.f32.mrf.mxu0
    %v6020 = vadd.f32 %v5888, %v6019
    %6021 = vdwg.mxu0
    %6022 = vmatpush.msra.mxu0 0.0
    %6023 = vmatpush.msra.mxu0 0.0
    %6024 = vmatpush.msra.mxu0 0.0
    %6025 = vmatpush.msra.mxu0 0.0
    %6026 = vmatpush.msra.mxu0 0.0
    %6027 = vmatpush.msra.mxu0 %v5881
    %6028 = vmatpush.msra.mxu0 %v5875
    %6029 = vmatpush.msra.mxu0 %v5869
    %6030 = vmatpush.msra.mxu0 %v5863
    %6031 = vmatpush.msra.mxu0 %v5857
    %6032 = vmatpush.msra.mxu0 %v5851
    %6033 = vmatpush.msra.mxu0 %v5845
    %6034 = vmatpush.msra.mxu0 %v5839
    %6035 = vmatpush.msra.mxu0 %v5833
    %6036 = vmatpush.msra.mxu0 %v5827
    %6037 = vmatpush.msra.mxu0 %v5821
    %6038 = vmatmul.f32.gmra.mxu0 %v5900
    %v6039 = vpop.f32.mrf.mxu0
    %v6040 = vadd.f32 %v5889, %v6039
    %6041 = vmatmul.f32.gmra.mxu0 %v5903
    %v6042 = vpop.f32.mrf.mxu0
    %v6043 = vadd.f32 %v5889, %v6042
    %6044 = vmatmul.f32.gmra.mxu0 %v5906
    %v6045 = vpop.f32.mrf.mxu0
    %v6046 = vadd.f32 %v5889, %v6045
    %6047 = vmatmul.f32.gmra.mxu0 %v5909
    %v6048 = vpop.f32.mrf.mxu0
    %v6049 = vadd.f32 %v5889, %v6048
    %6050 = vmatmul.f32.gmra.mxu0 %v5912
    %v6051 = vpop.f32.mrf.mxu0
    %v6052 = vadd.f32 %v5889, %v6051
    %6053 = vmatmul.f32.gmra.mxu0 %v5915
    %v6054 = vpop.f32.mrf.mxu0
    %v6055 = vadd.f32 %v5889, %v6054
    %6056 = vdwg.mxu0
    %6057 = vmatpush.msra.mxu0 0.0
    %6058 = vmatpush.msra.mxu0 0.0
    %6059 = vmatpush.msra.mxu0 0.0
    %6060 = vmatpush.msra.mxu0 0.0
    %6061 = vmatpush.msra.mxu0 0.0
    %6062 = vmatpush.msra.mxu0 %v5882
    %6063 = vmatpush.msra.mxu0 %v5876
    %6064 = vmatpush.msra.mxu0 %v5870
    %6065 = vmatpush.msra.mxu0 %v5864
    %6066 = vmatpush.msra.mxu0 %v5858
    %6067 = vmatpush.msra.mxu0 %v5852
    %6068 = vmatpush.msra.mxu0 %v5846
    %6069 = vmatpush.msra.mxu0 %v5840
    %6070 = vmatpush.msra.mxu0 %v5834
    %6071 = vmatpush.msra.mxu0 %v5828
    %6072 = vmatpush.msra.mxu0 %v5822
    %6073 = vmatmul.f32.gmra.mxu0 %v5900
    %v6074 = vpop.f32.mrf.mxu0
    %v6075 = vadd.f32 %v5890, %v6074
    %6076 = vmatmul.f32.gmra.mxu0 %v5903
    %v6077 = vpop.f32.mrf.mxu0
    %v6078 = vadd.f32 %v5890, %v6077
    %6079 = vmatmul.f32.gmra.mxu0 %v5906
    %v6080 = vpop.f32.mrf.mxu0
    %v6081 = vadd.f32 %v5890, %v6080
    %6082 = vmatmul.f32.gmra.mxu0 %v5909
    %v6083 = vpop.f32.mrf.mxu0
    %v6084 = vadd.f32 %v5890, %v6083
    %6085 = vmatmul.f32.gmra.mxu0 %v5912
    %v6086 = vpop.f32.mrf.mxu0
    %v6087 = vadd.f32 %v5890, %v6086
    %6088 = vmatmul.f32.gmra.mxu0 %v5915
    %v6089 = vpop.f32.mrf.mxu0
    %v6090 = vadd.f32 %v5890, %v6089
    %6091 = vdwg.mxu0
    %6092 = vmatpush.msra.mxu0 0.0
    %6093 = vmatpush.msra.mxu0 0.0
    %6094 = vmatpush.msra.mxu0 0.0
    %6095 = vmatpush.msra.mxu0 0.0
    %6096 = vmatpush.msra.mxu0 0.0
    %6097 = vmatpush.msra.mxu0 %v5883
    %6098 = vmatpush.msra.mxu0 %v5877
    %6099 = vmatpush.msra.mxu0 %v5871
    %6100 = vmatpush.msra.mxu0 %v5865
    %6101 = vmatpush.msra.mxu0 %v5859
    %6102 = vmatpush.msra.mxu0 %v5853
    %6103 = vmatpush.msra.mxu0 %v5847
    %6104 = vmatpush.msra.mxu0 %v5841
    %6105 = vmatpush.msra.mxu0 %v5835
    %6106 = vmatpush.msra.mxu0 %v5829
    %6107 = vmatpush.msra.mxu0 %v5823
    %6108 = vmatmul.f32.gmra.mxu0 %v5900
    %v6109 = vpop.f32.mrf.mxu0
    %v6110 = vadd.f32 %v5891, %v6109
    %6111 = vmatmul.f32.gmra.mxu0 %v5903
    %v6112 = vpop.f32.mrf.mxu0
    %v6113 = vadd.f32 %v5891, %v6112
    %6114 = vmatmul.f32.gmra.mxu0 %v5906
    %v6115 = vpop.f32.mrf.mxu0
    %v6116 = vadd.f32 %v5891, %v6115
    %6117 = vmatmul.f32.gmra.mxu0 %v5909
    %v6118 = vpop.f32.mrf.mxu0
    %v6119 = vadd.f32 %v5891, %v6118
    %6120 = vmatmul.f32.gmra.mxu0 %v5912
    %v6121 = vpop.f32.mrf.mxu0
    %v6122 = vadd.f32 %v5891, %v6121
    %6123 = vmatmul.f32.gmra.mxu0 %v5915
    %v6124 = vpop.f32.mrf.mxu0
    %v6125 = vadd.f32 %v5891, %v6124
    %6126 = vdwg.mxu0
    %vm6127 = vcmp.gt.f32.partialorder %v5935, 0.0
    %vm6128 = vcmp.gt.f32.partialorder %v5970, 0.0
    %vm6129 = vcmp.gt.f32.partialorder %v6005, 0.0
    %vm6130 = vcmp.gt.f32.partialorder %v6040, 0.0
    %vm6131 = vcmp.gt.f32.partialorder %v6075, 0.0
    %vm6132 = vcmp.gt.f32.partialorder %v6110, 0.0
    %vm6133 = vcmp.gt.f32.partialorder %v5938, 0.0
    %vm6134 = vcmp.gt.f32.partialorder %v5973, 0.0
    %vm6135 = vcmp.gt.f32.partialorder %v6008, 0.0
    %vm6136 = vcmp.gt.f32.partialorder %v6043, 0.0
    %vm6137 = vcmp.gt.f32.partialorder %v6078, 0.0
    %vm6138 = vcmp.gt.f32.partialorder %v6113, 0.0
    %vm6139 = vcmp.gt.f32.partialorder %v5941, 0.0
    %vm6140 = vcmp.gt.f32.partialorder %v5976, 0.0
    %vm6141 = vcmp.gt.f32.partialorder %v6011, 0.0
    %vm6142 = vcmp.gt.f32.partialorder %v6046, 0.0
    %vm6143 = vcmp.gt.f32.partialorder %v6081, 0.0
    %vm6144 = vcmp.gt.f32.partialorder %v6116, 0.0
    %vm6145 = vcmp.gt.f32.partialorder %v5944, 0.0
    %vm6146 = vcmp.gt.f32.partialorder %v5979, 0.0
    %vm6147 = vcmp.gt.f32.partialorder %v6014, 0.0
    %vm6148 = vcmp.gt.f32.partialorder %v6049, 0.0
    %vm6149 = vcmp.gt.f32.partialorder %v6084, 0.0
    %vm6150 = vcmp.gt.f32.partialorder %v6119, 0.0
    %vm6151 = vcmp.gt.f32.partialorder %v5947, 0.0
    %vm6152 = vcmp.gt.f32.partialorder %v5982, 0.0
    %vm6153 = vcmp.gt.f32.partialorder %v6017, 0.0
    %vm6154 = vcmp.gt.f32.partialorder %v6052, 0.0
    %vm6155 = vcmp.gt.f32.partialorder %v6087, 0.0
    %vm6156 = vcmp.gt.f32.partialorder %v6122, 0.0
    %vm6157 = vcmp.gt.f32.partialorder %v5950, 0.0
    %vm6158 = vcmp.gt.f32.partialorder %v5985, 0.0
    %vm6159 = vcmp.gt.f32.partialorder %v6020, 0.0
    %vm6160 = vcmp.gt.f32.partialorder %v6055, 0.0
    %vm6161 = vcmp.gt.f32.partialorder %v6090, 0.0
    %vm6162 = vcmp.gt.f32.partialorder %v6125, 0.0
    %v6163 = vmul.f32 %v5935, 0.1
    %v6164 = vmul.f32 %v5970, 0.1
    %v6165 = vmul.f32 %v6005, 0.1
    %v6166 = vmul.f32 %v6040, 0.1
    %v6167 = vmul.f32 %v6075, 0.1
    %v6168 = vmul.f32 %v6110, 0.1
    %v6169 = vmul.f32 %v5938, 0.1
    %v6170 = vmul.f32 %v5973, 0.1
    %v6171 = vmul.f32 %v6008, 0.1
    %v6172 = vmul.f32 %v6043, 0.1
    %v6173 = vmul.f32 %v6078, 0.1
    %v6174 = vmul.f32 %v6113, 0.1
    %v6175 = vmul.f32 %v5941, 0.1
    %v6176 = vmul.f32 %v5976, 0.1
    %v6177 = vmul.f32 %v6011, 0.1
    %v6178 = vmul.f32 %v6046, 0.1
    %v6179 = vmul.f32 %v6081, 0.1
    %v6180 = vmul.f32 %v6116, 0.1
    %v6181 = vmul.f32 %v5944, 0.1
    %v6182 = vmul.f32 %v5979, 0.1
    %v6183 = vmul.f32 %v6014, 0.1
    %v6184 = vmul.f32 %v6049, 0.1
    %v6185 = vmul.f32 %v6084, 0.1
    %v6186 = vmul.f32 %v6119, 0.1
    %v6187 = vmul.f32 %v5947, 0.1
    %v6188 = vmul.f32 %v5982, 0.1
    %v6189 = vmul.f32 %v6017, 0.1
    %v6190 = vmul.f32 %v6052, 0.1
    %v6191 = vmul.f32 %v6087, 0.1
    %v6192 = vmul.f32 %v6122, 0.1
    %v6193 = vmul.f32 %v5950, 0.1
    %v6194 = vmul.f32 %v5985, 0.1
    %v6195 = vmul.f32 %v6020, 0.1
    %v6196 = vmul.f32 %v6055, 0.1
    %v6197 = vmul.f32 %v6090, 0.1
    %v6198 = vmul.f32 %v6125, 0.1
    %v6199 = vsel %vm6127, %v5935, %v6163
    %v6200 = vsel %vm6128, %v5970, %v6164
    %v6201 = vsel %vm6129, %v6005, %v6165
    %v6202 = vsel %vm6130, %v6040, %v6166
    %v6203 = vsel %vm6131, %v6075, %v6167
    %v6204 = vsel %vm6132, %v6110, %v6168
    %v6205 = vsel %vm6133, %v5938, %v6169
    %v6206 = vsel %vm6134, %v5973, %v6170
    %v6207 = vsel %vm6135, %v6008, %v6171
    %v6208 = vsel %vm6136, %v6043, %v6172
    %v6209 = vsel %vm6137, %v6078, %v6173
    %v6210 = vsel %vm6138, %v6113, %v6174
    %v6211 = vsel %vm6139, %v5941, %v6175
    %v6212 = vsel %vm6140, %v5976, %v6176
    %v6213 = vsel %vm6141, %v6011, %v6177
    %v6214 = vsel %vm6142, %v6046, %v6178
    %v6215 = vsel %vm6143, %v6081, %v6179
    %v6216 = vsel %vm6144, %v6116, %v6180
    %v6217 = vsel %vm6145, %v5944, %v6181
    %v6218 = vsel %vm6146, %v5979, %v6182
    %v6219 = vsel %vm6147, %v6014, %v6183
    %v6220 = vsel %vm6148, %v6049, %v6184
    %v6221 = vsel %vm6149, %v6084, %v6185
    %v6222 = vsel %vm6150, %v6119, %v6186
    %v6223 = vsel %vm6151, %v5947, %v6187
    %v6224 = vsel %vm6152, %v5982, %v6188
    %v6225 = vsel %vm6153, %v6017, %v6189
    %v6226 = vsel %vm6154, %v6052, %v6190
    %v6227 = vsel %vm6155, %v6087, %v6191
    %v6228 = vsel %vm6156, %v6122, %v6192
    %v6229 = vsel %vm6157, %v5950, %v6193
    %v6230 = vsel %vm6158, %v5985, %v6194
    %v6231 = vsel %vm6159, %v6020, %v6195
    %v6232 = vsel %vm6160, %v6055, %v6196
    %v6233 = vsel %vm6161, %v6090, %v6197
    %v6234 = vsel %vm6162, %v6125, %v6198
    %v6235 = vld [vmem:[#allocation38] sm:$0xff]
    %v6236 = vld [vmem:[#allocation38 + $0x8] sm:$0xff]
    %v6237 = vld [vmem:[#allocation38 + $0x10] sm:$0xff]
    %v6238 = vld [vmem:[#allocation38 + $0x18] sm:$0xff]
    %v6239 = vld [vmem:[#allocation38 + $0x20] sm:$0xff]
    %v6240 = vld [vmem:[#allocation38 + $0x28] sm:$0xff]
    %v6241 = vld [vmem:[#allocation38 + $0x30] sm:$0xff]
    %v6242 = vld [vmem:[#allocation38 + $0x38] sm:$0xff]
    %v6243 = vld [vmem:[#allocation38 + $0x40] sm:$0xff]
    %v6244 = vld [vmem:[#allocation38 + $0x48] sm:$0xff]
    %v6245 = vld [vmem:[#allocation38 + $0x50] sm:$0xff]
    %v6246 = vld [vmem:[#allocation38 + $0x58] sm:$0xff]
    %v6247 = vld [vmem:[#allocation38 + $0x60] sm:$0xff]
    %v6248 = vld [vmem:[#allocation38 + $0x68] sm:$0xff]
    %v6249 = vld [vmem:[#allocation38 + $0x70] sm:$0xff]
    %v6250 = vld [vmem:[#allocation38 + $0x78] sm:$0xff]
    %v6251 = vld [vmem:[#allocation38 + $0x80] sm:$0xff]
    %v6252 = vld [vmem:[#allocation38 + $0x88] sm:$0xff]
    %v6253 = vld [vmem:[#allocation38 + $0x90] sm:$0xff]
    %v6254 = vld [vmem:[#allocation38 + $0x98] sm:$0xff]
    %v6255 = vld [vmem:[#allocation38 + $0xa0] sm:$0xff]
    %v6256 = vld [vmem:[#allocation38 + $0xa8] sm:$0xff]
    %v6257 = vld [vmem:[#allocation38 + $0xb0] sm:$0xff]
    %v6258 = vld [vmem:[#allocation38 + $0xb8] sm:$0xff]
    %v6259 = vld [vmem:[#allocation38 + $0xc0] sm:$0xff]
    %v6260 = vld [vmem:[#allocation38 + $0xc8] sm:$0xff]
    %v6261 = vld [vmem:[#allocation38 + $0xd0] sm:$0xff]
    %v6262 = vld [vmem:[#allocation38 + $0xd8] sm:$0xff]
    %v6263 = vld [vmem:[#allocation38 + $0xe0] sm:$0xff]
    %v6264 = vld [vmem:[#allocation38 + $0xe8] sm:$0xff]
    %v6265 = vld [vmem:[#allocation38 + $0xf0] sm:$0xff]
    %v6266 = vld [vmem:[#allocation38 + $0xf8] sm:$0xff]
    %v6267 = vld [vmem:[#allocation38 + $0x100] sm:$0xff]
    %v6268 = vld [vmem:[#allocation38 + $0x108] sm:$0xff]
    %v6269 = vld [vmem:[#allocation38 + $0x110] sm:$0xff]
    %v6270 = vld [vmem:[#allocation38 + $0x118] sm:$0xff]
    %v6271 = vld [vmem:[#allocation38 + $0x120] sm:$0xff]
    %v6272 = vld [vmem:[#allocation38 + $0x128] sm:$0xff]
    %v6273 = vld [vmem:[#allocation38 + $0x130] sm:$0xff]
    %v6274 = vld [vmem:[#allocation38 + $0x138] sm:$0xff]
    %v6275 = vld [vmem:[#allocation38 + $0x140] sm:$0xff]
    %v6276 = vld [vmem:[#allocation38 + $0x148] sm:$0xff]
    %v6277 = vld [vmem:[#allocation38 + $0x150] sm:$0xff]
    %v6278 = vld [vmem:[#allocation38 + $0x158] sm:$0xff]
    %v6279 = vld [vmem:[#allocation38 + $0x160] sm:$0xff]
    %v6280 = vld [vmem:[#allocation38 + $0x168] sm:$0xff]
    %v6281 = vld [vmem:[#allocation38 + $0x170] sm:$0xff]
    %v6282 = vld [vmem:[#allocation38 + $0x178] sm:$0xff]
    %v6283 = vld [vmem:[#allocation38 + $0x180] sm:$0xff]
    %v6284 = vld [vmem:[#allocation38 + $0x188] sm:$0xff]
    %v6285 = vld [vmem:[#allocation38 + $0x190] sm:$0xff]
    %v6286 = vld [vmem:[#allocation38 + $0x198] sm:$0xff]
    %v6287 = vld [vmem:[#allocation38 + $0x1a0] sm:$0xff]
    %v6288 = vld [vmem:[#allocation38 + $0x1a8] sm:$0xff]
    %v6289 = vld [vmem:[#allocation38 + $0x1b0] sm:$0xff]
    %v6290 = vld [vmem:[#allocation38 + $0x1b8] sm:$0xff]
    %v6291 = vld [vmem:[#allocation38 + $0x1c0] sm:$0xff]
    %v6292 = vld [vmem:[#allocation38 + $0x1c8] sm:$0xff]
    %v6293 = vld [vmem:[#allocation38 + $0x1d0] sm:$0xff]
    %v6294 = vld [vmem:[#allocation38 + $0x1d8] sm:$0xff]
    %v6295 = vld [vmem:[#allocation38 + $0x1e0] sm:$0xff]
    %v6296 = vld [vmem:[#allocation38 + $0x1e8] sm:$0xff]
    %v6297 = vld [vmem:[#allocation38 + $0x1f0] sm:$0xff]
    %v6298 = vld [vmem:[#allocation38 + $0x1f8] sm:$0xff]
    %v6299 = vld [vmem:[#allocation38 + $0x200] sm:$0xff]
    %v6300 = vld [vmem:[#allocation38 + $0x208] sm:$0xff]
    %v6301 = vld [vmem:[#allocation38 + $0x210] sm:$0xff]
    %v6302 = vld [vmem:[#allocation38 + $0x218] sm:$0xff]
    %v6303 = vld [vmem:[#allocation38 + $0x220] sm:$0xff]
    %v6304 = vld [vmem:[#allocation38 + $0x228] sm:$0xff]
    %v6305 = vld [vmem:[#allocation38 + $0x230] sm:$0xff]
    %v6306 = vld [vmem:[#allocation38 + $0x238] sm:$0xff]
    %v6307 = vld [vmem:[#allocation38 + $0x240] sm:$0xff]
    %v6308 = vld [vmem:[#allocation38 + $0x248] sm:$0xff]
    %v6309 = vld [vmem:[#allocation38 + $0x250] sm:$0xff]
    %v6310 = vld [vmem:[#allocation38 + $0x258] sm:$0xff]
    %v6311 = vld [vmem:[#allocation38 + $0x260] sm:$0xff]
    %v6312 = vld [vmem:[#allocation38 + $0x268] sm:$0xff]
    %v6313 = vld [vmem:[#allocation38 + $0x270] sm:$0xff]
    %v6314 = vld [vmem:[#allocation38 + $0x278] sm:$0xff]
    %v6315 = vld [vmem:[#allocation38 + $0x280] sm:$0xff]
    %v6316 = vld [vmem:[#allocation38 + $0x288] sm:$0xff]
    %v6317 = vld [vmem:[#allocation38 + $0x290] sm:$0xff]
    %v6318 = vld [vmem:[#allocation38 + $0x298] sm:$0xff]
    %v6319 = vld [vmem:[#allocation38 + $0x2a0] sm:$0xff]
    %v6320 = vld [vmem:[#allocation38 + $0x2a8] sm:$0xff]
    %v6321 = vld [vmem:[#allocation38 + $0x2b0] sm:$0xff]
    %v6322 = vld [vmem:[#allocation38 + $0x2b8] sm:$0xff]
    %v6323 = vld [vmem:[#allocation38 + $0x2c0] sm:$0xff]
    %v6324 = vld [vmem:[#allocation38 + $0x2c8] sm:$0xff]
    %v6325 = vld [vmem:[#allocation38 + $0x2d0] sm:$0xff]
    %v6326 = vld [vmem:[#allocation38 + $0x2d8] sm:$0xff]
    %v6327 = vld [vmem:[#allocation38 + $0x2e0] sm:$0xff]
    %v6328 = vld [vmem:[#allocation38 + $0x2e8] sm:$0xff]
    %v6329 = vld [vmem:[#allocation38 + $0x2f0] sm:$0xff]
    %v6330 = vld [vmem:[#allocation38 + $0x2f8] sm:$0xff]
    %v6331 = vld [vmem:[#allocation38 + $0x300] sm:$0xff]
    %v6332 = vld [vmem:[#allocation38 + $0x308] sm:$0xff]
    %v6333 = vld [vmem:[#allocation38 + $0x310] sm:$0xff]
    %v6334 = vld [vmem:[#allocation38 + $0x318] sm:$0xff]
    %v6335 = vld [vmem:[#allocation38 + $0x320] sm:$0xff]
    %v6336 = vld [vmem:[#allocation38 + $0x328] sm:$0xff]
    %v6337 = vld [vmem:[#allocation38 + $0x330] sm:$0xff]
    %v6338 = vld [vmem:[#allocation38 + $0x338] sm:$0xff]
    %v6339 = vld [vmem:[#allocation38 + $0x340] sm:$0xff]
    %v6340 = vld [vmem:[#allocation38 + $0x348] sm:$0xff]
    %v6341 = vld [vmem:[#allocation38 + $0x350] sm:$0xff]
    %v6342 = vld [vmem:[#allocation38 + $0x358] sm:$0xff]
    %v6343 = vld [vmem:[#allocation38 + $0x360] sm:$0xff]
    %v6344 = vld [vmem:[#allocation38 + $0x368] sm:$0xff]
    %v6345 = vld [vmem:[#allocation38 + $0x370] sm:$0xff]
    %v6346 = vld [vmem:[#allocation38 + $0x378] sm:$0xff]
    %v6347 = vld [vmem:[#allocation38 + $0x380] sm:$0xff]
    %v6348 = vld [vmem:[#allocation38 + $0x388] sm:$0xff]
    %v6349 = vld [vmem:[#allocation38 + $0x390] sm:$0xff]
    %v6350 = vld [vmem:[#allocation38 + $0x398] sm:$0xff]
    %v6351 = vld [vmem:[#allocation38 + $0x3a0] sm:$0xff]
    %v6352 = vld [vmem:[#allocation38 + $0x3a8] sm:$0xff]
    %v6353 = vld [vmem:[#allocation38 + $0x3b0] sm:$0xff]
    %v6354 = vld [vmem:[#allocation38 + $0x3b8] sm:$0xff]
    %v6355 = vld [vmem:[#allocation38 + $0x3c0] sm:$0xff]
    %v6356 = vld [vmem:[#allocation38 + $0x3c8] sm:$0xff]
    %v6357 = vld [vmem:[#allocation38 + $0x3d0] sm:$0xff]
    %v6358 = vld [vmem:[#allocation38 + $0x3d8] sm:$0xff]
    %v6359 = vld [vmem:[#allocation38 + $0x3e0] sm:$0xff]
    %v6360 = vld [vmem:[#allocation38 + $0x3e8] sm:$0xff]
    %v6361 = vld [vmem:[#allocation38 + $0x3f0] sm:$0xff]
    %v6362 = vld [vmem:[#allocation38 + $0x3f8] sm:$0xff]
    %v6363 = vld [vmem:[#allocation38 + $0x400] sm:$0xff]
    %v6364 = vld [vmem:[#allocation38 + $0x408] sm:$0xff]
    %v6365 = vld [vmem:[#allocation38 + $0x410] sm:$0xff]
    %v6366 = vld [vmem:[#allocation38 + $0x418] sm:$0xff]
    %v6367 = vld [vmem:[#allocation38 + $0x420] sm:$0xff]
    %v6368 = vld [vmem:[#allocation38 + $0x428] sm:$0xff]
    %v6369 = vld [vmem:[#allocation38 + $0x430] sm:$0xff]
    %v6370 = vld [vmem:[#allocation38 + $0x438] sm:$0xff]
    %v6371 = vld [vmem:[#allocation38 + $0x440] sm:$0xff]
    %v6372 = vld [vmem:[#allocation38 + $0x448] sm:$0xff]
    %v6373 = vld [vmem:[#allocation38 + $0x450] sm:$0xff]
    %v6374 = vld [vmem:[#allocation38 + $0x458] sm:$0xff]
    %v6375 = vld [vmem:[#allocation38 + $0x460] sm:$0xff]
    %v6376 = vld [vmem:[#allocation38 + $0x468] sm:$0xff]
    %v6377 = vld [vmem:[#allocation38 + $0x470] sm:$0xff]
    %v6378 = vld [vmem:[#allocation38 + $0x478] sm:$0xff]
    %v6379 = vld [vmem:[#allocation38 + $0x480] sm:$0xff]
    %v6380 = vld [vmem:[#allocation38 + $0x488] sm:$0xff]
    %v6381 = vld [vmem:[#allocation38 + $0x490] sm:$0xff]
    %v6382 = vld [vmem:[#allocation38 + $0x498] sm:$0xff]
    %v6383 = vld [vmem:[#allocation38 + $0x4a0] sm:$0xff]
    %v6384 = vld [vmem:[#allocation38 + $0x4a8] sm:$0xff]
    %v6385 = vld [vmem:[#allocation38 + $0x4b0] sm:$0xff]
    %v6386 = vld [vmem:[#allocation38 + $0x4b8] sm:$0xff]
    %v6387 = vld [vmem:[#allocation38 + $0x4c0] sm:$0xff]
    %v6388 = vld [vmem:[#allocation38 + $0x4c8] sm:$0xff]
    %v6389 = vld [vmem:[#allocation38 + $0x4d0] sm:$0xff]
    %v6390 = vld [vmem:[#allocation38 + $0x4d8] sm:$0xff]
    %v6391 = vld [vmem:[#allocation38 + $0x4e0] sm:$0xff]
    %v6392 = vld [vmem:[#allocation38 + $0x4e8] sm:$0xff]
    %v6393 = vld [vmem:[#allocation38 + $0x4f0] sm:$0xff]
    %v6394 = vld [vmem:[#allocation38 + $0x4f8] sm:$0xff]
    %v6395 = vld [vmem:[#allocation38 + $0x500] sm:$0xff]
    %v6396 = vld [vmem:[#allocation38 + $0x508] sm:$0xff]
    %v6397 = vld [vmem:[#allocation38 + $0x510] sm:$0xff]
    %v6398 = vld [vmem:[#allocation38 + $0x518] sm:$0xff]
    %v6399 = vld [vmem:[#allocation38 + $0x520] sm:$0xff]
    %v6400 = vld [vmem:[#allocation38 + $0x528] sm:$0xff]
    %v6401 = vld [vmem:[#allocation38 + $0x530] sm:$0xff]
    %v6402 = vld [vmem:[#allocation38 + $0x538] sm:$0xff]
    %v6403 = vld [vmem:[#allocation38 + $0x540] sm:$0xff]
    %v6404 = vld [vmem:[#allocation38 + $0x548] sm:$0xff]
    %v6405 = vld [vmem:[#allocation38 + $0x550] sm:$0xff]
    %v6406 = vld [vmem:[#allocation38 + $0x558] sm:$0xff]
    %v6407 = vld [vmem:[#allocation38 + $0x560] sm:$0xff]
    %v6408 = vld [vmem:[#allocation38 + $0x568] sm:$0xff]
    %v6409 = vld [vmem:[#allocation38 + $0x570] sm:$0xff]
    %v6410 = vld [vmem:[#allocation38 + $0x578] sm:$0xff]
    %v6411 = vld [vmem:[#allocation38 + $0x580] sm:$0xff]
    %v6412 = vld [vmem:[#allocation38 + $0x588] sm:$0xff]
    %v6413 = vld [vmem:[#allocation38 + $0x590] sm:$0xff]
    %v6414 = vld [vmem:[#allocation38 + $0x598] sm:$0xff]
    %v6415 = vld [vmem:[#allocation38 + $0x5a0] sm:$0xff]
    %v6416 = vld [vmem:[#allocation38 + $0x5a8] sm:$0xff]
    %v6417 = vld [vmem:[#allocation38 + $0x5b0] sm:$0xff]
    %v6418 = vld [vmem:[#allocation38 + $0x5b8] sm:$0xff]
    %v6419 = vld [vmem:[#allocation38 + $0x5c0] sm:$0xff]
    %v6420 = vld [vmem:[#allocation38 + $0x5c8] sm:$0xff]
    %v6421 = vld [vmem:[#allocation38 + $0x5d0] sm:$0xff]
    %v6422 = vld [vmem:[#allocation38 + $0x5d8] sm:$0xff]
    %v6423 = vld [vmem:[#allocation38 + $0x5e0] sm:$0xff]
    %v6424 = vld [vmem:[#allocation38 + $0x5e8] sm:$0xff]
    %v6425 = vld [vmem:[#allocation38 + $0x5f0] sm:$0xff]
    %v6426 = vld [vmem:[#allocation38 + $0x5f8] sm:$0xff]
    %v6427 = vld [vmem:[#allocation38 + $0x600] sm:$0xff]
    %v6428 = vld [vmem:[#allocation38 + $0x608] sm:$0xff]
    %v6429 = vld [vmem:[#allocation38 + $0x610] sm:$0xff]
    %v6430 = vld [vmem:[#allocation38 + $0x618] sm:$0xff]
    %v6431 = vld [vmem:[#allocation38 + $0x620] sm:$0xff]
    %v6432 = vld [vmem:[#allocation38 + $0x628] sm:$0xff]
    %v6433 = vld [vmem:[#allocation38 + $0x630] sm:$0xff]
    %v6434 = vld [vmem:[#allocation38 + $0x638] sm:$0xff]
    %v6435 = vld [vmem:[#allocation38 + $0x640] sm:$0xff]
    %v6436 = vld [vmem:[#allocation38 + $0x648] sm:$0xff]
    %v6437 = vld [vmem:[#allocation38 + $0x650] sm:$0xff]
    %v6438 = vld [vmem:[#allocation38 + $0x658] sm:$0xff]
    %v6439 = vld [vmem:[#allocation38 + $0x660] sm:$0xff]
    %v6440 = vld [vmem:[#allocation38 + $0x668] sm:$0xff]
    %v6441 = vld [vmem:[#allocation38 + $0x670] sm:$0xff]
    %v6442 = vld [vmem:[#allocation38 + $0x678] sm:$0xff]
    %v6443 = vld [vmem:[#allocation38 + $0x680] sm:$0xff]
    %v6444 = vld [vmem:[#allocation38 + $0x688] sm:$0xff]
    %v6445 = vld [vmem:[#allocation38 + $0x690] sm:$0xff]
    %v6446 = vld [vmem:[#allocation38 + $0x698] sm:$0xff]
    %v6447 = vld [vmem:[#allocation38 + $0x6a0] sm:$0xff]
    %v6448 = vld [vmem:[#allocation38 + $0x6a8] sm:$0xff]
    %v6449 = vld [vmem:[#allocation38 + $0x6b0] sm:$0xff]
    %v6450 = vld [vmem:[#allocation38 + $0x6b8] sm:$0xff]
    %v6451 = vld [vmem:[#allocation38 + $0x6c0] sm:$0xff]
    %v6452 = vld [vmem:[#allocation38 + $0x6c8] sm:$0xff]
    %v6453 = vld [vmem:[#allocation38 + $0x6d0] sm:$0xff]
    %v6454 = vld [vmem:[#allocation38 + $0x6d8] sm:$0xff]
    %v6455 = vld [vmem:[#allocation38 + $0x6e0] sm:$0xff]
    %v6456 = vld [vmem:[#allocation38 + $0x6e8] sm:$0xff]
    %v6457 = vld [vmem:[#allocation38 + $0x6f0] sm:$0xff]
    %v6458 = vld [vmem:[#allocation38 + $0x6f8] sm:$0xff]
    %v6459 = vld [vmem:[#allocation38 + $0x700] sm:$0xff]
    %v6460 = vld [vmem:[#allocation38 + $0x708] sm:$0xff]
    %v6461 = vld [vmem:[#allocation38 + $0x710] sm:$0xff]
    %v6462 = vld [vmem:[#allocation38 + $0x718] sm:$0xff]
    %v6463 = vld [vmem:[#allocation38 + $0x720] sm:$0xff]
    %v6464 = vld [vmem:[#allocation38 + $0x728] sm:$0xff]
    %v6465 = vld [vmem:[#allocation38 + $0x730] sm:$0xff]
    %v6466 = vld [vmem:[#allocation38 + $0x738] sm:$0xff]
    %v6467 = vld [vmem:[#allocation38 + $0x740] sm:$0xff]
    %v6468 = vld [vmem:[#allocation38 + $0x748] sm:$0xff]
    %v6469 = vld [vmem:[#allocation38 + $0x750] sm:$0xff]
    %v6470 = vld [vmem:[#allocation38 + $0x758] sm:$0xff]
    %v6471 = vld [vmem:[#allocation38 + $0x760] sm:$0xff]
    %v6472 = vld [vmem:[#allocation38 + $0x768] sm:$0xff]
    %v6473 = vld [vmem:[#allocation38 + $0x770] sm:$0xff]
    %v6474 = vld [vmem:[#allocation38 + $0x778] sm:$0xff]
    %v6475 = vld [vmem:[#allocation38 + $0x780] sm:$0xff]
    %v6476 = vld [vmem:[#allocation38 + $0x788] sm:$0xff]
    %v6477 = vld [vmem:[#allocation38 + $0x790] sm:$0xff]
    %v6478 = vld [vmem:[#allocation38 + $0x798] sm:$0xff]
    %v6479 = vld [vmem:[#allocation38 + $0x7a0] sm:$0xff]
    %v6480 = vld [vmem:[#allocation38 + $0x7a8] sm:$0xff]
    %v6481 = vld [vmem:[#allocation38 + $0x7b0] sm:$0xff]
    %v6482 = vld [vmem:[#allocation38 + $0x7b8] sm:$0xff]
    %v6483 = vld [vmem:[#allocation38 + $0x7c0] sm:$0xff]
    %v6484 = vld [vmem:[#allocation38 + $0x7c8] sm:$0xff]
    %v6485 = vld [vmem:[#allocation38 + $0x7d0] sm:$0xff]
    %v6486 = vld [vmem:[#allocation38 + $0x7d8] sm:$0xff]
    %v6487 = vld [vmem:[#allocation38 + $0x7e0] sm:$0xff]
    %v6488 = vld [vmem:[#allocation38 + $0x7e8] sm:$0xff]
    %v6489 = vld [vmem:[#allocation38 + $0x7f0] sm:$0xff]
    %v6490 = vld [vmem:[#allocation38 + $0x7f8] sm:$0xff]
    %v6491 = vld [vmem:[#allocation38 + $0x800] sm:$0xff]
    %v6492 = vld [vmem:[#allocation38 + $0x808] sm:$0xff]
    %v6493 = vld [vmem:[#allocation38 + $0x810] sm:$0xff]
    %v6494 = vld [vmem:[#allocation38 + $0x818] sm:$0xff]
    %v6495 = vld [vmem:[#allocation38 + $0x820] sm:$0xff]
    %v6496 = vld [vmem:[#allocation38 + $0x828] sm:$0xff]
    %v6497 = vld [vmem:[#allocation38 + $0x830] sm:$0xff]
    %v6498 = vld [vmem:[#allocation38 + $0x838] sm:$0xff]
    %v6499 = vld [vmem:[#allocation38 + $0x840] sm:$0xff]
    %v6500 = vld [vmem:[#allocation38 + $0x848] sm:$0xff]
    %v6501 = vld [vmem:[#allocation38 + $0x850] sm:$0xff]
    %v6502 = vld [vmem:[#allocation38 + $0x858] sm:$0xff]
    %v6503 = vld [vmem:[#allocation38 + $0x860] sm:$0xff]
    %v6504 = vld [vmem:[#allocation38 + $0x868] sm:$0xff]
    %v6505 = vld [vmem:[#allocation38 + $0x870] sm:$0xff]
    %v6506 = vld [vmem:[#allocation38 + $0x878] sm:$0xff]
    %v6507 = vld [vmem:[#allocation38 + $0x880] sm:$0xff]
    %v6508 = vld [vmem:[#allocation38 + $0x888] sm:$0xff]
    %v6509 = vld [vmem:[#allocation38 + $0x890] sm:$0xff]
    %v6510 = vld [vmem:[#allocation38 + $0x898] sm:$0xff]
    %v6511 = vld [vmem:[#allocation38 + $0x8a0] sm:$0xff]
    %v6512 = vld [vmem:[#allocation38 + $0x8a8] sm:$0xff]
    %v6513 = vld [vmem:[#allocation38 + $0x8b0] sm:$0xff]
    %v6514 = vld [vmem:[#allocation38 + $0x8b8] sm:$0xff]
    %v6515 = vld [vmem:[#allocation38 + $0x8c0] sm:$0xff]
    %v6516 = vld [vmem:[#allocation38 + $0x8c8] sm:$0xff]
    %v6517 = vld [vmem:[#allocation38 + $0x8d0] sm:$0xff]
    %v6518 = vld [vmem:[#allocation38 + $0x8d8] sm:$0xff]
    %v6519 = vld [vmem:[#allocation38 + $0x8e0] sm:$0xff]
    %v6520 = vld [vmem:[#allocation38 + $0x8e8] sm:$0xff]
    %v6521 = vld [vmem:[#allocation38 + $0x8f0] sm:$0xff]
    %v6522 = vld [vmem:[#allocation38 + $0x8f8] sm:$0xff]
    %v6523 = vld [vmem:[#allocation38 + $0x900] sm:$0xff]
    %v6524 = vld [vmem:[#allocation38 + $0x908] sm:$0xff]
    %v6525 = vld [vmem:[#allocation38 + $0x910] sm:$0xff]
    %v6526 = vld [vmem:[#allocation38 + $0x918] sm:$0xff]
    %v6527 = vld [vmem:[#allocation38 + $0x920] sm:$0xff]
    %v6528 = vld [vmem:[#allocation38 + $0x928] sm:$0xff]
    %v6529 = vld [vmem:[#allocation38 + $0x930] sm:$0xff]
    %v6530 = vld [vmem:[#allocation38 + $0x938] sm:$0xff]
    %v6531 = vld [vmem:[#allocation38 + $0x940] sm:$0xff]
    %v6532 = vld [vmem:[#allocation38 + $0x948] sm:$0xff]
    %v6533 = vld [vmem:[#allocation38 + $0x950] sm:$0xff]
    %v6534 = vld [vmem:[#allocation38 + $0x958] sm:$0xff]
    %v6535 = vld [vmem:[#allocation38 + $0x960] sm:$0xff]
    %v6536 = vld [vmem:[#allocation38 + $0x968] sm:$0xff]
    %v6537 = vld [vmem:[#allocation38 + $0x970] sm:$0xff]
    %v6538 = vld [vmem:[#allocation38 + $0x978] sm:$0xff]
    %v6539 = vld [vmem:[#allocation38 + $0x980] sm:$0xff]
    %v6540 = vld [vmem:[#allocation38 + $0x988] sm:$0xff]
    %v6541 = vld [vmem:[#allocation38 + $0x990] sm:$0xff]
    %v6542 = vld [vmem:[#allocation38 + $0x998] sm:$0xff]
    %v6543 = vld [vmem:[#allocation38 + $0x9a0] sm:$0xff]
    %v6544 = vld [vmem:[#allocation38 + $0x9a8] sm:$0xff]
    %v6545 = vld [vmem:[#allocation38 + $0x9b0] sm:$0xff]
    %v6546 = vld [vmem:[#allocation38 + $0x9b8] sm:$0xff]
    %v6547 = vld [vmem:[#allocation38 + $0x9c0] sm:$0xff]
    %v6548 = vld [vmem:[#allocation38 + $0x9c8] sm:$0xff]
    %v6549 = vld [vmem:[#allocation38 + $0x9d0] sm:$0xff]
    %v6550 = vld [vmem:[#allocation38 + $0x9d8] sm:$0xff]
    %v6551 = vld [vmem:[#allocation38 + $0x9e0] sm:$0xff]
    %v6552 = vld [vmem:[#allocation38 + $0x9e8] sm:$0xff]
    %v6553 = vld [vmem:[#allocation38 + $0x9f0] sm:$0xff]
    %v6554 = vld [vmem:[#allocation38 + $0x9f8] sm:$0xff]
    %v6555 = vld [vmem:[#allocation38 + $0xa00] sm:$0xff]
    %v6556 = vld [vmem:[#allocation38 + $0xa08] sm:$0xff]
    %v6557 = vld [vmem:[#allocation38 + $0xa10] sm:$0xff]
    %v6558 = vld [vmem:[#allocation38 + $0xa18] sm:$0xff]
    %v6559 = vld [vmem:[#allocation38 + $0xa20] sm:$0xff]
    %v6560 = vld [vmem:[#allocation38 + $0xa28] sm:$0xff]
    %v6561 = vld [vmem:[#allocation38 + $0xa30] sm:$0xff]
    %v6562 = vld [vmem:[#allocation38 + $0xa38] sm:$0xff]
    %v6563 = vld [vmem:[#allocation38 + $0xa40] sm:$0xff]
    %v6564 = vld [vmem:[#allocation38 + $0xa48] sm:$0xff]
    %v6565 = vld [vmem:[#allocation38 + $0xa50] sm:$0xff]
    %v6566 = vld [vmem:[#allocation38 + $0xa58] sm:$0xff]
    %v6567 = vld [vmem:[#allocation38 + $0xa60] sm:$0xff]
    %v6568 = vld [vmem:[#allocation38 + $0xa68] sm:$0xff]
    %v6569 = vld [vmem:[#allocation38 + $0xa70] sm:$0xff]
    %v6570 = vld [vmem:[#allocation38 + $0xa78] sm:$0xff]
    %v6571 = vld [vmem:[#allocation38 + $0xa80] sm:$0xff]
    %v6572 = vld [vmem:[#allocation38 + $0xa88] sm:$0xff]
    %v6573 = vld [vmem:[#allocation38 + $0xa90] sm:$0xff]
    %v6574 = vld [vmem:[#allocation38 + $0xa98] sm:$0xff]
    %v6575 = vld [vmem:[#allocation38 + $0xaa0] sm:$0xff]
    %v6576 = vld [vmem:[#allocation38 + $0xaa8] sm:$0xff]
    %v6577 = vld [vmem:[#allocation38 + $0xab0] sm:$0xff]
    %v6578 = vld [vmem:[#allocation38 + $0xab8] sm:$0xff]
    %v6579 = vld [vmem:[#allocation38 + $0xac0] sm:$0xff]
    %v6580 = vld [vmem:[#allocation38 + $0xac8] sm:$0xff]
    %v6581 = vld [vmem:[#allocation38 + $0xad0] sm:$0xff]
    %v6582 = vld [vmem:[#allocation38 + $0xad8] sm:$0xff]
    %v6583 = vld [vmem:[#allocation38 + $0xae0] sm:$0xff]
    %v6584 = vld [vmem:[#allocation38 + $0xae8] sm:$0xff]
    %v6585 = vld [vmem:[#allocation38 + $0xaf0] sm:$0xff]
    %v6586 = vld [vmem:[#allocation38 + $0xaf8] sm:$0xff]
    %v6587 = vld [vmem:[#allocation38 + $0xb00] sm:$0xff]
    %v6588 = vld [vmem:[#allocation38 + $0xb08] sm:$0xff]
    %v6589 = vld [vmem:[#allocation38 + $0xb10] sm:$0xff]
    %v6590 = vld [vmem:[#allocation38 + $0xb18] sm:$0xff]
    %v6591 = vld [vmem:[#allocation38 + $0xb20] sm:$0xff]
    %v6592 = vld [vmem:[#allocation38 + $0xb28] sm:$0xff]
    %v6593 = vld [vmem:[#allocation38 + $0xb30] sm:$0xff]
    %v6594 = vld [vmem:[#allocation38 + $0xb38] sm:$0xff]
    %v6595 = vld [vmem:[#allocation38 + $0xb40] sm:$0xff]
    %v6596 = vld [vmem:[#allocation38 + $0xb48] sm:$0xff]
    %v6597 = vld [vmem:[#allocation38 + $0xb50] sm:$0xff]
    %v6598 = vld [vmem:[#allocation38 + $0xb58] sm:$0xff]
    %v6599 = vld [vmem:[#allocation38 + $0xb60] sm:$0xff]
    %v6600 = vld [vmem:[#allocation38 + $0xb68] sm:$0xff]
    %v6601 = vld [vmem:[#allocation38 + $0xb70] sm:$0xff]
    %v6602 = vld [vmem:[#allocation38 + $0xb78] sm:$0xff]
    %v6603 = vld [vmem:[#allocation38 + $0xb80] sm:$0xff]
    %v6604 = vld [vmem:[#allocation38 + $0xb88] sm:$0xff]
    %v6605 = vld [vmem:[#allocation38 + $0xb90] sm:$0xff]
    %v6606 = vld [vmem:[#allocation38 + $0xb98] sm:$0xff]
    %v6607 = vld [vmem:[#allocation38 + $0xba0] sm:$0xff]
    %v6608 = vld [vmem:[#allocation38 + $0xba8] sm:$0xff]
    %v6609 = vld [vmem:[#allocation38 + $0xbb0] sm:$0xff]
    %v6610 = vld [vmem:[#allocation38 + $0xbb8] sm:$0xff]
    %v6611 = vld [vmem:[#allocation38 + $0xbc0] sm:$0xff]
    %v6612 = vld [vmem:[#allocation38 + $0xbc8] sm:$0xff]
    %v6613 = vld [vmem:[#allocation38 + $0xbd0] sm:$0xff]
    %v6614 = vld [vmem:[#allocation38 + $0xbd8] sm:$0xff]
    %v6615 = vld [vmem:[#allocation38 + $0xbe0] sm:$0xff]
    %v6616 = vld [vmem:[#allocation38 + $0xbe8] sm:$0xff]
    %v6617 = vld [vmem:[#allocation38 + $0xbf0] sm:$0xff]
    %v6618 = vld [vmem:[#allocation38 + $0xbf8] sm:$0xff]
    %6619 = vmatpush.msra.mxu0 %v6295
    %6620 = vmatpush.msra.mxu0 %v6291
    %6621 = vmatpush.msra.mxu0 %v6287
    %6622 = vmatpush.msra.mxu0 %v6283
    %6623 = vmatpush.msra.mxu0 %v6279
    %6624 = vmatpush.msra.mxu0 %v6275
    %6625 = vmatpush.msra.mxu0 %v6271
    %6626 = vmatpush.msra.mxu0 %v6267
    %6627 = vmatpush.msra.mxu0 %v6263
    %6628 = vmatpush.msra.mxu0 %v6259
    %6629 = vmatpush.msra.mxu0 %v6255
    %6630 = vmatpush.msra.mxu0 %v6251
    %6631 = vmatpush.msra.mxu0 %v6247
    %6632 = vmatpush.msra.mxu0 %v6243
    %6633 = vmatpush.msra.mxu0 %v6239
    %6634 = vmatpush.msra.mxu0 %v6235
    %6635 = vmatmul.f32.gmra.mxu0 %v6199
    %v6636 = vpop.f32.mrf.mxu0
    %v6637 = vadd.f32 0.0, %v6636
    %6638 = vmatmul.f32.gmra.mxu0 %v6205
    %v6639 = vpop.f32.mrf.mxu0
    %v6640 = vadd.f32 0.0, %v6639
    %6641 = vmatmul.f32.gmra.mxu0 %v6211
    %v6642 = vpop.f32.mrf.mxu0
    %v6643 = vadd.f32 0.0, %v6642
    %6644 = vmatmul.f32.gmra.mxu0 %v6217
    %v6645 = vpop.f32.mrf.mxu0
    %v6646 = vadd.f32 0.0, %v6645
    %6647 = vmatmul.f32.gmra.mxu0 %v6223
    %v6648 = vpop.f32.mrf.mxu0
    %v6649 = vadd.f32 0.0, %v6648
    %6650 = vmatmul.f32.gmra.mxu0 %v6229
    %v6651 = vpop.f32.mrf.mxu0
    %v6652 = vadd.f32 0.0, %v6651
    %6653 = vdwg.mxu0
    %6654 = vmatpush.msra.mxu0 %v6359
    %6655 = vmatpush.msra.mxu0 %v6355
    %6656 = vmatpush.msra.mxu0 %v6351
    %6657 = vmatpush.msra.mxu0 %v6347
    %6658 = vmatpush.msra.mxu0 %v6343
    %6659 = vmatpush.msra.mxu0 %v6339
    %6660 = vmatpush.msra.mxu0 %v6335
    %6661 = vmatpush.msra.mxu0 %v6331
    %6662 = vmatpush.msra.mxu0 %v6327
    %6663 = vmatpush.msra.mxu0 %v6323
    %6664 = vmatpush.msra.mxu0 %v6319
    %6665 = vmatpush.msra.mxu0 %v6315
    %6666 = vmatpush.msra.mxu0 %v6311
    %6667 = vmatpush.msra.mxu0 %v6307
    %6668 = vmatpush.msra.mxu0 %v6303
    %6669 = vmatpush.msra.mxu0 %v6299
    %6670 = vmatmul.f32.gmra.mxu0 %v6200
    %v6671 = vpop.f32.mrf.mxu0
    %v6672 = vadd.f32 %v6637, %v6671
    %6673 = vmatmul.f32.gmra.mxu0 %v6206
    %v6674 = vpop.f32.mrf.mxu0
    %v6675 = vadd.f32 %v6640, %v6674
    %6676 = vmatmul.f32.gmra.mxu0 %v6212
    %v6677 = vpop.f32.mrf.mxu0
    %v6678 = vadd.f32 %v6643, %v6677
    %6679 = vmatmul.f32.gmra.mxu0 %v6218
    %v6680 = vpop.f32.mrf.mxu0
    %v6681 = vadd.f32 %v6646, %v6680
    %6682 = vmatmul.f32.gmra.mxu0 %v6224
    %v6683 = vpop.f32.mrf.mxu0
    %v6684 = vadd.f32 %v6649, %v6683
    %6685 = vmatmul.f32.gmra.mxu0 %v6230
    %v6686 = vpop.f32.mrf.mxu0
    %v6687 = vadd.f32 %v6652, %v6686
    %6688 = vdwg.mxu0
    %6689 = vmatpush.msra.mxu0 %v6423
    %6690 = vmatpush.msra.mxu0 %v6419
    %6691 = vmatpush.msra.mxu0 %v6415
    %6692 = vmatpush.msra.mxu0 %v6411
    %6693 = vmatpush.msra.mxu0 %v6407
    %6694 = vmatpush.msra.mxu0 %v6403
    %6695 = vmatpush.msra.mxu0 %v6399
    %6696 = vmatpush.msra.mxu0 %v6395
    %6697 = vmatpush.msra.mxu0 %v6391
    %6698 = vmatpush.msra.mxu0 %v6387
    %6699 = vmatpush.msra.mxu0 %v6383
    %6700 = vmatpush.msra.mxu0 %v6379
    %6701 = vmatpush.msra.mxu0 %v6375
    %6702 = vmatpush.msra.mxu0 %v6371
    %6703 = vmatpush.msra.mxu0 %v6367
    %6704 = vmatpush.msra.mxu0 %v6363
    %6705 = vmatmul.f32.gmra.mxu0 %v6201
    %v6706 = vpop.f32.mrf.mxu0
    %v6707 = vadd.f32 %v6672, %v6706
    %6708 = vmatmul.f32.gmra.mxu0 %v6207
    %v6709 = vpop.f32.mrf.mxu0
    %v6710 = vadd.f32 %v6675, %v6709
    %6711 = vmatmul.f32.gmra.mxu0 %v6213
    %v6712 = vpop.f32.mrf.mxu0
    %v6713 = vadd.f32 %v6678, %v6712
    %6714 = vmatmul.f32.gmra.mxu0 %v6219
    %v6715 = vpop.f32.mrf.mxu0
    %v6716 = vadd.f32 %v6681, %v6715
    %6717 = vmatmul.f32.gmra.mxu0 %v6225
    %v6718 = vpop.f32.mrf.mxu0
    %v6719 = vadd.f32 %v6684, %v6718
    %6720 = vmatmul.f32.gmra.mxu0 %v6231
    %v6721 = vpop.f32.mrf.mxu0
    %v6722 = vadd.f32 %v6687, %v6721
    %6723 = vdwg.mxu0
    %6724 = vmatpush.msra.mxu0 %v6487
    %6725 = vmatpush.msra.mxu0 %v6483
    %6726 = vmatpush.msra.mxu0 %v6479
    %6727 = vmatpush.msra.mxu0 %v6475
    %6728 = vmatpush.msra.mxu0 %v6471
    %6729 = vmatpush.msra.mxu0 %v6467
    %6730 = vmatpush.msra.mxu0 %v6463
    %6731 = vmatpush.msra.mxu0 %v6459
    %6732 = vmatpush.msra.mxu0 %v6455
    %6733 = vmatpush.msra.mxu0 %v6451
    %6734 = vmatpush.msra.mxu0 %v6447
    %6735 = vmatpush.msra.mxu0 %v6443
    %6736 = vmatpush.msra.mxu0 %v6439
    %6737 = vmatpush.msra.mxu0 %v6435
    %6738 = vmatpush.msra.mxu0 %v6431
    %6739 = vmatpush.msra.mxu0 %v6427
    %6740 = vmatmul.f32.gmra.mxu0 %v6202
    %v6741 = vpop.f32.mrf.mxu0
    %v6742 = vadd.f32 %v6707, %v6741
    %6743 = vmatmul.f32.gmra.mxu0 %v6208
    %v6744 = vpop.f32.mrf.mxu0
    %v6745 = vadd.f32 %v6710, %v6744
    %6746 = vmatmul.f32.gmra.mxu0 %v6214
    %v6747 = vpop.f32.mrf.mxu0
    %v6748 = vadd.f32 %v6713, %v6747
    %6749 = vmatmul.f32.gmra.mxu0 %v6220
    %v6750 = vpop.f32.mrf.mxu0
    %v6751 = vadd.f32 %v6716, %v6750
    %6752 = vmatmul.f32.gmra.mxu0 %v6226
    %v6753 = vpop.f32.mrf.mxu0
    %v6754 = vadd.f32 %v6719, %v6753
    %6755 = vmatmul.f32.gmra.mxu0 %v6232
    %v6756 = vpop.f32.mrf.mxu0
    %v6757 = vadd.f32 %v6722, %v6756
    %6758 = vdwg.mxu0
    %6759 = vmatpush.msra.mxu0 %v6551
    %6760 = vmatpush.msra.mxu0 %v6547
    %6761 = vmatpush.msra.mxu0 %v6543
    %6762 = vmatpush.msra.mxu0 %v6539
    %6763 = vmatpush.msra.mxu0 %v6535
    %6764 = vmatpush.msra.mxu0 %v6531
    %6765 = vmatpush.msra.mxu0 %v6527
    %6766 = vmatpush.msra.mxu0 %v6523
    %6767 = vmatpush.msra.mxu0 %v6519
    %6768 = vmatpush.msra.mxu0 %v6515
    %6769 = vmatpush.msra.mxu0 %v6511
    %6770 = vmatpush.msra.mxu0 %v6507
    %6771 = vmatpush.msra.mxu0 %v6503
    %6772 = vmatpush.msra.mxu0 %v6499
    %6773 = vmatpush.msra.mxu0 %v6495
    %6774 = vmatpush.msra.mxu0 %v6491
    %6775 = vmatmul.f32.gmra.mxu0 %v6203
    %v6776 = vpop.f32.mrf.mxu0
    %v6777 = vadd.f32 %v6742, %v6776
    %6778 = vmatmul.f32.gmra.mxu0 %v6209
    %v6779 = vpop.f32.mrf.mxu0
    %v6780 = vadd.f32 %v6745, %v6779
    %6781 = vmatmul.f32.gmra.mxu0 %v6215
    %v6782 = vpop.f32.mrf.mxu0
    %v6783 = vadd.f32 %v6748, %v6782
    %6784 = vmatmul.f32.gmra.mxu0 %v6221
    %v6785 = vpop.f32.mrf.mxu0
    %v6786 = vadd.f32 %v6751, %v6785
    %6787 = vmatmul.f32.gmra.mxu0 %v6227
    %v6788 = vpop.f32.mrf.mxu0
    %v6789 = vadd.f32 %v6754, %v6788
    %6790 = vmatmul.f32.gmra.mxu0 %v6233
    %v6791 = vpop.f32.mrf.mxu0
    %v6792 = vadd.f32 %v6757, %v6791
    %6793 = vdwg.mxu0
    %6794 = vmatpush.msra.mxu0 %v6615
    %6795 = vmatpush.msra.mxu0 %v6611
    %6796 = vmatpush.msra.mxu0 %v6607
    %6797 = vmatpush.msra.mxu0 %v6603
    %6798 = vmatpush.msra.mxu0 %v6599
    %6799 = vmatpush.msra.mxu0 %v6595
    %6800 = vmatpush.msra.mxu0 %v6591
    %6801 = vmatpush.msra.mxu0 %v6587
    %6802 = vmatpush.msra.mxu0 %v6583
    %6803 = vmatpush.msra.mxu0 %v6579
    %6804 = vmatpush.msra.mxu0 %v6575
    %6805 = vmatpush.msra.mxu0 %v6571
    %6806 = vmatpush.msra.mxu0 %v6567
    %6807 = vmatpush.msra.mxu0 %v6563
    %6808 = vmatpush.msra.mxu0 %v6559
    %6809 = vmatpush.msra.mxu0 %v6555
    %6810 = vmatmul.f32.gmra.mxu0 %v6204
    %v6811 = vpop.f32.mrf.mxu0
    %v6812 = vadd.f32 %v6777, %v6811
    %6813 = vmatmul.f32.gmra.mxu0 %v6210
    %v6814 = vpop.f32.mrf.mxu0
    %v6815 = vadd.f32 %v6780, %v6814
    %6816 = vmatmul.f32.gmra.mxu0 %v6216
    %v6817 = vpop.f32.mrf.mxu0
    %v6818 = vadd.f32 %v6783, %v6817
    %6819 = vmatmul.f32.gmra.mxu0 %v6222
    %v6820 = vpop.f32.mrf.mxu0
    %v6821 = vadd.f32 %v6786, %v6820
    %6822 = vmatmul.f32.gmra.mxu0 %v6228
    %v6823 = vpop.f32.mrf.mxu0
    %v6824 = vadd.f32 %v6789, %v6823
    %6825 = vmatmul.f32.gmra.mxu0 %v6234
    %v6826 = vpop.f32.mrf.mxu0
    %v6827 = vadd.f32 %v6792, %v6826
    %6828 = vdwg.mxu0
    %6829 = vmatpush.msra.mxu0 %v6296
    %6830 = vmatpush.msra.mxu0 %v6292
    %6831 = vmatpush.msra.mxu0 %v6288
    %6832 = vmatpush.msra.mxu0 %v6284
    %6833 = vmatpush.msra.mxu0 %v6280
    %6834 = vmatpush.msra.mxu0 %v6276
    %6835 = vmatpush.msra.mxu0 %v6272
    %6836 = vmatpush.msra.mxu0 %v6268
    %6837 = vmatpush.msra.mxu0 %v6264
    %6838 = vmatpush.msra.mxu0 %v6260
    %6839 = vmatpush.msra.mxu0 %v6256
    %6840 = vmatpush.msra.mxu0 %v6252
    %6841 = vmatpush.msra.mxu0 %v6248
    %6842 = vmatpush.msra.mxu0 %v6244
    %6843 = vmatpush.msra.mxu0 %v6240
    %6844 = vmatpush.msra.mxu0 %v6236
    %6845 = vmatmul.f32.gmra.mxu0 %v6199
    %v6846 = vpop.f32.mrf.mxu0
    %v6847 = vadd.f32 0.0, %v6846
    %6848 = vmatmul.f32.gmra.mxu0 %v6205
    %v6849 = vpop.f32.mrf.mxu0
    %v6850 = vadd.f32 0.0, %v6849
    %6851 = vmatmul.f32.gmra.mxu0 %v6211
    %v6852 = vpop.f32.mrf.mxu0
    %v6853 = vadd.f32 0.0, %v6852
    %6854 = vmatmul.f32.gmra.mxu0 %v6217
    %v6855 = vpop.f32.mrf.mxu0
    %v6856 = vadd.f32 0.0, %v6855
    %6857 = vmatmul.f32.gmra.mxu0 %v6223
    %v6858 = vpop.f32.mrf.mxu0
    %v6859 = vadd.f32 0.0, %v6858
    %6860 = vmatmul.f32.gmra.mxu0 %v6229
    %v6861 = vpop.f32.mrf.mxu0
    %v6862 = vadd.f32 0.0, %v6861
    %6863 = vdwg.mxu0
    %6864 = vmatpush.msra.mxu0 %v6360
    %6865 = vmatpush.msra.mxu0 %v6356
    %6866 = vmatpush.msra.mxu0 %v6352
    %6867 = vmatpush.msra.mxu0 %v6348
    %6868 = vmatpush.msra.mxu0 %v6344
    %6869 = vmatpush.msra.mxu0 %v6340
    %6870 = vmatpush.msra.mxu0 %v6336
    %6871 = vmatpush.msra.mxu0 %v6332
    %6872 = vmatpush.msra.mxu0 %v6328
    %6873 = vmatpush.msra.mxu0 %v6324
    %6874 = vmatpush.msra.mxu0 %v6320
    %6875 = vmatpush.msra.mxu0 %v6316
    %6876 = vmatpush.msra.mxu0 %v6312
    %6877 = vmatpush.msra.mxu0 %v6308
    %6878 = vmatpush.msra.mxu0 %v6304
    %6879 = vmatpush.msra.mxu0 %v6300
    %6880 = vmatmul.f32.gmra.mxu0 %v6200
    %v6881 = vpop.f32.mrf.mxu0
    %v6882 = vadd.f32 %v6847, %v6881
    %6883 = vmatmul.f32.gmra.mxu0 %v6206
    %v6884 = vpop.f32.mrf.mxu0
    %v6885 = vadd.f32 %v6850, %v6884
    %6886 = vmatmul.f32.gmra.mxu0 %v6212
    %v6887 = vpop.f32.mrf.mxu0
    %v6888 = vadd.f32 %v6853, %v6887
    %6889 = vmatmul.f32.gmra.mxu0 %v6218
    %v6890 = vpop.f32.mrf.mxu0
    %v6891 = vadd.f32 %v6856, %v6890
    %6892 = vmatmul.f32.gmra.mxu0 %v6224
    %v6893 = vpop.f32.mrf.mxu0
    %v6894 = vadd.f32 %v6859, %v6893
    %6895 = vmatmul.f32.gmra.mxu0 %v6230
    %v6896 = vpop.f32.mrf.mxu0
    %v6897 = vadd.f32 %v6862, %v6896
    %6898 = vdwg.mxu0
    %6899 = vmatpush.msra.mxu0 %v6424
    %6900 = vmatpush.msra.mxu0 %v6420
    %6901 = vmatpush.msra.mxu0 %v6416
    %6902 = vmatpush.msra.mxu0 %v6412
    %6903 = vmatpush.msra.mxu0 %v6408
    %6904 = vmatpush.msra.mxu0 %v6404
    %6905 = vmatpush.msra.mxu0 %v6400
    %6906 = vmatpush.msra.mxu0 %v6396
    %6907 = vmatpush.msra.mxu0 %v6392
    %6908 = vmatpush.msra.mxu0 %v6388
    %6909 = vmatpush.msra.mxu0 %v6384
    %6910 = vmatpush.msra.mxu0 %v6380
    %6911 = vmatpush.msra.mxu0 %v6376
    %6912 = vmatpush.msra.mxu0 %v6372
    %6913 = vmatpush.msra.mxu0 %v6368
    %6914 = vmatpush.msra.mxu0 %v6364
    %6915 = vmatmul.f32.gmra.mxu0 %v6201
    %v6916 = vpop.f32.mrf.mxu0
    %v6917 = vadd.f32 %v6882, %v6916
    %6918 = vmatmul.f32.gmra.mxu0 %v6207
    %v6919 = vpop.f32.mrf.mxu0
    %v6920 = vadd.f32 %v6885, %v6919
    %6921 = vmatmul.f32.gmra.mxu0 %v6213
    %v6922 = vpop.f32.mrf.mxu0
    %v6923 = vadd.f32 %v6888, %v6922
    %6924 = vmatmul.f32.gmra.mxu0 %v6219
    %v6925 = vpop.f32.mrf.mxu0
    %v6926 = vadd.f32 %v6891, %v6925
    %6927 = vmatmul.f32.gmra.mxu0 %v6225
    %v6928 = vpop.f32.mrf.mxu0
    %v6929 = vadd.f32 %v6894, %v6928
    %6930 = vmatmul.f32.gmra.mxu0 %v6231
    %v6931 = vpop.f32.mrf.mxu0
    %v6932 = vadd.f32 %v6897, %v6931
    %6933 = vdwg.mxu0
    %6934 = vmatpush.msra.mxu0 %v6488
    %6935 = vmatpush.msra.mxu0 %v6484
    %6936 = vmatpush.msra.mxu0 %v6480
    %6937 = vmatpush.msra.mxu0 %v6476
    %6938 = vmatpush.msra.mxu0 %v6472
    %6939 = vmatpush.msra.mxu0 %v6468
    %6940 = vmatpush.msra.mxu0 %v6464
    %6941 = vmatpush.msra.mxu0 %v6460
    %6942 = vmatpush.msra.mxu0 %v6456
    %6943 = vmatpush.msra.mxu0 %v6452
    %6944 = vmatpush.msra.mxu0 %v6448
    %6945 = vmatpush.msra.mxu0 %v6444
    %6946 = vmatpush.msra.mxu0 %v6440
    %6947 = vmatpush.msra.mxu0 %v6436
    %6948 = vmatpush.msra.mxu0 %v6432
    %6949 = vmatpush.msra.mxu0 %v6428
    %6950 = vmatmul.f32.gmra.mxu0 %v6202
    %v6951 = vpop.f32.mrf.mxu0
    %v6952 = vadd.f32 %v6917, %v6951
    %6953 = vmatmul.f32.gmra.mxu0 %v6208
    %v6954 = vpop.f32.mrf.mxu0
    %v6955 = vadd.f32 %v6920, %v6954
    %6956 = vmatmul.f32.gmra.mxu0 %v6214
    %v6957 = vpop.f32.mrf.mxu0
    %v6958 = vadd.f32 %v6923, %v6957
    %6959 = vmatmul.f32.gmra.mxu0 %v6220
    %v6960 = vpop.f32.mrf.mxu0
    %v6961 = vadd.f32 %v6926, %v6960
    %6962 = vmatmul.f32.gmra.mxu0 %v6226
    %v6963 = vpop.f32.mrf.mxu0
    %v6964 = vadd.f32 %v6929, %v6963
    %6965 = vmatmul.f32.gmra.mxu0 %v6232
    %v6966 = vpop.f32.mrf.mxu0
    %v6967 = vadd.f32 %v6932, %v6966
    %6968 = vdwg.mxu0
    %6969 = vmatpush.msra.mxu0 %v6552
    %6970 = vmatpush.msra.mxu0 %v6548
    %6971 = vmatpush.msra.mxu0 %v6544
    %6972 = vmatpush.msra.mxu0 %v6540
    %6973 = vmatpush.msra.mxu0 %v6536
    %6974 = vmatpush.msra.mxu0 %v6532
    %6975 = vmatpush.msra.mxu0 %v6528
    %6976 = vmatpush.msra.mxu0 %v6524
    %6977 = vmatpush.msra.mxu0 %v6520
    %6978 = vmatpush.msra.mxu0 %v6516
    %6979 = vmatpush.msra.mxu0 %v6512
    %6980 = vmatpush.msra.mxu0 %v6508
    %6981 = vmatpush.msra.mxu0 %v6504
    %6982 = vmatpush.msra.mxu0 %v6500
    %6983 = vmatpush.msra.mxu0 %v6496
    %6984 = vmatpush.msra.mxu0 %v6492
    %6985 = vmatmul.f32.gmra.mxu0 %v6203
    %v6986 = vpop.f32.mrf.mxu0
    %v6987 = vadd.f32 %v6952, %v6986
    %6988 = vmatmul.f32.gmra.mxu0 %v6209
    %v6989 = vpop.f32.mrf.mxu0
    %v6990 = vadd.f32 %v6955, %v6989
    %6991 = vmatmul.f32.gmra.mxu0 %v6215
    %v6992 = vpop.f32.mrf.mxu0
    %v6993 = vadd.f32 %v6958, %v6992
    %6994 = vmatmul.f32.gmra.mxu0 %v6221
    %v6995 = vpop.f32.mrf.mxu0
    %v6996 = vadd.f32 %v6961, %v6995
    %6997 = vmatmul.f32.gmra.mxu0 %v6227
    %v6998 = vpop.f32.mrf.mxu0
    %v6999 = vadd.f32 %v6964, %v6998
    %7000 = vmatmul.f32.gmra.mxu0 %v6233
    %v7001 = vpop.f32.mrf.mxu0
    %v7002 = vadd.f32 %v6967, %v7001
    %7003 = vdwg.mxu0
    %7004 = vmatpush.msra.mxu0 %v6616
    %7005 = vmatpush.msra.mxu0 %v6612
    %7006 = vmatpush.msra.mxu0 %v6608
    %7007 = vmatpush.msra.mxu0 %v6604
    %7008 = vmatpush.msra.mxu0 %v6600
    %7009 = vmatpush.msra.mxu0 %v6596
    %7010 = vmatpush.msra.mxu0 %v6592
    %7011 = vmatpush.msra.mxu0 %v6588
    %7012 = vmatpush.msra.mxu0 %v6584
    %7013 = vmatpush.msra.mxu0 %v6580
    %7014 = vmatpush.msra.mxu0 %v6576
    %7015 = vmatpush.msra.mxu0 %v6572
    %7016 = vmatpush.msra.mxu0 %v6568
    %7017 = vmatpush.msra.mxu0 %v6564
    %7018 = vmatpush.msra.mxu0 %v6560
    %7019 = vmatpush.msra.mxu0 %v6556
    %7020 = vmatmul.f32.gmra.mxu0 %v6204
    %v7021 = vpop.f32.mrf.mxu0
    %v7022 = vadd.f32 %v6987, %v7021
    %7023 = vmatmul.f32.gmra.mxu0 %v6210
    %v7024 = vpop.f32.mrf.mxu0
    %v7025 = vadd.f32 %v6990, %v7024
    %7026 = vmatmul.f32.gmra.mxu0 %v6216
    %v7027 = vpop.f32.mrf.mxu0
    %v7028 = vadd.f32 %v6993, %v7027
    %7029 = vmatmul.f32.gmra.mxu0 %v6222
    %v7030 = vpop.f32.mrf.mxu0
    %v7031 = vadd.f32 %v6996, %v7030
    %7032 = vmatmul.f32.gmra.mxu0 %v6228
    %v7033 = vpop.f32.mrf.mxu0
    %v7034 = vadd.f32 %v6999, %v7033
    %7035 = vmatmul.f32.gmra.mxu0 %v6234
    %v7036 = vpop.f32.mrf.mxu0
    %v7037 = vadd.f32 %v7002, %v7036
    %7038 = vdwg.mxu0
    %7039 = vmatpush.msra.mxu0 %v6297
    %7040 = vmatpush.msra.mxu0 %v6293
    %7041 = vmatpush.msra.mxu0 %v6289
    %7042 = vmatpush.msra.mxu0 %v6285
    %7043 = vmatpush.msra.mxu0 %v6281
    %7044 = vmatpush.msra.mxu0 %v6277
    %7045 = vmatpush.msra.mxu0 %v6273
    %7046 = vmatpush.msra.mxu0 %v6269
    %7047 = vmatpush.msra.mxu0 %v6265
    %7048 = vmatpush.msra.mxu0 %v6261
    %7049 = vmatpush.msra.mxu0 %v6257
    %7050 = vmatpush.msra.mxu0 %v6253
    %7051 = vmatpush.msra.mxu0 %v6249
    %7052 = vmatpush.msra.mxu0 %v6245
    %7053 = vmatpush.msra.mxu0 %v6241
    %7054 = vmatpush.msra.mxu0 %v6237
    %7055 = vmatmul.f32.gmra.mxu0 %v6199
    %v7056 = vpop.f32.mrf.mxu0
    %v7057 = vadd.f32 0.0, %v7056
    %7058 = vmatmul.f32.gmra.mxu0 %v6205
    %v7059 = vpop.f32.mrf.mxu0
    %v7060 = vadd.f32 0.0, %v7059
    %7061 = vmatmul.f32.gmra.mxu0 %v6211
    %v7062 = vpop.f32.mrf.mxu0
    %v7063 = vadd.f32 0.0, %v7062
    %7064 = vmatmul.f32.gmra.mxu0 %v6217
    %v7065 = vpop.f32.mrf.mxu0
    %v7066 = vadd.f32 0.0, %v7065
    %7067 = vmatmul.f32.gmra.mxu0 %v6223
    %v7068 = vpop.f32.mrf.mxu0
    %v7069 = vadd.f32 0.0, %v7068
    %7070 = vmatmul.f32.gmra.mxu0 %v6229
    %v7071 = vpop.f32.mrf.mxu0
    %v7072 = vadd.f32 0.0, %v7071
    %7073 = vdwg.mxu0
    %7074 = vmatpush.msra.mxu0 %v6361
    %7075 = vmatpush.msra.mxu0 %v6357
    %7076 = vmatpush.msra.mxu0 %v6353
    %7077 = vmatpush.msra.mxu0 %v6349
    %7078 = vmatpush.msra.mxu0 %v6345
    %7079 = vmatpush.msra.mxu0 %v6341
    %7080 = vmatpush.msra.mxu0 %v6337
    %7081 = vmatpush.msra.mxu0 %v6333
    %7082 = vmatpush.msra.mxu0 %v6329
    %7083 = vmatpush.msra.mxu0 %v6325
    %7084 = vmatpush.msra.mxu0 %v6321
    %7085 = vmatpush.msra.mxu0 %v6317
    %7086 = vmatpush.msra.mxu0 %v6313
    %7087 = vmatpush.msra.mxu0 %v6309
    %7088 = vmatpush.msra.mxu0 %v6305
    %7089 = vmatpush.msra.mxu0 %v6301
    %7090 = vmatmul.f32.gmra.mxu0 %v6200
    %v7091 = vpop.f32.mrf.mxu0
    %v7092 = vadd.f32 %v7057, %v7091
    %7093 = vmatmul.f32.gmra.mxu0 %v6206
    %v7094 = vpop.f32.mrf.mxu0
    %v7095 = vadd.f32 %v7060, %v7094
    %7096 = vmatmul.f32.gmra.mxu0 %v6212
    %v7097 = vpop.f32.mrf.mxu0
    %v7098 = vadd.f32 %v7063, %v7097
    %7099 = vmatmul.f32.gmra.mxu0 %v6218
    %v7100 = vpop.f32.mrf.mxu0
    %v7101 = vadd.f32 %v7066, %v7100
    %7102 = vmatmul.f32.gmra.mxu0 %v6224
    %v7103 = vpop.f32.mrf.mxu0
    %v7104 = vadd.f32 %v7069, %v7103
    %7105 = vmatmul.f32.gmra.mxu0 %v6230
    %v7106 = vpop.f32.mrf.mxu0
    %v7107 = vadd.f32 %v7072, %v7106
    %7108 = vdwg.mxu0
    %7109 = vmatpush.msra.mxu0 %v6425
    %7110 = vmatpush.msra.mxu0 %v6421
    %7111 = vmatpush.msra.mxu0 %v6417
    %7112 = vmatpush.msra.mxu0 %v6413
    %7113 = vmatpush.msra.mxu0 %v6409
    %7114 = vmatpush.msra.mxu0 %v6405
    %7115 = vmatpush.msra.mxu0 %v6401
    %7116 = vmatpush.msra.mxu0 %v6397
    %7117 = vmatpush.msra.mxu0 %v6393
    %7118 = vmatpush.msra.mxu0 %v6389
    %7119 = vmatpush.msra.mxu0 %v6385
    %7120 = vmatpush.msra.mxu0 %v6381
    %7121 = vmatpush.msra.mxu0 %v6377
    %7122 = vmatpush.msra.mxu0 %v6373
    %7123 = vmatpush.msra.mxu0 %v6369
    %7124 = vmatpush.msra.mxu0 %v6365
    %7125 = vmatmul.f32.gmra.mxu0 %v6201
    %v7126 = vpop.f32.mrf.mxu0
    %v7127 = vadd.f32 %v7092, %v7126
    %7128 = vmatmul.f32.gmra.mxu0 %v6207
    %v7129 = vpop.f32.mrf.mxu0
    %v7130 = vadd.f32 %v7095, %v7129
    %7131 = vmatmul.f32.gmra.mxu0 %v6213
    %v7132 = vpop.f32.mrf.mxu0
    %v7133 = vadd.f32 %v7098, %v7132
    %7134 = vmatmul.f32.gmra.mxu0 %v6219
    %v7135 = vpop.f32.mrf.mxu0
    %v7136 = vadd.f32 %v7101, %v7135
    %7137 = vmatmul.f32.gmra.mxu0 %v6225
    %v7138 = vpop.f32.mrf.mxu0
    %v7139 = vadd.f32 %v7104, %v7138
    %7140 = vmatmul.f32.gmra.mxu0 %v6231
    %v7141 = vpop.f32.mrf.mxu0
    %v7142 = vadd.f32 %v7107, %v7141
    %7143 = vdwg.mxu0
    %7144 = vmatpush.msra.mxu0 %v6489
    %7145 = vmatpush.msra.mxu0 %v6485
    %7146 = vmatpush.msra.mxu0 %v6481
    %7147 = vmatpush.msra.mxu0 %v6477
    %7148 = vmatpush.msra.mxu0 %v6473
    %7149 = vmatpush.msra.mxu0 %v6469
    %7150 = vmatpush.msra.mxu0 %v6465
    %7151 = vmatpush.msra.mxu0 %v6461
    %7152 = vmatpush.msra.mxu0 %v6457
    %7153 = vmatpush.msra.mxu0 %v6453
    %7154 = vmatpush.msra.mxu0 %v6449
    %7155 = vmatpush.msra.mxu0 %v6445
    %7156 = vmatpush.msra.mxu0 %v6441
    %7157 = vmatpush.msra.mxu0 %v6437
    %7158 = vmatpush.msra.mxu0 %v6433
    %7159 = vmatpush.msra.mxu0 %v6429
    %7160 = vmatmul.f32.gmra.mxu0 %v6202
    %v7161 = vpop.f32.mrf.mxu0
    %v7162 = vadd.f32 %v7127, %v7161
    %7163 = vmatmul.f32.gmra.mxu0 %v6208
    %v7164 = vpop.f32.mrf.mxu0
    %v7165 = vadd.f32 %v7130, %v7164
    %7166 = vmatmul.f32.gmra.mxu0 %v6214
    %v7167 = vpop.f32.mrf.mxu0
    %v7168 = vadd.f32 %v7133, %v7167
    %7169 = vmatmul.f32.gmra.mxu0 %v6220
    %v7170 = vpop.f32.mrf.mxu0
    %v7171 = vadd.f32 %v7136, %v7170
    %7172 = vmatmul.f32.gmra.mxu0 %v6226
    %v7173 = vpop.f32.mrf.mxu0
    %v7174 = vadd.f32 %v7139, %v7173
    %7175 = vmatmul.f32.gmra.mxu0 %v6232
    %v7176 = vpop.f32.mrf.mxu0
    %v7177 = vadd.f32 %v7142, %v7176
    %7178 = vdwg.mxu0
    %7179 = vmatpush.msra.mxu0 %v6553
    %7180 = vmatpush.msra.mxu0 %v6549
    %7181 = vmatpush.msra.mxu0 %v6545
    %7182 = vmatpush.msra.mxu0 %v6541
    %7183 = vmatpush.msra.mxu0 %v6537
    %7184 = vmatpush.msra.mxu0 %v6533
    %7185 = vmatpush.msra.mxu0 %v6529
    %7186 = vmatpush.msra.mxu0 %v6525
    %7187 = vmatpush.msra.mxu0 %v6521
    %7188 = vmatpush.msra.mxu0 %v6517
    %7189 = vmatpush.msra.mxu0 %v6513
    %7190 = vmatpush.msra.mxu0 %v6509
    %7191 = vmatpush.msra.mxu0 %v6505
    %7192 = vmatpush.msra.mxu0 %v6501
    %7193 = vmatpush.msra.mxu0 %v6497
    %7194 = vmatpush.msra.mxu0 %v6493
    %7195 = vmatmul.f32.gmra.mxu0 %v6203
    %v7196 = vpop.f32.mrf.mxu0
    %v7197 = vadd.f32 %v7162, %v7196
    %7198 = vmatmul.f32.gmra.mxu0 %v6209
    %v7199 = vpop.f32.mrf.mxu0
    %v7200 = vadd.f32 %v7165, %v7199
    %7201 = vmatmul.f32.gmra.mxu0 %v6215
    %v7202 = vpop.f32.mrf.mxu0
    %v7203 = vadd.f32 %v7168, %v7202
    %7204 = vmatmul.f32.gmra.mxu0 %v6221
    %v7205 = vpop.f32.mrf.mxu0
    %v7206 = vadd.f32 %v7171, %v7205
    %7207 = vmatmul.f32.gmra.mxu0 %v6227
    %v7208 = vpop.f32.mrf.mxu0
    %v7209 = vadd.f32 %v7174, %v7208
    %7210 = vmatmul.f32.gmra.mxu0 %v6233
    %v7211 = vpop.f32.mrf.mxu0
    %v7212 = vadd.f32 %v7177, %v7211
    %7213 = vdwg.mxu0
    %7214 = vmatpush.msra.mxu0 %v6617
    %7215 = vmatpush.msra.mxu0 %v6613
    %7216 = vmatpush.msra.mxu0 %v6609
    %7217 = vmatpush.msra.mxu0 %v6605
    %7218 = vmatpush.msra.mxu0 %v6601
    %7219 = vmatpush.msra.mxu0 %v6597
    %7220 = vmatpush.msra.mxu0 %v6593
    %7221 = vmatpush.msra.mxu0 %v6589
    %7222 = vmatpush.msra.mxu0 %v6585
    %7223 = vmatpush.msra.mxu0 %v6581
    %7224 = vmatpush.msra.mxu0 %v6577
    %7225 = vmatpush.msra.mxu0 %v6573
    %7226 = vmatpush.msra.mxu0 %v6569
    %7227 = vmatpush.msra.mxu0 %v6565
    %7228 = vmatpush.msra.mxu0 %v6561
    %7229 = vmatpush.msra.mxu0 %v6557
    %7230 = vmatmul.f32.gmra.mxu0 %v6204
    %v7231 = vpop.f32.mrf.mxu0
    %v7232 = vadd.f32 %v7197, %v7231
    %7233 = vmatmul.f32.gmra.mxu0 %v6210
    %v7234 = vpop.f32.mrf.mxu0
    %v7235 = vadd.f32 %v7200, %v7234
    %7236 = vmatmul.f32.gmra.mxu0 %v6216
    %v7237 = vpop.f32.mrf.mxu0
    %v7238 = vadd.f32 %v7203, %v7237
    %7239 = vmatmul.f32.gmra.mxu0 %v6222
    %v7240 = vpop.f32.mrf.mxu0
    %v7241 = vadd.f32 %v7206, %v7240
    %7242 = vmatmul.f32.gmra.mxu0 %v6228
    %v7243 = vpop.f32.mrf.mxu0
    %v7244 = vadd.f32 %v7209, %v7243
    %7245 = vmatmul.f32.gmra.mxu0 %v6234
    %v7246 = vpop.f32.mrf.mxu0
    %v7247 = vadd.f32 %v7212, %v7246
    %7248 = vdwg.mxu0
    %7249 = vmatpush.msra.mxu0 %v6298
    %7250 = vmatpush.msra.mxu0 %v6294
    %7251 = vmatpush.msra.mxu0 %v6290
    %7252 = vmatpush.msra.mxu0 %v6286
    %7253 = vmatpush.msra.mxu0 %v6282
    %7254 = vmatpush.msra.mxu0 %v6278
    %7255 = vmatpush.msra.mxu0 %v6274
    %7256 = vmatpush.msra.mxu0 %v6270
    %7257 = vmatpush.msra.mxu0 %v6266
    %7258 = vmatpush.msra.mxu0 %v6262
    %7259 = vmatpush.msra.mxu0 %v6258
    %7260 = vmatpush.msra.mxu0 %v6254
    %7261 = vmatpush.msra.mxu0 %v6250
    %7262 = vmatpush.msra.mxu0 %v6246
    %7263 = vmatpush.msra.mxu0 %v6242
    %7264 = vmatpush.msra.mxu0 %v6238
    %7265 = vmatmul.f32.gmra.mxu0 %v6199
    %v7266 = vpop.f32.mrf.mxu0
    %v7267 = vadd.f32 0.0, %v7266
    %7268 = vmatmul.f32.gmra.mxu0 %v6205
    %v7269 = vpop.f32.mrf.mxu0
    %v7270 = vadd.f32 0.0, %v7269
    %7271 = vmatmul.f32.gmra.mxu0 %v6211
    %v7272 = vpop.f32.mrf.mxu0
    %v7273 = vadd.f32 0.0, %v7272
    %7274 = vmatmul.f32.gmra.mxu0 %v6217
    %v7275 = vpop.f32.mrf.mxu0
    %v7276 = vadd.f32 0.0, %v7275
    %7277 = vmatmul.f32.gmra.mxu0 %v6223
    %v7278 = vpop.f32.mrf.mxu0
    %v7279 = vadd.f32 0.0, %v7278
    %7280 = vmatmul.f32.gmra.mxu0 %v6229
    %v7281 = vpop.f32.mrf.mxu0
    %v7282 = vadd.f32 0.0, %v7281
    %7283 = vdwg.mxu0
    %7284 = vmatpush.msra.mxu0 %v6362
    %7285 = vmatpush.msra.mxu0 %v6358
    %7286 = vmatpush.msra.mxu0 %v6354
    %7287 = vmatpush.msra.mxu0 %v6350
    %7288 = vmatpush.msra.mxu0 %v6346
    %7289 = vmatpush.msra.mxu0 %v6342
    %7290 = vmatpush.msra.mxu0 %v6338
    %7291 = vmatpush.msra.mxu0 %v6334
    %7292 = vmatpush.msra.mxu0 %v6330
    %7293 = vmatpush.msra.mxu0 %v6326
    %7294 = vmatpush.msra.mxu0 %v6322
    %7295 = vmatpush.msra.mxu0 %v6318
    %7296 = vmatpush.msra.mxu0 %v6314
    %7297 = vmatpush.msra.mxu0 %v6310
    %7298 = vmatpush.msra.mxu0 %v6306
    %7299 = vmatpush.msra.mxu0 %v6302
    %7300 = vmatmul.f32.gmra.mxu0 %v6200
    %v7301 = vpop.f32.mrf.mxu0
    %v7302 = vadd.f32 %v7267, %v7301
    %7303 = vmatmul.f32.gmra.mxu0 %v6206
    %v7304 = vpop.f32.mrf.mxu0
    %v7305 = vadd.f32 %v7270, %v7304
    %7306 = vmatmul.f32.gmra.mxu0 %v6212
    %v7307 = vpop.f32.mrf.mxu0
    %v7308 = vadd.f32 %v7273, %v7307
    %7309 = vmatmul.f32.gmra.mxu0 %v6218
    %v7310 = vpop.f32.mrf.mxu0
    %v7311 = vadd.f32 %v7276, %v7310
    %7312 = vmatmul.f32.gmra.mxu0 %v6224
    %v7313 = vpop.f32.mrf.mxu0
    %v7314 = vadd.f32 %v7279, %v7313
    %7315 = vmatmul.f32.gmra.mxu0 %v6230
    %v7316 = vpop.f32.mrf.mxu0
    %v7317 = vadd.f32 %v7282, %v7316
    %7318 = vdwg.mxu0
    %7319 = vmatpush.msra.mxu0 %v6426
    %7320 = vmatpush.msra.mxu0 %v6422
    %7321 = vmatpush.msra.mxu0 %v6418
    %7322 = vmatpush.msra.mxu0 %v6414
    %7323 = vmatpush.msra.mxu0 %v6410
    %7324 = vmatpush.msra.mxu0 %v6406
    %7325 = vmatpush.msra.mxu0 %v6402
    %7326 = vmatpush.msra.mxu0 %v6398
    %7327 = vmatpush.msra.mxu0 %v6394
    %7328 = vmatpush.msra.mxu0 %v6390
    %7329 = vmatpush.msra.mxu0 %v6386
    %7330 = vmatpush.msra.mxu0 %v6382
    %7331 = vmatpush.msra.mxu0 %v6378
    %7332 = vmatpush.msra.mxu0 %v6374
    %7333 = vmatpush.msra.mxu0 %v6370
    %7334 = vmatpush.msra.mxu0 %v6366
    %7335 = vmatmul.f32.gmra.mxu0 %v6201
    %v7336 = vpop.f32.mrf.mxu0
    %v7337 = vadd.f32 %v7302, %v7336
    %7338 = vmatmul.f32.gmra.mxu0 %v6207
    %v7339 = vpop.f32.mrf.mxu0
    %v7340 = vadd.f32 %v7305, %v7339
    %7341 = vmatmul.f32.gmra.mxu0 %v6213
    %v7342 = vpop.f32.mrf.mxu0
    %v7343 = vadd.f32 %v7308, %v7342
    %7344 = vmatmul.f32.gmra.mxu0 %v6219
    %v7345 = vpop.f32.mrf.mxu0
    %v7346 = vadd.f32 %v7311, %v7345
    %7347 = vmatmul.f32.gmra.mxu0 %v6225
    %v7348 = vpop.f32.mrf.mxu0
    %v7349 = vadd.f32 %v7314, %v7348
    %7350 = vmatmul.f32.gmra.mxu0 %v6231
    %v7351 = vpop.f32.mrf.mxu0
    %v7352 = vadd.f32 %v7317, %v7351
    %7353 = vdwg.mxu0
    %7354 = vmatpush.msra.mxu0 %v6490
    %7355 = vmatpush.msra.mxu0 %v6486
    %7356 = vmatpush.msra.mxu0 %v6482
    %7357 = vmatpush.msra.mxu0 %v6478
    %7358 = vmatpush.msra.mxu0 %v6474
    %7359 = vmatpush.msra.mxu0 %v6470
    %7360 = vmatpush.msra.mxu0 %v6466
    %7361 = vmatpush.msra.mxu0 %v6462
    %7362 = vmatpush.msra.mxu0 %v6458
    %7363 = vmatpush.msra.mxu0 %v6454
    %7364 = vmatpush.msra.mxu0 %v6450
    %7365 = vmatpush.msra.mxu0 %v6446
    %7366 = vmatpush.msra.mxu0 %v6442
    %7367 = vmatpush.msra.mxu0 %v6438
    %7368 = vmatpush.msra.mxu0 %v6434
    %7369 = vmatpush.msra.mxu0 %v6430
    %7370 = vmatmul.f32.gmra.mxu0 %v6202
    %v7371 = vpop.f32.mrf.mxu0
    %v7372 = vadd.f32 %v7337, %v7371
    %7373 = vmatmul.f32.gmra.mxu0 %v6208
    %v7374 = vpop.f32.mrf.mxu0
    %v7375 = vadd.f32 %v7340, %v7374
    %7376 = vmatmul.f32.gmra.mxu0 %v6214
    %v7377 = vpop.f32.mrf.mxu0
    %v7378 = vadd.f32 %v7343, %v7377
    %7379 = vmatmul.f32.gmra.mxu0 %v6220
    %v7380 = vpop.f32.mrf.mxu0
    %v7381 = vadd.f32 %v7346, %v7380
    %7382 = vmatmul.f32.gmra.mxu0 %v6226
    %v7383 = vpop.f32.mrf.mxu0
    %v7384 = vadd.f32 %v7349, %v7383
    %7385 = vmatmul.f32.gmra.mxu0 %v6232
    %v7386 = vpop.f32.mrf.mxu0
    %v7387 = vadd.f32 %v7352, %v7386
    %7388 = vdwg.mxu0
    %7389 = vmatpush.msra.mxu0 %v6554
    %7390 = vmatpush.msra.mxu0 %v6550
    %7391 = vmatpush.msra.mxu0 %v6546
    %7392 = vmatpush.msra.mxu0 %v6542
    %7393 = vmatpush.msra.mxu0 %v6538
    %7394 = vmatpush.msra.mxu0 %v6534
    %7395 = vmatpush.msra.mxu0 %v6530
    %7396 = vmatpush.msra.mxu0 %v6526
    %7397 = vmatpush.msra.mxu0 %v6522
    %7398 = vmatpush.msra.mxu0 %v6518
    %7399 = vmatpush.msra.mxu0 %v6514
    %7400 = vmatpush.msra.mxu0 %v6510
    %7401 = vmatpush.msra.mxu0 %v6506
    %7402 = vmatpush.msra.mxu0 %v6502
    %7403 = vmatpush.msra.mxu0 %v6498
    %7404 = vmatpush.msra.mxu0 %v6494
    %7405 = vmatmul.f32.gmra.mxu0 %v6203
    %v7406 = vpop.f32.mrf.mxu0
    %v7407 = vadd.f32 %v7372, %v7406
    %7408 = vmatmul.f32.gmra.mxu0 %v6209
    %v7409 = vpop.f32.mrf.mxu0
    %v7410 = vadd.f32 %v7375, %v7409
    %7411 = vmatmul.f32.gmra.mxu0 %v6215
    %v7412 = vpop.f32.mrf.mxu0
    %v7413 = vadd.f32 %v7378, %v7412
    %7414 = vmatmul.f32.gmra.mxu0 %v6221
    %v7415 = vpop.f32.mrf.mxu0
    %v7416 = vadd.f32 %v7381, %v7415
    %7417 = vmatmul.f32.gmra.mxu0 %v6227
    %v7418 = vpop.f32.mrf.mxu0
    %v7419 = vadd.f32 %v7384, %v7418
    %7420 = vmatmul.f32.gmra.mxu0 %v6233
    %v7421 = vpop.f32.mrf.mxu0
    %v7422 = vadd.f32 %v7387, %v7421
    %7423 = vdwg.mxu0
    %7424 = vmatpush.msra.mxu0 %v6618
    %7425 = vmatpush.msra.mxu0 %v6614
    %7426 = vmatpush.msra.mxu0 %v6610
    %7427 = vmatpush.msra.mxu0 %v6606
    %7428 = vmatpush.msra.mxu0 %v6602
    %7429 = vmatpush.msra.mxu0 %v6598
    %7430 = vmatpush.msra.mxu0 %v6594
    %7431 = vmatpush.msra.mxu0 %v6590
    %7432 = vmatpush.msra.mxu0 %v6586
    %7433 = vmatpush.msra.mxu0 %v6582
    %7434 = vmatpush.msra.mxu0 %v6578
    %7435 = vmatpush.msra.mxu0 %v6574
    %7436 = vmatpush.msra.mxu0 %v6570
    %7437 = vmatpush.msra.mxu0 %v6566
    %7438 = vmatpush.msra.mxu0 %v6562
    %7439 = vmatpush.msra.mxu0 %v6558
    %7440 = vmatmul.f32.gmra.mxu0 %v6204
    %v7441 = vpop.f32.mrf.mxu0
    %v7442 = vadd.f32 %v7407, %v7441
    %7443 = vmatmul.f32.gmra.mxu0 %v6210
    %v7444 = vpop.f32.mrf.mxu0
    %v7445 = vadd.f32 %v7410, %v7444
    %7446 = vmatmul.f32.gmra.mxu0 %v6216
    %v7447 = vpop.f32.mrf.mxu0
    %v7448 = vadd.f32 %v7413, %v7447
    %7449 = vmatmul.f32.gmra.mxu0 %v6222
    %v7450 = vpop.f32.mrf.mxu0
    %v7451 = vadd.f32 %v7416, %v7450
    %7452 = vmatmul.f32.gmra.mxu0 %v6228
    %v7453 = vpop.f32.mrf.mxu0
    %v7454 = vadd.f32 %v7419, %v7453
    %7455 = vmatmul.f32.gmra.mxu0 %v6234
    %v7456 = vpop.f32.mrf.mxu0
    %v7457 = vadd.f32 %v7422, %v7456
    %7458 = vdwg.mxu0
    %7459 = vst [vmem:[#allocation5] sm:$0xff] %v6812
    %7460 = vst [vmem:[#allocation5 + $0x8] sm:$0xff] %v6815
    %7461 = vst [vmem:[#allocation5 + $0x10] sm:$0xff] %v6818
    %7462 = vst [vmem:[#allocation5 + $0x18] sm:$0xff] %v6821
    %7463 = vst [vmem:[#allocation5 + $0x20] sm:$0xff] %v6824
    %7464 = vst [vmem:[#allocation5 + $0x28] sm:$0xf] %v6827
    %7465 = vst [vmem:[#allocation5 + $0x2c] sm:$0xff] %v7022
    %7466 = vst [vmem:[#allocation5 + $0x34] sm:$0xff] %v7025
    %7467 = vst [vmem:[#allocation5 + $0x3c] sm:$0xff] %v7028
    %7468 = vst [vmem:[#allocation5 + $0x44] sm:$0xff] %v7031
    %7469 = vst [vmem:[#allocation5 + $0x4c] sm:$0xff] %v7034
    %7470 = vst [vmem:[#allocation5 + $0x54] sm:$0xf] %v7037
    %7471 = vst [vmem:[#allocation5 + $0x58] sm:$0xff] %v7232
    %7472 = vst [vmem:[#allocation5 + $0x60] sm:$0xff] %v7235
    %7473 = vst [vmem:[#allocation5 + $0x68] sm:$0xff] %v7238
    %7474 = vst [vmem:[#allocation5 + $0x70] sm:$0xff] %v7241
    %7475 = vst [vmem:[#allocation5 + $0x78] sm:$0xff] %v7244
    %7476 = vst [vmem:[#allocation5 + $0x80] sm:$0xf] %v7247
    %7477 = vst [vmem:[#allocation5 + $0x84] sm:$0xff] %v7442
    %7478 = vst [vmem:[#allocation5 + $0x8c] sm:$0xff] %v7445
    %7479 = vst [vmem:[#allocation5 + $0x94] sm:$0xff] %v7448
    %7480 = vst [vmem:[#allocation5 + $0x9c] sm:$0xff] %v7451
    %7481 = vst [vmem:[#allocation5 + $0xa4] sm:$0xff] %v7454
    %7482 = vst [vmem:[#allocation5 + $0xac] sm:$0xf] %v7457
    %v7483 = vld [vmem:[#allocation39] sm:$0xff]
    %v7484 = vld [vmem:[#allocation39 + $0x8] sm:$0xff]
    %v7485 = vld [vmem:[#allocation39 + $0x10] sm:$0xff]
    %v7486 = vld [vmem:[#allocation39 + $0x18] sm:$0xff]
    %v7487 = vld [vmem:[#allocation39 + $0x20] sm:$0xff]
    %v7488 = vld [vmem:[#allocation39 + $0x28] sm:$0xff]
    %v7489 = vld [vmem:[#allocation39 + $0x30] sm:$0xff]
    %v7490 = vld [vmem:[#allocation39 + $0x38] sm:$0xff]
    %v7491 = vld [vmem:[#allocation39 + $0x40] sm:$0xff]
    %v7492 = vld [vmem:[#allocation39 + $0x48] sm:$0xff]
    %v7493 = vld [vmem:[#allocation39 + $0x50] sm:$0xff]
    %v7494 = vld [vmem:[#allocation39 + $0x58] sm:$0xff]
    %v7495 = vld [vmem:[#allocation39 + $0x60] sm:$0xff]
    %v7496 = vld [vmem:[#allocation39 + $0x68] sm:$0xff]
    %v7497 = vld [vmem:[#allocation39 + $0x70] sm:$0xff]
    %v7498 = vld [vmem:[#allocation39 + $0x78] sm:$0xff]
    %v7499 = vld [vmem:[#allocation39 + $0x80] sm:$0xff]
    %v7500 = vld [vmem:[#allocation39 + $0x88] sm:$0xff]
    %v7501 = vld [vmem:[#allocation39 + $0x90] sm:$0xff]
    %v7502 = vld [vmem:[#allocation39 + $0x98] sm:$0xff]
    %v7503 = vld [vmem:[#allocation39 + $0xa0] sm:$0xff]
    %v7504 = vld [vmem:[#allocation39 + $0xa8] sm:$0xff]
    %v7505 = vld [vmem:[#allocation5] sm:$0xff]
    %v7506 = vld [vmem:[#allocation5 + $0x8] sm:$0xff]
    %v7507 = vld [vmem:[#allocation5 + $0x10] sm:$0xff]
    %v7508 = vld [vmem:[#allocation5 + $0x18] sm:$0xff]
    %v7509 = vld [vmem:[#allocation5 + $0x20] sm:$0xff]
    %v7510 = vld [vmem:[#allocation5 + $0x28] sm:$0xff]
    %v7511 = vld [vmem:[#allocation5 + $0x30] sm:$0xff]
    %v7512 = vld [vmem:[#allocation5 + $0x38] sm:$0xff]
    %v7513 = vld [vmem:[#allocation5 + $0x40] sm:$0xff]
    %v7514 = vld [vmem:[#allocation5 + $0x48] sm:$0xff]
    %v7515 = vld [vmem:[#allocation5 + $0x50] sm:$0xff]
    %v7516 = vld [vmem:[#allocation5 + $0x58] sm:$0xff]
    %v7517 = vld [vmem:[#allocation5 + $0x60] sm:$0xff]
    %v7518 = vld [vmem:[#allocation5 + $0x68] sm:$0xff]
    %v7519 = vld [vmem:[#allocation5 + $0x70] sm:$0xff]
    %v7520 = vld [vmem:[#allocation5 + $0x78] sm:$0xff]
    %v7521 = vld [vmem:[#allocation5 + $0x80] sm:$0xff]
    %v7522 = vld [vmem:[#allocation5 + $0x88] sm:$0xff]
    %v7523 = vld [vmem:[#allocation5 + $0x90] sm:$0xff]
    %v7524 = vld [vmem:[#allocation5 + $0x98] sm:$0xff]
    %v7525 = vld [vmem:[#allocation5 + $0xa0] sm:$0xff]
    %v7526 = vld [vmem:[#allocation5 + $0xa8] sm:$0xff]
    %v7527 = vld [vmem:[#allocation41] sm:$0x1]
    %v7529 = vperm.slane %v7527, 0
    %vm7531 = vcmask 392192
    %v7533 = vsel %vm7531, %v7484, 0
    %v7536 = vsel %vm7531, %v7486, 0
    %v7539 = vsel %vm7531, %v7488, 0
    %v7542 = vsel %vm7531, %v7490, 0
    %v7545 = vsel %vm7531, %v7492, 0
    %v7548 = vsel %vm7531, %v7494, 0
    %v7551 = vsel %vm7531, %v7496, 0
    %v7554 = vsel %vm7531, %v7498, 0
    %v7557 = vsel %vm7531, %v7500, 0
    %v7560 = vsel %vm7531, %v7502, 0
    %v7563 = vsel %vm7531, %v7504, 0
    %7565 = vmatpush.msra.mxu0 %v7520
    %7566 = vmatpush.msra.mxu0 %v7519
    %7567 = vmatpush.msra.mxu0 %v7518
    %7568 = vmatpush.msra.mxu0 %v7517
    %7569 = vmatpush.msra.mxu0 %v7516
    %7570 = vmatpush.msra.mxu0 %v7515
    %7571 = vmatpush.msra.mxu0 %v7514
    %7572 = vmatpush.msra.mxu0 %v7513
    %7573 = vmatpush.msra.mxu0 %v7512
    %7574 = vmatpush.msra.mxu0 %v7511
    %7575 = vmatpush.msra.mxu0 %v7510
    %7576 = vmatpush.msra.mxu0 %v7509
    %7577 = vmatpush.msra.mxu0 %v7508
    %7578 = vmatpush.msra.mxu0 %v7507
    %7579 = vmatpush.msra.mxu0 %v7506
    %7580 = vmatpush.msra.mxu0 %v7505
    %7581 = vmatmul.f32.gmra.mxu0 %v7483
    %v7582 = vpop.f32.mrf.mxu0
    %v7583 = vadd.f32 %v7529, %v7582
    %7584 = vmatmul.f32.gmra.mxu0 %v7485
    %v7585 = vpop.f32.mrf.mxu0
    %v7586 = vadd.f32 %v7529, %v7585
    %7587 = vmatmul.f32.gmra.mxu0 %v7487
    %v7588 = vpop.f32.mrf.mxu0
    %v7589 = vadd.f32 %v7529, %v7588
    %7590 = vmatmul.f32.gmra.mxu0 %v7489
    %v7591 = vpop.f32.mrf.mxu0
    %v7592 = vadd.f32 %v7529, %v7591
    %7593 = vmatmul.f32.gmra.mxu0 %v7491
    %v7594 = vpop.f32.mrf.mxu0
    %v7595 = vadd.f32 %v7529, %v7594
    %7596 = vmatmul.f32.gmra.mxu0 %v7493
    %v7597 = vpop.f32.mrf.mxu0
    %v7598 = vadd.f32 %v7529, %v7597
    %7599 = vmatmul.f32.gmra.mxu0 %v7495
    %v7600 = vpop.f32.mrf.mxu0
    %v7601 = vadd.f32 %v7529, %v7600
    %7602 = vmatmul.f32.gmra.mxu0 %v7497
    %v7603 = vpop.f32.mrf.mxu0
    %v7604 = vadd.f32 %v7529, %v7603
    %7605 = vmatmul.f32.gmra.mxu0 %v7499
    %v7606 = vpop.f32.mrf.mxu0
    %v7607 = vadd.f32 %v7529, %v7606
    %7608 = vmatmul.f32.gmra.mxu0 %v7501
    %v7609 = vpop.f32.mrf.mxu0
    %v7610 = vadd.f32 %v7529, %v7609
    %7611 = vmatmul.f32.gmra.mxu0 %v7503
    %v7612 = vpop.f32.mrf.mxu0
    %v7613 = vadd.f32 %v7529, %v7612
    %7614 = vdwg.mxu0
    %7615 = vmatpush.msra.mxu0 0.0
    %7616 = vmatpush.msra.mxu0 0.0
    %7617 = vmatpush.msra.mxu0 0.0
    %7618 = vmatpush.msra.mxu0 0.0
    %7619 = vmatpush.msra.mxu0 0.0
    %7620 = vmatpush.msra.mxu0 0.0
    %7621 = vmatpush.msra.mxu0 0.0
    %7622 = vmatpush.msra.mxu0 0.0
    %7623 = vmatpush.msra.mxu0 0.0
    %7624 = vmatpush.msra.mxu0 0.0
    %7625 = vmatpush.msra.mxu0 %v7526
    %7626 = vmatpush.msra.mxu0 %v7525
    %7627 = vmatpush.msra.mxu0 %v7524
    %7628 = vmatpush.msra.mxu0 %v7523
    %7629 = vmatpush.msra.mxu0 %v7522
    %7630 = vmatpush.msra.mxu0 %v7521
    %7631 = vmatmul.f32.gmra.mxu0 %v7533
    %v7632 = vpop.f32.mrf.mxu0
    %v7633 = vadd.f32 %v7583, %v7632
    %7634 = vmatmul.f32.gmra.mxu0 %v7536
    %v7635 = vpop.f32.mrf.mxu0
    %v7636 = vadd.f32 %v7586, %v7635
    %7637 = vmatmul.f32.gmra.mxu0 %v7539
    %v7638 = vpop.f32.mrf.mxu0
    %v7639 = vadd.f32 %v7589, %v7638
    %7640 = vmatmul.f32.gmra.mxu0 %v7542
    %v7641 = vpop.f32.mrf.mxu0
    %v7642 = vadd.f32 %v7592, %v7641
    %7643 = vmatmul.f32.gmra.mxu0 %v7545
    %v7644 = vpop.f32.mrf.mxu0
    %v7645 = vadd.f32 %v7595, %v7644
    %7646 = vmatmul.f32.gmra.mxu0 %v7548
    %v7647 = vpop.f32.mrf.mxu0
    %v7648 = vadd.f32 %v7598, %v7647
    %7649 = vmatmul.f32.gmra.mxu0 %v7551
    %v7650 = vpop.f32.mrf.mxu0
    %v7651 = vadd.f32 %v7601, %v7650
    %7652 = vmatmul.f32.gmra.mxu0 %v7554
    %v7653 = vpop.f32.mrf.mxu0
    %v7654 = vadd.f32 %v7604, %v7653
    %7655 = vmatmul.f32.gmra.mxu0 %v7557
    %v7656 = vpop.f32.mrf.mxu0
    %v7657 = vadd.f32 %v7607, %v7656
    %7658 = vmatmul.f32.gmra.mxu0 %v7560
    %v7659 = vpop.f32.mrf.mxu0
    %v7660 = vadd.f32 %v7610, %v7659
    %7661 = vmatmul.f32.gmra.mxu0 %v7563
    %v7662 = vpop.f32.mrf.mxu0
    %v7663 = vadd.f32 %v7613, %v7662
    %7664 = vdwg.mxu0
    %vm7665 = vcmp.gt.f32.partialorder %v7633, 0.0
    %vm7666 = vcmp.gt.f32.partialorder %v7636, 0.0
    %vm7667 = vcmp.gt.f32.partialorder %v7639, 0.0
    %vm7668 = vcmp.gt.f32.partialorder %v7642, 0.0
    %vm7669 = vcmp.gt.f32.partialorder %v7645, 0.0
    %vm7670 = vcmp.gt.f32.partialorder %v7648, 0.0
    %vm7671 = vcmp.gt.f32.partialorder %v7651, 0.0
    %vm7672 = vcmp.gt.f32.partialorder %v7654, 0.0
    %vm7673 = vcmp.gt.f32.partialorder %v7657, 0.0
    %vm7674 = vcmp.gt.f32.partialorder %v7660, 0.0
    %vm7675 = vcmp.gt.f32.partialorder %v7663, 0.0
    %v7676 = vmul.f32 %v7633, 0.1
    %v7677 = vmul.f32 %v7636, 0.1
    %v7678 = vmul.f32 %v7639, 0.1
    %v7679 = vmul.f32 %v7642, 0.1
    %v7680 = vmul.f32 %v7645, 0.1
    %v7681 = vmul.f32 %v7648, 0.1
    %v7682 = vmul.f32 %v7651, 0.1
    %v7683 = vmul.f32 %v7654, 0.1
    %v7684 = vmul.f32 %v7657, 0.1
    %v7685 = vmul.f32 %v7660, 0.1
    %v7686 = vmul.f32 %v7663, 0.1
    %v7687 = vsel %vm7665, %v7633, %v7676
    %v7688 = vsel %vm7666, %v7636, %v7677
    %v7689 = vsel %vm7667, %v7639, %v7678
    %v7690 = vsel %vm7668, %v7642, %v7679
    %v7691 = vsel %vm7669, %v7645, %v7680
    %v7692 = vsel %vm7670, %v7648, %v7681
    %v7693 = vsel %vm7671, %v7651, %v7682
    %v7694 = vsel %vm7672, %v7654, %v7683
    %v7695 = vsel %vm7673, %v7657, %v7684
    %v7696 = vsel %vm7674, %v7660, %v7685
    %v7697 = vsel %vm7675, %v7663, %v7686
    %7698 = vst [vmem:[#allocation42] sm:$0xff] %v7687
    %7699 = vst [vmem:[#allocation42 + $0x8] sm:$0xff] %v7688
    %7700 = vst [vmem:[#allocation42 + $0x10] sm:$0xff] %v7689
    %7701 = vst [vmem:[#allocation42 + $0x18] sm:$0xff] %v7690
    %7702 = vst [vmem:[#allocation42 + $0x20] sm:$0xff] %v7691
    %7703 = vst [vmem:[#allocation42 + $0x28] sm:$0xff] %v7692
    %7704 = vst [vmem:[#allocation42 + $0x30] sm:$0xff] %v7693
    %7705 = vst [vmem:[#allocation42 + $0x38] sm:$0xff] %v7694
    %7706 = vst [vmem:[#allocation42 + $0x40] sm:$0xff] %v7695
    %7707 = vst [vmem:[#allocation42 + $0x48] sm:$0xff] %v7696
    %7708 = vst [vmem:[#allocation42 + $0x50] sm:$0xff] %v7697
    // Predicated region
    $region194: #{tpu_custom_call.1} parent=1 // pred_check
      _
    $region195: #{tpu_custom_call.1} parent=1 // pred_check_branch
      %7710 = sbr.rel (0) target = $region197
    $region196: #{tpu_custom_call.1} parent=1 // pred_region
      %7712 = vsyncadd [#allocation8], 0
      %s7713 = sshll.u32 [#allocation42], 4
      %s7714 = int_to_ptr.vmem [resolvable:$true] %s7713
      %s7715 = sshll.u32 %s25, 4
      %s7716 = int_to_ptr.hbm [resolvable:$true] %s7715
      %7721 = dma.vmem_to_hbm [thread:$0]  %s7714, 1408, %s7716, [#allocation8], 128, 128, 8
    $region197: #{tpu_custom_call.1} parent=1 // pred_fallthru
      _
    // Predicated region
    $region198: #{tpu_custom_call.1} parent=1 // pred_check
      _
    $region199: #{tpu_custom_call.1} parent=1 // pred_check_branch
      %7723 = sbr.rel (0) target = $region201
    $region200: #{tpu_custom_call.1} parent=1 // pred_region
      %7725 = vsyncadd [#allocation44], 0
      %s7727 = sshll.u32 [#allocation43], 4
      %s7728 = int_to_ptr.vmem [resolvable:$true] %s7727
      %s7729 = sshll.u32 %s26, 4
      %s7730 = int_to_ptr.hbm [resolvable:$true] %s7729
      %7732 = dma.vmem_to_hbm [thread:$0]  %s7728, 32, %s7730, [#allocation44]
    $region201: #{tpu_custom_call.1} parent=1 // pred_fallthru
      _
    // Predicated region
    $region202: #{tpu_custom_call.1} parent=1 // pred_check
      _
    $region203: #{tpu_custom_call.1} parent=1 // pred_check_branch
      %7734 = sbr.rel (0) target = $region205
    $region204: #{tpu_custom_call.1} parent=1 // pred_region
      %7736 = vsyncadd [#allocation44], 0
      %s7738 = sshll.u32 [#allocation45], 4
      %s7739 = int_to_ptr.vmem [resolvable:$true] %s7738
      %s7740 = sshll.u32 %s27, 4
      %s7741 = int_to_ptr.hbm [resolvable:$true] %s7740
      %7743 = dma.vmem_to_hbm [thread:$0]  %s7739, 32, %s7741, [#allocation44]
    $region205: #{tpu_custom_call.1} parent=1 // pred_fallthru
      _
    // Predicated region
    $region206: #{tpu_custom_call.1} parent=1 // pred_check
      _
    $region207: #{tpu_custom_call.1} parent=1 // pred_check_branch
      %7745 = sbr.rel (0) target = $region209
    $region208: #{tpu_custom_call.1} parent=1 // pred_region
      %7747 = dma.done [#allocation8], 1408
    $region209: #{tpu_custom_call.1} parent=1 // pred_fallthru
      _
    // Predicated region
    $region210: #{tpu_custom_call.1} parent=1 // pred_check
      _
    $region211: #{tpu_custom_call.1} parent=1 // pred_check_branch
      %7749 = sbr.rel (0) target = $region213
    $region212: #{tpu_custom_call.1} parent=1 // pred_region
      %7751 = dma.done [#allocation44], 32
    $region213: #{tpu_custom_call.1} parent=1 // pred_fallthru
      _
    // Predicated region
    $region214: #{tpu_custom_call.1} parent=1 // pred_check
      _
    $region215: #{tpu_custom_call.1} parent=1 // pred_check_branch
      %7753 = sbr.rel (0) target = $region217
    $region216: #{tpu_custom_call.1} parent=1 // pred_region
      %7755 = dma.done [#allocation44], 32
    $region217: #{tpu_custom_call.1} parent=1 // pred_fallthru
      _
    %7756 = vsyncpa [#allocation7], 1
    %7757 = vsyncpa [#allocation10], 1
    %7758 = vsyncpa [#allocation13], 1
    %7759 = vsyncpa [#allocation16], 1
    %7760 = vsyncpa [#allocation19], 1
    %7761 = vsyncpa [#allocation22], 1
    %7762 = vsyncpa [#allocation25], 1
    %7763 = vsyncpa [#allocation28], 1
    %7764 = vsyncpa [#allocation31], 1
    %7765 = vsyncpa [#allocation34], 1
    %7766 = vsyncpa [#allocation37], 1
    %7767 = vsyncpa [#allocation40], 1
    %7768 = vsyncpa [#allocation8], 1
    %7769 = vsyncpa [#allocation44], 1

</llo_original>
